<compile_context>
chip_gen: v7x
topology: tpu7x:2x2x1
jax: 0.10.0
libtpu: 0.0.40
codegen_flags: <defaults>
</compile_context>

<pallas_src>
import functools
import math

import numpy as np
import jax
import jax.numpy as jnp
from jax import lax
from jax.experimental import pallas as pl
from jax.experimental.pallas import tpu as pltpu


# (Cin, Cout, K, padding, gem_pool) for the 6 conv blocks of CNN1d_hight.cnn1
_BLOCK_CFG = (
    (1, 16, 32, 0, 1),
    (16, 16, 32, 0, 4),
    (16, 32, 32, 1, 1),
    (32, 32, 16, 1, 4),
    (32, 64, 16, 1, 1),
    (64, 64, 16, 1, 2),
)

_GEM_P = 3.0      # GeM p at its nn.Parameter init value
_GEM_EPS = 1e-6
_BN_EPS = 1e-5


def _tap(hb, k, pad, lc, lin, cin):
    """k-th im2col tap of a (Cin, Lin) activation with implicit zero padding.

    Only the edge taps of padded convs need a 1-column zero concat; interior
    taps are plain (already lane-shifted) slices of the UNPADDED activation,
    so no full padded copy is ever materialized.
    """
    lo = k - pad
    hi = lo + lc
    if lo >= 0 and hi <= lin:
        return hb[:, lo:hi]
    if lo < 0:                                   # left zero edge (first tap)
        z = jnp.zeros((cin, -lo), hb.dtype)
        return jnp.concatenate([z, hb[:, :hi]], axis=1)
    z = jnp.zeros((cin, hi - lin), hb.dtype)     # right zero edge (last tap)
    return jnp.concatenate([hb[:, lo:lin], z], axis=1)


def _cnn1d_hight_kernel(x_ref, *refs, cfg, gem_p, gem_eps, bn_eps):
    """Fused 6-block forward.

    refs = per block: (w, b, gamma, beta[, pool_sel]) ... , then o_ref.
    """
    o_ref = refs[-1]
    prm = refs[:-1]
    B = x_ref.shape[0]
    n_blocks = len(cfg)

    # Per-batch activations kept SEPARATE (no lane-misaligned batch concats).
    # Between blocks they are stored in bf16 so the next gather moves half the
    # bytes; block 1 starts from the f32 input (Cin=1 rows pack poorly in bf16).
    h = [x_ref[b] for b in range(B)]             # (Cin=1, Lin) f32
    idx = 0

    for blk, (cin, cout, K, pad, pool) in enumerate(cfg):
        w2 = prm[idx][...]                       # (Cout, K*Cin) bf16
        bias = prm[idx + 1][...]                 # (Cout, 1) f32
        gamma = prm[idx + 2][...]                # (Cout, 1) f32
        beta = prm[idx + 3][...]                 # (Cout, 1) f32
        idx += 4
        sel = None
        if pool > 1:
            sel = prm[idx][...]                  # (Lf, Lp) bf16, 1/pool baked in
            idx += 1

        lin = h[0].shape[1]
        lc = lin + 2 * pad - K + 1               # conv output length

        # ---- per-batch Conv1d as one im2col bf16 MXU matmul [+ GeM pool] ----
        zs = []
        for b in range(B):
            hb = h[b]                            # (Cin, Lin) bf16 (f32 in blk 0)
            taps = [_tap(hb, k, pad, lc, lin, cin) for k in range(K)]
            a = jnp.concatenate(taps, axis=0)    # (K*Cin, Lc)
            if a.dtype != jnp.bfloat16:
                a = a.astype(jnp.bfloat16)
            y = jnp.dot(w2, a, preferred_element_type=jnp.float32) + bias

            if pool > 1:
                # GeM: avg_pool1d(clamp(y, eps)^p, pool)^(1/p), stride = pool.
                lp = lc // pool
                lf = lp * pool
                yc = jnp.maximum(y[:, :lf], gem_eps)
                y3 = yc * yc * yc                # p == 3 (VPU)
                pooled = jnp.dot(y3.astype(jnp.bfloat16), sel,
                                 preferred_element_type=jnp.float32)
                z = jnp.exp((1.0 / gem_p) * jnp.log(pooled))   # ^(1/p), > 0
            else:
                z = y
            zs.append(z)                         # (Cout, Lz) f32

        lz = zs[0].shape[1]

        # ---- BatchNorm1d: training-mode batch stats, two-pass biased var ----
        # Only the tiny (Cout, 1) partial sums are combined across batches.
        inv_n = 1.0 / float(B * lz)
        s1 = jnp.sum(zs[0], axis=1, keepdims=True)
        for b in range(1, B):
            s1 = s1 + jnp.sum(zs[b], axis=1, keepdims=True)
        mean = s1 * inv_n
        zc = [z - mean for z in zs]
        s2 = jnp.sum(zc[0] * zc[0], axis=1, keepdims=True)
        for b in range(1, B):
            s2 = s2 + jnp.sum(zc[b] * zc[b], axis=1, keepdims=True)
        var = s2 * inv_n
        scale = lax.rsqrt(var + bn_eps) * gamma

        # ---- normalize + SiLU (sigmoid via EUP tanh, no VALU divide) ----
        for b in range(B):
            hbn = zc[b] * scale + beta
            act = hbn * (0.5 * jnp.tanh(0.5 * hbn) + 0.5)      # x * sigmoid(x)
            if blk == n_blocks - 1:
                o_ref[b] = act                                 # (Cout, Lout) f32
            else:
                h[b] = act.astype(jnp.bfloat16)


def _pool_matrix(lf, lp, pool):
    """Host-precomputed (Lf, Lp) bf16 average-pool matrix, 1/pool baked in."""
    rows = np.arange(lf)[:, None] // pool
    cols = np.arange(lp)[None, :]
    sel = (rows == cols).astype(np.float32) / float(pool)      # 0.25 / 0.5 exact
    return jnp.asarray(sel, jnp.bfloat16)


def cnn1d_hight_forward(x, params):
    """x: (B, 1, L) float32.  Returns (B, 64, Lout) float32."""
    B, _, lin = x.shape

    flat = []
    l = lin
    for p, (cin, cout, k, pad, pool) in zip(params, _BLOCK_CFG):
        flat.extend([p["w"], p["b"], p["gamma"], p["beta"]])
        lc = l + 2 * pad - k + 1
        if pool > 1:
            lp = lc // pool
            flat.append(_pool_matrix(lp * pool, lp, pool))
            l = lp
        else:
            l = lc
    lout = l
    cout_final = _BLOCK_CFG[-1][1]

    kernel = functools.partial(_cnn1d_hight_kernel, cfg=_BLOCK_CFG,
                               gem_p=_GEM_P, gem_eps=_GEM_EPS, bn_eps=_BN_EPS)
    vmem = pl.BlockSpec(memory_space=pltpu.MemorySpace.VMEM)

    return pl.pallas_call(
        kernel,
        out_shape=jax.ShapeDtypeStruct((B, cout_final, lout), jnp.float32),
        in_specs=[vmem] * (1 + len(flat)),
        out_specs=vmem,
        compiler_params=pltpu.CompilerParams(
            vmem_limit_bytes=16 * 1024 * 1024),   # resident footprint ~1-2 MiB
    )(x, *flat)


def init_params(key):
    params = []
    for (cin, cout, k, pad, pool) in _BLOCK_CFG:
        key, kw, kb = jax.random.split(key, 3)
        bound = 1.0 / math.sqrt(cin * k)          # PyTorch default Conv1d init
        w = jax.random.uniform(kw, (cout, cin, k), jnp.float32, -bound, bound)
        b = jax.random.uniform(kb, (cout, 1), jnp.float32, -bound, bound)
        # (Cout, Cin, K) -> (Cout, K, Cin) -> (Cout, K*Cin), bf16 for the MXU;
        # row layout matches the im2col concat order (tap-major, channel-minor).
        w2 = jnp.transpose(w, (0, 2, 1)).reshape(cout, k * cin)
        params.append(dict(
            w=w2.astype(jnp.bfloat16),
            b=b,
            gamma=jnp.ones((cout, 1), jnp.float32),   # BN weight init
            beta=jnp.zeros((cout, 1), jnp.float32),   # BN bias init
        ))
    return params


if __name__ == "__main__":
    key = jax.random.PRNGKey(0)
    kx, kp = jax.random.split(key)
    # Minimum viable input length for this architecture is ~680; use 768.
    B, L = 2, 768
    x = jax.random.normal(kx, (B, 1, L), jnp.float32)
    params = init_params(kp)

    fwd = jax.jit(cnn1d_hight_forward)
    out = jax.block_until_ready(fwd(x, params))
    assert out.shape == (B, 64, 3), out.shape
    assert bool(jnp.all(jnp.isfinite(out)))
    print("KERNEL_OK")
</pallas_src>

<mosaic_0001>
module attributes {stable_mosaic.version = 11 : i64} {
  func.func @_cnn1d_hight_kernel(%arg0: memref<2x1x768xf32, #tpu.memory_space<vmem>>, %arg1: memref<16x32xbf16, #tpu.memory_space<vmem>>, %arg2: memref<16x1xf32, #tpu.memory_space<vmem>>, %arg3: memref<16x1xf32, #tpu.memory_space<vmem>>, %arg4: memref<16x1xf32, #tpu.memory_space<vmem>>, %arg5: memref<16x512xbf16, #tpu.memory_space<vmem>>, %arg6: memref<16x1xf32, #tpu.memory_space<vmem>>, %arg7: memref<16x1xf32, #tpu.memory_space<vmem>>, %arg8: memref<16x1xf32, #tpu.memory_space<vmem>>, %arg9: memref<704x176xbf16, #tpu.memory_space<vmem>>, %arg10: memref<32x512xbf16, #tpu.memory_space<vmem>>, %arg11: memref<32x1xf32, #tpu.memory_space<vmem>>, %arg12: memref<32x1xf32, #tpu.memory_space<vmem>>, %arg13: memref<32x1xf32, #tpu.memory_space<vmem>>, %arg14: memref<32x512xbf16, #tpu.memory_space<vmem>>, %arg15: memref<32x1xf32, #tpu.memory_space<vmem>>, %arg16: memref<32x1xf32, #tpu.memory_space<vmem>>, %arg17: memref<32x1xf32, #tpu.memory_space<vmem>>, %arg18: memref<132x33xbf16, #tpu.memory_space<vmem>>, %arg19: memref<64x512xbf16, #tpu.memory_space<vmem>>, %arg20: memref<64x1xf32, #tpu.memory_space<vmem>>, %arg21: memref<64x1xf32, #tpu.memory_space<vmem>>, %arg22: memref<64x1xf32, #tpu.memory_space<vmem>>, %arg23: memref<64x1024xbf16, #tpu.memory_space<vmem>>, %arg24: memref<64x1xf32, #tpu.memory_space<vmem>>, %arg25: memref<64x1xf32, #tpu.memory_space<vmem>>, %arg26: memref<64x1xf32, #tpu.memory_space<vmem>>, %arg27: memref<6x3xbf16, #tpu.memory_space<vmem>>, %arg28: memref<2x64x3xf32, #tpu.memory_space<vmem>>) attributes {dimension_semantics = [], scalar_prefetch = 0 : i64, scratch_operands = 0 : i64, tpu.core_type = #tpu.core_type<tc>} {
    %c0 = arith.constant 0 : index
    %c0_0 = arith.constant 0 : index
    %c0_1 = arith.constant 0 : index
    %0 = vector.load %arg0[%c0, %c0_0, %c0_1] : memref<2x1x768xf32, #tpu.memory_space<vmem>>, vector<1x1x768xf32>
    %1 = vector.shape_cast %0 : vector<1x1x768xf32> to vector<1x768xf32>
    %c1 = arith.constant 1 : index
    %c0_2 = arith.constant 0 : index
    %c0_3 = arith.constant 0 : index
    %2 = vector.load %arg0[%c1, %c0_2, %c0_3] : memref<2x1x768xf32, #tpu.memory_space<vmem>>, vector<1x1x768xf32>
    %3 = vector.shape_cast %2 : vector<1x1x768xf32> to vector<1x768xf32>
    %c0_4 = arith.constant 0 : index
    %c0_5 = arith.constant 0 : index
    %4 = vector.load %arg1[%c0_4, %c0_5] : memref<16x32xbf16, #tpu.memory_space<vmem>>, vector<16x32xbf16>
    %c0_6 = arith.constant 0 : index
    %c0_7 = arith.constant 0 : index
    %5 = vector.load %arg2[%c0_6, %c0_7] : memref<16x1xf32, #tpu.memory_space<vmem>>, vector<16x1xf32>
    %c0_8 = arith.constant 0 : index
    %c0_9 = arith.constant 0 : index
    %6 = vector.load %arg3[%c0_8, %c0_9] : memref<16x1xf32, #tpu.memory_space<vmem>>, vector<16x1xf32>
    %c0_10 = arith.constant 0 : index
    %c0_11 = arith.constant 0 : index
    %7 = vector.load %arg4[%c0_10, %c0_11] : memref<16x1xf32, #tpu.memory_space<vmem>>, vector<16x1xf32>
    %8 = vector.extract_strided_slice %1 {offsets = [0, 0], sizes = [1, 737], strides = [1, 1]} : vector<1x768xf32> to vector<1x737xf32>
    %9 = vector.extract_strided_slice %1 {offsets = [0, 1], sizes = [1, 737], strides = [1, 1]} : vector<1x768xf32> to vector<1x737xf32>
    %10 = vector.extract_strided_slice %1 {offsets = [0, 2], sizes = [1, 737], strides = [1, 1]} : vector<1x768xf32> to vector<1x737xf32>
    %11 = vector.extract_strided_slice %1 {offsets = [0, 3], sizes = [1, 737], strides = [1, 1]} : vector<1x768xf32> to vector<1x737xf32>
    %12 = vector.extract_strided_slice %1 {offsets = [0, 4], sizes = [1, 737], strides = [1, 1]} : vector<1x768xf32> to vector<1x737xf32>
    %13 = vector.extract_strided_slice %1 {offsets = [0, 5], sizes = [1, 737], strides = [1, 1]} : vector<1x768xf32> to vector<1x737xf32>
    %14 = vector.extract_strided_slice %1 {offsets = [0, 6], sizes = [1, 737], strides = [1, 1]} : vector<1x768xf32> to vector<1x737xf32>
    %15 = vector.extract_strided_slice %1 {offsets = [0, 7], sizes = [1, 737], strides = [1, 1]} : vector<1x768xf32> to vector<1x737xf32>
    %16 = vector.extract_strided_slice %1 {offsets = [0, 8], sizes = [1, 737], strides = [1, 1]} : vector<1x768xf32> to vector<1x737xf32>
    %17 = vector.extract_strided_slice %1 {offsets = [0, 9], sizes = [1, 737], strides = [1, 1]} : vector<1x768xf32> to vector<1x737xf32>
    %18 = vector.extract_strided_slice %1 {offsets = [0, 10], sizes = [1, 737], strides = [1, 1]} : vector<1x768xf32> to vector<1x737xf32>
    %19 = vector.extract_strided_slice %1 {offsets = [0, 11], sizes = [1, 737], strides = [1, 1]} : vector<1x768xf32> to vector<1x737xf32>
    %20 = vector.extract_strided_slice %1 {offsets = [0, 12], sizes = [1, 737], strides = [1, 1]} : vector<1x768xf32> to vector<1x737xf32>
    %21 = vector.extract_strided_slice %1 {offsets = [0, 13], sizes = [1, 737], strides = [1, 1]} : vector<1x768xf32> to vector<1x737xf32>
    %22 = vector.extract_strided_slice %1 {offsets = [0, 14], sizes = [1, 737], strides = [1, 1]} : vector<1x768xf32> to vector<1x737xf32>
    %23 = vector.extract_strided_slice %1 {offsets = [0, 15], sizes = [1, 737], strides = [1, 1]} : vector<1x768xf32> to vector<1x737xf32>
    %24 = vector.extract_strided_slice %1 {offsets = [0, 16], sizes = [1, 737], strides = [1, 1]} : vector<1x768xf32> to vector<1x737xf32>
    %25 = vector.extract_strided_slice %1 {offsets = [0, 17], sizes = [1, 737], strides = [1, 1]} : vector<1x768xf32> to vector<1x737xf32>
    %26 = vector.extract_strided_slice %1 {offsets = [0, 18], sizes = [1, 737], strides = [1, 1]} : vector<1x768xf32> to vector<1x737xf32>
    %27 = vector.extract_strided_slice %1 {offsets = [0, 19], sizes = [1, 737], strides = [1, 1]} : vector<1x768xf32> to vector<1x737xf32>
    %28 = vector.extract_strided_slice %1 {offsets = [0, 20], sizes = [1, 737], strides = [1, 1]} : vector<1x768xf32> to vector<1x737xf32>
    %29 = vector.extract_strided_slice %1 {offsets = [0, 21], sizes = [1, 737], strides = [1, 1]} : vector<1x768xf32> to vector<1x737xf32>
    %30 = vector.extract_strided_slice %1 {offsets = [0, 22], sizes = [1, 737], strides = [1, 1]} : vector<1x768xf32> to vector<1x737xf32>
    %31 = vector.extract_strided_slice %1 {offsets = [0, 23], sizes = [1, 737], strides = [1, 1]} : vector<1x768xf32> to vector<1x737xf32>
    %32 = vector.extract_strided_slice %1 {offsets = [0, 24], sizes = [1, 737], strides = [1, 1]} : vector<1x768xf32> to vector<1x737xf32>
    %33 = vector.extract_strided_slice %1 {offsets = [0, 25], sizes = [1, 737], strides = [1, 1]} : vector<1x768xf32> to vector<1x737xf32>
    %34 = vector.extract_strided_slice %1 {offsets = [0, 26], sizes = [1, 737], strides = [1, 1]} : vector<1x768xf32> to vector<1x737xf32>
    %35 = vector.extract_strided_slice %1 {offsets = [0, 27], sizes = [1, 737], strides = [1, 1]} : vector<1x768xf32> to vector<1x737xf32>
    %36 = vector.extract_strided_slice %1 {offsets = [0, 28], sizes = [1, 737], strides = [1, 1]} : vector<1x768xf32> to vector<1x737xf32>
    %37 = vector.extract_strided_slice %1 {offsets = [0, 29], sizes = [1, 737], strides = [1, 1]} : vector<1x768xf32> to vector<1x737xf32>
    %38 = vector.extract_strided_slice %1 {offsets = [0, 30], sizes = [1, 737], strides = [1, 1]} : vector<1x768xf32> to vector<1x737xf32>
    %39 = vector.extract_strided_slice %1 {offsets = [0, 31], sizes = [1, 737], strides = [1, 1]} : vector<1x768xf32> to vector<1x737xf32>
    %40 = tpu.concatenate %8, %9, %10, %11, %12, %13, %14, %15, %16, %17, %18, %19, %20, %21, %22, %23 in 0 : vector<1x737xf32>, vector<1x737xf32>, vector<1x737xf32>, vector<1x737xf32>, vector<1x737xf32>, vector<1x737xf32>, vector<1x737xf32>, vector<1x737xf32>, vector<1x737xf32>, vector<1x737xf32>, vector<1x737xf32>, vector<1x737xf32>, vector<1x737xf32>, vector<1x737xf32>, vector<1x737xf32>, vector<1x737xf32> -> vector<16x737xf32>
    %41 = tpu.concatenate %24, %25, %26, %27, %28, %29, %30, %31, %32, %33, %34, %35, %36, %37, %38, %39 in 0 : vector<1x737xf32>, vector<1x737xf32>, vector<1x737xf32>, vector<1x737xf32>, vector<1x737xf32>, vector<1x737xf32>, vector<1x737xf32>, vector<1x737xf32>, vector<1x737xf32>, vector<1x737xf32>, vector<1x737xf32>, vector<1x737xf32>, vector<1x737xf32>, vector<1x737xf32>, vector<1x737xf32>, vector<1x737xf32> -> vector<16x737xf32>
    %42 = tpu.concatenate %40, %41 in 0 : vector<16x737xf32>, vector<16x737xf32> -> vector<32x737xf32>
    %43 = arith.truncf %42 : vector<32x737xf32> to vector<32x737xbf16>
    %cst = arith.constant dense<0.000000e+00> : vector<16x737xf32>
    %44 = tpu.matmul %4, %43, %cst {dimension_numbers = #tpu.dot_dimension_numbers<[1], [0], [0], [1], [0, 0, 1, 1], [], []>} : vector<16x32xbf16>, vector<32x737xbf16>, vector<16x737xf32> -> vector<16x737xf32>
    %45 = vector.broadcast %5 : vector<16x1xf32> to vector<16x737xf32>
    %46 = arith.addf %44, %45 : vector<16x737xf32>
    %47 = vector.extract_strided_slice %3 {offsets = [0, 0], sizes = [1, 737], strides = [1, 1]} : vector<1x768xf32> to vector<1x737xf32>
    %48 = vector.extract_strided_slice %3 {offsets = [0, 1], sizes = [1, 737], strides = [1, 1]} : vector<1x768xf32> to vector<1x737xf32>
    %49 = vector.extract_strided_slice %3 {offsets = [0, 2], sizes = [1, 737], strides = [1, 1]} : vector<1x768xf32> to vector<1x737xf32>
    %50 = vector.extract_strided_slice %3 {offsets = [0, 3], sizes = [1, 737], strides = [1, 1]} : vector<1x768xf32> to vector<1x737xf32>
    %51 = vector.extract_strided_slice %3 {offsets = [0, 4], sizes = [1, 737], strides = [1, 1]} : vector<1x768xf32> to vector<1x737xf32>
    %52 = vector.extract_strided_slice %3 {offsets = [0, 5], sizes = [1, 737], strides = [1, 1]} : vector<1x768xf32> to vector<1x737xf32>
    %53 = vector.extract_strided_slice %3 {offsets = [0, 6], sizes = [1, 737], strides = [1, 1]} : vector<1x768xf32> to vector<1x737xf32>
    %54 = vector.extract_strided_slice %3 {offsets = [0, 7], sizes = [1, 737], strides = [1, 1]} : vector<1x768xf32> to vector<1x737xf32>
    %55 = vector.extract_strided_slice %3 {offsets = [0, 8], sizes = [1, 737], strides = [1, 1]} : vector<1x768xf32> to vector<1x737xf32>
    %56 = vector.extract_strided_slice %3 {offsets = [0, 9], sizes = [1, 737], strides = [1, 1]} : vector<1x768xf32> to vector<1x737xf32>
    %57 = vector.extract_strided_slice %3 {offsets = [0, 10], sizes = [1, 737], strides = [1, 1]} : vector<1x768xf32> to vector<1x737xf32>
    %58 = vector.extract_strided_slice %3 {offsets = [0, 11], sizes = [1, 737], strides = [1, 1]} : vector<1x768xf32> to vector<1x737xf32>
    %59 = vector.extract_strided_slice %3 {offsets = [0, 12], sizes = [1, 737], strides = [1, 1]} : vector<1x768xf32> to vector<1x737xf32>
    %60 = vector.extract_strided_slice %3 {offsets = [0, 13], sizes = [1, 737], strides = [1, 1]} : vector<1x768xf32> to vector<1x737xf32>
    %61 = vector.extract_strided_slice %3 {offsets = [0, 14], sizes = [1, 737], strides = [1, 1]} : vector<1x768xf32> to vector<1x737xf32>
    %62 = vector.extract_strided_slice %3 {offsets = [0, 15], sizes = [1, 737], strides = [1, 1]} : vector<1x768xf32> to vector<1x737xf32>
    %63 = vector.extract_strided_slice %3 {offsets = [0, 16], sizes = [1, 737], strides = [1, 1]} : vector<1x768xf32> to vector<1x737xf32>
    %64 = vector.extract_strided_slice %3 {offsets = [0, 17], sizes = [1, 737], strides = [1, 1]} : vector<1x768xf32> to vector<1x737xf32>
    %65 = vector.extract_strided_slice %3 {offsets = [0, 18], sizes = [1, 737], strides = [1, 1]} : vector<1x768xf32> to vector<1x737xf32>
    %66 = vector.extract_strided_slice %3 {offsets = [0, 19], sizes = [1, 737], strides = [1, 1]} : vector<1x768xf32> to vector<1x737xf32>
    %67 = vector.extract_strided_slice %3 {offsets = [0, 20], sizes = [1, 737], strides = [1, 1]} : vector<1x768xf32> to vector<1x737xf32>
    %68 = vector.extract_strided_slice %3 {offsets = [0, 21], sizes = [1, 737], strides = [1, 1]} : vector<1x768xf32> to vector<1x737xf32>
    %69 = vector.extract_strided_slice %3 {offsets = [0, 22], sizes = [1, 737], strides = [1, 1]} : vector<1x768xf32> to vector<1x737xf32>
    %70 = vector.extract_strided_slice %3 {offsets = [0, 23], sizes = [1, 737], strides = [1, 1]} : vector<1x768xf32> to vector<1x737xf32>
    %71 = vector.extract_strided_slice %3 {offsets = [0, 24], sizes = [1, 737], strides = [1, 1]} : vector<1x768xf32> to vector<1x737xf32>
    %72 = vector.extract_strided_slice %3 {offsets = [0, 25], sizes = [1, 737], strides = [1, 1]} : vector<1x768xf32> to vector<1x737xf32>
    %73 = vector.extract_strided_slice %3 {offsets = [0, 26], sizes = [1, 737], strides = [1, 1]} : vector<1x768xf32> to vector<1x737xf32>
    %74 = vector.extract_strided_slice %3 {offsets = [0, 27], sizes = [1, 737], strides = [1, 1]} : vector<1x768xf32> to vector<1x737xf32>
    %75 = vector.extract_strided_slice %3 {offsets = [0, 28], sizes = [1, 737], strides = [1, 1]} : vector<1x768xf32> to vector<1x737xf32>
    %76 = vector.extract_strided_slice %3 {offsets = [0, 29], sizes = [1, 737], strides = [1, 1]} : vector<1x768xf32> to vector<1x737xf32>
    %77 = vector.extract_strided_slice %3 {offsets = [0, 30], sizes = [1, 737], strides = [1, 1]} : vector<1x768xf32> to vector<1x737xf32>
    %78 = vector.extract_strided_slice %3 {offsets = [0, 31], sizes = [1, 737], strides = [1, 1]} : vector<1x768xf32> to vector<1x737xf32>
    %79 = tpu.concatenate %47, %48, %49, %50, %51, %52, %53, %54, %55, %56, %57, %58, %59, %60, %61, %62 in 0 : vector<1x737xf32>, vector<1x737xf32>, vector<1x737xf32>, vector<1x737xf32>, vector<1x737xf32>, vector<1x737xf32>, vector<1x737xf32>, vector<1x737xf32>, vector<1x737xf32>, vector<1x737xf32>, vector<1x737xf32>, vector<1x737xf32>, vector<1x737xf32>, vector<1x737xf32>, vector<1x737xf32>, vector<1x737xf32> -> vector<16x737xf32>
    %80 = tpu.concatenate %63, %64, %65, %66, %67, %68, %69, %70, %71, %72, %73, %74, %75, %76, %77, %78 in 0 : vector<1x737xf32>, vector<1x737xf32>, vector<1x737xf32>, vector<1x737xf32>, vector<1x737xf32>, vector<1x737xf32>, vector<1x737xf32>, vector<1x737xf32>, vector<1x737xf32>, vector<1x737xf32>, vector<1x737xf32>, vector<1x737xf32>, vector<1x737xf32>, vector<1x737xf32>, vector<1x737xf32>, vector<1x737xf32> -> vector<16x737xf32>
    %81 = tpu.concatenate %79, %80 in 0 : vector<16x737xf32>, vector<16x737xf32> -> vector<32x737xf32>
    %82 = arith.truncf %81 : vector<32x737xf32> to vector<32x737xbf16>
    %cst_12 = arith.constant dense<0.000000e+00> : vector<16x737xf32>
    %83 = tpu.matmul %4, %82, %cst_12 {dimension_numbers = #tpu.dot_dimension_numbers<[1], [0], [0], [1], [0, 0, 1, 1], [], []>} : vector<16x32xbf16>, vector<32x737xbf16>, vector<16x737xf32> -> vector<16x737xf32>
    %84 = vector.broadcast %5 : vector<16x1xf32> to vector<16x737xf32>
    %85 = arith.addf %83, %84 : vector<16x737xf32>
    %cst_13 = arith.constant dense<0.000000e+00> : vector<16xf32>
    %86 = vector.multi_reduction <add>, %46, %cst_13 [1] : vector<16x737xf32> to vector<16xf32>
    %87 = vector.shape_cast %86 : vector<16xf32> to vector<16x1xf32>
    %cst_14 = arith.constant dense<0.000000e+00> : vector<16xf32>
    %88 = vector.multi_reduction <add>, %85, %cst_14 [1] : vector<16x737xf32> to vector<16xf32>
    %89 = vector.shape_cast %88 : vector<16xf32> to vector<16x1xf32>
    %90 = arith.addf %87, %89 : vector<16x1xf32>
    %cst_15 = arith.constant 6.78426062E-4 : f32
    %91 = vector.broadcast %cst_15 : f32 to vector<16x1xf32>
    %92 = arith.mulf %90, %91 : vector<16x1xf32>
    %93 = vector.broadcast %92 : vector<16x1xf32> to vector<16x737xf32>
    %94 = arith.subf %46, %93 : vector<16x737xf32>
    %95 = vector.broadcast %92 : vector<16x1xf32> to vector<16x737xf32>
    %96 = arith.subf %85, %95 : vector<16x737xf32>
    %97 = arith.mulf %94, %94 : vector<16x737xf32>
    %cst_16 = arith.constant dense<0.000000e+00> : vector<16xf32>
    %98 = vector.multi_reduction <add>, %97, %cst_16 [1] : vector<16x737xf32> to vector<16xf32>
    %99 = vector.shape_cast %98 : vector<16xf32> to vector<16x1xf32>
    %100 = arith.mulf %96, %96 : vector<16x737xf32>
    %cst_17 = arith.constant dense<0.000000e+00> : vector<16xf32>
    %101 = vector.multi_reduction <add>, %100, %cst_17 [1] : vector<16x737xf32> to vector<16xf32>
    %102 = vector.shape_cast %101 : vector<16xf32> to vector<16x1xf32>
    %103 = arith.addf %99, %102 : vector<16x1xf32>
    %cst_18 = arith.constant 6.78426062E-4 : f32
    %104 = vector.broadcast %cst_18 : f32 to vector<16x1xf32>
    %105 = arith.mulf %103, %104 : vector<16x1xf32>
    %cst_19 = arith.constant 9.99999974E-6 : f32
    %106 = vector.broadcast %cst_19 : f32 to vector<16x1xf32>
    %107 = arith.addf %105, %106 : vector<16x1xf32>
    %108 = math.rsqrt %107 : vector<16x1xf32>
    %109 = arith.mulf %108, %6 : vector<16x1xf32>
    %110 = vector.broadcast %109 : vector<16x1xf32> to vector<16x737xf32>
    %111 = arith.mulf %94, %110 : vector<16x737xf32>
    %112 = vector.broadcast %7 : vector<16x1xf32> to vector<16x737xf32>
    %113 = arith.addf %111, %112 : vector<16x737xf32>
    %cst_20 = arith.constant 5.000000e-01 : f32
    %114 = vector.broadcast %cst_20 : f32 to vector<16x737xf32>
    %115 = arith.mulf %114, %113 : vector<16x737xf32>
    %116 = math.tanh %115 : vector<16x737xf32>
    %cst_21 = arith.constant 5.000000e-01 : f32
    %117 = vector.broadcast %cst_21 : f32 to vector<16x737xf32>
    %118 = arith.mulf %117, %116 : vector<16x737xf32>
    %cst_22 = arith.constant 5.000000e-01 : f32
    %119 = vector.broadcast %cst_22 : f32 to vector<16x737xf32>
    %120 = arith.addf %118, %119 : vector<16x737xf32>
    %121 = arith.mulf %113, %120 : vector<16x737xf32>
    %122 = arith.truncf %121 : vector<16x737xf32> to vector<16x737xbf16>
    %123 = vector.broadcast %109 : vector<16x1xf32> to vector<16x737xf32>
    %124 = arith.mulf %96, %123 : vector<16x737xf32>
    %125 = vector.broadcast %7 : vector<16x1xf32> to vector<16x737xf32>
    %126 = arith.addf %124, %125 : vector<16x737xf32>
    %cst_23 = arith.constant 5.000000e-01 : f32
    %127 = vector.broadcast %cst_23 : f32 to vector<16x737xf32>
    %128 = arith.mulf %127, %126 : vector<16x737xf32>
    %129 = math.tanh %128 : vector<16x737xf32>
    %cst_24 = arith.constant 5.000000e-01 : f32
    %130 = vector.broadcast %cst_24 : f32 to vector<16x737xf32>
    %131 = arith.mulf %130, %129 : vector<16x737xf32>
    %cst_25 = arith.constant 5.000000e-01 : f32
    %132 = vector.broadcast %cst_25 : f32 to vector<16x737xf32>
    %133 = arith.addf %131, %132 : vector<16x737xf32>
    %134 = arith.mulf %126, %133 : vector<16x737xf32>
    %135 = arith.truncf %134 : vector<16x737xf32> to vector<16x737xbf16>
    %c0_26 = arith.constant 0 : index
    %c0_27 = arith.constant 0 : index
    %136 = vector.load %arg5[%c0_26, %c0_27] : memref<16x512xbf16, #tpu.memory_space<vmem>>, vector<16x512xbf16>
    %c0_28 = arith.constant 0 : index
    %c0_29 = arith.constant 0 : index
    %137 = vector.load %arg6[%c0_28, %c0_29] : memref<16x1xf32, #tpu.memory_space<vmem>>, vector<16x1xf32>
    %c0_30 = arith.constant 0 : index
    %c0_31 = arith.constant 0 : index
    %138 = vector.load %arg7[%c0_30, %c0_31] : memref<16x1xf32, #tpu.memory_space<vmem>>, vector<16x1xf32>
    %c0_32 = arith.constant 0 : index
    %c0_33 = arith.constant 0 : index
    %139 = vector.load %arg8[%c0_32, %c0_33] : memref<16x1xf32, #tpu.memory_space<vmem>>, vector<16x1xf32>
    %c0_34 = arith.constant 0 : index
    %c0_35 = arith.constant 0 : index
    %140 = vector.load %arg9[%c0_34, %c0_35] : memref<704x176xbf16, #tpu.memory_space<vmem>>, vector<704x176xbf16>
    %141 = vector.extract_strided_slice %122 {offsets = [0, 0], sizes = [16, 706], strides = [1, 1]} : vector<16x737xbf16> to vector<16x706xbf16>
    %142 = vector.extract_strided_slice %122 {offsets = [0, 1], sizes = [16, 706], strides = [1, 1]} : vector<16x737xbf16> to vector<16x706xbf16>
    %143 = vector.extract_strided_slice %122 {offsets = [0, 2], sizes = [16, 706], strides = [1, 1]} : vector<16x737xbf16> to vector<16x706xbf16>
    %144 = vector.extract_strided_slice %122 {offsets = [0, 3], sizes = [16, 706], strides = [1, 1]} : vector<16x737xbf16> to vector<16x706xbf16>
    %145 = vector.extract_strided_slice %122 {offsets = [0, 4], sizes = [16, 706], strides = [1, 1]} : vector<16x737xbf16> to vector<16x706xbf16>
    %146 = vector.extract_strided_slice %122 {offsets = [0, 5], sizes = [16, 706], strides = [1, 1]} : vector<16x737xbf16> to vector<16x706xbf16>
    %147 = vector.extract_strided_slice %122 {offsets = [0, 6], sizes = [16, 706], strides = [1, 1]} : vector<16x737xbf16> to vector<16x706xbf16>
    %148 = vector.extract_strided_slice %122 {offsets = [0, 7], sizes = [16, 706], strides = [1, 1]} : vector<16x737xbf16> to vector<16x706xbf16>
    %149 = vector.extract_strided_slice %122 {offsets = [0, 8], sizes = [16, 706], strides = [1, 1]} : vector<16x737xbf16> to vector<16x706xbf16>
    %150 = vector.extract_strided_slice %122 {offsets = [0, 9], sizes = [16, 706], strides = [1, 1]} : vector<16x737xbf16> to vector<16x706xbf16>
    %151 = vector.extract_strided_slice %122 {offsets = [0, 10], sizes = [16, 706], strides = [1, 1]} : vector<16x737xbf16> to vector<16x706xbf16>
    %152 = vector.extract_strided_slice %122 {offsets = [0, 11], sizes = [16, 706], strides = [1, 1]} : vector<16x737xbf16> to vector<16x706xbf16>
    %153 = vector.extract_strided_slice %122 {offsets = [0, 12], sizes = [16, 706], strides = [1, 1]} : vector<16x737xbf16> to vector<16x706xbf16>
    %154 = vector.extract_strided_slice %122 {offsets = [0, 13], sizes = [16, 706], strides = [1, 1]} : vector<16x737xbf16> to vector<16x706xbf16>
    %155 = vector.extract_strided_slice %122 {offsets = [0, 14], sizes = [16, 706], strides = [1, 1]} : vector<16x737xbf16> to vector<16x706xbf16>
    %156 = vector.extract_strided_slice %122 {offsets = [0, 15], sizes = [16, 706], strides = [1, 1]} : vector<16x737xbf16> to vector<16x706xbf16>
    %157 = vector.extract_strided_slice %122 {offsets = [0, 16], sizes = [16, 706], strides = [1, 1]} : vector<16x737xbf16> to vector<16x706xbf16>
    %158 = vector.extract_strided_slice %122 {offsets = [0, 17], sizes = [16, 706], strides = [1, 1]} : vector<16x737xbf16> to vector<16x706xbf16>
    %159 = vector.extract_strided_slice %122 {offsets = [0, 18], sizes = [16, 706], strides = [1, 1]} : vector<16x737xbf16> to vector<16x706xbf16>
    %160 = vector.extract_strided_slice %122 {offsets = [0, 19], sizes = [16, 706], strides = [1, 1]} : vector<16x737xbf16> to vector<16x706xbf16>
    %161 = vector.extract_strided_slice %122 {offsets = [0, 20], sizes = [16, 706], strides = [1, 1]} : vector<16x737xbf16> to vector<16x706xbf16>
    %162 = vector.extract_strided_slice %122 {offsets = [0, 21], sizes = [16, 706], strides = [1, 1]} : vector<16x737xbf16> to vector<16x706xbf16>
    %163 = vector.extract_strided_slice %122 {offsets = [0, 22], sizes = [16, 706], strides = [1, 1]} : vector<16x737xbf16> to vector<16x706xbf16>
    %164 = vector.extract_strided_slice %122 {offsets = [0, 23], sizes = [16, 706], strides = [1, 1]} : vector<16x737xbf16> to vector<16x706xbf16>
    %165 = vector.extract_strided_slice %122 {offsets = [0, 24], sizes = [16, 706], strides = [1, 1]} : vector<16x737xbf16> to vector<16x706xbf16>
    %166 = vector.extract_strided_slice %122 {offsets = [0, 25], sizes = [16, 706], strides = [1, 1]} : vector<16x737xbf16> to vector<16x706xbf16>
    %167 = vector.extract_strided_slice %122 {offsets = [0, 26], sizes = [16, 706], strides = [1, 1]} : vector<16x737xbf16> to vector<16x706xbf16>
    %168 = vector.extract_strided_slice %122 {offsets = [0, 27], sizes = [16, 706], strides = [1, 1]} : vector<16x737xbf16> to vector<16x706xbf16>
    %169 = vector.extract_strided_slice %122 {offsets = [0, 28], sizes = [16, 706], strides = [1, 1]} : vector<16x737xbf16> to vector<16x706xbf16>
    %170 = vector.extract_strided_slice %122 {offsets = [0, 29], sizes = [16, 706], strides = [1, 1]} : vector<16x737xbf16> to vector<16x706xbf16>
    %171 = vector.extract_strided_slice %122 {offsets = [0, 30], sizes = [16, 706], strides = [1, 1]} : vector<16x737xbf16> to vector<16x706xbf16>
    %172 = vector.extract_strided_slice %122 {offsets = [0, 31], sizes = [16, 706], strides = [1, 1]} : vector<16x737xbf16> to vector<16x706xbf16>
    %173 = tpu.concatenate %141, %142, %143, %144, %145, %146, %147, %148, %149, %150, %151, %152, %153, %154, %155, %156 in 0 : vector<16x706xbf16>, vector<16x706xbf16>, vector<16x706xbf16>, vector<16x706xbf16>, vector<16x706xbf16>, vector<16x706xbf16>, vector<16x706xbf16>, vector<16x706xbf16>, vector<16x706xbf16>, vector<16x706xbf16>, vector<16x706xbf16>, vector<16x706xbf16>, vector<16x706xbf16>, vector<16x706xbf16>, vector<16x706xbf16>, vector<16x706xbf16> -> vector<256x706xbf16>
    %174 = tpu.concatenate %157, %158, %159, %160, %161, %162, %163, %164, %165, %166, %167, %168, %169, %170, %171, %172 in 0 : vector<16x706xbf16>, vector<16x706xbf16>, vector<16x706xbf16>, vector<16x706xbf16>, vector<16x706xbf16>, vector<16x706xbf16>, vector<16x706xbf16>, vector<16x706xbf16>, vector<16x706xbf16>, vector<16x706xbf16>, vector<16x706xbf16>, vector<16x706xbf16>, vector<16x706xbf16>, vector<16x706xbf16>, vector<16x706xbf16>, vector<16x706xbf16> -> vector<256x706xbf16>
    %175 = tpu.concatenate %173, %174 in 0 : vector<256x706xbf16>, vector<256x706xbf16> -> vector<512x706xbf16>
    %cst_36 = arith.constant dense<0.000000e+00> : vector<16x706xf32>
    %176 = tpu.matmul %136, %175, %cst_36 {dimension_numbers = #tpu.dot_dimension_numbers<[1], [0], [0], [1], [0, 0, 1, 1], [], []>} : vector<16x512xbf16>, vector<512x706xbf16>, vector<16x706xf32> -> vector<16x706xf32>
    %177 = vector.broadcast %137 : vector<16x1xf32> to vector<16x706xf32>
    %178 = arith.addf %176, %177 : vector<16x706xf32>
    %179 = vector.extract_strided_slice %178 {offsets = [0, 0], sizes = [16, 704], strides = [1, 1]} : vector<16x706xf32> to vector<16x704xf32>
    %cst_37 = arith.constant 9.99999997E-7 : f32
    %180 = vector.broadcast %cst_37 : f32 to vector<16x704xf32>
    %181 = arith.maximumf %179, %180 : vector<16x704xf32>
    %182 = arith.mulf %181, %181 : vector<16x704xf32>
    %183 = arith.mulf %182, %181 : vector<16x704xf32>
    %184 = arith.truncf %183 : vector<16x704xf32> to vector<16x704xbf16>
    %cst_38 = arith.constant dense<0.000000e+00> : vector<16x176xf32>
    %185 = tpu.matmul %184, %140, %cst_38 {dimension_numbers = #tpu.dot_dimension_numbers<[1], [0], [0], [1], [0, 0, 1, 1], [], []>} : vector<16x704xbf16>, vector<704x176xbf16>, vector<16x176xf32> -> vector<16x176xf32>
    %186 = math.log %185 : vector<16x176xf32>
    %cst_39 = arith.constant 0.333333343 : f32
    %187 = vector.broadcast %cst_39 : f32 to vector<16x176xf32>
    %188 = arith.mulf %187, %186 : vector<16x176xf32>
    %189 = math.exp %188 : vector<16x176xf32>
    %190 = vector.extract_strided_slice %135 {offsets = [0, 0], sizes = [16, 706], strides = [1, 1]} : vector<16x737xbf16> to vector<16x706xbf16>
    %191 = vector.extract_strided_slice %135 {offsets = [0, 1], sizes = [16, 706], strides = [1, 1]} : vector<16x737xbf16> to vector<16x706xbf16>
    %192 = vector.extract_strided_slice %135 {offsets = [0, 2], sizes = [16, 706], strides = [1, 1]} : vector<16x737xbf16> to vector<16x706xbf16>
    %193 = vector.extract_strided_slice %135 {offsets = [0, 3], sizes = [16, 706], strides = [1, 1]} : vector<16x737xbf16> to vector<16x706xbf16>
    %194 = vector.extract_strided_slice %135 {offsets = [0, 4], sizes = [16, 706], strides = [1, 1]} : vector<16x737xbf16> to vector<16x706xbf16>
    %195 = vector.extract_strided_slice %135 {offsets = [0, 5], sizes = [16, 706], strides = [1, 1]} : vector<16x737xbf16> to vector<16x706xbf16>
    %196 = vector.extract_strided_slice %135 {offsets = [0, 6], sizes = [16, 706], strides = [1, 1]} : vector<16x737xbf16> to vector<16x706xbf16>
    %197 = vector.extract_strided_slice %135 {offsets = [0, 7], sizes = [16, 706], strides = [1, 1]} : vector<16x737xbf16> to vector<16x706xbf16>
    %198 = vector.extract_strided_slice %135 {offsets = [0, 8], sizes = [16, 706], strides = [1, 1]} : vector<16x737xbf16> to vector<16x706xbf16>
    %199 = vector.extract_strided_slice %135 {offsets = [0, 9], sizes = [16, 706], strides = [1, 1]} : vector<16x737xbf16> to vector<16x706xbf16>
    %200 = vector.extract_strided_slice %135 {offsets = [0, 10], sizes = [16, 706], strides = [1, 1]} : vector<16x737xbf16> to vector<16x706xbf16>
    %201 = vector.extract_strided_slice %135 {offsets = [0, 11], sizes = [16, 706], strides = [1, 1]} : vector<16x737xbf16> to vector<16x706xbf16>
    %202 = vector.extract_strided_slice %135 {offsets = [0, 12], sizes = [16, 706], strides = [1, 1]} : vector<16x737xbf16> to vector<16x706xbf16>
    %203 = vector.extract_strided_slice %135 {offsets = [0, 13], sizes = [16, 706], strides = [1, 1]} : vector<16x737xbf16> to vector<16x706xbf16>
    %204 = vector.extract_strided_slice %135 {offsets = [0, 14], sizes = [16, 706], strides = [1, 1]} : vector<16x737xbf16> to vector<16x706xbf16>
    %205 = vector.extract_strided_slice %135 {offsets = [0, 15], sizes = [16, 706], strides = [1, 1]} : vector<16x737xbf16> to vector<16x706xbf16>
    %206 = vector.extract_strided_slice %135 {offsets = [0, 16], sizes = [16, 706], strides = [1, 1]} : vector<16x737xbf16> to vector<16x706xbf16>
    %207 = vector.extract_strided_slice %135 {offsets = [0, 17], sizes = [16, 706], strides = [1, 1]} : vector<16x737xbf16> to vector<16x706xbf16>
    %208 = vector.extract_strided_slice %135 {offsets = [0, 18], sizes = [16, 706], strides = [1, 1]} : vector<16x737xbf16> to vector<16x706xbf16>
    %209 = vector.extract_strided_slice %135 {offsets = [0, 19], sizes = [16, 706], strides = [1, 1]} : vector<16x737xbf16> to vector<16x706xbf16>
    %210 = vector.extract_strided_slice %135 {offsets = [0, 20], sizes = [16, 706], strides = [1, 1]} : vector<16x737xbf16> to vector<16x706xbf16>
    %211 = vector.extract_strided_slice %135 {offsets = [0, 21], sizes = [16, 706], strides = [1, 1]} : vector<16x737xbf16> to vector<16x706xbf16>
    %212 = vector.extract_strided_slice %135 {offsets = [0, 22], sizes = [16, 706], strides = [1, 1]} : vector<16x737xbf16> to vector<16x706xbf16>
    %213 = vector.extract_strided_slice %135 {offsets = [0, 23], sizes = [16, 706], strides = [1, 1]} : vector<16x737xbf16> to vector<16x706xbf16>
    %214 = vector.extract_strided_slice %135 {offsets = [0, 24], sizes = [16, 706], strides = [1, 1]} : vector<16x737xbf16> to vector<16x706xbf16>
    %215 = vector.extract_strided_slice %135 {offsets = [0, 25], sizes = [16, 706], strides = [1, 1]} : vector<16x737xbf16> to vector<16x706xbf16>
    %216 = vector.extract_strided_slice %135 {offsets = [0, 26], sizes = [16, 706], strides = [1, 1]} : vector<16x737xbf16> to vector<16x706xbf16>
    %217 = vector.extract_strided_slice %135 {offsets = [0, 27], sizes = [16, 706], strides = [1, 1]} : vector<16x737xbf16> to vector<16x706xbf16>
    %218 = vector.extract_strided_slice %135 {offsets = [0, 28], sizes = [16, 706], strides = [1, 1]} : vector<16x737xbf16> to vector<16x706xbf16>
    %219 = vector.extract_strided_slice %135 {offsets = [0, 29], sizes = [16, 706], strides = [1, 1]} : vector<16x737xbf16> to vector<16x706xbf16>
    %220 = vector.extract_strided_slice %135 {offsets = [0, 30], sizes = [16, 706], strides = [1, 1]} : vector<16x737xbf16> to vector<16x706xbf16>
    %221 = vector.extract_strided_slice %135 {offsets = [0, 31], sizes = [16, 706], strides = [1, 1]} : vector<16x737xbf16> to vector<16x706xbf16>
    %222 = tpu.concatenate %190, %191, %192, %193, %194, %195, %196, %197, %198, %199, %200, %201, %202, %203, %204, %205 in 0 : vector<16x706xbf16>, vector<16x706xbf16>, vector<16x706xbf16>, vector<16x706xbf16>, vector<16x706xbf16>, vector<16x706xbf16>, vector<16x706xbf16>, vector<16x706xbf16>, vector<16x706xbf16>, vector<16x706xbf16>, vector<16x706xbf16>, vector<16x706xbf16>, vector<16x706xbf16>, vector<16x706xbf16>, vector<16x706xbf16>, vector<16x706xbf16> -> vector<256x706xbf16>
    %223 = tpu.concatenate %206, %207, %208, %209, %210, %211, %212, %213, %214, %215, %216, %217, %218, %219, %220, %221 in 0 : vector<16x706xbf16>, vector<16x706xbf16>, vector<16x706xbf16>, vector<16x706xbf16>, vector<16x706xbf16>, vector<16x706xbf16>, vector<16x706xbf16>, vector<16x706xbf16>, vector<16x706xbf16>, vector<16x706xbf16>, vector<16x706xbf16>, vector<16x706xbf16>, vector<16x706xbf16>, vector<16x706xbf16>, vector<16x706xbf16>, vector<16x706xbf16> -> vector<256x706xbf16>
    %224 = tpu.concatenate %222, %223 in 0 : vector<256x706xbf16>, vector<256x706xbf16> -> vector<512x706xbf16>
    %cst_40 = arith.constant dense<0.000000e+00> : vector<16x706xf32>
    %225 = tpu.matmul %136, %224, %cst_40 {dimension_numbers = #tpu.dot_dimension_numbers<[1], [0], [0], [1], [0, 0, 1, 1], [], []>} : vector<16x512xbf16>, vector<512x706xbf16>, vector<16x706xf32> -> vector<16x706xf32>
    %226 = vector.broadcast %137 : vector<16x1xf32> to vector<16x706xf32>
    %227 = arith.addf %225, %226 : vector<16x706xf32>
    %228 = vector.extract_strided_slice %227 {offsets = [0, 0], sizes = [16, 704], strides = [1, 1]} : vector<16x706xf32> to vector<16x704xf32>
    %cst_41 = arith.constant 9.99999997E-7 : f32
    %229 = vector.broadcast %cst_41 : f32 to vector<16x704xf32>
    %230 = arith.maximumf %228, %229 : vector<16x704xf32>
    %231 = arith.mulf %230, %230 : vector<16x704xf32>
    %232 = arith.mulf %231, %230 : vector<16x704xf32>
    %233 = arith.truncf %232 : vector<16x704xf32> to vector<16x704xbf16>
    %cst_42 = arith.constant dense<0.000000e+00> : vector<16x176xf32>
    %234 = tpu.matmul %233, %140, %cst_42 {dimension_numbers = #tpu.dot_dimension_numbers<[1], [0], [0], [1], [0, 0, 1, 1], [], []>} : vector<16x704xbf16>, vector<704x176xbf16>, vector<16x176xf32> -> vector<16x176xf32>
    %235 = math.log %234 : vector<16x176xf32>
    %cst_43 = arith.constant 0.333333343 : f32
    %236 = vector.broadcast %cst_43 : f32 to vector<16x176xf32>
    %237 = arith.mulf %236, %235 : vector<16x176xf32>
    %238 = math.exp %237 : vector<16x176xf32>
    %cst_44 = arith.constant dense<0.000000e+00> : vector<16xf32>
    %239 = vector.multi_reduction <add>, %189, %cst_44 [1] : vector<16x176xf32> to vector<16xf32>
    %240 = vector.shape_cast %239 : vector<16xf32> to vector<16x1xf32>
    %cst_45 = arith.constant dense<0.000000e+00> : vector<16xf32>
    %241 = vector.multi_reduction <add>, %238, %cst_45 [1] : vector<16x176xf32> to vector<16xf32>
    %242 = vector.shape_cast %241 : vector<16xf32> to vector<16x1xf32>
    %243 = arith.addf %240, %242 : vector<16x1xf32>
    %cst_46 = arith.constant 0.00284090918 : f32
    %244 = vector.broadcast %cst_46 : f32 to vector<16x1xf32>
    %245 = arith.mulf %243, %244 : vector<16x1xf32>
    %246 = vector.broadcast %245 : vector<16x1xf32> to vector<16x176xf32>
    %247 = arith.subf %189, %246 : vector<16x176xf32>
    %248 = vector.broadcast %245 : vector<16x1xf32> to vector<16x176xf32>
    %249 = arith.subf %238, %248 : vector<16x176xf32>
    %250 = arith.mulf %247, %247 : vector<16x176xf32>
    %cst_47 = arith.constant dense<0.000000e+00> : vector<16xf32>
    %251 = vector.multi_reduction <add>, %250, %cst_47 [1] : vector<16x176xf32> to vector<16xf32>
    %252 = vector.shape_cast %251 : vector<16xf32> to vector<16x1xf32>
    %253 = arith.mulf %249, %249 : vector<16x176xf32>
    %cst_48 = arith.constant dense<0.000000e+00> : vector<16xf32>
    %254 = vector.multi_reduction <add>, %253, %cst_48 [1] : vector<16x176xf32> to vector<16xf32>
    %255 = vector.shape_cast %254 : vector<16xf32> to vector<16x1xf32>
    %256 = arith.addf %252, %255 : vector<16x1xf32>
    %cst_49 = arith.constant 0.00284090918 : f32
    %257 = vector.broadcast %cst_49 : f32 to vector<16x1xf32>
    %258 = arith.mulf %256, %257 : vector<16x1xf32>
    %cst_50 = arith.constant 9.99999974E-6 : f32
    %259 = vector.broadcast %cst_50 : f32 to vector<16x1xf32>
    %260 = arith.addf %258, %259 : vector<16x1xf32>
    %261 = math.rsqrt %260 : vector<16x1xf32>
    %262 = arith.mulf %261, %138 : vector<16x1xf32>
    %263 = vector.broadcast %262 : vector<16x1xf32> to vector<16x176xf32>
    %264 = arith.mulf %247, %263 : vector<16x176xf32>
    %265 = vector.broadcast %139 : vector<16x1xf32> to vector<16x176xf32>
    %266 = arith.addf %264, %265 : vector<16x176xf32>
    %cst_51 = arith.constant 5.000000e-01 : f32
    %267 = vector.broadcast %cst_51 : f32 to vector<16x176xf32>
    %268 = arith.mulf %267, %266 : vector<16x176xf32>
    %269 = math.tanh %268 : vector<16x176xf32>
    %cst_52 = arith.constant 5.000000e-01 : f32
    %270 = vector.broadcast %cst_52 : f32 to vector<16x176xf32>
    %271 = arith.mulf %270, %269 : vector<16x176xf32>
    %cst_53 = arith.constant 5.000000e-01 : f32
    %272 = vector.broadcast %cst_53 : f32 to vector<16x176xf32>
    %273 = arith.addf %271, %272 : vector<16x176xf32>
    %274 = arith.mulf %266, %273 : vector<16x176xf32>
    %275 = arith.truncf %274 : vector<16x176xf32> to vector<16x176xbf16>
    %276 = vector.broadcast %262 : vector<16x1xf32> to vector<16x176xf32>
    %277 = arith.mulf %249, %276 : vector<16x176xf32>
    %278 = vector.broadcast %139 : vector<16x1xf32> to vector<16x176xf32>
    %279 = arith.addf %277, %278 : vector<16x176xf32>
    %cst_54 = arith.constant 5.000000e-01 : f32
    %280 = vector.broadcast %cst_54 : f32 to vector<16x176xf32>
    %281 = arith.mulf %280, %279 : vector<16x176xf32>
    %282 = math.tanh %281 : vector<16x176xf32>
    %cst_55 = arith.constant 5.000000e-01 : f32
    %283 = vector.broadcast %cst_55 : f32 to vector<16x176xf32>
    %284 = arith.mulf %283, %282 : vector<16x176xf32>
    %cst_56 = arith.constant 5.000000e-01 : f32
    %285 = vector.broadcast %cst_56 : f32 to vector<16x176xf32>
    %286 = arith.addf %284, %285 : vector<16x176xf32>
    %287 = arith.mulf %279, %286 : vector<16x176xf32>
    %288 = arith.truncf %287 : vector<16x176xf32> to vector<16x176xbf16>
    %c0_57 = arith.constant 0 : index
    %c0_58 = arith.constant 0 : index
    %289 = vector.load %arg10[%c0_57, %c0_58] : memref<32x512xbf16, #tpu.memory_space<vmem>>, vector<32x512xbf16>
    %c0_59 = arith.constant 0 : index
    %c0_60 = arith.constant 0 : index
    %290 = vector.load %arg11[%c0_59, %c0_60] : memref<32x1xf32, #tpu.memory_space<vmem>>, vector<32x1xf32>
    %c0_61 = arith.constant 0 : index
    %c0_62 = arith.constant 0 : index
    %291 = vector.load %arg12[%c0_61, %c0_62] : memref<32x1xf32, #tpu.memory_space<vmem>>, vector<32x1xf32>
    %c0_63 = arith.constant 0 : index
    %c0_64 = arith.constant 0 : index
    %292 = vector.load %arg13[%c0_63, %c0_64] : memref<32x1xf32, #tpu.memory_space<vmem>>, vector<32x1xf32>
    %cst_65 = arith.constant 0.000000e+00 : bf16
    %293 = vector.broadcast %cst_65 : bf16 to vector<16x1xbf16>
    %294 = vector.extract_strided_slice %275 {offsets = [0, 0], sizes = [16, 146], strides = [1, 1]} : vector<16x176xbf16> to vector<16x146xbf16>
    %295 = tpu.concatenate %293, %294 in 1 : vector<16x1xbf16>, vector<16x146xbf16> -> vector<16x147xbf16>
    %296 = vector.extract_strided_slice %275 {offsets = [0, 0], sizes = [16, 147], strides = [1, 1]} : vector<16x176xbf16> to vector<16x147xbf16>
    %297 = vector.extract_strided_slice %275 {offsets = [0, 1], sizes = [16, 147], strides = [1, 1]} : vector<16x176xbf16> to vector<16x147xbf16>
    %298 = vector.extract_strided_slice %275 {offsets = [0, 2], sizes = [16, 147], strides = [1, 1]} : vector<16x176xbf16> to vector<16x147xbf16>
    %299 = vector.extract_strided_slice %275 {offsets = [0, 3], sizes = [16, 147], strides = [1, 1]} : vector<16x176xbf16> to vector<16x147xbf16>
    %300 = vector.extract_strided_slice %275 {offsets = [0, 4], sizes = [16, 147], strides = [1, 1]} : vector<16x176xbf16> to vector<16x147xbf16>
    %301 = vector.extract_strided_slice %275 {offsets = [0, 5], sizes = [16, 147], strides = [1, 1]} : vector<16x176xbf16> to vector<16x147xbf16>
    %302 = vector.extract_strided_slice %275 {offsets = [0, 6], sizes = [16, 147], strides = [1, 1]} : vector<16x176xbf16> to vector<16x147xbf16>
    %303 = vector.extract_strided_slice %275 {offsets = [0, 7], sizes = [16, 147], strides = [1, 1]} : vector<16x176xbf16> to vector<16x147xbf16>
    %304 = vector.extract_strided_slice %275 {offsets = [0, 8], sizes = [16, 147], strides = [1, 1]} : vector<16x176xbf16> to vector<16x147xbf16>
    %305 = vector.extract_strided_slice %275 {offsets = [0, 9], sizes = [16, 147], strides = [1, 1]} : vector<16x176xbf16> to vector<16x147xbf16>
    %306 = vector.extract_strided_slice %275 {offsets = [0, 10], sizes = [16, 147], strides = [1, 1]} : vector<16x176xbf16> to vector<16x147xbf16>
    %307 = vector.extract_strided_slice %275 {offsets = [0, 11], sizes = [16, 147], strides = [1, 1]} : vector<16x176xbf16> to vector<16x147xbf16>
    %308 = vector.extract_strided_slice %275 {offsets = [0, 12], sizes = [16, 147], strides = [1, 1]} : vector<16x176xbf16> to vector<16x147xbf16>
    %309 = vector.extract_strided_slice %275 {offsets = [0, 13], sizes = [16, 147], strides = [1, 1]} : vector<16x176xbf16> to vector<16x147xbf16>
    %310 = vector.extract_strided_slice %275 {offsets = [0, 14], sizes = [16, 147], strides = [1, 1]} : vector<16x176xbf16> to vector<16x147xbf16>
    %311 = vector.extract_strided_slice %275 {offsets = [0, 15], sizes = [16, 147], strides = [1, 1]} : vector<16x176xbf16> to vector<16x147xbf16>
    %312 = vector.extract_strided_slice %275 {offsets = [0, 16], sizes = [16, 147], strides = [1, 1]} : vector<16x176xbf16> to vector<16x147xbf16>
    %313 = vector.extract_strided_slice %275 {offsets = [0, 17], sizes = [16, 147], strides = [1, 1]} : vector<16x176xbf16> to vector<16x147xbf16>
    %314 = vector.extract_strided_slice %275 {offsets = [0, 18], sizes = [16, 147], strides = [1, 1]} : vector<16x176xbf16> to vector<16x147xbf16>
    %315 = vector.extract_strided_slice %275 {offsets = [0, 19], sizes = [16, 147], strides = [1, 1]} : vector<16x176xbf16> to vector<16x147xbf16>
    %316 = vector.extract_strided_slice %275 {offsets = [0, 20], sizes = [16, 147], strides = [1, 1]} : vector<16x176xbf16> to vector<16x147xbf16>
    %317 = vector.extract_strided_slice %275 {offsets = [0, 21], sizes = [16, 147], strides = [1, 1]} : vector<16x176xbf16> to vector<16x147xbf16>
    %318 = vector.extract_strided_slice %275 {offsets = [0, 22], sizes = [16, 147], strides = [1, 1]} : vector<16x176xbf16> to vector<16x147xbf16>
    %319 = vector.extract_strided_slice %275 {offsets = [0, 23], sizes = [16, 147], strides = [1, 1]} : vector<16x176xbf16> to vector<16x147xbf16>
    %320 = vector.extract_strided_slice %275 {offsets = [0, 24], sizes = [16, 147], strides = [1, 1]} : vector<16x176xbf16> to vector<16x147xbf16>
    %321 = vector.extract_strided_slice %275 {offsets = [0, 25], sizes = [16, 147], strides = [1, 1]} : vector<16x176xbf16> to vector<16x147xbf16>
    %322 = vector.extract_strided_slice %275 {offsets = [0, 26], sizes = [16, 147], strides = [1, 1]} : vector<16x176xbf16> to vector<16x147xbf16>
    %323 = vector.extract_strided_slice %275 {offsets = [0, 27], sizes = [16, 147], strides = [1, 1]} : vector<16x176xbf16> to vector<16x147xbf16>
    %324 = vector.extract_strided_slice %275 {offsets = [0, 28], sizes = [16, 147], strides = [1, 1]} : vector<16x176xbf16> to vector<16x147xbf16>
    %325 = vector.extract_strided_slice %275 {offsets = [0, 29], sizes = [16, 147], strides = [1, 1]} : vector<16x176xbf16> to vector<16x147xbf16>
    %cst_66 = arith.constant 0.000000e+00 : bf16
    %326 = vector.broadcast %cst_66 : bf16 to vector<16x1xbf16>
    %327 = vector.extract_strided_slice %275 {offsets = [0, 30], sizes = [16, 146], strides = [1, 1]} : vector<16x176xbf16> to vector<16x146xbf16>
    %328 = tpu.concatenate %327, %326 in 1 : vector<16x146xbf16>, vector<16x1xbf16> -> vector<16x147xbf16>
    %329 = tpu.concatenate %295, %296, %297, %298, %299, %300, %301, %302, %303, %304, %305, %306, %307, %308, %309, %310 in 0 : vector<16x147xbf16>, vector<16x147xbf16>, vector<16x147xbf16>, vector<16x147xbf16>, vector<16x147xbf16>, vector<16x147xbf16>, vector<16x147xbf16>, vector<16x147xbf16>, vector<16x147xbf16>, vector<16x147xbf16>, vector<16x147xbf16>, vector<16x147xbf16>, vector<16x147xbf16>, vector<16x147xbf16>, vector<16x147xbf16>, vector<16x147xbf16> -> vector<256x147xbf16>
    %330 = tpu.concatenate %311, %312, %313, %314, %315, %316, %317, %318, %319, %320, %321, %322, %323, %324, %325, %328 in 0 : vector<16x147xbf16>, vector<16x147xbf16>, vector<16x147xbf16>, vector<16x147xbf16>, vector<16x147xbf16>, vector<16x147xbf16>, vector<16x147xbf16>, vector<16x147xbf16>, vector<16x147xbf16>, vector<16x147xbf16>, vector<16x147xbf16>, vector<16x147xbf16>, vector<16x147xbf16>, vector<16x147xbf16>, vector<16x147xbf16>, vector<16x147xbf16> -> vector<256x147xbf16>
    %331 = tpu.concatenate %329, %330 in 0 : vector<256x147xbf16>, vector<256x147xbf16> -> vector<512x147xbf16>
    %cst_67 = arith.constant dense<0.000000e+00> : vector<32x147xf32>
    %332 = tpu.matmul %289, %331, %cst_67 {dimension_numbers = #tpu.dot_dimension_numbers<[1], [0], [0], [1], [0, 0, 1, 1], [], []>} : vector<32x512xbf16>, vector<512x147xbf16>, vector<32x147xf32> -> vector<32x147xf32>
    %333 = vector.broadcast %290 : vector<32x1xf32> to vector<32x147xf32>
    %334 = arith.addf %332, %333 : vector<32x147xf32>
    %cst_68 = arith.constant 0.000000e+00 : bf16
    %335 = vector.broadcast %cst_68 : bf16 to vector<16x1xbf16>
    %336 = vector.extract_strided_slice %288 {offsets = [0, 0], sizes = [16, 146], strides = [1, 1]} : vector<16x176xbf16> to vector<16x146xbf16>
    %337 = tpu.concatenate %335, %336 in 1 : vector<16x1xbf16>, vector<16x146xbf16> -> vector<16x147xbf16>
    %338 = vector.extract_strided_slice %288 {offsets = [0, 0], sizes = [16, 147], strides = [1, 1]} : vector<16x176xbf16> to vector<16x147xbf16>
    %339 = vector.extract_strided_slice %288 {offsets = [0, 1], sizes = [16, 147], strides = [1, 1]} : vector<16x176xbf16> to vector<16x147xbf16>
    %340 = vector.extract_strided_slice %288 {offsets = [0, 2], sizes = [16, 147], strides = [1, 1]} : vector<16x176xbf16> to vector<16x147xbf16>
    %341 = vector.extract_strided_slice %288 {offsets = [0, 3], sizes = [16, 147], strides = [1, 1]} : vector<16x176xbf16> to vector<16x147xbf16>
    %342 = vector.extract_strided_slice %288 {offsets = [0, 4], sizes = [16, 147], strides = [1, 1]} : vector<16x176xbf16> to vector<16x147xbf16>
    %343 = vector.extract_strided_slice %288 {offsets = [0, 5], sizes = [16, 147], strides = [1, 1]} : vector<16x176xbf16> to vector<16x147xbf16>
    %344 = vector.extract_strided_slice %288 {offsets = [0, 6], sizes = [16, 147], strides = [1, 1]} : vector<16x176xbf16> to vector<16x147xbf16>
    %345 = vector.extract_strided_slice %288 {offsets = [0, 7], sizes = [16, 147], strides = [1, 1]} : vector<16x176xbf16> to vector<16x147xbf16>
    %346 = vector.extract_strided_slice %288 {offsets = [0, 8], sizes = [16, 147], strides = [1, 1]} : vector<16x176xbf16> to vector<16x147xbf16>
    %347 = vector.extract_strided_slice %288 {offsets = [0, 9], sizes = [16, 147], strides = [1, 1]} : vector<16x176xbf16> to vector<16x147xbf16>
    %348 = vector.extract_strided_slice %288 {offsets = [0, 10], sizes = [16, 147], strides = [1, 1]} : vector<16x176xbf16> to vector<16x147xbf16>
    %349 = vector.extract_strided_slice %288 {offsets = [0, 11], sizes = [16, 147], strides = [1, 1]} : vector<16x176xbf16> to vector<16x147xbf16>
    %350 = vector.extract_strided_slice %288 {offsets = [0, 12], sizes = [16, 147], strides = [1, 1]} : vector<16x176xbf16> to vector<16x147xbf16>
    %351 = vector.extract_strided_slice %288 {offsets = [0, 13], sizes = [16, 147], strides = [1, 1]} : vector<16x176xbf16> to vector<16x147xbf16>
    %352 = vector.extract_strided_slice %288 {offsets = [0, 14], sizes = [16, 147], strides = [1, 1]} : vector<16x176xbf16> to vector<16x147xbf16>
    %353 = vector.extract_strided_slice %288 {offsets = [0, 15], sizes = [16, 147], strides = [1, 1]} : vector<16x176xbf16> to vector<16x147xbf16>
    %354 = vector.extract_strided_slice %288 {offsets = [0, 16], sizes = [16, 147], strides = [1, 1]} : vector<16x176xbf16> to vector<16x147xbf16>
    %355 = vector.extract_strided_slice %288 {offsets = [0, 17], sizes = [16, 147], strides = [1, 1]} : vector<16x176xbf16> to vector<16x147xbf16>
    %356 = vector.extract_strided_slice %288 {offsets = [0, 18], sizes = [16, 147], strides = [1, 1]} : vector<16x176xbf16> to vector<16x147xbf16>
    %357 = vector.extract_strided_slice %288 {offsets = [0, 19], sizes = [16, 147], strides = [1, 1]} : vector<16x176xbf16> to vector<16x147xbf16>
    %358 = vector.extract_strided_slice %288 {offsets = [0, 20], sizes = [16, 147], strides = [1, 1]} : vector<16x176xbf16> to vector<16x147xbf16>
    %359 = vector.extract_strided_slice %288 {offsets = [0, 21], sizes = [16, 147], strides = [1, 1]} : vector<16x176xbf16> to vector<16x147xbf16>
    %360 = vector.extract_strided_slice %288 {offsets = [0, 22], sizes = [16, 147], strides = [1, 1]} : vector<16x176xbf16> to vector<16x147xbf16>
    %361 = vector.extract_strided_slice %288 {offsets = [0, 23], sizes = [16, 147], strides = [1, 1]} : vector<16x176xbf16> to vector<16x147xbf16>
    %362 = vector.extract_strided_slice %288 {offsets = [0, 24], sizes = [16, 147], strides = [1, 1]} : vector<16x176xbf16> to vector<16x147xbf16>
    %363 = vector.extract_strided_slice %288 {offsets = [0, 25], sizes = [16, 147], strides = [1, 1]} : vector<16x176xbf16> to vector<16x147xbf16>
    %364 = vector.extract_strided_slice %288 {offsets = [0, 26], sizes = [16, 147], strides = [1, 1]} : vector<16x176xbf16> to vector<16x147xbf16>
    %365 = vector.extract_strided_slice %288 {offsets = [0, 27], sizes = [16, 147], strides = [1, 1]} : vector<16x176xbf16> to vector<16x147xbf16>
    %366 = vector.extract_strided_slice %288 {offsets = [0, 28], sizes = [16, 147], strides = [1, 1]} : vector<16x176xbf16> to vector<16x147xbf16>
    %367 = vector.extract_strided_slice %288 {offsets = [0, 29], sizes = [16, 147], strides = [1, 1]} : vector<16x176xbf16> to vector<16x147xbf16>
    %cst_69 = arith.constant 0.000000e+00 : bf16
    %368 = vector.broadcast %cst_69 : bf16 to vector<16x1xbf16>
    %369 = vector.extract_strided_slice %288 {offsets = [0, 30], sizes = [16, 146], strides = [1, 1]} : vector<16x176xbf16> to vector<16x146xbf16>
    %370 = tpu.concatenate %369, %368 in 1 : vector<16x146xbf16>, vector<16x1xbf16> -> vector<16x147xbf16>
    %371 = tpu.concatenate %337, %338, %339, %340, %341, %342, %343, %344, %345, %346, %347, %348, %349, %350, %351, %352 in 0 : vector<16x147xbf16>, vector<16x147xbf16>, vector<16x147xbf16>, vector<16x147xbf16>, vector<16x147xbf16>, vector<16x147xbf16>, vector<16x147xbf16>, vector<16x147xbf16>, vector<16x147xbf16>, vector<16x147xbf16>, vector<16x147xbf16>, vector<16x147xbf16>, vector<16x147xbf16>, vector<16x147xbf16>, vector<16x147xbf16>, vector<16x147xbf16> -> vector<256x147xbf16>
    %372 = tpu.concatenate %353, %354, %355, %356, %357, %358, %359, %360, %361, %362, %363, %364, %365, %366, %367, %370 in 0 : vector<16x147xbf16>, vector<16x147xbf16>, vector<16x147xbf16>, vector<16x147xbf16>, vector<16x147xbf16>, vector<16x147xbf16>, vector<16x147xbf16>, vector<16x147xbf16>, vector<16x147xbf16>, vector<16x147xbf16>, vector<16x147xbf16>, vector<16x147xbf16>, vector<16x147xbf16>, vector<16x147xbf16>, vector<16x147xbf16>, vector<16x147xbf16> -> vector<256x147xbf16>
    %373 = tpu.concatenate %371, %372 in 0 : vector<256x147xbf16>, vector<256x147xbf16> -> vector<512x147xbf16>
    %cst_70 = arith.constant dense<0.000000e+00> : vector<32x147xf32>
    %374 = tpu.matmul %289, %373, %cst_70 {dimension_numbers = #tpu.dot_dimension_numbers<[1], [0], [0], [1], [0, 0, 1, 1], [], []>} : vector<32x512xbf16>, vector<512x147xbf16>, vector<32x147xf32> -> vector<32x147xf32>
    %375 = vector.broadcast %290 : vector<32x1xf32> to vector<32x147xf32>
    %376 = arith.addf %374, %375 : vector<32x147xf32>
    %cst_71 = arith.constant dense<0.000000e+00> : vector<32xf32>
    %377 = vector.multi_reduction <add>, %334, %cst_71 [1] : vector<32x147xf32> to vector<32xf32>
    %378 = vector.shape_cast %377 : vector<32xf32> to vector<32x1xf32>
    %cst_72 = arith.constant dense<0.000000e+00> : vector<32xf32>
    %379 = vector.multi_reduction <add>, %376, %cst_72 [1] : vector<32x147xf32> to vector<32xf32>
    %380 = vector.shape_cast %379 : vector<32xf32> to vector<32x1xf32>
    %381 = arith.addf %378, %380 : vector<32x1xf32>
    %cst_73 = arith.constant 0.00340136047 : f32
    %382 = vector.broadcast %cst_73 : f32 to vector<32x1xf32>
    %383 = arith.mulf %381, %382 : vector<32x1xf32>
    %384 = vector.broadcast %383 : vector<32x1xf32> to vector<32x147xf32>
    %385 = arith.subf %334, %384 : vector<32x147xf32>
    %386 = vector.broadcast %383 : vector<32x1xf32> to vector<32x147xf32>
    %387 = arith.subf %376, %386 : vector<32x147xf32>
    %388 = arith.mulf %385, %385 : vector<32x147xf32>
    %cst_74 = arith.constant dense<0.000000e+00> : vector<32xf32>
    %389 = vector.multi_reduction <add>, %388, %cst_74 [1] : vector<32x147xf32> to vector<32xf32>
    %390 = vector.shape_cast %389 : vector<32xf32> to vector<32x1xf32>
    %391 = arith.mulf %387, %387 : vector<32x147xf32>
    %cst_75 = arith.constant dense<0.000000e+00> : vector<32xf32>
    %392 = vector.multi_reduction <add>, %391, %cst_75 [1] : vector<32x147xf32> to vector<32xf32>
    %393 = vector.shape_cast %392 : vector<32xf32> to vector<32x1xf32>
    %394 = arith.addf %390, %393 : vector<32x1xf32>
    %cst_76 = arith.constant 0.00340136047 : f32
    %395 = vector.broadcast %cst_76 : f32 to vector<32x1xf32>
    %396 = arith.mulf %394, %395 : vector<32x1xf32>
    %cst_77 = arith.constant 9.99999974E-6 : f32
    %397 = vector.broadcast %cst_77 : f32 to vector<32x1xf32>
    %398 = arith.addf %396, %397 : vector<32x1xf32>
    %399 = math.rsqrt %398 : vector<32x1xf32>
    %400 = arith.mulf %399, %291 : vector<32x1xf32>
    %401 = vector.broadcast %400 : vector<32x1xf32> to vector<32x147xf32>
    %402 = arith.mulf %385, %401 : vector<32x147xf32>
    %403 = vector.broadcast %292 : vector<32x1xf32> to vector<32x147xf32>
    %404 = arith.addf %402, %403 : vector<32x147xf32>
    %cst_78 = arith.constant 5.000000e-01 : f32
    %405 = vector.broadcast %cst_78 : f32 to vector<32x147xf32>
    %406 = arith.mulf %405, %404 : vector<32x147xf32>
    %407 = math.tanh %406 : vector<32x147xf32>
    %cst_79 = arith.constant 5.000000e-01 : f32
    %408 = vector.broadcast %cst_79 : f32 to vector<32x147xf32>
    %409 = arith.mulf %408, %407 : vector<32x147xf32>
    %cst_80 = arith.constant 5.000000e-01 : f32
    %410 = vector.broadcast %cst_80 : f32 to vector<32x147xf32>
    %411 = arith.addf %409, %410 : vector<32x147xf32>
    %412 = arith.mulf %404, %411 : vector<32x147xf32>
    %413 = arith.truncf %412 : vector<32x147xf32> to vector<32x147xbf16>
    %414 = vector.broadcast %400 : vector<32x1xf32> to vector<32x147xf32>
    %415 = arith.mulf %387, %414 : vector<32x147xf32>
    %416 = vector.broadcast %292 : vector<32x1xf32> to vector<32x147xf32>
    %417 = arith.addf %415, %416 : vector<32x147xf32>
    %cst_81 = arith.constant 5.000000e-01 : f32
    %418 = vector.broadcast %cst_81 : f32 to vector<32x147xf32>
    %419 = arith.mulf %418, %417 : vector<32x147xf32>
    %420 = math.tanh %419 : vector<32x147xf32>
    %cst_82 = arith.constant 5.000000e-01 : f32
    %421 = vector.broadcast %cst_82 : f32 to vector<32x147xf32>
    %422 = arith.mulf %421, %420 : vector<32x147xf32>
    %cst_83 = arith.constant 5.000000e-01 : f32
    %423 = vector.broadcast %cst_83 : f32 to vector<32x147xf32>
    %424 = arith.addf %422, %423 : vector<32x147xf32>
    %425 = arith.mulf %417, %424 : vector<32x147xf32>
    %426 = arith.truncf %425 : vector<32x147xf32> to vector<32x147xbf16>
    %c0_84 = arith.constant 0 : index
    %c0_85 = arith.constant 0 : index
    %427 = vector.load %arg14[%c0_84, %c0_85] : memref<32x512xbf16, #tpu.memory_space<vmem>>, vector<32x512xbf16>
    %c0_86 = arith.constant 0 : index
    %c0_87 = arith.constant 0 : index
    %428 = vector.load %arg15[%c0_86, %c0_87] : memref<32x1xf32, #tpu.memory_space<vmem>>, vector<32x1xf32>
    %c0_88 = arith.constant 0 : index
    %c0_89 = arith.constant 0 : index
    %429 = vector.load %arg16[%c0_88, %c0_89] : memref<32x1xf32, #tpu.memory_space<vmem>>, vector<32x1xf32>
    %c0_90 = arith.constant 0 : index
    %c0_91 = arith.constant 0 : index
    %430 = vector.load %arg17[%c0_90, %c0_91] : memref<32x1xf32, #tpu.memory_space<vmem>>, vector<32x1xf32>
    %c0_92 = arith.constant 0 : index
    %c0_93 = arith.constant 0 : index
    %431 = vector.load %arg18[%c0_92, %c0_93] : memref<132x33xbf16, #tpu.memory_space<vmem>>, vector<132x33xbf16>
    %cst_94 = arith.constant 0.000000e+00 : bf16
    %432 = vector.broadcast %cst_94 : bf16 to vector<32x1xbf16>
    %433 = vector.extract_strided_slice %413 {offsets = [0, 0], sizes = [32, 133], strides = [1, 1]} : vector<32x147xbf16> to vector<32x133xbf16>
    %434 = tpu.concatenate %432, %433 in 1 : vector<32x1xbf16>, vector<32x133xbf16> -> vector<32x134xbf16>
    %435 = vector.extract_strided_slice %413 {offsets = [0, 0], sizes = [32, 134], strides = [1, 1]} : vector<32x147xbf16> to vector<32x134xbf16>
    %436 = vector.extract_strided_slice %413 {offsets = [0, 1], sizes = [32, 134], strides = [1, 1]} : vector<32x147xbf16> to vector<32x134xbf16>
    %437 = vector.extract_strided_slice %413 {offsets = [0, 2], sizes = [32, 134], strides = [1, 1]} : vector<32x147xbf16> to vector<32x134xbf16>
    %438 = vector.extract_strided_slice %413 {offsets = [0, 3], sizes = [32, 134], strides = [1, 1]} : vector<32x147xbf16> to vector<32x134xbf16>
    %439 = vector.extract_strided_slice %413 {offsets = [0, 4], sizes = [32, 134], strides = [1, 1]} : vector<32x147xbf16> to vector<32x134xbf16>
    %440 = vector.extract_strided_slice %413 {offsets = [0, 5], sizes = [32, 134], strides = [1, 1]} : vector<32x147xbf16> to vector<32x134xbf16>
    %441 = vector.extract_strided_slice %413 {offsets = [0, 6], sizes = [32, 134], strides = [1, 1]} : vector<32x147xbf16> to vector<32x134xbf16>
    %442 = vector.extract_strided_slice %413 {offsets = [0, 7], sizes = [32, 134], strides = [1, 1]} : vector<32x147xbf16> to vector<32x134xbf16>
    %443 = vector.extract_strided_slice %413 {offsets = [0, 8], sizes = [32, 134], strides = [1, 1]} : vector<32x147xbf16> to vector<32x134xbf16>
    %444 = vector.extract_strided_slice %413 {offsets = [0, 9], sizes = [32, 134], strides = [1, 1]} : vector<32x147xbf16> to vector<32x134xbf16>
    %445 = vector.extract_strided_slice %413 {offsets = [0, 10], sizes = [32, 134], strides = [1, 1]} : vector<32x147xbf16> to vector<32x134xbf16>
    %446 = vector.extract_strided_slice %413 {offsets = [0, 11], sizes = [32, 134], strides = [1, 1]} : vector<32x147xbf16> to vector<32x134xbf16>
    %447 = vector.extract_strided_slice %413 {offsets = [0, 12], sizes = [32, 134], strides = [1, 1]} : vector<32x147xbf16> to vector<32x134xbf16>
    %448 = vector.extract_strided_slice %413 {offsets = [0, 13], sizes = [32, 134], strides = [1, 1]} : vector<32x147xbf16> to vector<32x134xbf16>
    %cst_95 = arith.constant 0.000000e+00 : bf16
    %449 = vector.broadcast %cst_95 : bf16 to vector<32x1xbf16>
    %450 = vector.extract_strided_slice %413 {offsets = [0, 14], sizes = [32, 133], strides = [1, 1]} : vector<32x147xbf16> to vector<32x133xbf16>
    %451 = tpu.concatenate %450, %449 in 1 : vector<32x133xbf16>, vector<32x1xbf16> -> vector<32x134xbf16>
    %452 = tpu.concatenate %434, %435, %436, %437, %438, %439, %440, %441, %442, %443, %444, %445, %446, %447, %448, %451 in 0 : vector<32x134xbf16>, vector<32x134xbf16>, vector<32x134xbf16>, vector<32x134xbf16>, vector<32x134xbf16>, vector<32x134xbf16>, vector<32x134xbf16>, vector<32x134xbf16>, vector<32x134xbf16>, vector<32x134xbf16>, vector<32x134xbf16>, vector<32x134xbf16>, vector<32x134xbf16>, vector<32x134xbf16>, vector<32x134xbf16>, vector<32x134xbf16> -> vector<512x134xbf16>
    %cst_96 = arith.constant dense<0.000000e+00> : vector<32x134xf32>
    %453 = tpu.matmul %427, %452, %cst_96 {dimension_numbers = #tpu.dot_dimension_numbers<[1], [0], [0], [1], [0, 0, 1, 1], [], []>} : vector<32x512xbf16>, vector<512x134xbf16>, vector<32x134xf32> -> vector<32x134xf32>
    %454 = vector.broadcast %428 : vector<32x1xf32> to vector<32x134xf32>
    %455 = arith.addf %453, %454 : vector<32x134xf32>
    %456 = vector.extract_strided_slice %455 {offsets = [0, 0], sizes = [32, 132], strides = [1, 1]} : vector<32x134xf32> to vector<32x132xf32>
    %cst_97 = arith.constant 9.99999997E-7 : f32
    %457 = vector.broadcast %cst_97 : f32 to vector<32x132xf32>
    %458 = arith.maximumf %456, %457 : vector<32x132xf32>
    %459 = arith.mulf %458, %458 : vector<32x132xf32>
    %460 = arith.mulf %459, %458 : vector<32x132xf32>
    %461 = arith.truncf %460 : vector<32x132xf32> to vector<32x132xbf16>
    %cst_98 = arith.constant dense<0.000000e+00> : vector<32x33xf32>
    %462 = tpu.matmul %461, %431, %cst_98 {dimension_numbers = #tpu.dot_dimension_numbers<[1], [0], [0], [1], [0, 0, 1, 1], [], []>} : vector<32x132xbf16>, vector<132x33xbf16>, vector<32x33xf32> -> vector<32x33xf32>
    %463 = math.log %462 : vector<32x33xf32>
    %cst_99 = arith.constant 0.333333343 : f32
    %464 = vector.broadcast %cst_99 : f32 to vector<32x33xf32>
    %465 = arith.mulf %464, %463 : vector<32x33xf32>
    %466 = math.exp %465 : vector<32x33xf32>
    %cst_100 = arith.constant 0.000000e+00 : bf16
    %467 = vector.broadcast %cst_100 : bf16 to vector<32x1xbf16>
    %468 = vector.extract_strided_slice %426 {offsets = [0, 0], sizes = [32, 133], strides = [1, 1]} : vector<32x147xbf16> to vector<32x133xbf16>
    %469 = tpu.concatenate %467, %468 in 1 : vector<32x1xbf16>, vector<32x133xbf16> -> vector<32x134xbf16>
    %470 = vector.extract_strided_slice %426 {offsets = [0, 0], sizes = [32, 134], strides = [1, 1]} : vector<32x147xbf16> to vector<32x134xbf16>
    %471 = vector.extract_strided_slice %426 {offsets = [0, 1], sizes = [32, 134], strides = [1, 1]} : vector<32x147xbf16> to vector<32x134xbf16>
    %472 = vector.extract_strided_slice %426 {offsets = [0, 2], sizes = [32, 134], strides = [1, 1]} : vector<32x147xbf16> to vector<32x134xbf16>
    %473 = vector.extract_strided_slice %426 {offsets = [0, 3], sizes = [32, 134], strides = [1, 1]} : vector<32x147xbf16> to vector<32x134xbf16>
    %474 = vector.extract_strided_slice %426 {offsets = [0, 4], sizes = [32, 134], strides = [1, 1]} : vector<32x147xbf16> to vector<32x134xbf16>
    %475 = vector.extract_strided_slice %426 {offsets = [0, 5], sizes = [32, 134], strides = [1, 1]} : vector<32x147xbf16> to vector<32x134xbf16>
    %476 = vector.extract_strided_slice %426 {offsets = [0, 6], sizes = [32, 134], strides = [1, 1]} : vector<32x147xbf16> to vector<32x134xbf16>
    %477 = vector.extract_strided_slice %426 {offsets = [0, 7], sizes = [32, 134], strides = [1, 1]} : vector<32x147xbf16> to vector<32x134xbf16>
    %478 = vector.extract_strided_slice %426 {offsets = [0, 8], sizes = [32, 134], strides = [1, 1]} : vector<32x147xbf16> to vector<32x134xbf16>
    %479 = vector.extract_strided_slice %426 {offsets = [0, 9], sizes = [32, 134], strides = [1, 1]} : vector<32x147xbf16> to vector<32x134xbf16>
    %480 = vector.extract_strided_slice %426 {offsets = [0, 10], sizes = [32, 134], strides = [1, 1]} : vector<32x147xbf16> to vector<32x134xbf16>
    %481 = vector.extract_strided_slice %426 {offsets = [0, 11], sizes = [32, 134], strides = [1, 1]} : vector<32x147xbf16> to vector<32x134xbf16>
    %482 = vector.extract_strided_slice %426 {offsets = [0, 12], sizes = [32, 134], strides = [1, 1]} : vector<32x147xbf16> to vector<32x134xbf16>
    %483 = vector.extract_strided_slice %426 {offsets = [0, 13], sizes = [32, 134], strides = [1, 1]} : vector<32x147xbf16> to vector<32x134xbf16>
    %cst_101 = arith.constant 0.000000e+00 : bf16
    %484 = vector.broadcast %cst_101 : bf16 to vector<32x1xbf16>
    %485 = vector.extract_strided_slice %426 {offsets = [0, 14], sizes = [32, 133], strides = [1, 1]} : vector<32x147xbf16> to vector<32x133xbf16>
    %486 = tpu.concatenate %485, %484 in 1 : vector<32x133xbf16>, vector<32x1xbf16> -> vector<32x134xbf16>
    %487 = tpu.concatenate %469, %470, %471, %472, %473, %474, %475, %476, %477, %478, %479, %480, %481, %482, %483, %486 in 0 : vector<32x134xbf16>, vector<32x134xbf16>, vector<32x134xbf16>, vector<32x134xbf16>, vector<32x134xbf16>, vector<32x134xbf16>, vector<32x134xbf16>, vector<32x134xbf16>, vector<32x134xbf16>, vector<32x134xbf16>, vector<32x134xbf16>, vector<32x134xbf16>, vector<32x134xbf16>, vector<32x134xbf16>, vector<32x134xbf16>, vector<32x134xbf16> -> vector<512x134xbf16>
    %cst_102 = arith.constant dense<0.000000e+00> : vector<32x134xf32>
    %488 = tpu.matmul %427, %487, %cst_102 {dimension_numbers = #tpu.dot_dimension_numbers<[1], [0], [0], [1], [0, 0, 1, 1], [], []>} : vector<32x512xbf16>, vector<512x134xbf16>, vector<32x134xf32> -> vector<32x134xf32>
    %489 = vector.broadcast %428 : vector<32x1xf32> to vector<32x134xf32>
    %490 = arith.addf %488, %489 : vector<32x134xf32>
    %491 = vector.extract_strided_slice %490 {offsets = [0, 0], sizes = [32, 132], strides = [1, 1]} : vector<32x134xf32> to vector<32x132xf32>
    %cst_103 = arith.constant 9.99999997E-7 : f32
    %492 = vector.broadcast %cst_103 : f32 to vector<32x132xf32>
    %493 = arith.maximumf %491, %492 : vector<32x132xf32>
    %494 = arith.mulf %493, %493 : vector<32x132xf32>
    %495 = arith.mulf %494, %493 : vector<32x132xf32>
    %496 = arith.truncf %495 : vector<32x132xf32> to vector<32x132xbf16>
    %cst_104 = arith.constant dense<0.000000e+00> : vector<32x33xf32>
    %497 = tpu.matmul %496, %431, %cst_104 {dimension_numbers = #tpu.dot_dimension_numbers<[1], [0], [0], [1], [0, 0, 1, 1], [], []>} : vector<32x132xbf16>, vector<132x33xbf16>, vector<32x33xf32> -> vector<32x33xf32>
    %498 = math.log %497 : vector<32x33xf32>
    %cst_105 = arith.constant 0.333333343 : f32
    %499 = vector.broadcast %cst_105 : f32 to vector<32x33xf32>
    %500 = arith.mulf %499, %498 : vector<32x33xf32>
    %501 = math.exp %500 : vector<32x33xf32>
    %cst_106 = arith.constant dense<0.000000e+00> : vector<32xf32>
    %502 = vector.multi_reduction <add>, %466, %cst_106 [1] : vector<32x33xf32> to vector<32xf32>
    %503 = vector.shape_cast %502 : vector<32xf32> to vector<32x1xf32>
    %cst_107 = arith.constant dense<0.000000e+00> : vector<32xf32>
    %504 = vector.multi_reduction <add>, %501, %cst_107 [1] : vector<32x33xf32> to vector<32xf32>
    %505 = vector.shape_cast %504 : vector<32xf32> to vector<32x1xf32>
    %506 = arith.addf %503, %505 : vector<32x1xf32>
    %cst_108 = arith.constant 0.0151515156 : f32
    %507 = vector.broadcast %cst_108 : f32 to vector<32x1xf32>
    %508 = arith.mulf %506, %507 : vector<32x1xf32>
    %509 = vector.broadcast %508 : vector<32x1xf32> to vector<32x33xf32>
    %510 = arith.subf %466, %509 : vector<32x33xf32>
    %511 = vector.broadcast %508 : vector<32x1xf32> to vector<32x33xf32>
    %512 = arith.subf %501, %511 : vector<32x33xf32>
    %513 = arith.mulf %510, %510 : vector<32x33xf32>
    %cst_109 = arith.constant dense<0.000000e+00> : vector<32xf32>
    %514 = vector.multi_reduction <add>, %513, %cst_109 [1] : vector<32x33xf32> to vector<32xf32>
    %515 = vector.shape_cast %514 : vector<32xf32> to vector<32x1xf32>
    %516 = arith.mulf %512, %512 : vector<32x33xf32>
    %cst_110 = arith.constant dense<0.000000e+00> : vector<32xf32>
    %517 = vector.multi_reduction <add>, %516, %cst_110 [1] : vector<32x33xf32> to vector<32xf32>
    %518 = vector.shape_cast %517 : vector<32xf32> to vector<32x1xf32>
    %519 = arith.addf %515, %518 : vector<32x1xf32>
    %cst_111 = arith.constant 0.0151515156 : f32
    %520 = vector.broadcast %cst_111 : f32 to vector<32x1xf32>
    %521 = arith.mulf %519, %520 : vector<32x1xf32>
    %cst_112 = arith.constant 9.99999974E-6 : f32
    %522 = vector.broadcast %cst_112 : f32 to vector<32x1xf32>
    %523 = arith.addf %521, %522 : vector<32x1xf32>
    %524 = math.rsqrt %523 : vector<32x1xf32>
    %525 = arith.mulf %524, %429 : vector<32x1xf32>
    %526 = vector.broadcast %525 : vector<32x1xf32> to vector<32x33xf32>
    %527 = arith.mulf %510, %526 : vector<32x33xf32>
    %528 = vector.broadcast %430 : vector<32x1xf32> to vector<32x33xf32>
    %529 = arith.addf %527, %528 : vector<32x33xf32>
    %cst_113 = arith.constant 5.000000e-01 : f32
    %530 = vector.broadcast %cst_113 : f32 to vector<32x33xf32>
    %531 = arith.mulf %530, %529 : vector<32x33xf32>
    %532 = math.tanh %531 : vector<32x33xf32>
    %cst_114 = arith.constant 5.000000e-01 : f32
    %533 = vector.broadcast %cst_114 : f32 to vector<32x33xf32>
    %534 = arith.mulf %533, %532 : vector<32x33xf32>
    %cst_115 = arith.constant 5.000000e-01 : f32
    %535 = vector.broadcast %cst_115 : f32 to vector<32x33xf32>
    %536 = arith.addf %534, %535 : vector<32x33xf32>
    %537 = arith.mulf %529, %536 : vector<32x33xf32>
    %538 = arith.truncf %537 : vector<32x33xf32> to vector<32x33xbf16>
    %539 = vector.broadcast %525 : vector<32x1xf32> to vector<32x33xf32>
    %540 = arith.mulf %512, %539 : vector<32x33xf32>
    %541 = vector.broadcast %430 : vector<32x1xf32> to vector<32x33xf32>
    %542 = arith.addf %540, %541 : vector<32x33xf32>
    %cst_116 = arith.constant 5.000000e-01 : f32
    %543 = vector.broadcast %cst_116 : f32 to vector<32x33xf32>
    %544 = arith.mulf %543, %542 : vector<32x33xf32>
    %545 = math.tanh %544 : vector<32x33xf32>
    %cst_117 = arith.constant 5.000000e-01 : f32
    %546 = vector.broadcast %cst_117 : f32 to vector<32x33xf32>
    %547 = arith.mulf %546, %545 : vector<32x33xf32>
    %cst_118 = arith.constant 5.000000e-01 : f32
    %548 = vector.broadcast %cst_118 : f32 to vector<32x33xf32>
    %549 = arith.addf %547, %548 : vector<32x33xf32>
    %550 = arith.mulf %542, %549 : vector<32x33xf32>
    %551 = arith.truncf %550 : vector<32x33xf32> to vector<32x33xbf16>
    %c0_119 = arith.constant 0 : index
    %c0_120 = arith.constant 0 : index
    %552 = vector.load %arg19[%c0_119, %c0_120] : memref<64x512xbf16, #tpu.memory_space<vmem>>, vector<64x512xbf16>
    %c0_121 = arith.constant 0 : index
    %c0_122 = arith.constant 0 : index
    %553 = vector.load %arg20[%c0_121, %c0_122] : memref<64x1xf32, #tpu.memory_space<vmem>>, vector<64x1xf32>
    %c0_123 = arith.constant 0 : index
    %c0_124 = arith.constant 0 : index
    %554 = vector.load %arg21[%c0_123, %c0_124] : memref<64x1xf32, #tpu.memory_space<vmem>>, vector<64x1xf32>
    %c0_125 = arith.constant 0 : index
    %c0_126 = arith.constant 0 : index
    %555 = vector.load %arg22[%c0_125, %c0_126] : memref<64x1xf32, #tpu.memory_space<vmem>>, vector<64x1xf32>
    %cst_127 = arith.constant 0.000000e+00 : bf16
    %556 = vector.broadcast %cst_127 : bf16 to vector<32x1xbf16>
    %557 = vector.extract_strided_slice %538 {offsets = [0, 0], sizes = [32, 19], strides = [1, 1]} : vector<32x33xbf16> to vector<32x19xbf16>
    %558 = tpu.concatenate %556, %557 in 1 : vector<32x1xbf16>, vector<32x19xbf16> -> vector<32x20xbf16>
    %559 = vector.extract_strided_slice %538 {offsets = [0, 0], sizes = [32, 20], strides = [1, 1]} : vector<32x33xbf16> to vector<32x20xbf16>
    %560 = vector.extract_strided_slice %538 {offsets = [0, 1], sizes = [32, 20], strides = [1, 1]} : vector<32x33xbf16> to vector<32x20xbf16>
    %561 = vector.extract_strided_slice %538 {offsets = [0, 2], sizes = [32, 20], strides = [1, 1]} : vector<32x33xbf16> to vector<32x20xbf16>
    %562 = vector.extract_strided_slice %538 {offsets = [0, 3], sizes = [32, 20], strides = [1, 1]} : vector<32x33xbf16> to vector<32x20xbf16>
    %563 = vector.extract_strided_slice %538 {offsets = [0, 4], sizes = [32, 20], strides = [1, 1]} : vector<32x33xbf16> to vector<32x20xbf16>
    %564 = vector.extract_strided_slice %538 {offsets = [0, 5], sizes = [32, 20], strides = [1, 1]} : vector<32x33xbf16> to vector<32x20xbf16>
    %565 = vector.extract_strided_slice %538 {offsets = [0, 6], sizes = [32, 20], strides = [1, 1]} : vector<32x33xbf16> to vector<32x20xbf16>
    %566 = vector.extract_strided_slice %538 {offsets = [0, 7], sizes = [32, 20], strides = [1, 1]} : vector<32x33xbf16> to vector<32x20xbf16>
    %567 = vector.extract_strided_slice %538 {offsets = [0, 8], sizes = [32, 20], strides = [1, 1]} : vector<32x33xbf16> to vector<32x20xbf16>
    %568 = vector.extract_strided_slice %538 {offsets = [0, 9], sizes = [32, 20], strides = [1, 1]} : vector<32x33xbf16> to vector<32x20xbf16>
    %569 = vector.extract_strided_slice %538 {offsets = [0, 10], sizes = [32, 20], strides = [1, 1]} : vector<32x33xbf16> to vector<32x20xbf16>
    %570 = vector.extract_strided_slice %538 {offsets = [0, 11], sizes = [32, 20], strides = [1, 1]} : vector<32x33xbf16> to vector<32x20xbf16>
    %571 = vector.extract_strided_slice %538 {offsets = [0, 12], sizes = [32, 20], strides = [1, 1]} : vector<32x33xbf16> to vector<32x20xbf16>
    %572 = vector.extract_strided_slice %538 {offsets = [0, 13], sizes = [32, 20], strides = [1, 1]} : vector<32x33xbf16> to vector<32x20xbf16>
    %cst_128 = arith.constant 0.000000e+00 : bf16
    %573 = vector.broadcast %cst_128 : bf16 to vector<32x1xbf16>
    %574 = vector.extract_strided_slice %538 {offsets = [0, 14], sizes = [32, 19], strides = [1, 1]} : vector<32x33xbf16> to vector<32x19xbf16>
    %575 = tpu.concatenate %574, %573 in 1 : vector<32x19xbf16>, vector<32x1xbf16> -> vector<32x20xbf16>
    %576 = tpu.concatenate %558, %559, %560, %561, %562, %563, %564, %565, %566, %567, %568, %569, %570, %571, %572, %575 in 0 : vector<32x20xbf16>, vector<32x20xbf16>, vector<32x20xbf16>, vector<32x20xbf16>, vector<32x20xbf16>, vector<32x20xbf16>, vector<32x20xbf16>, vector<32x20xbf16>, vector<32x20xbf16>, vector<32x20xbf16>, vector<32x20xbf16>, vector<32x20xbf16>, vector<32x20xbf16>, vector<32x20xbf16>, vector<32x20xbf16>, vector<32x20xbf16> -> vector<512x20xbf16>
    %cst_129 = arith.constant dense<0.000000e+00> : vector<64x20xf32>
    %577 = tpu.matmul %552, %576, %cst_129 {dimension_numbers = #tpu.dot_dimension_numbers<[1], [0], [0], [1], [0, 0, 1, 1], [], []>} : vector<64x512xbf16>, vector<512x20xbf16>, vector<64x20xf32> -> vector<64x20xf32>
    %578 = vector.broadcast %553 : vector<64x1xf32> to vector<64x20xf32>
    %579 = arith.addf %577, %578 : vector<64x20xf32>
    %cst_130 = arith.constant 0.000000e+00 : bf16
    %580 = vector.broadcast %cst_130 : bf16 to vector<32x1xbf16>
    %581 = vector.extract_strided_slice %551 {offsets = [0, 0], sizes = [32, 19], strides = [1, 1]} : vector<32x33xbf16> to vector<32x19xbf16>
    %582 = tpu.concatenate %580, %581 in 1 : vector<32x1xbf16>, vector<32x19xbf16> -> vector<32x20xbf16>
    %583 = vector.extract_strided_slice %551 {offsets = [0, 0], sizes = [32, 20], strides = [1, 1]} : vector<32x33xbf16> to vector<32x20xbf16>
    %584 = vector.extract_strided_slice %551 {offsets = [0, 1], sizes = [32, 20], strides = [1, 1]} : vector<32x33xbf16> to vector<32x20xbf16>
    %585 = vector.extract_strided_slice %551 {offsets = [0, 2], sizes = [32, 20], strides = [1, 1]} : vector<32x33xbf16> to vector<32x20xbf16>
    %586 = vector.extract_strided_slice %551 {offsets = [0, 3], sizes = [32, 20], strides = [1, 1]} : vector<32x33xbf16> to vector<32x20xbf16>
    %587 = vector.extract_strided_slice %551 {offsets = [0, 4], sizes = [32, 20], strides = [1, 1]} : vector<32x33xbf16> to vector<32x20xbf16>
    %588 = vector.extract_strided_slice %551 {offsets = [0, 5], sizes = [32, 20], strides = [1, 1]} : vector<32x33xbf16> to vector<32x20xbf16>
    %589 = vector.extract_strided_slice %551 {offsets = [0, 6], sizes = [32, 20], strides = [1, 1]} : vector<32x33xbf16> to vector<32x20xbf16>
    %590 = vector.extract_strided_slice %551 {offsets = [0, 7], sizes = [32, 20], strides = [1, 1]} : vector<32x33xbf16> to vector<32x20xbf16>
    %591 = vector.extract_strided_slice %551 {offsets = [0, 8], sizes = [32, 20], strides = [1, 1]} : vector<32x33xbf16> to vector<32x20xbf16>
    %592 = vector.extract_strided_slice %551 {offsets = [0, 9], sizes = [32, 20], strides = [1, 1]} : vector<32x33xbf16> to vector<32x20xbf16>
    %593 = vector.extract_strided_slice %551 {offsets = [0, 10], sizes = [32, 20], strides = [1, 1]} : vector<32x33xbf16> to vector<32x20xbf16>
    %594 = vector.extract_strided_slice %551 {offsets = [0, 11], sizes = [32, 20], strides = [1, 1]} : vector<32x33xbf16> to vector<32x20xbf16>
    %595 = vector.extract_strided_slice %551 {offsets = [0, 12], sizes = [32, 20], strides = [1, 1]} : vector<32x33xbf16> to vector<32x20xbf16>
    %596 = vector.extract_strided_slice %551 {offsets = [0, 13], sizes = [32, 20], strides = [1, 1]} : vector<32x33xbf16> to vector<32x20xbf16>
    %cst_131 = arith.constant 0.000000e+00 : bf16
    %597 = vector.broadcast %cst_131 : bf16 to vector<32x1xbf16>
    %598 = vector.extract_strided_slice %551 {offsets = [0, 14], sizes = [32, 19], strides = [1, 1]} : vector<32x33xbf16> to vector<32x19xbf16>
    %599 = tpu.concatenate %598, %597 in 1 : vector<32x19xbf16>, vector<32x1xbf16> -> vector<32x20xbf16>
    %600 = tpu.concatenate %582, %583, %584, %585, %586, %587, %588, %589, %590, %591, %592, %593, %594, %595, %596, %599 in 0 : vector<32x20xbf16>, vector<32x20xbf16>, vector<32x20xbf16>, vector<32x20xbf16>, vector<32x20xbf16>, vector<32x20xbf16>, vector<32x20xbf16>, vector<32x20xbf16>, vector<32x20xbf16>, vector<32x20xbf16>, vector<32x20xbf16>, vector<32x20xbf16>, vector<32x20xbf16>, vector<32x20xbf16>, vector<32x20xbf16>, vector<32x20xbf16> -> vector<512x20xbf16>
    %cst_132 = arith.constant dense<0.000000e+00> : vector<64x20xf32>
    %601 = tpu.matmul %552, %600, %cst_132 {dimension_numbers = #tpu.dot_dimension_numbers<[1], [0], [0], [1], [0, 0, 1, 1], [], []>} : vector<64x512xbf16>, vector<512x20xbf16>, vector<64x20xf32> -> vector<64x20xf32>
    %602 = vector.broadcast %553 : vector<64x1xf32> to vector<64x20xf32>
    %603 = arith.addf %601, %602 : vector<64x20xf32>
    %cst_133 = arith.constant dense<0.000000e+00> : vector<64xf32>
    %604 = vector.multi_reduction <add>, %579, %cst_133 [1] : vector<64x20xf32> to vector<64xf32>
    %605 = vector.shape_cast %604 : vector<64xf32> to vector<64x1xf32>
    %cst_134 = arith.constant dense<0.000000e+00> : vector<64xf32>
    %606 = vector.multi_reduction <add>, %603, %cst_134 [1] : vector<64x20xf32> to vector<64xf32>
    %607 = vector.shape_cast %606 : vector<64xf32> to vector<64x1xf32>
    %608 = arith.addf %605, %607 : vector<64x1xf32>
    %cst_135 = arith.constant 2.500000e-02 : f32
    %609 = vector.broadcast %cst_135 : f32 to vector<64x1xf32>
    %610 = arith.mulf %608, %609 : vector<64x1xf32>
    %611 = vector.broadcast %610 : vector<64x1xf32> to vector<64x20xf32>
    %612 = arith.subf %579, %611 : vector<64x20xf32>
    %613 = vector.broadcast %610 : vector<64x1xf32> to vector<64x20xf32>
    %614 = arith.subf %603, %613 : vector<64x20xf32>
    %615 = arith.mulf %612, %612 : vector<64x20xf32>
    %cst_136 = arith.constant dense<0.000000e+00> : vector<64xf32>
    %616 = vector.multi_reduction <add>, %615, %cst_136 [1] : vector<64x20xf32> to vector<64xf32>
    %617 = vector.shape_cast %616 : vector<64xf32> to vector<64x1xf32>
    %618 = arith.mulf %614, %614 : vector<64x20xf32>
    %cst_137 = arith.constant dense<0.000000e+00> : vector<64xf32>
    %619 = vector.multi_reduction <add>, %618, %cst_137 [1] : vector<64x20xf32> to vector<64xf32>
    %620 = vector.shape_cast %619 : vector<64xf32> to vector<64x1xf32>
    %621 = arith.addf %617, %620 : vector<64x1xf32>
    %cst_138 = arith.constant 2.500000e-02 : f32
    %622 = vector.broadcast %cst_138 : f32 to vector<64x1xf32>
    %623 = arith.mulf %621, %622 : vector<64x1xf32>
    %cst_139 = arith.constant 9.99999974E-6 : f32
    %624 = vector.broadcast %cst_139 : f32 to vector<64x1xf32>
    %625 = arith.addf %623, %624 : vector<64x1xf32>
    %626 = math.rsqrt %625 : vector<64x1xf32>
    %627 = arith.mulf %626, %554 : vector<64x1xf32>
    %628 = vector.broadcast %627 : vector<64x1xf32> to vector<64x20xf32>
    %629 = arith.mulf %612, %628 : vector<64x20xf32>
    %630 = vector.broadcast %555 : vector<64x1xf32> to vector<64x20xf32>
    %631 = arith.addf %629, %630 : vector<64x20xf32>
    %cst_140 = arith.constant 5.000000e-01 : f32
    %632 = vector.broadcast %cst_140 : f32 to vector<64x20xf32>
    %633 = arith.mulf %632, %631 : vector<64x20xf32>
    %634 = math.tanh %633 : vector<64x20xf32>
    %cst_141 = arith.constant 5.000000e-01 : f32
    %635 = vector.broadcast %cst_141 : f32 to vector<64x20xf32>
    %636 = arith.mulf %635, %634 : vector<64x20xf32>
    %cst_142 = arith.constant 5.000000e-01 : f32
    %637 = vector.broadcast %cst_142 : f32 to vector<64x20xf32>
    %638 = arith.addf %636, %637 : vector<64x20xf32>
    %639 = arith.mulf %631, %638 : vector<64x20xf32>
    %640 = arith.truncf %639 : vector<64x20xf32> to vector<64x20xbf16>
    %641 = vector.broadcast %627 : vector<64x1xf32> to vector<64x20xf32>
    %642 = arith.mulf %614, %641 : vector<64x20xf32>
    %643 = vector.broadcast %555 : vector<64x1xf32> to vector<64x20xf32>
    %644 = arith.addf %642, %643 : vector<64x20xf32>
    %cst_143 = arith.constant 5.000000e-01 : f32
    %645 = vector.broadcast %cst_143 : f32 to vector<64x20xf32>
    %646 = arith.mulf %645, %644 : vector<64x20xf32>
    %647 = math.tanh %646 : vector<64x20xf32>
    %cst_144 = arith.constant 5.000000e-01 : f32
    %648 = vector.broadcast %cst_144 : f32 to vector<64x20xf32>
    %649 = arith.mulf %648, %647 : vector<64x20xf32>
    %cst_145 = arith.constant 5.000000e-01 : f32
    %650 = vector.broadcast %cst_145 : f32 to vector<64x20xf32>
    %651 = arith.addf %649, %650 : vector<64x20xf32>
    %652 = arith.mulf %644, %651 : vector<64x20xf32>
    %653 = arith.truncf %652 : vector<64x20xf32> to vector<64x20xbf16>
    %c0_146 = arith.constant 0 : index
    %c0_147 = arith.constant 0 : index
    %654 = vector.load %arg23[%c0_146, %c0_147] : memref<64x1024xbf16, #tpu.memory_space<vmem>>, vector<64x1024xbf16>
    %c0_148 = arith.constant 0 : index
    %c0_149 = arith.constant 0 : index
    %655 = vector.load %arg24[%c0_148, %c0_149] : memref<64x1xf32, #tpu.memory_space<vmem>>, vector<64x1xf32>
    %c0_150 = arith.constant 0 : index
    %c0_151 = arith.constant 0 : index
    %656 = vector.load %arg25[%c0_150, %c0_151] : memref<64x1xf32, #tpu.memory_space<vmem>>, vector<64x1xf32>
    %c0_152 = arith.constant 0 : index
    %c0_153 = arith.constant 0 : index
    %657 = vector.load %arg26[%c0_152, %c0_153] : memref<64x1xf32, #tpu.memory_space<vmem>>, vector<64x1xf32>
    %c0_154 = arith.constant 0 : index
    %c0_155 = arith.constant 0 : index
    %658 = vector.load %arg27[%c0_154, %c0_155] : memref<6x3xbf16, #tpu.memory_space<vmem>>, vector<6x3xbf16>
    %cst_156 = arith.constant 0.000000e+00 : bf16
    %659 = vector.broadcast %cst_156 : bf16 to vector<64x1xbf16>
    %660 = vector.extract_strided_slice %640 {offsets = [0, 0], sizes = [64, 6], strides = [1, 1]} : vector<64x20xbf16> to vector<64x6xbf16>
    %661 = tpu.concatenate %659, %660 in 1 : vector<64x1xbf16>, vector<64x6xbf16> -> vector<64x7xbf16>
    %662 = vector.extract_strided_slice %640 {offsets = [0, 0], sizes = [64, 7], strides = [1, 1]} : vector<64x20xbf16> to vector<64x7xbf16>
    %663 = vector.extract_strided_slice %640 {offsets = [0, 1], sizes = [64, 7], strides = [1, 1]} : vector<64x20xbf16> to vector<64x7xbf16>
    %664 = vector.extract_strided_slice %640 {offsets = [0, 2], sizes = [64, 7], strides = [1, 1]} : vector<64x20xbf16> to vector<64x7xbf16>
    %665 = vector.extract_strided_slice %640 {offsets = [0, 3], sizes = [64, 7], strides = [1, 1]} : vector<64x20xbf16> to vector<64x7xbf16>
    %666 = vector.extract_strided_slice %640 {offsets = [0, 4], sizes = [64, 7], strides = [1, 1]} : vector<64x20xbf16> to vector<64x7xbf16>
    %667 = vector.extract_strided_slice %640 {offsets = [0, 5], sizes = [64, 7], strides = [1, 1]} : vector<64x20xbf16> to vector<64x7xbf16>
    %668 = vector.extract_strided_slice %640 {offsets = [0, 6], sizes = [64, 7], strides = [1, 1]} : vector<64x20xbf16> to vector<64x7xbf16>
    %669 = vector.extract_strided_slice %640 {offsets = [0, 7], sizes = [64, 7], strides = [1, 1]} : vector<64x20xbf16> to vector<64x7xbf16>
    %670 = vector.extract_strided_slice %640 {offsets = [0, 8], sizes = [64, 7], strides = [1, 1]} : vector<64x20xbf16> to vector<64x7xbf16>
    %671 = vector.extract_strided_slice %640 {offsets = [0, 9], sizes = [64, 7], strides = [1, 1]} : vector<64x20xbf16> to vector<64x7xbf16>
    %672 = vector.extract_strided_slice %640 {offsets = [0, 10], sizes = [64, 7], strides = [1, 1]} : vector<64x20xbf16> to vector<64x7xbf16>
    %673 = vector.extract_strided_slice %640 {offsets = [0, 11], sizes = [64, 7], strides = [1, 1]} : vector<64x20xbf16> to vector<64x7xbf16>
    %674 = vector.extract_strided_slice %640 {offsets = [0, 12], sizes = [64, 7], strides = [1, 1]} : vector<64x20xbf16> to vector<64x7xbf16>
    %675 = vector.extract_strided_slice %640 {offsets = [0, 13], sizes = [64, 7], strides = [1, 1]} : vector<64x20xbf16> to vector<64x7xbf16>
    %cst_157 = arith.constant 0.000000e+00 : bf16
    %676 = vector.broadcast %cst_157 : bf16 to vector<64x1xbf16>
    %677 = vector.extract_strided_slice %640 {offsets = [0, 14], sizes = [64, 6], strides = [1, 1]} : vector<64x20xbf16> to vector<64x6xbf16>
    %678 = tpu.concatenate %677, %676 in 1 : vector<64x6xbf16>, vector<64x1xbf16> -> vector<64x7xbf16>
    %679 = tpu.concatenate %661, %662, %663, %664, %665, %666, %667, %668, %669, %670, %671, %672, %673, %674, %675, %678 in 0 : vector<64x7xbf16>, vector<64x7xbf16>, vector<64x7xbf16>, vector<64x7xbf16>, vector<64x7xbf16>, vector<64x7xbf16>, vector<64x7xbf16>, vector<64x7xbf16>, vector<64x7xbf16>, vector<64x7xbf16>, vector<64x7xbf16>, vector<64x7xbf16>, vector<64x7xbf16>, vector<64x7xbf16>, vector<64x7xbf16>, vector<64x7xbf16> -> vector<1024x7xbf16>
    %cst_158 = arith.constant dense<0.000000e+00> : vector<64x7xf32>
    %680 = tpu.matmul %654, %679, %cst_158 {dimension_numbers = #tpu.dot_dimension_numbers<[1], [0], [0], [1], [0, 0, 1, 1], [], []>} : vector<64x1024xbf16>, vector<1024x7xbf16>, vector<64x7xf32> -> vector<64x7xf32>
    %681 = vector.broadcast %655 : vector<64x1xf32> to vector<64x7xf32>
    %682 = arith.addf %680, %681 : vector<64x7xf32>
    %683 = vector.extract_strided_slice %682 {offsets = [0, 0], sizes = [64, 6], strides = [1, 1]} : vector<64x7xf32> to vector<64x6xf32>
    %cst_159 = arith.constant 9.99999997E-7 : f32
    %684 = vector.broadcast %cst_159 : f32 to vector<64x6xf32>
    %685 = arith.maximumf %683, %684 : vector<64x6xf32>
    %686 = arith.mulf %685, %685 : vector<64x6xf32>
    %687 = arith.mulf %686, %685 : vector<64x6xf32>
    %688 = arith.truncf %687 : vector<64x6xf32> to vector<64x6xbf16>
    %cst_160 = arith.constant dense<0.000000e+00> : vector<64x3xf32>
    %689 = tpu.matmul %688, %658, %cst_160 {dimension_numbers = #tpu.dot_dimension_numbers<[1], [0], [0], [1], [0, 0, 1, 1], [], []>} : vector<64x6xbf16>, vector<6x3xbf16>, vector<64x3xf32> -> vector<64x3xf32>
    %690 = math.log %689 : vector<64x3xf32>
    %cst_161 = arith.constant 0.333333343 : f32
    %691 = vector.broadcast %cst_161 : f32 to vector<64x3xf32>
    %692 = arith.mulf %691, %690 : vector<64x3xf32>
    %693 = math.exp %692 : vector<64x3xf32>
    %cst_162 = arith.constant 0.000000e+00 : bf16
    %694 = vector.broadcast %cst_162 : bf16 to vector<64x1xbf16>
    %695 = vector.extract_strided_slice %653 {offsets = [0, 0], sizes = [64, 6], strides = [1, 1]} : vector<64x20xbf16> to vector<64x6xbf16>
    %696 = tpu.concatenate %694, %695 in 1 : vector<64x1xbf16>, vector<64x6xbf16> -> vector<64x7xbf16>
    %697 = vector.extract_strided_slice %653 {offsets = [0, 0], sizes = [64, 7], strides = [1, 1]} : vector<64x20xbf16> to vector<64x7xbf16>
    %698 = vector.extract_strided_slice %653 {offsets = [0, 1], sizes = [64, 7], strides = [1, 1]} : vector<64x20xbf16> to vector<64x7xbf16>
    %699 = vector.extract_strided_slice %653 {offsets = [0, 2], sizes = [64, 7], strides = [1, 1]} : vector<64x20xbf16> to vector<64x7xbf16>
    %700 = vector.extract_strided_slice %653 {offsets = [0, 3], sizes = [64, 7], strides = [1, 1]} : vector<64x20xbf16> to vector<64x7xbf16>
    %701 = vector.extract_strided_slice %653 {offsets = [0, 4], sizes = [64, 7], strides = [1, 1]} : vector<64x20xbf16> to vector<64x7xbf16>
    %702 = vector.extract_strided_slice %653 {offsets = [0, 5], sizes = [64, 7], strides = [1, 1]} : vector<64x20xbf16> to vector<64x7xbf16>
    %703 = vector.extract_strided_slice %653 {offsets = [0, 6], sizes = [64, 7], strides = [1, 1]} : vector<64x20xbf16> to vector<64x7xbf16>
    %704 = vector.extract_strided_slice %653 {offsets = [0, 7], sizes = [64, 7], strides = [1, 1]} : vector<64x20xbf16> to vector<64x7xbf16>
    %705 = vector.extract_strided_slice %653 {offsets = [0, 8], sizes = [64, 7], strides = [1, 1]} : vector<64x20xbf16> to vector<64x7xbf16>
    %706 = vector.extract_strided_slice %653 {offsets = [0, 9], sizes = [64, 7], strides = [1, 1]} : vector<64x20xbf16> to vector<64x7xbf16>
    %707 = vector.extract_strided_slice %653 {offsets = [0, 10], sizes = [64, 7], strides = [1, 1]} : vector<64x20xbf16> to vector<64x7xbf16>
    %708 = vector.extract_strided_slice %653 {offsets = [0, 11], sizes = [64, 7], strides = [1, 1]} : vector<64x20xbf16> to vector<64x7xbf16>
    %709 = vector.extract_strided_slice %653 {offsets = [0, 12], sizes = [64, 7], strides = [1, 1]} : vector<64x20xbf16> to vector<64x7xbf16>
    %710 = vector.extract_strided_slice %653 {offsets = [0, 13], sizes = [64, 7], strides = [1, 1]} : vector<64x20xbf16> to vector<64x7xbf16>
    %cst_163 = arith.constant 0.000000e+00 : bf16
    %711 = vector.broadcast %cst_163 : bf16 to vector<64x1xbf16>
    %712 = vector.extract_strided_slice %653 {offsets = [0, 14], sizes = [64, 6], strides = [1, 1]} : vector<64x20xbf16> to vector<64x6xbf16>
    %713 = tpu.concatenate %712, %711 in 1 : vector<64x6xbf16>, vector<64x1xbf16> -> vector<64x7xbf16>
    %714 = tpu.concatenate %696, %697, %698, %699, %700, %701, %702, %703, %704, %705, %706, %707, %708, %709, %710, %713 in 0 : vector<64x7xbf16>, vector<64x7xbf16>, vector<64x7xbf16>, vector<64x7xbf16>, vector<64x7xbf16>, vector<64x7xbf16>, vector<64x7xbf16>, vector<64x7xbf16>, vector<64x7xbf16>, vector<64x7xbf16>, vector<64x7xbf16>, vector<64x7xbf16>, vector<64x7xbf16>, vector<64x7xbf16>, vector<64x7xbf16>, vector<64x7xbf16> -> vector<1024x7xbf16>
    %cst_164 = arith.constant dense<0.000000e+00> : vector<64x7xf32>
    %715 = tpu.matmul %654, %714, %cst_164 {dimension_numbers = #tpu.dot_dimension_numbers<[1], [0], [0], [1], [0, 0, 1, 1], [], []>} : vector<64x1024xbf16>, vector<1024x7xbf16>, vector<64x7xf32> -> vector<64x7xf32>
    %716 = vector.broadcast %655 : vector<64x1xf32> to vector<64x7xf32>
    %717 = arith.addf %715, %716 : vector<64x7xf32>
    %718 = vector.extract_strided_slice %717 {offsets = [0, 0], sizes = [64, 6], strides = [1, 1]} : vector<64x7xf32> to vector<64x6xf32>
    %cst_165 = arith.constant 9.99999997E-7 : f32
    %719 = vector.broadcast %cst_165 : f32 to vector<64x6xf32>
    %720 = arith.maximumf %718, %719 : vector<64x6xf32>
    %721 = arith.mulf %720, %720 : vector<64x6xf32>
    %722 = arith.mulf %721, %720 : vector<64x6xf32>
    %723 = arith.truncf %722 : vector<64x6xf32> to vector<64x6xbf16>
    %cst_166 = arith.constant dense<0.000000e+00> : vector<64x3xf32>
    %724 = tpu.matmul %723, %658, %cst_166 {dimension_numbers = #tpu.dot_dimension_numbers<[1], [0], [0], [1], [0, 0, 1, 1], [], []>} : vector<64x6xbf16>, vector<6x3xbf16>, vector<64x3xf32> -> vector<64x3xf32>
    %725 = math.log %724 : vector<64x3xf32>
    %cst_167 = arith.constant 0.333333343 : f32
    %726 = vector.broadcast %cst_167 : f32 to vector<64x3xf32>
    %727 = arith.mulf %726, %725 : vector<64x3xf32>
    %728 = math.exp %727 : vector<64x3xf32>
    %cst_168 = arith.constant dense<0.000000e+00> : vector<64xf32>
    %729 = vector.multi_reduction <add>, %693, %cst_168 [1] : vector<64x3xf32> to vector<64xf32>
    %730 = vector.shape_cast %729 : vector<64xf32> to vector<64x1xf32>
    %cst_169 = arith.constant dense<0.000000e+00> : vector<64xf32>
    %731 = vector.multi_reduction <add>, %728, %cst_169 [1] : vector<64x3xf32> to vector<64xf32>
    %732 = vector.shape_cast %731 : vector<64xf32> to vector<64x1xf32>
    %733 = arith.addf %730, %732 : vector<64x1xf32>
    %cst_170 = arith.constant 0.166666672 : f32
    %734 = vector.broadcast %cst_170 : f32 to vector<64x1xf32>
    %735 = arith.mulf %733, %734 : vector<64x1xf32>
    %736 = vector.broadcast %735 : vector<64x1xf32> to vector<64x3xf32>
    %737 = arith.subf %693, %736 : vector<64x3xf32>
    %738 = vector.broadcast %735 : vector<64x1xf32> to vector<64x3xf32>
    %739 = arith.subf %728, %738 : vector<64x3xf32>
    %740 = arith.mulf %737, %737 : vector<64x3xf32>
    %cst_171 = arith.constant dense<0.000000e+00> : vector<64xf32>
    %741 = vector.multi_reduction <add>, %740, %cst_171 [1] : vector<64x3xf32> to vector<64xf32>
    %742 = vector.shape_cast %741 : vector<64xf32> to vector<64x1xf32>
    %743 = arith.mulf %739, %739 : vector<64x3xf32>
    %cst_172 = arith.constant dense<0.000000e+00> : vector<64xf32>
    %744 = vector.multi_reduction <add>, %743, %cst_172 [1] : vector<64x3xf32> to vector<64xf32>
    %745 = vector.shape_cast %744 : vector<64xf32> to vector<64x1xf32>
    %746 = arith.addf %742, %745 : vector<64x1xf32>
    %cst_173 = arith.constant 0.166666672 : f32
    %747 = vector.broadcast %cst_173 : f32 to vector<64x1xf32>
    %748 = arith.mulf %746, %747 : vector<64x1xf32>
    %cst_174 = arith.constant 9.99999974E-6 : f32
    %749 = vector.broadcast %cst_174 : f32 to vector<64x1xf32>
    %750 = arith.addf %748, %749 : vector<64x1xf32>
    %751 = math.rsqrt %750 : vector<64x1xf32>
    %752 = arith.mulf %751, %656 : vector<64x1xf32>
    %753 = vector.broadcast %752 : vector<64x1xf32> to vector<64x3xf32>
    %754 = arith.mulf %737, %753 : vector<64x3xf32>
    %755 = vector.broadcast %657 : vector<64x1xf32> to vector<64x3xf32>
    %756 = arith.addf %754, %755 : vector<64x3xf32>
    %cst_175 = arith.constant 5.000000e-01 : f32
    %757 = vector.broadcast %cst_175 : f32 to vector<64x3xf32>
    %758 = arith.mulf %757, %756 : vector<64x3xf32>
    %759 = math.tanh %758 : vector<64x3xf32>
    %cst_176 = arith.constant 5.000000e-01 : f32
    %760 = vector.broadcast %cst_176 : f32 to vector<64x3xf32>
    %761 = arith.mulf %760, %759 : vector<64x3xf32>
    %cst_177 = arith.constant 5.000000e-01 : f32
    %762 = vector.broadcast %cst_177 : f32 to vector<64x3xf32>
    %763 = arith.addf %761, %762 : vector<64x3xf32>
    %764 = arith.mulf %756, %763 : vector<64x3xf32>
    %c0_178 = arith.constant 0 : index
    %c0_179 = arith.constant 0 : index
    %c0_180 = arith.constant 0 : index
    %765 = vector.load %arg28[%c0_178, %c0_179, %c0_180] : memref<2x64x3xf32, #tpu.memory_space<vmem>>, vector<1x64x3xf32>
    %766 = vector.shape_cast %765 : vector<1x64x3xf32> to vector<64x3xf32>
    %767 = vector.shape_cast %764 : vector<64x3xf32> to vector<1x64x3xf32>
    tpu.vector_store %arg28[%c0_178, %c0_179, %c0_180], %767 {strides = array<i32>} : memref<2x64x3xf32, #tpu.memory_space<vmem>>, vector<1x64x3xf32>,
    %768 = vector.broadcast %752 : vector<64x1xf32> to vector<64x3xf32>
    %769 = arith.mulf %739, %768 : vector<64x3xf32>
    %770 = vector.broadcast %657 : vector<64x1xf32> to vector<64x3xf32>
    %771 = arith.addf %769, %770 : vector<64x3xf32>
    %cst_181 = arith.constant 5.000000e-01 : f32
    %772 = vector.broadcast %cst_181 : f32 to vector<64x3xf32>
    %773 = arith.mulf %772, %771 : vector<64x3xf32>
    %774 = math.tanh %773 : vector<64x3xf32>
    %cst_182 = arith.constant 5.000000e-01 : f32
    %775 = vector.broadcast %cst_182 : f32 to vector<64x3xf32>
    %776 = arith.mulf %775, %774 : vector<64x3xf32>
    %cst_183 = arith.constant 5.000000e-01 : f32
    %777 = vector.broadcast %cst_183 : f32 to vector<64x3xf32>
    %778 = arith.addf %776, %777 : vector<64x3xf32>
    %779 = arith.mulf %771, %778 : vector<64x3xf32>
    %c1_184 = arith.constant 1 : index
    %c0_185 = arith.constant 0 : index
    %c0_186 = arith.constant 0 : index
    %780 = vector.load %arg28[%c1_184, %c0_185, %c0_186] : memref<2x64x3xf32, #tpu.memory_space<vmem>>, vector<1x64x3xf32>
    %781 = vector.shape_cast %780 : vector<1x64x3xf32> to vector<64x3xf32>
    %782 = vector.shape_cast %779 : vector<64x3xf32> to vector<1x64x3xf32>
    tpu.vector_store %arg28[%c1_184, %c0_185, %c0_186], %782 {strides = array<i32>} : memref<2x64x3xf32, #tpu.memory_space<vmem>>, vector<1x64x3xf32>,
    return
  }
}

</mosaic_0001>

<llo_original>
// kernel: cnn1d_hight_forward.1
$region0: #{cnn1d_hight_forward.1}
  #allocation0 [shape = 'u32[]', space=smem, size = 0x4, offset = 0x4, fixed_abs, tag = 'smem constant byte address 0x4 - core index']
  #allocation1 [shape = 'u32[144,128]{1,0:T(1,128)}', space=vmem, size = 0x12000, scoped, tag = 'internal scratch']
  %s0 = inlined_call_operand.vmem [shape: f32[2,1,768], index: 0, kind: input, shape index: {}]
  %s1 = inlined_call_operand.vmem [shape: bf16[16,32], index: 1, kind: input, shape index: {}]
  %s2 = inlined_call_operand.vmem [shape: f32[16,1], index: 2, kind: input, shape index: {}]
  %s3 = inlined_call_operand.vmem [shape: f32[16,1], index: 3, kind: input, shape index: {}]
  %s4 = inlined_call_operand.vmem [shape: f32[16,1], index: 4, kind: input, shape index: {}]
  %s5 = inlined_call_operand.vmem [shape: bf16[16,512], index: 5, kind: input, shape index: {}]
  %s6 = inlined_call_operand.vmem [shape: f32[16,1], index: 6, kind: input, shape index: {}]
  %s7 = inlined_call_operand.vmem [shape: f32[16,1], index: 7, kind: input, shape index: {}]
  %s8 = inlined_call_operand.vmem [shape: f32[16,1], index: 8, kind: input, shape index: {}]
  %s9 = inlined_call_operand.vmem [shape: bf16[704,176], index: 9, kind: input, shape index: {}]
  %s10 = inlined_call_operand.vmem [shape: bf16[32,512], index: 10, kind: input, shape index: {}]
  %s11 = inlined_call_operand.vmem [shape: f32[32,1], index: 11, kind: input, shape index: {}]
  %s12 = inlined_call_operand.vmem [shape: f32[32,1], index: 12, kind: input, shape index: {}]
  %s13 = inlined_call_operand.vmem [shape: f32[32,1], index: 13, kind: input, shape index: {}]
  %s14 = inlined_call_operand.vmem [shape: bf16[32,512], index: 14, kind: input, shape index: {}]
  %s15 = inlined_call_operand.vmem [shape: f32[32,1], index: 15, kind: input, shape index: {}]
  %s16 = inlined_call_operand.vmem [shape: f32[32,1], index: 16, kind: input, shape index: {}]
  %s17 = inlined_call_operand.vmem [shape: f32[32,1], index: 17, kind: input, shape index: {}]
  %s18 = inlined_call_operand.vmem [shape: bf16[132,33], index: 18, kind: input, shape index: {}]
  %s19 = inlined_call_operand.vmem [shape: bf16[64,512], index: 19, kind: input, shape index: {}]
  %s20 = inlined_call_operand.vmem [shape: f32[64,1], index: 20, kind: input, shape index: {}]
  %s21 = inlined_call_operand.vmem [shape: f32[64,1], index: 21, kind: input, shape index: {}]
  %s22 = inlined_call_operand.vmem [shape: f32[64,1], index: 22, kind: input, shape index: {}]
  %s23 = inlined_call_operand.vmem [shape: bf16[64,1024], index: 23, kind: input, shape index: {}]
  %s24 = inlined_call_operand.vmem [shape: f32[64,1], index: 24, kind: input, shape index: {}]
  %s25 = inlined_call_operand.vmem [shape: f32[64,1], index: 25, kind: input, shape index: {}]
  %s26 = inlined_call_operand.vmem [shape: f32[64,1], index: 26, kind: input, shape index: {}]
  %s27 = inlined_call_operand.vmem [shape: bf16[6,3], index: 27, kind: input, shape index: {}]
  %s28 = inlined_call_operand.vmem [shape: f32[2,64,3], index: 28, kind: output, shape index: {}]
  %s29 = sld [smem:[#allocation0]]
  $region122: #{cnn1d_hight_forward.1} parent=0
    _
  %s31 = ssub.s32 1, %s29
  %s32 = scalar_select 0, %s31, %s29
  // Predicated region
  $region2: #{cnn1d_hight_forward.1} parent=0 // pred_check
    _
  $region3: #{cnn1d_hight_forward.1} parent=0 // pred_check_branch
    %34 = sbr.rel (0) target = $region5
  $region4: #{cnn1d_hight_forward.1} parent=0 // pred_region
    _
  $region5: #{cnn1d_hight_forward.1} parent=0 // pred_fallthru
    _
  // Predicated region
  $region6: #{cnn1d_hight_forward.1} parent=0 // pred_check
    _
  $region7: #{cnn1d_hight_forward.1} parent=0 // pred_check_branch
    %36 = sbr.rel (0) target = $region9
  $region8: #{cnn1d_hight_forward.1} parent=0 // pred_region
    _
  $region9: #{cnn1d_hight_forward.1} parent=0 // pred_fallthru
    _
  // Predicated region
  $region10: #{cnn1d_hight_forward.1} parent=0 // pred_check
    _
  $region11: #{cnn1d_hight_forward.1} parent=0 // pred_check_branch
    %38 = sbr.rel (0) target = $region13
  $region12: #{cnn1d_hight_forward.1} parent=0 // pred_region
    _
  $region13: #{cnn1d_hight_forward.1} parent=0 // pred_fallthru
    _
  // Predicated region
  $region14: #{cnn1d_hight_forward.1} parent=0 // pred_check
    _
  $region15: #{cnn1d_hight_forward.1} parent=0 // pred_check_branch
    %40 = sbr.rel (0) target = $region17
  $region16: #{cnn1d_hight_forward.1} parent=0 // pred_region
    _
  $region17: #{cnn1d_hight_forward.1} parent=0 // pred_fallthru
    _
  // Predicated region
  $region18: #{cnn1d_hight_forward.1} parent=0 // pred_check
    _
  $region19: #{cnn1d_hight_forward.1} parent=0 // pred_check_branch
    %42 = sbr.rel (0) target = $region21
  $region20: #{cnn1d_hight_forward.1} parent=0 // pred_region
    _
  $region21: #{cnn1d_hight_forward.1} parent=0 // pred_fallthru
    _
  // Predicated region
  $region22: #{cnn1d_hight_forward.1} parent=0 // pred_check
    _
  $region23: #{cnn1d_hight_forward.1} parent=0 // pred_check_branch
    %44 = sbr.rel (0) target = $region25
  $region24: #{cnn1d_hight_forward.1} parent=0 // pred_region
    _
  $region25: #{cnn1d_hight_forward.1} parent=0 // pred_fallthru
    _
  // Predicated region
  $region26: #{cnn1d_hight_forward.1} parent=0 // pred_check
    _
  $region27: #{cnn1d_hight_forward.1} parent=0 // pred_check_branch
    %46 = sbr.rel (0) target = $region29
  $region28: #{cnn1d_hight_forward.1} parent=0 // pred_region
    _
  $region29: #{cnn1d_hight_forward.1} parent=0 // pred_fallthru
    _
  // Predicated region
  $region30: #{cnn1d_hight_forward.1} parent=0 // pred_check
    _
  $region31: #{cnn1d_hight_forward.1} parent=0 // pred_check_branch
    %48 = sbr.rel (0) target = $region33
  $region32: #{cnn1d_hight_forward.1} parent=0 // pred_region
    _
  $region33: #{cnn1d_hight_forward.1} parent=0 // pred_fallthru
    _
  // Predicated region
  $region34: #{cnn1d_hight_forward.1} parent=0 // pred_check
    _
  $region35: #{cnn1d_hight_forward.1} parent=0 // pred_check_branch
    %50 = sbr.rel (0) target = $region37
  $region36: #{cnn1d_hight_forward.1} parent=0 // pred_region
    _
  $region37: #{cnn1d_hight_forward.1} parent=0 // pred_fallthru
    _
  // Predicated region
  $region38: #{cnn1d_hight_forward.1} parent=0 // pred_check
    _
  $region39: #{cnn1d_hight_forward.1} parent=0 // pred_check_branch
    %52 = sbr.rel (0) target = $region41
  $region40: #{cnn1d_hight_forward.1} parent=0 // pred_region
    _
  $region41: #{cnn1d_hight_forward.1} parent=0 // pred_fallthru
    _
  // Predicated region
  $region42: #{cnn1d_hight_forward.1} parent=0 // pred_check
    _
  $region43: #{cnn1d_hight_forward.1} parent=0 // pred_check_branch
    %54 = sbr.rel (0) target = $region45
  $region44: #{cnn1d_hight_forward.1} parent=0 // pred_region
    _
  $region45: #{cnn1d_hight_forward.1} parent=0 // pred_fallthru
    _
  // Predicated region
  $region46: #{cnn1d_hight_forward.1} parent=0 // pred_check
    _
  $region47: #{cnn1d_hight_forward.1} parent=0 // pred_check_branch
    %56 = sbr.rel (0) target = $region49
  $region48: #{cnn1d_hight_forward.1} parent=0 // pred_region
    _
  $region49: #{cnn1d_hight_forward.1} parent=0 // pred_fallthru
    _
  // Predicated region
  $region50: #{cnn1d_hight_forward.1} parent=0 // pred_check
    _
  $region51: #{cnn1d_hight_forward.1} parent=0 // pred_check_branch
    %58 = sbr.rel (0) target = $region53
  $region52: #{cnn1d_hight_forward.1} parent=0 // pred_region
    _
  $region53: #{cnn1d_hight_forward.1} parent=0 // pred_fallthru
    _
  // Predicated region
  $region54: #{cnn1d_hight_forward.1} parent=0 // pred_check
    _
  $region55: #{cnn1d_hight_forward.1} parent=0 // pred_check_branch
    %60 = sbr.rel (0) target = $region57
  $region56: #{cnn1d_hight_forward.1} parent=0 // pred_region
    _
  $region57: #{cnn1d_hight_forward.1} parent=0 // pred_fallthru
    _
  // Predicated region
  $region58: #{cnn1d_hight_forward.1} parent=0 // pred_check
    _
  $region59: #{cnn1d_hight_forward.1} parent=0 // pred_check_branch
    %62 = sbr.rel (0) target = $region61
  $region60: #{cnn1d_hight_forward.1} parent=0 // pred_region
    _
  $region61: #{cnn1d_hight_forward.1} parent=0 // pred_fallthru
    _
  // Predicated region
  $region62: #{cnn1d_hight_forward.1} parent=0 // pred_check
    _
  $region63: #{cnn1d_hight_forward.1} parent=0 // pred_check_branch
    %64 = sbr.rel (0) target = $region65
  $region64: #{cnn1d_hight_forward.1} parent=0 // pred_region
    _
  $region65: #{cnn1d_hight_forward.1} parent=0 // pred_fallthru
    _
  // Predicated region
  $region66: #{cnn1d_hight_forward.1} parent=0 // pred_check
    _
  $region67: #{cnn1d_hight_forward.1} parent=0 // pred_check_branch
    %66 = sbr.rel (0) target = $region69
  $region68: #{cnn1d_hight_forward.1} parent=0 // pred_region
    _
  $region69: #{cnn1d_hight_forward.1} parent=0 // pred_fallthru
    _
  // Predicated region
  $region70: #{cnn1d_hight_forward.1} parent=0 // pred_check
    _
  $region71: #{cnn1d_hight_forward.1} parent=0 // pred_check_branch
    %68 = sbr.rel (0) target = $region73
  $region72: #{cnn1d_hight_forward.1} parent=0 // pred_region
    _
  $region73: #{cnn1d_hight_forward.1} parent=0 // pred_fallthru
    _
  // Predicated region
  $region74: #{cnn1d_hight_forward.1} parent=0 // pred_check
    _
  $region75: #{cnn1d_hight_forward.1} parent=0 // pred_check_branch
    %70 = sbr.rel (0) target = $region77
  $region76: #{cnn1d_hight_forward.1} parent=0 // pred_region
    _
  $region77: #{cnn1d_hight_forward.1} parent=0 // pred_fallthru
    _
  // Predicated region
  $region78: #{cnn1d_hight_forward.1} parent=0 // pred_check
    _
  $region79: #{cnn1d_hight_forward.1} parent=0 // pred_check_branch
    %72 = sbr.rel (0) target = $region81
  $region80: #{cnn1d_hight_forward.1} parent=0 // pred_region
    _
  $region81: #{cnn1d_hight_forward.1} parent=0 // pred_fallthru
    _
  // Predicated region
  $region82: #{cnn1d_hight_forward.1} parent=0 // pred_check
    _
  $region83: #{cnn1d_hight_forward.1} parent=0 // pred_check_branch
    %74 = sbr.rel (0) target = $region85
  $region84: #{cnn1d_hight_forward.1} parent=0 // pred_region
    _
  $region85: #{cnn1d_hight_forward.1} parent=0 // pred_fallthru
    _
  // Predicated region
  $region86: #{cnn1d_hight_forward.1} parent=0 // pred_check
    _
  $region87: #{cnn1d_hight_forward.1} parent=0 // pred_check_branch
    %76 = sbr.rel (0) target = $region89
  $region88: #{cnn1d_hight_forward.1} parent=0 // pred_region
    _
  $region89: #{cnn1d_hight_forward.1} parent=0 // pred_fallthru
    _
  // Predicated region
  $region90: #{cnn1d_hight_forward.1} parent=0 // pred_check
    _
  $region91: #{cnn1d_hight_forward.1} parent=0 // pred_check_branch
    %78 = sbr.rel (0) target = $region93
  $region92: #{cnn1d_hight_forward.1} parent=0 // pred_region
    _
  $region93: #{cnn1d_hight_forward.1} parent=0 // pred_fallthru
    _
  // Predicated region
  $region94: #{cnn1d_hight_forward.1} parent=0 // pred_check
    _
  $region95: #{cnn1d_hight_forward.1} parent=0 // pred_check_branch
    %80 = sbr.rel (0) target = $region97
  $region96: #{cnn1d_hight_forward.1} parent=0 // pred_region
    _
  $region97: #{cnn1d_hight_forward.1} parent=0 // pred_fallthru
    _
  // Predicated region
  $region98: #{cnn1d_hight_forward.1} parent=0 // pred_check
    _
  $region99: #{cnn1d_hight_forward.1} parent=0 // pred_check_branch
    %82 = sbr.rel (0) target = $region101
  $region100: #{cnn1d_hight_forward.1} parent=0 // pred_region
    _
  $region101: #{cnn1d_hight_forward.1} parent=0 // pred_fallthru
    _
  // Predicated region
  $region102: #{cnn1d_hight_forward.1} parent=0 // pred_check
    _
  $region103: #{cnn1d_hight_forward.1} parent=0 // pred_check_branch
    %84 = sbr.rel (0) target = $region105
  $region104: #{cnn1d_hight_forward.1} parent=0 // pred_region
    _
  $region105: #{cnn1d_hight_forward.1} parent=0 // pred_fallthru
    _
  // Predicated region
  $region106: #{cnn1d_hight_forward.1} parent=0 // pred_check
    _
  $region107: #{cnn1d_hight_forward.1} parent=0 // pred_check_branch
    %86 = sbr.rel (0) target = $region109
  $region108: #{cnn1d_hight_forward.1} parent=0 // pred_region
    _
  $region109: #{cnn1d_hight_forward.1} parent=0 // pred_fallthru
    _
  // Predicated region
  $region110: #{cnn1d_hight_forward.1} parent=0 // pred_check
    _
  $region111: #{cnn1d_hight_forward.1} parent=0 // pred_check_branch
    %88 = sbr.rel (0) target = $region113
  $region112: #{cnn1d_hight_forward.1} parent=0 // pred_region
    _
  $region113: #{cnn1d_hight_forward.1} parent=0 // pred_fallthru
    _
  %v90 = vld [vmem:[%s0] sm:$0x3f]
  %s91 = scalar_lea.vmem %s0, 6
  %v92 = vld [vmem:[%s91] sm:$0x3f]
  %v93 = vld [vmem:[%s1] sm:$0xf]
  %v94 = vld [vmem:[%s1 + $0x4] sm:$0xf]
  %v95 = vld [vmem:[%s2] sm:$0xff]
  %v96 = vld [vmem:[%s2 + $0x8] sm:$0xff]
  %v97 = vld [vmem:[%s3] sm:$0xff]
  %v98 = vld [vmem:[%s3 + $0x8] sm:$0xff]
  %v99 = vld [vmem:[%s4] sm:$0xff]
  %v100 = vld [vmem:[%s4 + $0x8] sm:$0xff]
  %v102 = vlaneseq
  %v103 = vshrl.u32 %v102, 7
  %v104 = vsub.s32 0, %v103
  %v105 = vrot.slane %v90, %v104
  %v106 = vlaneseq
  %v107 = vshrl.u32 %v106, 7
  %v108 = vsub.s32 1, %v107
  %v109 = vrot.slane %v90, %v108
  %v110 = vlaneseq
  %v111 = vshrl.u32 %v110, 7
  %v112 = vsub.s32 2, %v111
  %v113 = vrot.slane %v90, %v112
  %v114 = vlaneseq
  %v115 = vshrl.u32 %v114, 7
  %v116 = vsub.s32 3, %v115
  %v117 = vrot.slane %v90, %v116
  %v118 = vlaneseq
  %v119 = vshrl.u32 %v118, 7
  %v120 = vsub.s32 4, %v119
  %v121 = vrot.slane %v90, %v120
  %v122 = vlaneseq
  %v123 = vshrl.u32 %v122, 7
  %v124 = vsub.s32 5, %v123
  %v125 = vrot.slane %v90, %v124
  %132 = vrot.lane.b32.xlu0 %v105, 127
  %v133 = vpop.permute.xlu0 %132
  %134 = vrot.lane.b32.xlu0 %v109, 127
  %v135 = vpop.permute.xlu0 %134
  %136 = vrot.lane.b32.xlu0 %v113, 127
  %v137 = vpop.permute.xlu0 %136
  %138 = vrot.lane.b32.xlu0 %v117, 127
  %v139 = vpop.permute.xlu0 %138
  %140 = vrot.lane.b32.xlu0 %v121, 127
  %v141 = vpop.permute.xlu0 %140
  %142 = vrot.lane.b32.xlu0 %v125, 127
  %v143 = vpop.permute.xlu0 %142
  %vm144 = vcmask 1039360
  %v145 = vsel %vm144, %v133, %v135
  %v146 = vsel %vm144, %v135, %v137
  %v147 = vsel %vm144, %v137, %v139
  %v148 = vsel %vm144, %v139, %v141
  %v149 = vsel %vm144, %v141, %v143
  %156 = vrot.lane.b32.xlu0 %v105, 126
  %v157 = vpop.permute.xlu0 %156
  %158 = vrot.lane.b32.xlu0 %v109, 126
  %v159 = vpop.permute.xlu0 %158
  %160 = vrot.lane.b32.xlu0 %v113, 126
  %v161 = vpop.permute.xlu0 %160
  %162 = vrot.lane.b32.xlu0 %v117, 126
  %v163 = vpop.permute.xlu0 %162
  %164 = vrot.lane.b32.xlu0 %v121, 126
  %v165 = vpop.permute.xlu0 %164
  %166 = vrot.lane.b32.xlu0 %v125, 126
  %v167 = vpop.permute.xlu0 %166
  %vm168 = vcmask 1031168
  %v169 = vsel %vm168, %v157, %v159
  %v170 = vsel %vm168, %v159, %v161
  %v171 = vsel %vm168, %v161, %v163
  %v172 = vsel %vm168, %v163, %v165
  %v173 = vsel %vm168, %v165, %v167
  %180 = vrot.lane.b32.xlu0 %v105, 125
  %v181 = vpop.permute.xlu0 %180
  %182 = vrot.lane.b32.xlu0 %v109, 125
  %v183 = vpop.permute.xlu0 %182
  %184 = vrot.lane.b32.xlu0 %v113, 125
  %v185 = vpop.permute.xlu0 %184
  %186 = vrot.lane.b32.xlu0 %v117, 125
  %v187 = vpop.permute.xlu0 %186
  %188 = vrot.lane.b32.xlu0 %v121, 125
  %v189 = vpop.permute.xlu0 %188
  %190 = vrot.lane.b32.xlu0 %v125, 125
  %v191 = vpop.permute.xlu0 %190
  %vm192 = vcmask 1022976
  %v193 = vsel %vm192, %v181, %v183
  %v194 = vsel %vm192, %v183, %v185
  %v195 = vsel %vm192, %v185, %v187
  %v196 = vsel %vm192, %v187, %v189
  %v197 = vsel %vm192, %v189, %v191
  %204 = vrot.lane.b32.xlu0 %v105, 124
  %v205 = vpop.permute.xlu0 %204
  %206 = vrot.lane.b32.xlu0 %v109, 124
  %v207 = vpop.permute.xlu0 %206
  %208 = vrot.lane.b32.xlu0 %v113, 124
  %v209 = vpop.permute.xlu0 %208
  %210 = vrot.lane.b32.xlu0 %v117, 124
  %v211 = vpop.permute.xlu0 %210
  %212 = vrot.lane.b32.xlu0 %v121, 124
  %v213 = vpop.permute.xlu0 %212
  %214 = vrot.lane.b32.xlu0 %v125, 124
  %v215 = vpop.permute.xlu0 %214
  %vm216 = vcmask 1014784
  %v217 = vsel %vm216, %v205, %v207
  %v218 = vsel %vm216, %v207, %v209
  %v219 = vsel %vm216, %v209, %v211
  %v220 = vsel %vm216, %v211, %v213
  %v221 = vsel %vm216, %v213, %v215
  %228 = vrot.lane.b32.xlu0 %v105, 123
  %v229 = vpop.permute.xlu0 %228
  %230 = vrot.lane.b32.xlu0 %v109, 123
  %v231 = vpop.permute.xlu0 %230
  %232 = vrot.lane.b32.xlu0 %v113, 123
  %v233 = vpop.permute.xlu0 %232
  %234 = vrot.lane.b32.xlu0 %v117, 123
  %v235 = vpop.permute.xlu0 %234
  %236 = vrot.lane.b32.xlu0 %v121, 123
  %v237 = vpop.permute.xlu0 %236
  %238 = vrot.lane.b32.xlu0 %v125, 123
  %v239 = vpop.permute.xlu0 %238
  %vm240 = vcmask 1006592
  %v241 = vsel %vm240, %v229, %v231
  %v242 = vsel %vm240, %v231, %v233
  %v243 = vsel %vm240, %v233, %v235
  %v244 = vsel %vm240, %v235, %v237
  %v245 = vsel %vm240, %v237, %v239
  %252 = vrot.lane.b32.xlu0 %v105, 122
  %v253 = vpop.permute.xlu0 %252
  %254 = vrot.lane.b32.xlu0 %v109, 122
  %v255 = vpop.permute.xlu0 %254
  %256 = vrot.lane.b32.xlu0 %v113, 122
  %v257 = vpop.permute.xlu0 %256
  %258 = vrot.lane.b32.xlu0 %v117, 122
  %v259 = vpop.permute.xlu0 %258
  %260 = vrot.lane.b32.xlu0 %v121, 122
  %v261 = vpop.permute.xlu0 %260
  %262 = vrot.lane.b32.xlu0 %v125, 122
  %v263 = vpop.permute.xlu0 %262
  %vm264 = vcmask 998400
  %v265 = vsel %vm264, %v253, %v255
  %v266 = vsel %vm264, %v255, %v257
  %v267 = vsel %vm264, %v257, %v259
  %v268 = vsel %vm264, %v259, %v261
  %v269 = vsel %vm264, %v261, %v263
  %276 = vrot.lane.b32.xlu0 %v105, 121
  %v277 = vpop.permute.xlu0 %276
  %278 = vrot.lane.b32.xlu0 %v109, 121
  %v279 = vpop.permute.xlu0 %278
  %280 = vrot.lane.b32.xlu0 %v113, 121
  %v281 = vpop.permute.xlu0 %280
  %282 = vrot.lane.b32.xlu0 %v117, 121
  %v283 = vpop.permute.xlu0 %282
  %284 = vrot.lane.b32.xlu0 %v121, 121
  %v285 = vpop.permute.xlu0 %284
  %286 = vrot.lane.b32.xlu0 %v125, 121
  %v287 = vpop.permute.xlu0 %286
  %vm288 = vcmask 990208
  %v289 = vsel %vm288, %v277, %v279
  %v290 = vsel %vm288, %v279, %v281
  %v291 = vsel %vm288, %v281, %v283
  %v292 = vsel %vm288, %v283, %v285
  %v293 = vsel %vm288, %v285, %v287
  %300 = vrot.lane.b32.xlu0 %v105, 120
  %v301 = vpop.permute.xlu0 %300
  %302 = vrot.lane.b32.xlu0 %v109, 120
  %v303 = vpop.permute.xlu0 %302
  %304 = vrot.lane.b32.xlu0 %v113, 120
  %v305 = vpop.permute.xlu0 %304
  %306 = vrot.lane.b32.xlu0 %v117, 120
  %v307 = vpop.permute.xlu0 %306
  %308 = vrot.lane.b32.xlu0 %v121, 120
  %v309 = vpop.permute.xlu0 %308
  %310 = vrot.lane.b32.xlu0 %v125, 120
  %v311 = vpop.permute.xlu0 %310
  %vm312 = vcmask 982016
  %v313 = vsel %vm312, %v301, %v303
  %v314 = vsel %vm312, %v303, %v305
  %v315 = vsel %vm312, %v305, %v307
  %v316 = vsel %vm312, %v307, %v309
  %v317 = vsel %vm312, %v309, %v311
  %324 = vrot.lane.b32.xlu0 %v105, 119
  %v325 = vpop.permute.xlu0 %324
  %326 = vrot.lane.b32.xlu0 %v109, 119
  %v327 = vpop.permute.xlu0 %326
  %328 = vrot.lane.b32.xlu0 %v113, 119
  %v329 = vpop.permute.xlu0 %328
  %330 = vrot.lane.b32.xlu0 %v117, 119
  %v331 = vpop.permute.xlu0 %330
  %332 = vrot.lane.b32.xlu0 %v121, 119
  %v333 = vpop.permute.xlu0 %332
  %334 = vrot.lane.b32.xlu0 %v125, 119
  %v335 = vpop.permute.xlu0 %334
  %vm336 = vcmask 973824
  %v337 = vsel %vm336, %v325, %v327
  %v338 = vsel %vm336, %v327, %v329
  %v339 = vsel %vm336, %v329, %v331
  %v340 = vsel %vm336, %v331, %v333
  %v341 = vsel %vm336, %v333, %v335
  %348 = vrot.lane.b32.xlu0 %v105, 118
  %v349 = vpop.permute.xlu0 %348
  %350 = vrot.lane.b32.xlu0 %v109, 118
  %v351 = vpop.permute.xlu0 %350
  %352 = vrot.lane.b32.xlu0 %v113, 118
  %v353 = vpop.permute.xlu0 %352
  %354 = vrot.lane.b32.xlu0 %v117, 118
  %v355 = vpop.permute.xlu0 %354
  %356 = vrot.lane.b32.xlu0 %v121, 118
  %v357 = vpop.permute.xlu0 %356
  %358 = vrot.lane.b32.xlu0 %v125, 118
  %v359 = vpop.permute.xlu0 %358
  %vm360 = vcmask 965632
  %v361 = vsel %vm360, %v349, %v351
  %v362 = vsel %vm360, %v351, %v353
  %v363 = vsel %vm360, %v353, %v355
  %v364 = vsel %vm360, %v355, %v357
  %v365 = vsel %vm360, %v357, %v359
  %372 = vrot.lane.b32.xlu0 %v105, 117
  %v373 = vpop.permute.xlu0 %372
  %374 = vrot.lane.b32.xlu0 %v109, 117
  %v375 = vpop.permute.xlu0 %374
  %376 = vrot.lane.b32.xlu0 %v113, 117
  %v377 = vpop.permute.xlu0 %376
  %378 = vrot.lane.b32.xlu0 %v117, 117
  %v379 = vpop.permute.xlu0 %378
  %380 = vrot.lane.b32.xlu0 %v121, 117
  %v381 = vpop.permute.xlu0 %380
  %382 = vrot.lane.b32.xlu0 %v125, 117
  %v383 = vpop.permute.xlu0 %382
  %vm384 = vcmask 957440
  %v385 = vsel %vm384, %v373, %v375
  %v386 = vsel %vm384, %v375, %v377
  %v387 = vsel %vm384, %v377, %v379
  %v388 = vsel %vm384, %v379, %v381
  %v389 = vsel %vm384, %v381, %v383
  %396 = vrot.lane.b32.xlu0 %v105, 116
  %v397 = vpop.permute.xlu0 %396
  %398 = vrot.lane.b32.xlu0 %v109, 116
  %v399 = vpop.permute.xlu0 %398
  %400 = vrot.lane.b32.xlu0 %v113, 116
  %v401 = vpop.permute.xlu0 %400
  %402 = vrot.lane.b32.xlu0 %v117, 116
  %v403 = vpop.permute.xlu0 %402
  %404 = vrot.lane.b32.xlu0 %v121, 116
  %v405 = vpop.permute.xlu0 %404
  %406 = vrot.lane.b32.xlu0 %v125, 116
  %v407 = vpop.permute.xlu0 %406
  %vm408 = vcmask 949248
  %v409 = vsel %vm408, %v397, %v399
  %v410 = vsel %vm408, %v399, %v401
  %v411 = vsel %vm408, %v401, %v403
  %v412 = vsel %vm408, %v403, %v405
  %v413 = vsel %vm408, %v405, %v407
  %420 = vrot.lane.b32.xlu0 %v105, 115
  %v421 = vpop.permute.xlu0 %420
  %422 = vrot.lane.b32.xlu0 %v109, 115
  %v423 = vpop.permute.xlu0 %422
  %424 = vrot.lane.b32.xlu0 %v113, 115
  %v425 = vpop.permute.xlu0 %424
  %426 = vrot.lane.b32.xlu0 %v117, 115
  %v427 = vpop.permute.xlu0 %426
  %428 = vrot.lane.b32.xlu0 %v121, 115
  %v429 = vpop.permute.xlu0 %428
  %430 = vrot.lane.b32.xlu0 %v125, 115
  %v431 = vpop.permute.xlu0 %430
  %vm432 = vcmask 941056
  %v433 = vsel %vm432, %v421, %v423
  %v434 = vsel %vm432, %v423, %v425
  %v435 = vsel %vm432, %v425, %v427
  %v436 = vsel %vm432, %v427, %v429
  %v437 = vsel %vm432, %v429, %v431
  %444 = vrot.lane.b32.xlu0 %v105, 114
  %v445 = vpop.permute.xlu0 %444
  %446 = vrot.lane.b32.xlu0 %v109, 114
  %v447 = vpop.permute.xlu0 %446
  %448 = vrot.lane.b32.xlu0 %v113, 114
  %v449 = vpop.permute.xlu0 %448
  %450 = vrot.lane.b32.xlu0 %v117, 114
  %v451 = vpop.permute.xlu0 %450
  %452 = vrot.lane.b32.xlu0 %v121, 114
  %v453 = vpop.permute.xlu0 %452
  %454 = vrot.lane.b32.xlu0 %v125, 114
  %v455 = vpop.permute.xlu0 %454
  %vm456 = vcmask 932864
  %v457 = vsel %vm456, %v445, %v447
  %v458 = vsel %vm456, %v447, %v449
  %v459 = vsel %vm456, %v449, %v451
  %v460 = vsel %vm456, %v451, %v453
  %v461 = vsel %vm456, %v453, %v455
  %468 = vrot.lane.b32.xlu0 %v105, 113
  %v469 = vpop.permute.xlu0 %468
  %470 = vrot.lane.b32.xlu0 %v109, 113
  %v471 = vpop.permute.xlu0 %470
  %472 = vrot.lane.b32.xlu0 %v113, 113
  %v473 = vpop.permute.xlu0 %472
  %474 = vrot.lane.b32.xlu0 %v117, 113
  %v475 = vpop.permute.xlu0 %474
  %476 = vrot.lane.b32.xlu0 %v121, 113
  %v477 = vpop.permute.xlu0 %476
  %478 = vrot.lane.b32.xlu0 %v125, 113
  %v479 = vpop.permute.xlu0 %478
  %vm480 = vcmask 924672
  %v481 = vsel %vm480, %v469, %v471
  %v482 = vsel %vm480, %v471, %v473
  %v483 = vsel %vm480, %v473, %v475
  %v484 = vsel %vm480, %v475, %v477
  %v485 = vsel %vm480, %v477, %v479
  %vm492 = vcmask 1040384
  %v493 = vsel %vm492, %v105, %v145
  %v494 = vsel %vm492, %v109, %v146
  %v495 = vsel %vm492, %v113, %v147
  %v496 = vsel %vm492, %v117, %v148
  %v497 = vsel %vm492, %v121, %v149
  %v498 = vsel %vm492, %v125, %v143
  %vm499 = vcmask 1041408
  %v500 = vsel %vm499, %v493, %v169
  %v501 = vsel %vm499, %v494, %v170
  %v502 = vsel %vm499, %v495, %v171
  %v503 = vsel %vm499, %v496, %v172
  %v504 = vsel %vm499, %v497, %v173
  %v505 = vsel %vm499, %v498, %v167
  %vm506 = vcmask 1042432
  %v507 = vsel %vm506, %v500, %v193
  %v508 = vsel %vm506, %v501, %v194
  %v509 = vsel %vm506, %v502, %v195
  %v510 = vsel %vm506, %v503, %v196
  %v511 = vsel %vm506, %v504, %v197
  %v512 = vsel %vm506, %v505, %v191
  %vm513 = vcmask 1043456
  %v514 = vsel %vm513, %v507, %v217
  %v515 = vsel %vm513, %v508, %v218
  %v516 = vsel %vm513, %v509, %v219
  %v517 = vsel %vm513, %v510, %v220
  %v518 = vsel %vm513, %v511, %v221
  %v519 = vsel %vm513, %v512, %v215
  %vm520 = vcmask 1044480
  %v521 = vsel %vm520, %v514, %v241
  %v522 = vsel %vm520, %v515, %v242
  %v523 = vsel %vm520, %v516, %v243
  %v524 = vsel %vm520, %v517, %v244
  %v525 = vsel %vm520, %v518, %v245
  %v526 = vsel %vm520, %v519, %v239
  %vm527 = vcmask 1045504
  %v528 = vsel %vm527, %v521, %v265
  %v529 = vsel %vm527, %v522, %v266
  %v530 = vsel %vm527, %v523, %v267
  %v531 = vsel %vm527, %v524, %v268
  %v532 = vsel %vm527, %v525, %v269
  %v533 = vsel %vm527, %v526, %v263
  %vm534 = vcmask 1046528
  %v535 = vsel %vm534, %v528, %v289
  %v536 = vsel %vm534, %v529, %v290
  %v537 = vsel %vm534, %v530, %v291
  %v538 = vsel %vm534, %v531, %v292
  %v539 = vsel %vm534, %v532, %v293
  %v540 = vsel %vm534, %v533, %v287
  %v541 = vsel %vm492, %v313, %v337
  %v542 = vsel %vm492, %v314, %v338
  %v543 = vsel %vm492, %v315, %v339
  %v544 = vsel %vm492, %v316, %v340
  %v545 = vsel %vm492, %v317, %v341
  %v546 = vsel %vm492, %v311, %v335
  %v547 = vsel %vm499, %v541, %v361
  %v548 = vsel %vm499, %v542, %v362
  %v549 = vsel %vm499, %v543, %v363
  %v550 = vsel %vm499, %v544, %v364
  %v551 = vsel %vm499, %v545, %v365
  %v552 = vsel %vm499, %v546, %v359
  %v553 = vsel %vm506, %v547, %v385
  %v554 = vsel %vm506, %v548, %v386
  %v555 = vsel %vm506, %v549, %v387
  %v556 = vsel %vm506, %v550, %v388
  %v557 = vsel %vm506, %v551, %v389
  %v558 = vsel %vm506, %v552, %v383
  %v559 = vsel %vm513, %v553, %v409
  %v560 = vsel %vm513, %v554, %v410
  %v561 = vsel %vm513, %v555, %v411
  %v562 = vsel %vm513, %v556, %v412
  %v563 = vsel %vm513, %v557, %v413
  %v564 = vsel %vm513, %v558, %v407
  %v565 = vsel %vm520, %v559, %v433
  %v566 = vsel %vm520, %v560, %v434
  %v567 = vsel %vm520, %v561, %v435
  %v568 = vsel %vm520, %v562, %v436
  %v569 = vsel %vm520, %v563, %v437
  %v570 = vsel %vm520, %v564, %v431
  %v571 = vsel %vm527, %v565, %v457
  %v572 = vsel %vm527, %v566, %v458
  %v573 = vsel %vm527, %v567, %v459
  %v574 = vsel %vm527, %v568, %v460
  %v575 = vsel %vm527, %v569, %v461
  %v576 = vsel %vm527, %v570, %v455
  %v577 = vsel %vm534, %v571, %v481
  %v578 = vsel %vm534, %v572, %v482
  %v579 = vsel %vm534, %v573, %v483
  %v580 = vsel %vm534, %v574, %v484
  %v581 = vsel %vm534, %v575, %v485
  %v582 = vsel %vm534, %v576, %v479
  %595 = vrot.lane.b32.xlu0 %v535, 112
  %v596 = vpop.permute.xlu0 %595
  %597 = vrot.lane.b32.xlu0 %v536, 112
  %v598 = vpop.permute.xlu0 %597
  %599 = vrot.lane.b32.xlu0 %v537, 112
  %v600 = vpop.permute.xlu0 %599
  %601 = vrot.lane.b32.xlu0 %v538, 112
  %v602 = vpop.permute.xlu0 %601
  %603 = vrot.lane.b32.xlu0 %v539, 112
  %v604 = vpop.permute.xlu0 %603
  %605 = vrot.lane.b32.xlu0 %v540, 112
  %v606 = vpop.permute.xlu0 %605
  %607 = vrot.lane.b32.xlu0 %v577, 112
  %v608 = vpop.permute.xlu0 %607
  %609 = vrot.lane.b32.xlu0 %v578, 112
  %v610 = vpop.permute.xlu0 %609
  %611 = vrot.lane.b32.xlu0 %v579, 112
  %v612 = vpop.permute.xlu0 %611
  %613 = vrot.lane.b32.xlu0 %v580, 112
  %v614 = vpop.permute.xlu0 %613
  %615 = vrot.lane.b32.xlu0 %v581, 112
  %v616 = vpop.permute.xlu0 %615
  %617 = vrot.lane.b32.xlu0 %v582, 112
  %v618 = vpop.permute.xlu0 %617
  %vm619 = vcmask 916480
  %v620 = vsel %vm619, %v596, %v598
  %v621 = vsel %vm619, %v598, %v600
  %v622 = vsel %vm619, %v600, %v602
  %v623 = vsel %vm619, %v602, %v604
  %v624 = vsel %vm619, %v604, %v606
  %v625 = vsel %vm619, %v608, %v610
  %v626 = vsel %vm619, %v610, %v612
  %v627 = vsel %vm619, %v612, %v614
  %v628 = vsel %vm619, %v614, %v616
  %v629 = vsel %vm619, %v616, %v618
  %v642 = vpack.c.bf16 %v577, %v535
  %v643 = vpack.c.bf16 %v578, %v536
  %v644 = vpack.c.bf16 %v579, %v537
  %v645 = vpack.c.bf16 %v580, %v538
  %v646 = vpack.c.bf16 %v581, %v539
  %v647 = vpack.c.bf16 %v582, %v540
  %v648 = vpack.c.bf16 %v625, %v620
  %v649 = vpack.c.bf16 %v626, %v621
  %v650 = vpack.c.bf16 %v627, %v622
  %v651 = vpack.c.bf16 %v628, %v623
  %v652 = vpack.c.bf16 %v629, %v624
  %v653 = vpack.c.bf16 %v618, %v606
  %655 = vset.pattern.permute.xlu0 0
  %656 = vperm.xlu0 %655, %v95
  %v657 = vpop.permute.xlu0 %656
  %660 = vset.pattern.permute.xlu0 0
  %661 = vperm.xlu0 %660, %v96
  %v662 = vpop.permute.xlu0 %661
  %v666 = vunpack.c.l.b16 %v93
  %v667 = vunpack.c.l.b16 %v94
  %v668 = vpack.c.b16 %v667, %v666
  %vm669 = vcmask 261120
  %v671 = vsel %vm669, %v668, 0
  %673 = vmatprep.subr.bf16.mxu0 %v643
  %674 = vmatpush1.bf16.msra.mxu0 %v642
  %675 = vmatprep.subr.bf16.mxu0 %v649
  %676 = vmatpush1.bf16.msra.mxu0 %v648
  %677 = vmatprep.subr.bf16.mxu0 0
  %678 = vmatpush1.bf16.msra.mxu0 0
  %679 = vmatprep.subr.bf16.mxu0 0
  %680 = vmatpush1.bf16.msra.mxu0 0
  %681 = vmatprep.subr.bf16.mxu0 0
  %682 = vmatpush1.bf16.msra.mxu0 0
  %683 = vmatprep.subr.bf16.mxu0 0
  %684 = vmatpush1.bf16.msra.mxu0 0
  %685 = vmatprep.subr.bf16.mxu0 0
  %686 = vmatpush1.bf16.msra.mxu0 0
  %687 = vmatprep.subr.bf16.mxu0 0
  %688 = vmatpush1.bf16.msra.mxu0 0
  %689 = vmatprep.subr.bf16.mxu0 0
  %690 = vmatpush1.bf16.msra.mxu0 0
  %691 = vmatprep.subr.bf16.mxu0 0
  %692 = vmatpush1.bf16.msra.mxu0 0
  %693 = vmatprep.subr.bf16.mxu0 0
  %694 = vmatpush1.bf16.msra.mxu0 0
  %695 = vmatprep.subr.bf16.mxu0 0
  %696 = vmatpush1.bf16.msra.mxu0 0
  %697 = vmatprep.subr.bf16.mxu0 0
  %698 = vmatpush1.bf16.msra.mxu0 0
  %699 = vmatprep.subr.bf16.mxu0 0
  %700 = vmatpush1.bf16.msra.mxu0 0
  %701 = vmatprep.subr.bf16.mxu0 0
  %702 = vmatpush1.bf16.msra.mxu0 0
  %703 = vmatprep.subr.bf16.mxu0 0
  %704 = vmatpush1.bf16.msra.mxu0 0
  %705 = vmatprep.mubr.bf16.mxu0 0
  %706 = vmatmul.mubr.bf16.gmra.mrb[0].mxu0 %v671
  %v707 = vpop.f32.mrb[0].mxu0
  %v708 = vadd.f32 %v657, %v707
  %v709 = vpop.f32.mrb[0].mxu0
  %v710 = vadd.f32 %v657, %v709
  %v711 = vpop.f32.mrb[0].mxu0
  %v712 = vadd.f32 %v662, %v711
  %v713 = vpop.f32.mrb[0].mxu0
  %v714 = vadd.f32 %v662, %v713
  %715 = vdwg.mxu0
  %716 = vmatprep.subr.bf16.mxu0 %v645
  %717 = vmatpush1.bf16.msra.mxu0 %v644
  %718 = vmatprep.subr.bf16.mxu0 %v651
  %719 = vmatpush1.bf16.msra.mxu0 %v650
  %720 = vmatprep.subr.bf16.mxu0 0
  %721 = vmatpush1.bf16.msra.mxu0 0
  %722 = vmatprep.subr.bf16.mxu0 0
  %723 = vmatpush1.bf16.msra.mxu0 0
  %724 = vmatprep.subr.bf16.mxu0 0
  %725 = vmatpush1.bf16.msra.mxu0 0
  %726 = vmatprep.subr.bf16.mxu0 0
  %727 = vmatpush1.bf16.msra.mxu0 0
  %728 = vmatprep.subr.bf16.mxu0 0
  %729 = vmatpush1.bf16.msra.mxu0 0
  %730 = vmatprep.subr.bf16.mxu0 0
  %731 = vmatpush1.bf16.msra.mxu0 0
  %732 = vmatprep.subr.bf16.mxu0 0
  %733 = vmatpush1.bf16.msra.mxu0 0
  %734 = vmatprep.subr.bf16.mxu0 0
  %735 = vmatpush1.bf16.msra.mxu0 0
  %736 = vmatprep.subr.bf16.mxu0 0
  %737 = vmatpush1.bf16.msra.mxu0 0
  %738 = vmatprep.subr.bf16.mxu0 0
  %739 = vmatpush1.bf16.msra.mxu0 0
  %740 = vmatprep.subr.bf16.mxu0 0
  %741 = vmatpush1.bf16.msra.mxu0 0
  %742 = vmatprep.subr.bf16.mxu0 0
  %743 = vmatpush1.bf16.msra.mxu0 0
  %744 = vmatprep.subr.bf16.mxu0 0
  %745 = vmatpush1.bf16.msra.mxu0 0
  %746 = vmatprep.subr.bf16.mxu0 0
  %747 = vmatpush1.bf16.msra.mxu0 0
  %748 = vmatprep.mubr.bf16.mxu0 0
  %749 = vmatmul.mubr.bf16.gmra.mrb[0].mxu0 %v671
  %v750 = vpop.f32.mrb[0].mxu0
  %v751 = vadd.f32 %v657, %v750
  %v752 = vpop.f32.mrb[0].mxu0
  %v753 = vadd.f32 %v657, %v752
  %v754 = vpop.f32.mrb[0].mxu0
  %v755 = vadd.f32 %v662, %v754
  %v756 = vpop.f32.mrb[0].mxu0
  %v757 = vadd.f32 %v662, %v756
  %758 = vdwg.mxu0
  %759 = vmatprep.subr.bf16.mxu0 %v647
  %760 = vmatpush1.bf16.msra.mxu0 %v646
  %761 = vmatprep.subr.bf16.mxu0 %v653
  %762 = vmatpush1.bf16.msra.mxu0 %v652
  %763 = vmatprep.subr.bf16.mxu0 0
  %764 = vmatpush1.bf16.msra.mxu0 0
  %765 = vmatprep.subr.bf16.mxu0 0
  %766 = vmatpush1.bf16.msra.mxu0 0
  %767 = vmatprep.subr.bf16.mxu0 0
  %768 = vmatpush1.bf16.msra.mxu0 0
  %769 = vmatprep.subr.bf16.mxu0 0
  %770 = vmatpush1.bf16.msra.mxu0 0
  %771 = vmatprep.subr.bf16.mxu0 0
  %772 = vmatpush1.bf16.msra.mxu0 0
  %773 = vmatprep.subr.bf16.mxu0 0
  %774 = vmatpush1.bf16.msra.mxu0 0
  %775 = vmatprep.subr.bf16.mxu0 0
  %776 = vmatpush1.bf16.msra.mxu0 0
  %777 = vmatprep.subr.bf16.mxu0 0
  %778 = vmatpush1.bf16.msra.mxu0 0
  %779 = vmatprep.subr.bf16.mxu0 0
  %780 = vmatpush1.bf16.msra.mxu0 0
  %781 = vmatprep.subr.bf16.mxu0 0
  %782 = vmatpush1.bf16.msra.mxu0 0
  %783 = vmatprep.subr.bf16.mxu0 0
  %784 = vmatpush1.bf16.msra.mxu0 0
  %785 = vmatprep.subr.bf16.mxu0 0
  %786 = vmatpush1.bf16.msra.mxu0 0
  %787 = vmatprep.subr.bf16.mxu0 0
  %788 = vmatpush1.bf16.msra.mxu0 0
  %789 = vmatprep.subr.bf16.mxu0 0
  %790 = vmatpush1.bf16.msra.mxu0 0
  %791 = vmatprep.mubr.bf16.mxu0 0
  %792 = vmatmul.mubr.bf16.gmra.mrb[0].mxu0 %v671
  %v793 = vpop.f32.mrb[0].mxu0
  %v794 = vadd.f32 %v657, %v793
  %v795 = vpop.f32.mrb[0].mxu0
  %v796 = vadd.f32 %v657, %v795
  %v797 = vpop.f32.mrb[0].mxu0
  %v798 = vadd.f32 %v662, %v797
  %v799 = vpop.f32.mrb[0].mxu0
  %v800 = vadd.f32 %v662, %v799
  %801 = vdwg.mxu0
  %v803 = vlaneseq
  %v804 = vshrl.u32 %v803, 7
  %v805 = vsub.s32 0, %v804
  %v806 = vrot.slane %v92, %v805
  %v807 = vlaneseq
  %v808 = vshrl.u32 %v807, 7
  %v809 = vsub.s32 1, %v808
  %v810 = vrot.slane %v92, %v809
  %v811 = vlaneseq
  %v812 = vshrl.u32 %v811, 7
  %v813 = vsub.s32 2, %v812
  %v814 = vrot.slane %v92, %v813
  %v815 = vlaneseq
  %v816 = vshrl.u32 %v815, 7
  %v817 = vsub.s32 3, %v816
  %v818 = vrot.slane %v92, %v817
  %v819 = vlaneseq
  %v820 = vshrl.u32 %v819, 7
  %v821 = vsub.s32 4, %v820
  %v822 = vrot.slane %v92, %v821
  %v823 = vlaneseq
  %v824 = vshrl.u32 %v823, 7
  %v825 = vsub.s32 5, %v824
  %v826 = vrot.slane %v92, %v825
  %833 = vrot.lane.b32.xlu0 %v806, 127
  %v834 = vpop.permute.xlu0 %833
  %835 = vrot.lane.b32.xlu0 %v810, 127
  %v836 = vpop.permute.xlu0 %835
  %837 = vrot.lane.b32.xlu0 %v814, 127
  %v838 = vpop.permute.xlu0 %837
  %839 = vrot.lane.b32.xlu0 %v818, 127
  %v840 = vpop.permute.xlu0 %839
  %841 = vrot.lane.b32.xlu0 %v822, 127
  %v842 = vpop.permute.xlu0 %841
  %843 = vrot.lane.b32.xlu0 %v826, 127
  %v844 = vpop.permute.xlu0 %843
  %v845 = vsel %vm144, %v834, %v836
  %v846 = vsel %vm144, %v836, %v838
  %v847 = vsel %vm144, %v838, %v840
  %v848 = vsel %vm144, %v840, %v842
  %v849 = vsel %vm144, %v842, %v844
  %856 = vrot.lane.b32.xlu0 %v806, 126
  %v857 = vpop.permute.xlu0 %856
  %858 = vrot.lane.b32.xlu0 %v810, 126
  %v859 = vpop.permute.xlu0 %858
  %860 = vrot.lane.b32.xlu0 %v814, 126
  %v861 = vpop.permute.xlu0 %860
  %862 = vrot.lane.b32.xlu0 %v818, 126
  %v863 = vpop.permute.xlu0 %862
  %864 = vrot.lane.b32.xlu0 %v822, 126
  %v865 = vpop.permute.xlu0 %864
  %866 = vrot.lane.b32.xlu0 %v826, 126
  %v867 = vpop.permute.xlu0 %866
  %v868 = vsel %vm168, %v857, %v859
  %v869 = vsel %vm168, %v859, %v861
  %v870 = vsel %vm168, %v861, %v863
  %v871 = vsel %vm168, %v863, %v865
  %v872 = vsel %vm168, %v865, %v867
  %879 = vrot.lane.b32.xlu0 %v806, 125
  %v880 = vpop.permute.xlu0 %879
  %881 = vrot.lane.b32.xlu0 %v810, 125
  %v882 = vpop.permute.xlu0 %881
  %883 = vrot.lane.b32.xlu0 %v814, 125
  %v884 = vpop.permute.xlu0 %883
  %885 = vrot.lane.b32.xlu0 %v818, 125
  %v886 = vpop.permute.xlu0 %885
  %887 = vrot.lane.b32.xlu0 %v822, 125
  %v888 = vpop.permute.xlu0 %887
  %889 = vrot.lane.b32.xlu0 %v826, 125
  %v890 = vpop.permute.xlu0 %889
  %v891 = vsel %vm192, %v880, %v882
  %v892 = vsel %vm192, %v882, %v884
  %v893 = vsel %vm192, %v884, %v886
  %v894 = vsel %vm192, %v886, %v888
  %v895 = vsel %vm192, %v888, %v890
  %902 = vrot.lane.b32.xlu0 %v806, 124
  %v903 = vpop.permute.xlu0 %902
  %904 = vrot.lane.b32.xlu0 %v810, 124
  %v905 = vpop.permute.xlu0 %904
  %906 = vrot.lane.b32.xlu0 %v814, 124
  %v907 = vpop.permute.xlu0 %906
  %908 = vrot.lane.b32.xlu0 %v818, 124
  %v909 = vpop.permute.xlu0 %908
  %910 = vrot.lane.b32.xlu0 %v822, 124
  %v911 = vpop.permute.xlu0 %910
  %912 = vrot.lane.b32.xlu0 %v826, 124
  %v913 = vpop.permute.xlu0 %912
  %v914 = vsel %vm216, %v903, %v905
  %v915 = vsel %vm216, %v905, %v907
  %v916 = vsel %vm216, %v907, %v909
  %v917 = vsel %vm216, %v909, %v911
  %v918 = vsel %vm216, %v911, %v913
  %925 = vrot.lane.b32.xlu0 %v806, 123
  %v926 = vpop.permute.xlu0 %925
  %927 = vrot.lane.b32.xlu0 %v810, 123
  %v928 = vpop.permute.xlu0 %927
  %929 = vrot.lane.b32.xlu0 %v814, 123
  %v930 = vpop.permute.xlu0 %929
  %931 = vrot.lane.b32.xlu0 %v818, 123
  %v932 = vpop.permute.xlu0 %931
  %933 = vrot.lane.b32.xlu0 %v822, 123
  %v934 = vpop.permute.xlu0 %933
  %935 = vrot.lane.b32.xlu0 %v826, 123
  %v936 = vpop.permute.xlu0 %935
  %v937 = vsel %vm240, %v926, %v928
  %v938 = vsel %vm240, %v928, %v930
  %v939 = vsel %vm240, %v930, %v932
  %v940 = vsel %vm240, %v932, %v934
  %v941 = vsel %vm240, %v934, %v936
  %948 = vrot.lane.b32.xlu0 %v806, 122
  %v949 = vpop.permute.xlu0 %948
  %950 = vrot.lane.b32.xlu0 %v810, 122
  %v951 = vpop.permute.xlu0 %950
  %952 = vrot.lane.b32.xlu0 %v814, 122
  %v953 = vpop.permute.xlu0 %952
  %954 = vrot.lane.b32.xlu0 %v818, 122
  %v955 = vpop.permute.xlu0 %954
  %956 = vrot.lane.b32.xlu0 %v822, 122
  %v957 = vpop.permute.xlu0 %956
  %958 = vrot.lane.b32.xlu0 %v826, 122
  %v959 = vpop.permute.xlu0 %958
  %v960 = vsel %vm264, %v949, %v951
  %v961 = vsel %vm264, %v951, %v953
  %v962 = vsel %vm264, %v953, %v955
  %v963 = vsel %vm264, %v955, %v957
  %v964 = vsel %vm264, %v957, %v959
  %971 = vrot.lane.b32.xlu0 %v806, 121
  %v972 = vpop.permute.xlu0 %971
  %973 = vrot.lane.b32.xlu0 %v810, 121
  %v974 = vpop.permute.xlu0 %973
  %975 = vrot.lane.b32.xlu0 %v814, 121
  %v976 = vpop.permute.xlu0 %975
  %977 = vrot.lane.b32.xlu0 %v818, 121
  %v978 = vpop.permute.xlu0 %977
  %979 = vrot.lane.b32.xlu0 %v822, 121
  %v980 = vpop.permute.xlu0 %979
  %981 = vrot.lane.b32.xlu0 %v826, 121
  %v982 = vpop.permute.xlu0 %981
  %v983 = vsel %vm288, %v972, %v974
  %v984 = vsel %vm288, %v974, %v976
  %v985 = vsel %vm288, %v976, %v978
  %v986 = vsel %vm288, %v978, %v980
  %v987 = vsel %vm288, %v980, %v982
  %994 = vrot.lane.b32.xlu0 %v806, 120
  %v995 = vpop.permute.xlu0 %994
  %996 = vrot.lane.b32.xlu0 %v810, 120
  %v997 = vpop.permute.xlu0 %996
  %998 = vrot.lane.b32.xlu0 %v814, 120
  %v999 = vpop.permute.xlu0 %998
  %1000 = vrot.lane.b32.xlu0 %v818, 120
  %v1001 = vpop.permute.xlu0 %1000
  %1002 = vrot.lane.b32.xlu0 %v822, 120
  %v1003 = vpop.permute.xlu0 %1002
  %1004 = vrot.lane.b32.xlu0 %v826, 120
  %v1005 = vpop.permute.xlu0 %1004
  %v1006 = vsel %vm312, %v995, %v997
  %v1007 = vsel %vm312, %v997, %v999
  %v1008 = vsel %vm312, %v999, %v1001
  %v1009 = vsel %vm312, %v1001, %v1003
  %v1010 = vsel %vm312, %v1003, %v1005
  %1017 = vrot.lane.b32.xlu0 %v806, 119
  %v1018 = vpop.permute.xlu0 %1017
  %1019 = vrot.lane.b32.xlu0 %v810, 119
  %v1020 = vpop.permute.xlu0 %1019
  %1021 = vrot.lane.b32.xlu0 %v814, 119
  %v1022 = vpop.permute.xlu0 %1021
  %1023 = vrot.lane.b32.xlu0 %v818, 119
  %v1024 = vpop.permute.xlu0 %1023
  %1025 = vrot.lane.b32.xlu0 %v822, 119
  %v1026 = vpop.permute.xlu0 %1025
  %1027 = vrot.lane.b32.xlu0 %v826, 119
  %v1028 = vpop.permute.xlu0 %1027
  %v1029 = vsel %vm336, %v1018, %v1020
  %v1030 = vsel %vm336, %v1020, %v1022
  %v1031 = vsel %vm336, %v1022, %v1024
  %v1032 = vsel %vm336, %v1024, %v1026
  %v1033 = vsel %vm336, %v1026, %v1028
  %1040 = vrot.lane.b32.xlu0 %v806, 118
  %v1041 = vpop.permute.xlu0 %1040
  %1042 = vrot.lane.b32.xlu0 %v810, 118
  %v1043 = vpop.permute.xlu0 %1042
  %1044 = vrot.lane.b32.xlu0 %v814, 118
  %v1045 = vpop.permute.xlu0 %1044
  %1046 = vrot.lane.b32.xlu0 %v818, 118
  %v1047 = vpop.permute.xlu0 %1046
  %1048 = vrot.lane.b32.xlu0 %v822, 118
  %v1049 = vpop.permute.xlu0 %1048
  %1050 = vrot.lane.b32.xlu0 %v826, 118
  %v1051 = vpop.permute.xlu0 %1050
  %v1052 = vsel %vm360, %v1041, %v1043
  %v1053 = vsel %vm360, %v1043, %v1045
  %v1054 = vsel %vm360, %v1045, %v1047
  %v1055 = vsel %vm360, %v1047, %v1049
  %v1056 = vsel %vm360, %v1049, %v1051
  %1063 = vrot.lane.b32.xlu0 %v806, 117
  %v1064 = vpop.permute.xlu0 %1063
  %1065 = vrot.lane.b32.xlu0 %v810, 117
  %v1066 = vpop.permute.xlu0 %1065
  %1067 = vrot.lane.b32.xlu0 %v814, 117
  %v1068 = vpop.permute.xlu0 %1067
  %1069 = vrot.lane.b32.xlu0 %v818, 117
  %v1070 = vpop.permute.xlu0 %1069
  %1071 = vrot.lane.b32.xlu0 %v822, 117
  %v1072 = vpop.permute.xlu0 %1071
  %1073 = vrot.lane.b32.xlu0 %v826, 117
  %v1074 = vpop.permute.xlu0 %1073
  %v1075 = vsel %vm384, %v1064, %v1066
  %v1076 = vsel %vm384, %v1066, %v1068
  %v1077 = vsel %vm384, %v1068, %v1070
  %v1078 = vsel %vm384, %v1070, %v1072
  %v1079 = vsel %vm384, %v1072, %v1074
  %1086 = vrot.lane.b32.xlu0 %v806, 116
  %v1087 = vpop.permute.xlu0 %1086
  %1088 = vrot.lane.b32.xlu0 %v810, 116
  %v1089 = vpop.permute.xlu0 %1088
  %1090 = vrot.lane.b32.xlu0 %v814, 116
  %v1091 = vpop.permute.xlu0 %1090
  %1092 = vrot.lane.b32.xlu0 %v818, 116
  %v1093 = vpop.permute.xlu0 %1092
  %1094 = vrot.lane.b32.xlu0 %v822, 116
  %v1095 = vpop.permute.xlu0 %1094
  %1096 = vrot.lane.b32.xlu0 %v826, 116
  %v1097 = vpop.permute.xlu0 %1096
  %v1098 = vsel %vm408, %v1087, %v1089
  %v1099 = vsel %vm408, %v1089, %v1091
  %v1100 = vsel %vm408, %v1091, %v1093
  %v1101 = vsel %vm408, %v1093, %v1095
  %v1102 = vsel %vm408, %v1095, %v1097
  %1109 = vrot.lane.b32.xlu0 %v806, 115
  %v1110 = vpop.permute.xlu0 %1109
  %1111 = vrot.lane.b32.xlu0 %v810, 115
  %v1112 = vpop.permute.xlu0 %1111
  %1113 = vrot.lane.b32.xlu0 %v814, 115
  %v1114 = vpop.permute.xlu0 %1113
  %1115 = vrot.lane.b32.xlu0 %v818, 115
  %v1116 = vpop.permute.xlu0 %1115
  %1117 = vrot.lane.b32.xlu0 %v822, 115
  %v1118 = vpop.permute.xlu0 %1117
  %1119 = vrot.lane.b32.xlu0 %v826, 115
  %v1120 = vpop.permute.xlu0 %1119
  %v1121 = vsel %vm432, %v1110, %v1112
  %v1122 = vsel %vm432, %v1112, %v1114
  %v1123 = vsel %vm432, %v1114, %v1116
  %v1124 = vsel %vm432, %v1116, %v1118
  %v1125 = vsel %vm432, %v1118, %v1120
  %1132 = vrot.lane.b32.xlu0 %v806, 114
  %v1133 = vpop.permute.xlu0 %1132
  %1134 = vrot.lane.b32.xlu0 %v810, 114
  %v1135 = vpop.permute.xlu0 %1134
  %1136 = vrot.lane.b32.xlu0 %v814, 114
  %v1137 = vpop.permute.xlu0 %1136
  %1138 = vrot.lane.b32.xlu0 %v818, 114
  %v1139 = vpop.permute.xlu0 %1138
  %1140 = vrot.lane.b32.xlu0 %v822, 114
  %v1141 = vpop.permute.xlu0 %1140
  %1142 = vrot.lane.b32.xlu0 %v826, 114
  %v1143 = vpop.permute.xlu0 %1142
  %v1144 = vsel %vm456, %v1133, %v1135
  %v1145 = vsel %vm456, %v1135, %v1137
  %v1146 = vsel %vm456, %v1137, %v1139
  %v1147 = vsel %vm456, %v1139, %v1141
  %v1148 = vsel %vm456, %v1141, %v1143
  %1155 = vrot.lane.b32.xlu0 %v806, 113
  %v1156 = vpop.permute.xlu0 %1155
  %1157 = vrot.lane.b32.xlu0 %v810, 113
  %v1158 = vpop.permute.xlu0 %1157
  %1159 = vrot.lane.b32.xlu0 %v814, 113
  %v1160 = vpop.permute.xlu0 %1159
  %1161 = vrot.lane.b32.xlu0 %v818, 113
  %v1162 = vpop.permute.xlu0 %1161
  %1163 = vrot.lane.b32.xlu0 %v822, 113
  %v1164 = vpop.permute.xlu0 %1163
  %1165 = vrot.lane.b32.xlu0 %v826, 113
  %v1166 = vpop.permute.xlu0 %1165
  %v1167 = vsel %vm480, %v1156, %v1158
  %v1168 = vsel %vm480, %v1158, %v1160
  %v1169 = vsel %vm480, %v1160, %v1162
  %v1170 = vsel %vm480, %v1162, %v1164
  %v1171 = vsel %vm480, %v1164, %v1166
  %v1178 = vsel %vm492, %v806, %v845
  %v1179 = vsel %vm492, %v810, %v846
  %v1180 = vsel %vm492, %v814, %v847
  %v1181 = vsel %vm492, %v818, %v848
  %v1182 = vsel %vm492, %v822, %v849
  %v1183 = vsel %vm492, %v826, %v844
  %v1184 = vsel %vm499, %v1178, %v868
  %v1185 = vsel %vm499, %v1179, %v869
  %v1186 = vsel %vm499, %v1180, %v870
  %v1187 = vsel %vm499, %v1181, %v871
  %v1188 = vsel %vm499, %v1182, %v872
  %v1189 = vsel %vm499, %v1183, %v867
  %v1190 = vsel %vm506, %v1184, %v891
  %v1191 = vsel %vm506, %v1185, %v892
  %v1192 = vsel %vm506, %v1186, %v893
  %v1193 = vsel %vm506, %v1187, %v894
  %v1194 = vsel %vm506, %v1188, %v895
  %v1195 = vsel %vm506, %v1189, %v890
  %v1196 = vsel %vm513, %v1190, %v914
  %v1197 = vsel %vm513, %v1191, %v915
  %v1198 = vsel %vm513, %v1192, %v916
  %v1199 = vsel %vm513, %v1193, %v917
  %v1200 = vsel %vm513, %v1194, %v918
  %v1201 = vsel %vm513, %v1195, %v913
  %v1202 = vsel %vm520, %v1196, %v937
  %v1203 = vsel %vm520, %v1197, %v938
  %v1204 = vsel %vm520, %v1198, %v939
  %v1205 = vsel %vm520, %v1199, %v940
  %v1206 = vsel %vm520, %v1200, %v941
  %v1207 = vsel %vm520, %v1201, %v936
  %v1208 = vsel %vm527, %v1202, %v960
  %v1209 = vsel %vm527, %v1203, %v961
  %v1210 = vsel %vm527, %v1204, %v962
  %v1211 = vsel %vm527, %v1205, %v963
  %v1212 = vsel %vm527, %v1206, %v964
  %v1213 = vsel %vm527, %v1207, %v959
  %v1214 = vsel %vm534, %v1208, %v983
  %v1215 = vsel %vm534, %v1209, %v984
  %v1216 = vsel %vm534, %v1210, %v985
  %v1217 = vsel %vm534, %v1211, %v986
  %v1218 = vsel %vm534, %v1212, %v987
  %v1219 = vsel %vm534, %v1213, %v982
  %v1220 = vsel %vm492, %v1006, %v1029
  %v1221 = vsel %vm492, %v1007, %v1030
  %v1222 = vsel %vm492, %v1008, %v1031
  %v1223 = vsel %vm492, %v1009, %v1032
  %v1224 = vsel %vm492, %v1010, %v1033
  %v1225 = vsel %vm492, %v1005, %v1028
  %v1226 = vsel %vm499, %v1220, %v1052
  %v1227 = vsel %vm499, %v1221, %v1053
  %v1228 = vsel %vm499, %v1222, %v1054
  %v1229 = vsel %vm499, %v1223, %v1055
  %v1230 = vsel %vm499, %v1224, %v1056
  %v1231 = vsel %vm499, %v1225, %v1051
  %v1232 = vsel %vm506, %v1226, %v1075
  %v1233 = vsel %vm506, %v1227, %v1076
  %v1234 = vsel %vm506, %v1228, %v1077
  %v1235 = vsel %vm506, %v1229, %v1078
  %v1236 = vsel %vm506, %v1230, %v1079
  %v1237 = vsel %vm506, %v1231, %v1074
  %v1238 = vsel %vm513, %v1232, %v1098
  %v1239 = vsel %vm513, %v1233, %v1099
  %v1240 = vsel %vm513, %v1234, %v1100
  %v1241 = vsel %vm513, %v1235, %v1101
  %v1242 = vsel %vm513, %v1236, %v1102
  %v1243 = vsel %vm513, %v1237, %v1097
  %v1244 = vsel %vm520, %v1238, %v1121
  %v1245 = vsel %vm520, %v1239, %v1122
  %v1246 = vsel %vm520, %v1240, %v1123
  %v1247 = vsel %vm520, %v1241, %v1124
  %v1248 = vsel %vm520, %v1242, %v1125
  %v1249 = vsel %vm520, %v1243, %v1120
  %v1250 = vsel %vm527, %v1244, %v1144
  %v1251 = vsel %vm527, %v1245, %v1145
  %v1252 = vsel %vm527, %v1246, %v1146
  %v1253 = vsel %vm527, %v1247, %v1147
  %v1254 = vsel %vm527, %v1248, %v1148
  %v1255 = vsel %vm527, %v1249, %v1143
  %v1256 = vsel %vm534, %v1250, %v1167
  %v1257 = vsel %vm534, %v1251, %v1168
  %v1258 = vsel %vm534, %v1252, %v1169
  %v1259 = vsel %vm534, %v1253, %v1170
  %v1260 = vsel %vm534, %v1254, %v1171
  %v1261 = vsel %vm534, %v1255, %v1166
  %1274 = vrot.lane.b32.xlu0 %v1214, 112
  %v1275 = vpop.permute.xlu0 %1274
  %1276 = vrot.lane.b32.xlu0 %v1215, 112
  %v1277 = vpop.permute.xlu0 %1276
  %1278 = vrot.lane.b32.xlu0 %v1216, 112
  %v1279 = vpop.permute.xlu0 %1278
  %1280 = vrot.lane.b32.xlu0 %v1217, 112
  %v1281 = vpop.permute.xlu0 %1280
  %1282 = vrot.lane.b32.xlu0 %v1218, 112
  %v1283 = vpop.permute.xlu0 %1282
  %1284 = vrot.lane.b32.xlu0 %v1219, 112
  %v1285 = vpop.permute.xlu0 %1284
  %1286 = vrot.lane.b32.xlu0 %v1256, 112
  %v1287 = vpop.permute.xlu0 %1286
  %1288 = vrot.lane.b32.xlu0 %v1257, 112
  %v1289 = vpop.permute.xlu0 %1288
  %1290 = vrot.lane.b32.xlu0 %v1258, 112
  %v1291 = vpop.permute.xlu0 %1290
  %1292 = vrot.lane.b32.xlu0 %v1259, 112
  %v1293 = vpop.permute.xlu0 %1292
  %1294 = vrot.lane.b32.xlu0 %v1260, 112
  %v1295 = vpop.permute.xlu0 %1294
  %1296 = vrot.lane.b32.xlu0 %v1261, 112
  %v1297 = vpop.permute.xlu0 %1296
  %v1298 = vsel %vm619, %v1275, %v1277
  %v1299 = vsel %vm619, %v1277, %v1279
  %v1300 = vsel %vm619, %v1279, %v1281
  %v1301 = vsel %vm619, %v1281, %v1283
  %v1302 = vsel %vm619, %v1283, %v1285
  %v1303 = vsel %vm619, %v1287, %v1289
  %v1304 = vsel %vm619, %v1289, %v1291
  %v1305 = vsel %vm619, %v1291, %v1293
  %v1306 = vsel %vm619, %v1293, %v1295
  %v1307 = vsel %vm619, %v1295, %v1297
  %v1320 = vpack.c.bf16 %v1256, %v1214
  %v1321 = vpack.c.bf16 %v1257, %v1215
  %v1322 = vpack.c.bf16 %v1258, %v1216
  %v1323 = vpack.c.bf16 %v1259, %v1217
  %v1324 = vpack.c.bf16 %v1260, %v1218
  %v1325 = vpack.c.bf16 %v1261, %v1219
  %v1326 = vpack.c.bf16 %v1303, %v1298
  %v1327 = vpack.c.bf16 %v1304, %v1299
  %v1328 = vpack.c.bf16 %v1305, %v1300
  %v1329 = vpack.c.bf16 %v1306, %v1301
  %v1330 = vpack.c.bf16 %v1307, %v1302
  %v1331 = vpack.c.bf16 %v1297, %v1285
  %1332 = vmatprep.subr.bf16.mxu0 %v1321
  %1333 = vmatpush1.bf16.msra.mxu0 %v1320
  %1334 = vmatprep.subr.bf16.mxu0 %v1327
  %1335 = vmatpush1.bf16.msra.mxu0 %v1326
  %1336 = vmatprep.subr.bf16.mxu0 0
  %1337 = vmatpush1.bf16.msra.mxu0 0
  %1338 = vmatprep.subr.bf16.mxu0 0
  %1339 = vmatpush1.bf16.msra.mxu0 0
  %1340 = vmatprep.subr.bf16.mxu0 0
  %1341 = vmatpush1.bf16.msra.mxu0 0
  %1342 = vmatprep.subr.bf16.mxu0 0
  %1343 = vmatpush1.bf16.msra.mxu0 0
  %1344 = vmatprep.subr.bf16.mxu0 0
  %1345 = vmatpush1.bf16.msra.mxu0 0
  %1346 = vmatprep.subr.bf16.mxu0 0
  %1347 = vmatpush1.bf16.msra.mxu0 0
  %1348 = vmatprep.subr.bf16.mxu0 0
  %1349 = vmatpush1.bf16.msra.mxu0 0
  %1350 = vmatprep.subr.bf16.mxu0 0
  %1351 = vmatpush1.bf16.msra.mxu0 0
  %1352 = vmatprep.subr.bf16.mxu0 0
  %1353 = vmatpush1.bf16.msra.mxu0 0
  %1354 = vmatprep.subr.bf16.mxu0 0
  %1355 = vmatpush1.bf16.msra.mxu0 0
  %1356 = vmatprep.subr.bf16.mxu0 0
  %1357 = vmatpush1.bf16.msra.mxu0 0
  %1358 = vmatprep.subr.bf16.mxu0 0
  %1359 = vmatpush1.bf16.msra.mxu0 0
  %1360 = vmatprep.subr.bf16.mxu0 0
  %1361 = vmatpush1.bf16.msra.mxu0 0
  %1362 = vmatprep.subr.bf16.mxu0 0
  %1363 = vmatpush1.bf16.msra.mxu0 0
  %1364 = vmatprep.mubr.bf16.mxu0 0
  %1365 = vmatmul.mubr.bf16.gmra.mrb[0].mxu0 %v671
  %v1366 = vpop.f32.mrb[0].mxu0
  %v1367 = vadd.f32 %v657, %v1366
  %v1368 = vpop.f32.mrb[0].mxu0
  %v1369 = vadd.f32 %v657, %v1368
  %v1370 = vpop.f32.mrb[0].mxu0
  %v1371 = vadd.f32 %v662, %v1370
  %v1372 = vpop.f32.mrb[0].mxu0
  %v1373 = vadd.f32 %v662, %v1372
  %1374 = vdwg.mxu0
  %1375 = vmatprep.subr.bf16.mxu0 %v1323
  %1376 = vmatpush1.bf16.msra.mxu0 %v1322
  %1377 = vmatprep.subr.bf16.mxu0 %v1329
  %1378 = vmatpush1.bf16.msra.mxu0 %v1328
  %1379 = vmatprep.subr.bf16.mxu0 0
  %1380 = vmatpush1.bf16.msra.mxu0 0
  %1381 = vmatprep.subr.bf16.mxu0 0
  %1382 = vmatpush1.bf16.msra.mxu0 0
  %1383 = vmatprep.subr.bf16.mxu0 0
  %1384 = vmatpush1.bf16.msra.mxu0 0
  %1385 = vmatprep.subr.bf16.mxu0 0
  %1386 = vmatpush1.bf16.msra.mxu0 0
  %1387 = vmatprep.subr.bf16.mxu0 0
  %1388 = vmatpush1.bf16.msra.mxu0 0
  %1389 = vmatprep.subr.bf16.mxu0 0
  %1390 = vmatpush1.bf16.msra.mxu0 0
  %1391 = vmatprep.subr.bf16.mxu0 0
  %1392 = vmatpush1.bf16.msra.mxu0 0
  %1393 = vmatprep.subr.bf16.mxu0 0
  %1394 = vmatpush1.bf16.msra.mxu0 0
  %1395 = vmatprep.subr.bf16.mxu0 0
  %1396 = vmatpush1.bf16.msra.mxu0 0
  %1397 = vmatprep.subr.bf16.mxu0 0
  %1398 = vmatpush1.bf16.msra.mxu0 0
  %1399 = vmatprep.subr.bf16.mxu0 0
  %1400 = vmatpush1.bf16.msra.mxu0 0
  %1401 = vmatprep.subr.bf16.mxu0 0
  %1402 = vmatpush1.bf16.msra.mxu0 0
  %1403 = vmatprep.subr.bf16.mxu0 0
  %1404 = vmatpush1.bf16.msra.mxu0 0
  %1405 = vmatprep.subr.bf16.mxu0 0
  %1406 = vmatpush1.bf16.msra.mxu0 0
  %1407 = vmatprep.mubr.bf16.mxu0 0
  %1408 = vmatmul.mubr.bf16.gmra.mrb[0].mxu0 %v671
  %v1409 = vpop.f32.mrb[0].mxu0
  %v1410 = vadd.f32 %v657, %v1409
  %v1411 = vpop.f32.mrb[0].mxu0
  %v1412 = vadd.f32 %v657, %v1411
  %v1413 = vpop.f32.mrb[0].mxu0
  %v1414 = vadd.f32 %v662, %v1413
  %v1415 = vpop.f32.mrb[0].mxu0
  %v1416 = vadd.f32 %v662, %v1415
  %1417 = vdwg.mxu0
  %1418 = vmatprep.subr.bf16.mxu0 %v1325
  %1419 = vmatpush1.bf16.msra.mxu0 %v1324
  %1420 = vmatprep.subr.bf16.mxu0 %v1331
  %1421 = vmatpush1.bf16.msra.mxu0 %v1330
  %1422 = vmatprep.subr.bf16.mxu0 0
  %1423 = vmatpush1.bf16.msra.mxu0 0
  %1424 = vmatprep.subr.bf16.mxu0 0
  %1425 = vmatpush1.bf16.msra.mxu0 0
  %1426 = vmatprep.subr.bf16.mxu0 0
  %1427 = vmatpush1.bf16.msra.mxu0 0
  %1428 = vmatprep.subr.bf16.mxu0 0
  %1429 = vmatpush1.bf16.msra.mxu0 0
  %1430 = vmatprep.subr.bf16.mxu0 0
  %1431 = vmatpush1.bf16.msra.mxu0 0
  %1432 = vmatprep.subr.bf16.mxu0 0
  %1433 = vmatpush1.bf16.msra.mxu0 0
  %1434 = vmatprep.subr.bf16.mxu0 0
  %1435 = vmatpush1.bf16.msra.mxu0 0
  %1436 = vmatprep.subr.bf16.mxu0 0
  %1437 = vmatpush1.bf16.msra.mxu0 0
  %1438 = vmatprep.subr.bf16.mxu0 0
  %1439 = vmatpush1.bf16.msra.mxu0 0
  %1440 = vmatprep.subr.bf16.mxu0 0
  %1441 = vmatpush1.bf16.msra.mxu0 0
  %1442 = vmatprep.subr.bf16.mxu0 0
  %1443 = vmatpush1.bf16.msra.mxu0 0
  %1444 = vmatprep.subr.bf16.mxu0 0
  %1445 = vmatpush1.bf16.msra.mxu0 0
  %1446 = vmatprep.subr.bf16.mxu0 0
  %1447 = vmatpush1.bf16.msra.mxu0 0
  %1448 = vmatprep.subr.bf16.mxu0 0
  %1449 = vmatpush1.bf16.msra.mxu0 0
  %1450 = vmatprep.mubr.bf16.mxu0 0
  %1451 = vmatmul.mubr.bf16.gmra.mrb[0].mxu0 %v671
  %v1452 = vpop.f32.mrb[0].mxu0
  %v1453 = vadd.f32 %v657, %v1452
  %v1454 = vpop.f32.mrb[0].mxu0
  %v1455 = vadd.f32 %v657, %v1454
  %v1456 = vpop.f32.mrb[0].mxu0
  %v1457 = vadd.f32 %v662, %v1456
  %v1458 = vpop.f32.mrb[0].mxu0
  %v1459 = vadd.f32 %v662, %v1458
  %1460 = vdwg.mxu0
  %v1461 = vadd.f32 %v708, %v710
  %v1462 = vadd.f32 %v1461, %v751
  %v1463 = vadd.f32 %v1462, %v753
  %v1464 = vadd.f32 %v1463, %v794
  %vm1465 = vcmask 793600
  %v1466 = vsel %vm1465, %v796, 0.0
  %v1467 = vadd.f32 %v1464, %v1466
  %1468 = vadd.xlane.f32.xlu0 %v1467
  %v1469 = vpop.xlane.xlu0 %1468
  %v1470 = vadd.f32 %v712, %v714
  %v1471 = vadd.f32 %v1470, %v755
  %v1472 = vadd.f32 %v1471, %v757
  %v1473 = vadd.f32 %v1472, %v798
  %v1474 = vsel %vm1465, %v800, 0.0
  %v1475 = vadd.f32 %v1473, %v1474
  %1476 = vadd.xlane.f32.xlu0 %v1475
  %v1477 = vpop.xlane.xlu0 %1476
  %v1478 = vadd.f32 %v1367, %v1369
  %v1479 = vadd.f32 %v1478, %v1410
  %v1480 = vadd.f32 %v1479, %v1412
  %v1481 = vadd.f32 %v1480, %v1453
  %v1482 = vsel %vm1465, %v1455, 0.0
  %v1483 = vadd.f32 %v1481, %v1482
  %1484 = vadd.xlane.f32.xlu0 %v1483
  %v1485 = vpop.xlane.xlu0 %1484
  %v1486 = vadd.f32 %v1371, %v1373
  %v1487 = vadd.f32 %v1486, %v1414
  %v1488 = vadd.f32 %v1487, %v1416
  %v1489 = vadd.f32 %v1488, %v1457
  %v1490 = vsel %vm1465, %v1459, 0.0
  %v1491 = vadd.f32 %v1489, %v1490
  %1492 = vadd.xlane.f32.xlu0 %v1491
  %v1493 = vpop.xlane.xlu0 %1492
  %v1494 = vadd.f32 %v1469, %v1485
  %v1495 = vadd.f32 %v1477, %v1493
  %v1496 = vmul.f32 %v1494, 0.00067842606
  %v1497 = vmul.f32 %v1495, 0.00067842606
  %v1498 = vsub.f32 %v708, %v1496
  %v1499 = vsub.f32 %v710, %v1496
  %v1500 = vsub.f32 %v751, %v1496
  %v1501 = vsub.f32 %v753, %v1496
  %v1502 = vsub.f32 %v794, %v1496
  %v1503 = vsub.f32 %v796, %v1496
  %v1504 = vsub.f32 %v712, %v1497
  %v1505 = vsub.f32 %v714, %v1497
  %v1506 = vsub.f32 %v755, %v1497
  %v1507 = vsub.f32 %v757, %v1497
  %v1508 = vsub.f32 %v798, %v1497
  %v1509 = vsub.f32 %v800, %v1497
  %v1510 = vsub.f32 %v1367, %v1496
  %v1511 = vsub.f32 %v1369, %v1496
  %v1512 = vsub.f32 %v1410, %v1496
  %v1513 = vsub.f32 %v1412, %v1496
  %v1514 = vsub.f32 %v1453, %v1496
  %v1515 = vsub.f32 %v1455, %v1496
  %v1516 = vsub.f32 %v1371, %v1497
  %v1517 = vsub.f32 %v1373, %v1497
  %v1518 = vsub.f32 %v1414, %v1497
  %v1519 = vsub.f32 %v1416, %v1497
  %v1520 = vsub.f32 %v1457, %v1497
  %v1521 = vsub.f32 %v1459, %v1497
  %v1522 = vmul.f32 %v1498, %v1498
  %v1523 = vmul.f32 %v1499, %v1499
  %v1524 = vmul.f32 %v1500, %v1500
  %v1525 = vmul.f32 %v1501, %v1501
  %v1526 = vmul.f32 %v1502, %v1502
  %v1527 = vmul.f32 %v1503, %v1503
  %v1528 = vmul.f32 %v1504, %v1504
  %v1529 = vmul.f32 %v1505, %v1505
  %v1530 = vmul.f32 %v1506, %v1506
  %v1531 = vmul.f32 %v1507, %v1507
  %v1532 = vmul.f32 %v1508, %v1508
  %v1533 = vmul.f32 %v1509, %v1509
  %v1534 = vadd.f32 %v1522, %v1523
  %v1535 = vadd.f32 %v1534, %v1524
  %v1536 = vadd.f32 %v1535, %v1525
  %v1537 = vadd.f32 %v1536, %v1526
  %v1538 = vsel %vm1465, %v1527, 0.0
  %v1539 = vadd.f32 %v1537, %v1538
  %1540 = vadd.xlane.f32.xlu0 %v1539
  %v1541 = vpop.xlane.xlu0 %1540
  %v1542 = vadd.f32 %v1528, %v1529
  %v1543 = vadd.f32 %v1542, %v1530
  %v1544 = vadd.f32 %v1543, %v1531
  %v1545 = vadd.f32 %v1544, %v1532
  %v1546 = vsel %vm1465, %v1533, 0.0
  %v1547 = vadd.f32 %v1545, %v1546
  %1548 = vadd.xlane.f32.xlu0 %v1547
  %v1549 = vpop.xlane.xlu0 %1548
  %v1550 = vmul.f32 %v1510, %v1510
  %v1551 = vmul.f32 %v1511, %v1511
  %v1552 = vmul.f32 %v1512, %v1512
  %v1553 = vmul.f32 %v1513, %v1513
  %v1554 = vmul.f32 %v1514, %v1514
  %v1555 = vmul.f32 %v1515, %v1515
  %v1556 = vmul.f32 %v1516, %v1516
  %v1557 = vmul.f32 %v1517, %v1517
  %v1558 = vmul.f32 %v1518, %v1518
  %v1559 = vmul.f32 %v1519, %v1519
  %v1560 = vmul.f32 %v1520, %v1520
  %v1561 = vmul.f32 %v1521, %v1521
  %v1562 = vadd.f32 %v1550, %v1551
  %v1563 = vadd.f32 %v1562, %v1552
  %v1564 = vadd.f32 %v1563, %v1553
  %v1565 = vadd.f32 %v1564, %v1554
  %v1566 = vsel %vm1465, %v1555, 0.0
  %v1567 = vadd.f32 %v1565, %v1566
  %1568 = vadd.xlane.f32.xlu0 %v1567
  %v1569 = vpop.xlane.xlu0 %1568
  %v1570 = vadd.f32 %v1556, %v1557
  %v1571 = vadd.f32 %v1570, %v1558
  %v1572 = vadd.f32 %v1571, %v1559
  %v1573 = vadd.f32 %v1572, %v1560
  %v1574 = vsel %vm1465, %v1561, 0.0
  %v1575 = vadd.f32 %v1573, %v1574
  %1576 = vadd.xlane.f32.xlu0 %v1575
  %v1577 = vpop.xlane.xlu0 %1576
  %v1578 = vadd.f32 %v1541, %v1569
  %v1579 = vadd.f32 %v1549, %v1577
  %v1580 = vmul.f32 %v1578, 0.00067842606
  %v1581 = vmul.f32 %v1579, 0.00067842606
  %v1582 = vadd.f32 %v1580, 1e-05
  %v1583 = vadd.f32 %v1581, 1e-05
  %v1584 = vrsqrt.pop %v1582
  %v1585 = vrsqrt.pop %v1583
  %v1586 = vmul.f32 %v1584, %v97
  %v1587 = vmul.f32 %v1585, %v98
  %1589 = vset.pattern.permute.xlu0 0
  %1590 = vperm.xlu0 %1589, %v1586
  %v1591 = vpop.permute.xlu0 %1590
  %1594 = vset.pattern.permute.xlu0 0
  %1595 = vperm.xlu0 %1594, %v1587
  %v1596 = vpop.permute.xlu0 %1595
  %v1598 = vmul.f32 %v1498, %v1591
  %v1599 = vmul.f32 %v1499, %v1591
  %v1600 = vmul.f32 %v1500, %v1591
  %v1601 = vmul.f32 %v1501, %v1591
  %v1602 = vmul.f32 %v1502, %v1591
  %v1603 = vmul.f32 %v1503, %v1591
  %v1604 = vmul.f32 %v1504, %v1596
  %v1605 = vmul.f32 %v1505, %v1596
  %v1606 = vmul.f32 %v1506, %v1596
  %v1607 = vmul.f32 %v1507, %v1596
  %v1608 = vmul.f32 %v1508, %v1596
  %v1609 = vmul.f32 %v1509, %v1596
  %1611 = vset.pattern.permute.xlu0 0
  %1612 = vperm.xlu0 %1611, %v99
  %v1613 = vpop.permute.xlu0 %1612
  %1616 = vset.pattern.permute.xlu0 0
  %1617 = vperm.xlu0 %1616, %v100
  %v1618 = vpop.permute.xlu0 %1617
  %v1620 = vadd.f32 %v1598, %v1613
  %v1621 = vadd.f32 %v1599, %v1613
  %v1622 = vadd.f32 %v1600, %v1613
  %v1623 = vadd.f32 %v1601, %v1613
  %v1624 = vadd.f32 %v1602, %v1613
  %v1625 = vadd.f32 %v1603, %v1613
  %v1626 = vadd.f32 %v1604, %v1618
  %v1627 = vadd.f32 %v1605, %v1618
  %v1628 = vadd.f32 %v1606, %v1618
  %v1629 = vadd.f32 %v1607, %v1618
  %v1630 = vadd.f32 %v1608, %v1618
  %v1631 = vadd.f32 %v1609, %v1618
  %v1632 = vmul.f32 %v1620, 0.5
  %v1633 = vmul.f32 %v1621, 0.5
  %v1634 = vmul.f32 %v1622, 0.5
  %v1635 = vmul.f32 %v1623, 0.5
  %v1636 = vmul.f32 %v1624, 0.5
  %v1637 = vmul.f32 %v1625, 0.5
  %v1638 = vmul.f32 %v1626, 0.5
  %v1639 = vmul.f32 %v1627, 0.5
  %v1640 = vmul.f32 %v1628, 0.5
  %v1641 = vmul.f32 %v1629, 0.5
  %v1642 = vmul.f32 %v1630, 0.5
  %v1643 = vmul.f32 %v1631, 0.5
  %v1644 = vtanh.pop %v1632
  %v1645 = vtanh.pop %v1633
  %v1646 = vtanh.pop %v1634
  %v1647 = vtanh.pop %v1635
  %v1648 = vtanh.pop %v1636
  %v1649 = vtanh.pop %v1637
  %v1650 = vtanh.pop %v1638
  %v1651 = vtanh.pop %v1639
  %v1652 = vtanh.pop %v1640
  %v1653 = vtanh.pop %v1641
  %v1654 = vtanh.pop %v1642
  %v1655 = vtanh.pop %v1643
  %v1656 = vmul.f32 %v1644, 0.5
  %v1657 = vmul.f32 %v1645, 0.5
  %v1658 = vmul.f32 %v1646, 0.5
  %v1659 = vmul.f32 %v1647, 0.5
  %v1660 = vmul.f32 %v1648, 0.5
  %v1661 = vmul.f32 %v1649, 0.5
  %v1662 = vmul.f32 %v1650, 0.5
  %v1663 = vmul.f32 %v1651, 0.5
  %v1664 = vmul.f32 %v1652, 0.5
  %v1665 = vmul.f32 %v1653, 0.5
  %v1666 = vmul.f32 %v1654, 0.5
  %v1667 = vmul.f32 %v1655, 0.5
  %v1668 = vadd.f32 %v1656, 0.5
  %v1669 = vadd.f32 %v1657, 0.5
  %v1670 = vadd.f32 %v1658, 0.5
  %v1671 = vadd.f32 %v1659, 0.5
  %v1672 = vadd.f32 %v1660, 0.5
  %v1673 = vadd.f32 %v1661, 0.5
  %v1674 = vadd.f32 %v1662, 0.5
  %v1675 = vadd.f32 %v1663, 0.5
  %v1676 = vadd.f32 %v1664, 0.5
  %v1677 = vadd.f32 %v1665, 0.5
  %v1678 = vadd.f32 %v1666, 0.5
  %v1679 = vadd.f32 %v1667, 0.5
  %v1680 = vmul.f32 %v1620, %v1668
  %v1681 = vmul.f32 %v1621, %v1669
  %v1682 = vmul.f32 %v1622, %v1670
  %v1683 = vmul.f32 %v1623, %v1671
  %v1684 = vmul.f32 %v1624, %v1672
  %v1685 = vmul.f32 %v1625, %v1673
  %v1686 = vmul.f32 %v1626, %v1674
  %v1687 = vmul.f32 %v1627, %v1675
  %v1688 = vmul.f32 %v1628, %v1676
  %v1689 = vmul.f32 %v1629, %v1677
  %v1690 = vmul.f32 %v1630, %v1678
  %v1691 = vmul.f32 %v1631, %v1679
  %v1692 = vpack.c.bf16 %v1686, %v1680
  %v1693 = vpack.c.bf16 %v1687, %v1681
  %v1694 = vpack.c.bf16 %v1688, %v1682
  %v1695 = vpack.c.bf16 %v1689, %v1683
  %v1696 = vpack.c.bf16 %v1690, %v1684
  %v1697 = vpack.c.bf16 %v1691, %v1685
  %v1698 = vmul.f32 %v1510, %v1591
  %v1699 = vmul.f32 %v1511, %v1591
  %v1700 = vmul.f32 %v1512, %v1591
  %v1701 = vmul.f32 %v1513, %v1591
  %v1702 = vmul.f32 %v1514, %v1591
  %v1703 = vmul.f32 %v1515, %v1591
  %v1704 = vmul.f32 %v1516, %v1596
  %v1705 = vmul.f32 %v1517, %v1596
  %v1706 = vmul.f32 %v1518, %v1596
  %v1707 = vmul.f32 %v1519, %v1596
  %v1708 = vmul.f32 %v1520, %v1596
  %v1709 = vmul.f32 %v1521, %v1596
  %v1710 = vadd.f32 %v1698, %v1613
  %v1711 = vadd.f32 %v1699, %v1613
  %v1712 = vadd.f32 %v1700, %v1613
  %v1713 = vadd.f32 %v1701, %v1613
  %v1714 = vadd.f32 %v1702, %v1613
  %v1715 = vadd.f32 %v1703, %v1613
  %v1716 = vadd.f32 %v1704, %v1618
  %v1717 = vadd.f32 %v1705, %v1618
  %v1718 = vadd.f32 %v1706, %v1618
  %v1719 = vadd.f32 %v1707, %v1618
  %v1720 = vadd.f32 %v1708, %v1618
  %v1721 = vadd.f32 %v1709, %v1618
  %v1722 = vmul.f32 %v1710, 0.5
  %v1723 = vmul.f32 %v1711, 0.5
  %v1724 = vmul.f32 %v1712, 0.5
  %v1725 = vmul.f32 %v1713, 0.5
  %v1726 = vmul.f32 %v1714, 0.5
  %v1727 = vmul.f32 %v1715, 0.5
  %v1728 = vmul.f32 %v1716, 0.5
  %v1729 = vmul.f32 %v1717, 0.5
  %v1730 = vmul.f32 %v1718, 0.5
  %v1731 = vmul.f32 %v1719, 0.5
  %v1732 = vmul.f32 %v1720, 0.5
  %v1733 = vmul.f32 %v1721, 0.5
  %v1734 = vtanh.pop %v1722
  %v1735 = vtanh.pop %v1723
  %v1736 = vtanh.pop %v1724
  %v1737 = vtanh.pop %v1725
  %v1738 = vtanh.pop %v1726
  %v1739 = vtanh.pop %v1727
  %v1740 = vtanh.pop %v1728
  %v1741 = vtanh.pop %v1729
  %v1742 = vtanh.pop %v1730
  %v1743 = vtanh.pop %v1731
  %v1744 = vtanh.pop %v1732
  %v1745 = vtanh.pop %v1733
  %v1746 = vmul.f32 %v1734, 0.5
  %v1747 = vmul.f32 %v1735, 0.5
  %v1748 = vmul.f32 %v1736, 0.5
  %v1749 = vmul.f32 %v1737, 0.5
  %v1750 = vmul.f32 %v1738, 0.5
  %v1751 = vmul.f32 %v1739, 0.5
  %v1752 = vmul.f32 %v1740, 0.5
  %v1753 = vmul.f32 %v1741, 0.5
  %v1754 = vmul.f32 %v1742, 0.5
  %v1755 = vmul.f32 %v1743, 0.5
  %v1756 = vmul.f32 %v1744, 0.5
  %v1757 = vmul.f32 %v1745, 0.5
  %v1758 = vadd.f32 %v1746, 0.5
  %v1759 = vadd.f32 %v1747, 0.5
  %v1760 = vadd.f32 %v1748, 0.5
  %v1761 = vadd.f32 %v1749, 0.5
  %v1762 = vadd.f32 %v1750, 0.5
  %v1763 = vadd.f32 %v1751, 0.5
  %v1764 = vadd.f32 %v1752, 0.5
  %v1765 = vadd.f32 %v1753, 0.5
  %v1766 = vadd.f32 %v1754, 0.5
  %v1767 = vadd.f32 %v1755, 0.5
  %v1768 = vadd.f32 %v1756, 0.5
  %v1769 = vadd.f32 %v1757, 0.5
  %v1770 = vmul.f32 %v1710, %v1758
  %v1771 = vmul.f32 %v1711, %v1759
  %v1772 = vmul.f32 %v1712, %v1760
  %v1773 = vmul.f32 %v1713, %v1761
  %v1774 = vmul.f32 %v1714, %v1762
  %v1775 = vmul.f32 %v1715, %v1763
  %v1776 = vmul.f32 %v1716, %v1764
  %v1777 = vmul.f32 %v1717, %v1765
  %v1778 = vmul.f32 %v1718, %v1766
  %v1779 = vmul.f32 %v1719, %v1767
  %v1780 = vmul.f32 %v1720, %v1768
  %v1781 = vmul.f32 %v1721, %v1769
  %v1782 = vpack.c.bf16 %v1776, %v1770
  %v1783 = vpack.c.bf16 %v1777, %v1771
  %v1784 = vpack.c.bf16 %v1778, %v1772
  %v1785 = vpack.c.bf16 %v1779, %v1773
  %v1786 = vpack.c.bf16 %v1780, %v1774
  %v1787 = vpack.c.bf16 %v1781, %v1775
  %v1788 = vld [vmem:[%s5] sm:$0xff]
  %v1789 = vld [vmem:[%s5 + $0x8] sm:$0xff]
  %v1790 = vld [vmem:[%s5 + $0x10] sm:$0xff]
  %v1791 = vld [vmem:[%s5 + $0x18] sm:$0xff]
  %v1792 = vld [vmem:[%s6] sm:$0xff]
  %v1793 = vld [vmem:[%s6 + $0x8] sm:$0xff]
  %v1794 = vld [vmem:[%s7] sm:$0xff]
  %v1795 = vld [vmem:[%s7 + $0x8] sm:$0xff]
  %v1796 = vld [vmem:[%s8] sm:$0xff]
  %v1797 = vld [vmem:[%s8 + $0x8] sm:$0xff]
  %v1798 = vld [vmem:[%s9] sm:$0xff]
  %v1799 = vld [vmem:[%s9 + $0x8] sm:$0xff]
  %v1800 = vld [vmem:[%s9 + $0x10] sm:$0xff]
  %v1801 = vld [vmem:[%s9 + $0x18] sm:$0xff]
  %v1802 = vld [vmem:[%s9 + $0x20] sm:$0xff]
  %v1803 = vld [vmem:[%s9 + $0x28] sm:$0xff]
  %v1804 = vld [vmem:[%s9 + $0x30] sm:$0xff]
  %v1805 = vld [vmem:[%s9 + $0x38] sm:$0xff]
  %v1806 = vld [vmem:[%s9 + $0x40] sm:$0xff]
  %v1807 = vld [vmem:[%s9 + $0x48] sm:$0xff]
  %v1808 = vld [vmem:[%s9 + $0x50] sm:$0xff]
  %v1809 = vld [vmem:[%s9 + $0x58] sm:$0xff]
  %v1810 = vld [vmem:[%s9 + $0x60] sm:$0xff]
  %v1811 = vld [vmem:[%s9 + $0x68] sm:$0xff]
  %v1812 = vld [vmem:[%s9 + $0x70] sm:$0xff]
  %v1813 = vld [vmem:[%s9 + $0x78] sm:$0xff]
  %v1814 = vld [vmem:[%s9 + $0x80] sm:$0xff]
  %v1815 = vld [vmem:[%s9 + $0x88] sm:$0xff]
  %v1816 = vld [vmem:[%s9 + $0x90] sm:$0xff]
  %v1817 = vld [vmem:[%s9 + $0x98] sm:$0xff]
  %v1818 = vld [vmem:[%s9 + $0xa0] sm:$0xff]
  %v1819 = vld [vmem:[%s9 + $0xa8] sm:$0xff]
  %v1820 = vld [vmem:[%s9 + $0xb0] sm:$0xff]
  %v1821 = vld [vmem:[%s9 + $0xb8] sm:$0xff]
  %v1822 = vld [vmem:[%s9 + $0xc0] sm:$0xff]
  %v1823 = vld [vmem:[%s9 + $0xc8] sm:$0xff]
  %v1824 = vld [vmem:[%s9 + $0xd0] sm:$0xff]
  %v1825 = vld [vmem:[%s9 + $0xd8] sm:$0xff]
  %v1826 = vld [vmem:[%s9 + $0xe0] sm:$0xff]
  %v1827 = vld [vmem:[%s9 + $0xe8] sm:$0xff]
  %v1828 = vld [vmem:[%s9 + $0xf0] sm:$0xff]
  %v1829 = vld [vmem:[%s9 + $0xf8] sm:$0xff]
  %v1830 = vld [vmem:[%s9 + $0x100] sm:$0xff]
  %v1831 = vld [vmem:[%s9 + $0x108] sm:$0xff]
  %v1832 = vld [vmem:[%s9 + $0x110] sm:$0xff]
  %v1833 = vld [vmem:[%s9 + $0x118] sm:$0xff]
  %v1834 = vld [vmem:[%s9 + $0x120] sm:$0xff]
  %v1835 = vld [vmem:[%s9 + $0x128] sm:$0xff]
  %v1836 = vld [vmem:[%s9 + $0x130] sm:$0xff]
  %v1837 = vld [vmem:[%s9 + $0x138] sm:$0xff]
  %v1838 = vld [vmem:[%s9 + $0x140] sm:$0xff]
  %v1839 = vld [vmem:[%s9 + $0x148] sm:$0xff]
  %v1840 = vld [vmem:[%s9 + $0x150] sm:$0xff]
  %v1841 = vld [vmem:[%s9 + $0x158] sm:$0xff]
  %v1842 = vld [vmem:[%s9 + $0x160] sm:$0xff]
  %v1843 = vld [vmem:[%s9 + $0x168] sm:$0xff]
  %v1844 = vld [vmem:[%s9 + $0x170] sm:$0xff]
  %v1845 = vld [vmem:[%s9 + $0x178] sm:$0xff]
  %v1846 = vld [vmem:[%s9 + $0x180] sm:$0xff]
  %v1847 = vld [vmem:[%s9 + $0x188] sm:$0xff]
  %v1848 = vld [vmem:[%s9 + $0x190] sm:$0xff]
  %v1849 = vld [vmem:[%s9 + $0x198] sm:$0xff]
  %v1850 = vld [vmem:[%s9 + $0x1a0] sm:$0xff]
  %v1851 = vld [vmem:[%s9 + $0x1a8] sm:$0xff]
  %v1852 = vld [vmem:[%s9 + $0x1b0] sm:$0xff]
  %v1853 = vld [vmem:[%s9 + $0x1b8] sm:$0xff]
  %v1854 = vld [vmem:[%s9 + $0x1c0] sm:$0xff]
  %v1855 = vld [vmem:[%s9 + $0x1c8] sm:$0xff]
  %v1856 = vld [vmem:[%s9 + $0x1d0] sm:$0xff]
  %v1857 = vld [vmem:[%s9 + $0x1d8] sm:$0xff]
  %v1858 = vld [vmem:[%s9 + $0x1e0] sm:$0xff]
  %v1859 = vld [vmem:[%s9 + $0x1e8] sm:$0xff]
  %v1860 = vld [vmem:[%s9 + $0x1f0] sm:$0xff]
  %v1861 = vld [vmem:[%s9 + $0x1f8] sm:$0xff]
  %v1862 = vld [vmem:[%s9 + $0x200] sm:$0xff]
  %v1863 = vld [vmem:[%s9 + $0x208] sm:$0xff]
  %v1864 = vld [vmem:[%s9 + $0x210] sm:$0xff]
  %v1865 = vld [vmem:[%s9 + $0x218] sm:$0xff]
  %v1866 = vld [vmem:[%s9 + $0x220] sm:$0xff]
  %v1867 = vld [vmem:[%s9 + $0x228] sm:$0xff]
  %v1868 = vld [vmem:[%s9 + $0x230] sm:$0xff]
  %v1869 = vld [vmem:[%s9 + $0x238] sm:$0xff]
  %v1870 = vld [vmem:[%s9 + $0x240] sm:$0xff]
  %v1871 = vld [vmem:[%s9 + $0x248] sm:$0xff]
  %v1872 = vld [vmem:[%s9 + $0x250] sm:$0xff]
  %v1873 = vld [vmem:[%s9 + $0x258] sm:$0xff]
  %v1874 = vld [vmem:[%s9 + $0x260] sm:$0xff]
  %v1875 = vld [vmem:[%s9 + $0x268] sm:$0xff]
  %v1876 = vld [vmem:[%s9 + $0x270] sm:$0xff]
  %v1877 = vld [vmem:[%s9 + $0x278] sm:$0xff]
  %v1878 = vld [vmem:[%s9 + $0x280] sm:$0xff]
  %v1879 = vld [vmem:[%s9 + $0x288] sm:$0xff]
  %v1880 = vld [vmem:[%s9 + $0x290] sm:$0xff]
  %v1881 = vld [vmem:[%s9 + $0x298] sm:$0xff]
  %v1882 = vld [vmem:[%s9 + $0x2a0] sm:$0xff]
  %v1883 = vld [vmem:[%s9 + $0x2a8] sm:$0xff]
  %v1884 = vld [vmem:[%s9 + $0x2b0] sm:$0xff]
  %v1885 = vld [vmem:[%s9 + $0x2b8] sm:$0xff]
  %1892 = vrot.lane.b32.xlu0 %v1692, 127
  %v1893 = vpop.permute.xlu0 %1892
  %1894 = vrot.lane.b32.xlu0 %v1693, 127
  %v1895 = vpop.permute.xlu0 %1894
  %1896 = vrot.lane.b32.xlu0 %v1694, 127
  %v1897 = vpop.permute.xlu0 %1896
  %1898 = vrot.lane.b32.xlu0 %v1695, 127
  %v1899 = vpop.permute.xlu0 %1898
  %1900 = vrot.lane.b32.xlu0 %v1696, 127
  %v1901 = vpop.permute.xlu0 %1900
  %1902 = vrot.lane.b32.xlu0 %v1697, 127
  %v1903 = vpop.permute.xlu0 %1902
  %vm1904 = vcmask 1039360
  %v1905 = vsel %vm1904, %v1893, %v1895
  %v1906 = vsel %vm1904, %v1895, %v1897
  %v1907 = vsel %vm1904, %v1897, %v1899
  %v1908 = vsel %vm1904, %v1899, %v1901
  %v1909 = vsel %vm1904, %v1901, %v1903
  %1916 = vrot.lane.b32.xlu0 %v1692, 126
  %v1917 = vpop.permute.xlu0 %1916
  %1918 = vrot.lane.b32.xlu0 %v1693, 126
  %v1919 = vpop.permute.xlu0 %1918
  %1920 = vrot.lane.b32.xlu0 %v1694, 126
  %v1921 = vpop.permute.xlu0 %1920
  %1922 = vrot.lane.b32.xlu0 %v1695, 126
  %v1923 = vpop.permute.xlu0 %1922
  %1924 = vrot.lane.b32.xlu0 %v1696, 126
  %v1925 = vpop.permute.xlu0 %1924
  %1926 = vrot.lane.b32.xlu0 %v1697, 126
  %v1927 = vpop.permute.xlu0 %1926
  %vm1928 = vcmask 1031168
  %v1929 = vsel %vm1928, %v1917, %v1919
  %v1930 = vsel %vm1928, %v1919, %v1921
  %v1931 = vsel %vm1928, %v1921, %v1923
  %v1932 = vsel %vm1928, %v1923, %v1925
  %v1933 = vsel %vm1928, %v1925, %v1927
  %1940 = vrot.lane.b32.xlu0 %v1692, 125
  %v1941 = vpop.permute.xlu0 %1940
  %1942 = vrot.lane.b32.xlu0 %v1693, 125
  %v1943 = vpop.permute.xlu0 %1942
  %1944 = vrot.lane.b32.xlu0 %v1694, 125
  %v1945 = vpop.permute.xlu0 %1944
  %1946 = vrot.lane.b32.xlu0 %v1695, 125
  %v1947 = vpop.permute.xlu0 %1946
  %1948 = vrot.lane.b32.xlu0 %v1696, 125
  %v1949 = vpop.permute.xlu0 %1948
  %1950 = vrot.lane.b32.xlu0 %v1697, 125
  %v1951 = vpop.permute.xlu0 %1950
  %vm1952 = vcmask 1022976
  %v1953 = vsel %vm1952, %v1941, %v1943
  %v1954 = vsel %vm1952, %v1943, %v1945
  %v1955 = vsel %vm1952, %v1945, %v1947
  %v1956 = vsel %vm1952, %v1947, %v1949
  %v1957 = vsel %vm1952, %v1949, %v1951
  %1964 = vrot.lane.b32.xlu0 %v1692, 124
  %v1965 = vpop.permute.xlu0 %1964
  %1966 = vrot.lane.b32.xlu0 %v1693, 124
  %v1967 = vpop.permute.xlu0 %1966
  %1968 = vrot.lane.b32.xlu0 %v1694, 124
  %v1969 = vpop.permute.xlu0 %1968
  %1970 = vrot.lane.b32.xlu0 %v1695, 124
  %v1971 = vpop.permute.xlu0 %1970
  %1972 = vrot.lane.b32.xlu0 %v1696, 124
  %v1973 = vpop.permute.xlu0 %1972
  %1974 = vrot.lane.b32.xlu0 %v1697, 124
  %v1975 = vpop.permute.xlu0 %1974
  %vm1976 = vcmask 1014784
  %v1977 = vsel %vm1976, %v1965, %v1967
  %v1978 = vsel %vm1976, %v1967, %v1969
  %v1979 = vsel %vm1976, %v1969, %v1971
  %v1980 = vsel %vm1976, %v1971, %v1973
  %v1981 = vsel %vm1976, %v1973, %v1975
  %1988 = vrot.lane.b32.xlu0 %v1692, 123
  %v1989 = vpop.permute.xlu0 %1988
  %1990 = vrot.lane.b32.xlu0 %v1693, 123
  %v1991 = vpop.permute.xlu0 %1990
  %1992 = vrot.lane.b32.xlu0 %v1694, 123
  %v1993 = vpop.permute.xlu0 %1992
  %1994 = vrot.lane.b32.xlu0 %v1695, 123
  %v1995 = vpop.permute.xlu0 %1994
  %1996 = vrot.lane.b32.xlu0 %v1696, 123
  %v1997 = vpop.permute.xlu0 %1996
  %1998 = vrot.lane.b32.xlu0 %v1697, 123
  %v1999 = vpop.permute.xlu0 %1998
  %vm2000 = vcmask 1006592
  %v2001 = vsel %vm2000, %v1989, %v1991
  %v2002 = vsel %vm2000, %v1991, %v1993
  %v2003 = vsel %vm2000, %v1993, %v1995
  %v2004 = vsel %vm2000, %v1995, %v1997
  %v2005 = vsel %vm2000, %v1997, %v1999
  %2012 = vrot.lane.b32.xlu0 %v1692, 122
  %v2013 = vpop.permute.xlu0 %2012
  %2014 = vrot.lane.b32.xlu0 %v1693, 122
  %v2015 = vpop.permute.xlu0 %2014
  %2016 = vrot.lane.b32.xlu0 %v1694, 122
  %v2017 = vpop.permute.xlu0 %2016
  %2018 = vrot.lane.b32.xlu0 %v1695, 122
  %v2019 = vpop.permute.xlu0 %2018
  %2020 = vrot.lane.b32.xlu0 %v1696, 122
  %v2021 = vpop.permute.xlu0 %2020
  %2022 = vrot.lane.b32.xlu0 %v1697, 122
  %v2023 = vpop.permute.xlu0 %2022
  %vm2024 = vcmask 998400
  %v2025 = vsel %vm2024, %v2013, %v2015
  %v2026 = vsel %vm2024, %v2015, %v2017
  %v2027 = vsel %vm2024, %v2017, %v2019
  %v2028 = vsel %vm2024, %v2019, %v2021
  %v2029 = vsel %vm2024, %v2021, %v2023
  %2036 = vrot.lane.b32.xlu0 %v1692, 121
  %v2037 = vpop.permute.xlu0 %2036
  %2038 = vrot.lane.b32.xlu0 %v1693, 121
  %v2039 = vpop.permute.xlu0 %2038
  %2040 = vrot.lane.b32.xlu0 %v1694, 121
  %v2041 = vpop.permute.xlu0 %2040
  %2042 = vrot.lane.b32.xlu0 %v1695, 121
  %v2043 = vpop.permute.xlu0 %2042
  %2044 = vrot.lane.b32.xlu0 %v1696, 121
  %v2045 = vpop.permute.xlu0 %2044
  %2046 = vrot.lane.b32.xlu0 %v1697, 121
  %v2047 = vpop.permute.xlu0 %2046
  %vm2048 = vcmask 990208
  %v2049 = vsel %vm2048, %v2037, %v2039
  %v2050 = vsel %vm2048, %v2039, %v2041
  %v2051 = vsel %vm2048, %v2041, %v2043
  %v2052 = vsel %vm2048, %v2043, %v2045
  %v2053 = vsel %vm2048, %v2045, %v2047
  %2060 = vrot.lane.b32.xlu0 %v1692, 120
  %v2061 = vpop.permute.xlu0 %2060
  %2062 = vrot.lane.b32.xlu0 %v1693, 120
  %v2063 = vpop.permute.xlu0 %2062
  %2064 = vrot.lane.b32.xlu0 %v1694, 120
  %v2065 = vpop.permute.xlu0 %2064
  %2066 = vrot.lane.b32.xlu0 %v1695, 120
  %v2067 = vpop.permute.xlu0 %2066
  %2068 = vrot.lane.b32.xlu0 %v1696, 120
  %v2069 = vpop.permute.xlu0 %2068
  %2070 = vrot.lane.b32.xlu0 %v1697, 120
  %v2071 = vpop.permute.xlu0 %2070
  %vm2072 = vcmask 982016
  %v2073 = vsel %vm2072, %v2061, %v2063
  %v2074 = vsel %vm2072, %v2063, %v2065
  %v2075 = vsel %vm2072, %v2065, %v2067
  %v2076 = vsel %vm2072, %v2067, %v2069
  %v2077 = vsel %vm2072, %v2069, %v2071
  %2084 = vrot.lane.b32.xlu0 %v1692, 119
  %v2085 = vpop.permute.xlu0 %2084
  %2086 = vrot.lane.b32.xlu0 %v1693, 119
  %v2087 = vpop.permute.xlu0 %2086
  %2088 = vrot.lane.b32.xlu0 %v1694, 119
  %v2089 = vpop.permute.xlu0 %2088
  %2090 = vrot.lane.b32.xlu0 %v1695, 119
  %v2091 = vpop.permute.xlu0 %2090
  %2092 = vrot.lane.b32.xlu0 %v1696, 119
  %v2093 = vpop.permute.xlu0 %2092
  %2094 = vrot.lane.b32.xlu0 %v1697, 119
  %v2095 = vpop.permute.xlu0 %2094
  %vm2096 = vcmask 973824
  %v2097 = vsel %vm2096, %v2085, %v2087
  %v2098 = vsel %vm2096, %v2087, %v2089
  %v2099 = vsel %vm2096, %v2089, %v2091
  %v2100 = vsel %vm2096, %v2091, %v2093
  %v2101 = vsel %vm2096, %v2093, %v2095
  %2108 = vrot.lane.b32.xlu0 %v1692, 118
  %v2109 = vpop.permute.xlu0 %2108
  %2110 = vrot.lane.b32.xlu0 %v1693, 118
  %v2111 = vpop.permute.xlu0 %2110
  %2112 = vrot.lane.b32.xlu0 %v1694, 118
  %v2113 = vpop.permute.xlu0 %2112
  %2114 = vrot.lane.b32.xlu0 %v1695, 118
  %v2115 = vpop.permute.xlu0 %2114
  %2116 = vrot.lane.b32.xlu0 %v1696, 118
  %v2117 = vpop.permute.xlu0 %2116
  %2118 = vrot.lane.b32.xlu0 %v1697, 118
  %v2119 = vpop.permute.xlu0 %2118
  %vm2120 = vcmask 965632
  %v2121 = vsel %vm2120, %v2109, %v2111
  %v2122 = vsel %vm2120, %v2111, %v2113
  %v2123 = vsel %vm2120, %v2113, %v2115
  %v2124 = vsel %vm2120, %v2115, %v2117
  %v2125 = vsel %vm2120, %v2117, %v2119
  %2132 = vrot.lane.b32.xlu0 %v1692, 117
  %v2133 = vpop.permute.xlu0 %2132
  %2134 = vrot.lane.b32.xlu0 %v1693, 117
  %v2135 = vpop.permute.xlu0 %2134
  %2136 = vrot.lane.b32.xlu0 %v1694, 117
  %v2137 = vpop.permute.xlu0 %2136
  %2138 = vrot.lane.b32.xlu0 %v1695, 117
  %v2139 = vpop.permute.xlu0 %2138
  %2140 = vrot.lane.b32.xlu0 %v1696, 117
  %v2141 = vpop.permute.xlu0 %2140
  %2142 = vrot.lane.b32.xlu0 %v1697, 117
  %v2143 = vpop.permute.xlu0 %2142
  %vm2144 = vcmask 957440
  %v2145 = vsel %vm2144, %v2133, %v2135
  %v2146 = vsel %vm2144, %v2135, %v2137
  %v2147 = vsel %vm2144, %v2137, %v2139
  %v2148 = vsel %vm2144, %v2139, %v2141
  %v2149 = vsel %vm2144, %v2141, %v2143
  %2156 = vrot.lane.b32.xlu0 %v1692, 116
  %v2157 = vpop.permute.xlu0 %2156
  %2158 = vrot.lane.b32.xlu0 %v1693, 116
  %v2159 = vpop.permute.xlu0 %2158
  %2160 = vrot.lane.b32.xlu0 %v1694, 116
  %v2161 = vpop.permute.xlu0 %2160
  %2162 = vrot.lane.b32.xlu0 %v1695, 116
  %v2163 = vpop.permute.xlu0 %2162
  %2164 = vrot.lane.b32.xlu0 %v1696, 116
  %v2165 = vpop.permute.xlu0 %2164
  %2166 = vrot.lane.b32.xlu0 %v1697, 116
  %v2167 = vpop.permute.xlu0 %2166
  %vm2168 = vcmask 949248
  %v2169 = vsel %vm2168, %v2157, %v2159
  %v2170 = vsel %vm2168, %v2159, %v2161
  %v2171 = vsel %vm2168, %v2161, %v2163
  %v2172 = vsel %vm2168, %v2163, %v2165
  %v2173 = vsel %vm2168, %v2165, %v2167
  %2180 = vrot.lane.b32.xlu0 %v1692, 115
  %v2181 = vpop.permute.xlu0 %2180
  %2182 = vrot.lane.b32.xlu0 %v1693, 115
  %v2183 = vpop.permute.xlu0 %2182
  %2184 = vrot.lane.b32.xlu0 %v1694, 115
  %v2185 = vpop.permute.xlu0 %2184
  %2186 = vrot.lane.b32.xlu0 %v1695, 115
  %v2187 = vpop.permute.xlu0 %2186
  %2188 = vrot.lane.b32.xlu0 %v1696, 115
  %v2189 = vpop.permute.xlu0 %2188
  %2190 = vrot.lane.b32.xlu0 %v1697, 115
  %v2191 = vpop.permute.xlu0 %2190
  %vm2192 = vcmask 941056
  %v2193 = vsel %vm2192, %v2181, %v2183
  %v2194 = vsel %vm2192, %v2183, %v2185
  %v2195 = vsel %vm2192, %v2185, %v2187
  %v2196 = vsel %vm2192, %v2187, %v2189
  %v2197 = vsel %vm2192, %v2189, %v2191
  %2204 = vrot.lane.b32.xlu0 %v1692, 114
  %v2205 = vpop.permute.xlu0 %2204
  %2206 = vrot.lane.b32.xlu0 %v1693, 114
  %v2207 = vpop.permute.xlu0 %2206
  %2208 = vrot.lane.b32.xlu0 %v1694, 114
  %v2209 = vpop.permute.xlu0 %2208
  %2210 = vrot.lane.b32.xlu0 %v1695, 114
  %v2211 = vpop.permute.xlu0 %2210
  %2212 = vrot.lane.b32.xlu0 %v1696, 114
  %v2213 = vpop.permute.xlu0 %2212
  %2214 = vrot.lane.b32.xlu0 %v1697, 114
  %v2215 = vpop.permute.xlu0 %2214
  %vm2216 = vcmask 932864
  %v2217 = vsel %vm2216, %v2205, %v2207
  %v2218 = vsel %vm2216, %v2207, %v2209
  %v2219 = vsel %vm2216, %v2209, %v2211
  %v2220 = vsel %vm2216, %v2211, %v2213
  %v2221 = vsel %vm2216, %v2213, %v2215
  %2228 = vrot.lane.b32.xlu0 %v1692, 113
  %v2229 = vpop.permute.xlu0 %2228
  %2230 = vrot.lane.b32.xlu0 %v1693, 113
  %v2231 = vpop.permute.xlu0 %2230
  %2232 = vrot.lane.b32.xlu0 %v1694, 113
  %v2233 = vpop.permute.xlu0 %2232
  %2234 = vrot.lane.b32.xlu0 %v1695, 113
  %v2235 = vpop.permute.xlu0 %2234
  %2236 = vrot.lane.b32.xlu0 %v1696, 113
  %v2237 = vpop.permute.xlu0 %2236
  %2238 = vrot.lane.b32.xlu0 %v1697, 113
  %v2239 = vpop.permute.xlu0 %2238
  %vm2240 = vcmask 924672
  %v2241 = vsel %vm2240, %v2229, %v2231
  %v2242 = vsel %vm2240, %v2231, %v2233
  %v2243 = vsel %vm2240, %v2233, %v2235
  %v2244 = vsel %vm2240, %v2235, %v2237
  %v2245 = vsel %vm2240, %v2237, %v2239
  %2252 = vrot.lane.b32.xlu0 %v1692, 112
  %v2253 = vpop.permute.xlu0 %2252
  %2254 = vrot.lane.b32.xlu0 %v1693, 112
  %v2255 = vpop.permute.xlu0 %2254
  %2256 = vrot.lane.b32.xlu0 %v1694, 112
  %v2257 = vpop.permute.xlu0 %2256
  %2258 = vrot.lane.b32.xlu0 %v1695, 112
  %v2259 = vpop.permute.xlu0 %2258
  %2260 = vrot.lane.b32.xlu0 %v1696, 112
  %v2261 = vpop.permute.xlu0 %2260
  %2262 = vrot.lane.b32.xlu0 %v1697, 112
  %v2263 = vpop.permute.xlu0 %2262
  %2264 = vrot.lane.b32.xlu0 %v1905, 112
  %v2265 = vpop.permute.xlu0 %2264
  %2266 = vrot.lane.b32.xlu0 %v1906, 112
  %v2267 = vpop.permute.xlu0 %2266
  %2268 = vrot.lane.b32.xlu0 %v1907, 112
  %v2269 = vpop.permute.xlu0 %2268
  %2270 = vrot.lane.b32.xlu0 %v1908, 112
  %v2271 = vpop.permute.xlu0 %2270
  %2272 = vrot.lane.b32.xlu0 %v1909, 112
  %v2273 = vpop.permute.xlu0 %2272
  %2274 = vrot.lane.b32.xlu0 %v1903, 112
  %v2275 = vpop.permute.xlu0 %2274
  %2276 = vrot.lane.b32.xlu0 %v1929, 112
  %v2277 = vpop.permute.xlu0 %2276
  %2278 = vrot.lane.b32.xlu0 %v1930, 112
  %v2279 = vpop.permute.xlu0 %2278
  %2280 = vrot.lane.b32.xlu0 %v1931, 112
  %v2281 = vpop.permute.xlu0 %2280
  %2282 = vrot.lane.b32.xlu0 %v1932, 112
  %v2283 = vpop.permute.xlu0 %2282
  %2284 = vrot.lane.b32.xlu0 %v1933, 112
  %v2285 = vpop.permute.xlu0 %2284
  %2286 = vrot.lane.b32.xlu0 %v1927, 112
  %v2287 = vpop.permute.xlu0 %2286
  %2288 = vrot.lane.b32.xlu0 %v1953, 112
  %v2289 = vpop.permute.xlu0 %2288
  %2290 = vrot.lane.b32.xlu0 %v1954, 112
  %v2291 = vpop.permute.xlu0 %2290
  %2292 = vrot.lane.b32.xlu0 %v1955, 112
  %v2293 = vpop.permute.xlu0 %2292
  %2294 = vrot.lane.b32.xlu0 %v1956, 112
  %v2295 = vpop.permute.xlu0 %2294
  %2296 = vrot.lane.b32.xlu0 %v1957, 112
  %v2297 = vpop.permute.xlu0 %2296
  %2298 = vrot.lane.b32.xlu0 %v1951, 112
  %v2299 = vpop.permute.xlu0 %2298
  %2300 = vrot.lane.b32.xlu0 %v1977, 112
  %v2301 = vpop.permute.xlu0 %2300
  %2302 = vrot.lane.b32.xlu0 %v1978, 112
  %v2303 = vpop.permute.xlu0 %2302
  %2304 = vrot.lane.b32.xlu0 %v1979, 112
  %v2305 = vpop.permute.xlu0 %2304
  %2306 = vrot.lane.b32.xlu0 %v1980, 112
  %v2307 = vpop.permute.xlu0 %2306
  %2308 = vrot.lane.b32.xlu0 %v1981, 112
  %v2309 = vpop.permute.xlu0 %2308
  %2310 = vrot.lane.b32.xlu0 %v1975, 112
  %v2311 = vpop.permute.xlu0 %2310
  %2312 = vrot.lane.b32.xlu0 %v2001, 112
  %v2313 = vpop.permute.xlu0 %2312
  %2314 = vrot.lane.b32.xlu0 %v2002, 112
  %v2315 = vpop.permute.xlu0 %2314
  %2316 = vrot.lane.b32.xlu0 %v2003, 112
  %v2317 = vpop.permute.xlu0 %2316
  %2318 = vrot.lane.b32.xlu0 %v2004, 112
  %v2319 = vpop.permute.xlu0 %2318
  %2320 = vrot.lane.b32.xlu0 %v2005, 112
  %v2321 = vpop.permute.xlu0 %2320
  %2322 = vrot.lane.b32.xlu0 %v1999, 112
  %v2323 = vpop.permute.xlu0 %2322
  %2324 = vrot.lane.b32.xlu0 %v2025, 112
  %v2325 = vpop.permute.xlu0 %2324
  %2326 = vrot.lane.b32.xlu0 %v2026, 112
  %v2327 = vpop.permute.xlu0 %2326
  %2328 = vrot.lane.b32.xlu0 %v2027, 112
  %v2329 = vpop.permute.xlu0 %2328
  %2330 = vrot.lane.b32.xlu0 %v2028, 112
  %v2331 = vpop.permute.xlu0 %2330
  %2332 = vrot.lane.b32.xlu0 %v2029, 112
  %v2333 = vpop.permute.xlu0 %2332
  %2334 = vrot.lane.b32.xlu0 %v2023, 112
  %v2335 = vpop.permute.xlu0 %2334
  %2336 = vrot.lane.b32.xlu0 %v2049, 112
  %v2337 = vpop.permute.xlu0 %2336
  %2338 = vrot.lane.b32.xlu0 %v2050, 112
  %v2339 = vpop.permute.xlu0 %2338
  %2340 = vrot.lane.b32.xlu0 %v2051, 112
  %v2341 = vpop.permute.xlu0 %2340
  %2342 = vrot.lane.b32.xlu0 %v2052, 112
  %v2343 = vpop.permute.xlu0 %2342
  %2344 = vrot.lane.b32.xlu0 %v2053, 112
  %v2345 = vpop.permute.xlu0 %2344
  %2346 = vrot.lane.b32.xlu0 %v2047, 112
  %v2347 = vpop.permute.xlu0 %2346
  %2348 = vrot.lane.b32.xlu0 %v2073, 112
  %v2349 = vpop.permute.xlu0 %2348
  %2350 = vrot.lane.b32.xlu0 %v2074, 112
  %v2351 = vpop.permute.xlu0 %2350
  %2352 = vrot.lane.b32.xlu0 %v2075, 112
  %v2353 = vpop.permute.xlu0 %2352
  %2354 = vrot.lane.b32.xlu0 %v2076, 112
  %v2355 = vpop.permute.xlu0 %2354
  %2356 = vrot.lane.b32.xlu0 %v2077, 112
  %v2357 = vpop.permute.xlu0 %2356
  %2358 = vrot.lane.b32.xlu0 %v2071, 112
  %v2359 = vpop.permute.xlu0 %2358
  %2360 = vrot.lane.b32.xlu0 %v2097, 112
  %v2361 = vpop.permute.xlu0 %2360
  %2362 = vrot.lane.b32.xlu0 %v2098, 112
  %v2363 = vpop.permute.xlu0 %2362
  %2364 = vrot.lane.b32.xlu0 %v2099, 112
  %v2365 = vpop.permute.xlu0 %2364
  %2366 = vrot.lane.b32.xlu0 %v2100, 112
  %v2367 = vpop.permute.xlu0 %2366
  %2368 = vrot.lane.b32.xlu0 %v2101, 112
  %v2369 = vpop.permute.xlu0 %2368
  %2370 = vrot.lane.b32.xlu0 %v2095, 112
  %v2371 = vpop.permute.xlu0 %2370
  %2372 = vrot.lane.b32.xlu0 %v2121, 112
  %v2373 = vpop.permute.xlu0 %2372
  %2374 = vrot.lane.b32.xlu0 %v2122, 112
  %v2375 = vpop.permute.xlu0 %2374
  %2376 = vrot.lane.b32.xlu0 %v2123, 112
  %v2377 = vpop.permute.xlu0 %2376
  %2378 = vrot.lane.b32.xlu0 %v2124, 112
  %v2379 = vpop.permute.xlu0 %2378
  %2380 = vrot.lane.b32.xlu0 %v2125, 112
  %v2381 = vpop.permute.xlu0 %2380
  %2382 = vrot.lane.b32.xlu0 %v2119, 112
  %v2383 = vpop.permute.xlu0 %2382
  %2384 = vrot.lane.b32.xlu0 %v2145, 112
  %v2385 = vpop.permute.xlu0 %2384
  %2386 = vrot.lane.b32.xlu0 %v2146, 112
  %v2387 = vpop.permute.xlu0 %2386
  %2388 = vrot.lane.b32.xlu0 %v2147, 112
  %v2389 = vpop.permute.xlu0 %2388
  %2390 = vrot.lane.b32.xlu0 %v2148, 112
  %v2391 = vpop.permute.xlu0 %2390
  %2392 = vrot.lane.b32.xlu0 %v2149, 112
  %v2393 = vpop.permute.xlu0 %2392
  %2394 = vrot.lane.b32.xlu0 %v2143, 112
  %v2395 = vpop.permute.xlu0 %2394
  %2396 = vrot.lane.b32.xlu0 %v2169, 112
  %v2397 = vpop.permute.xlu0 %2396
  %2398 = vrot.lane.b32.xlu0 %v2170, 112
  %v2399 = vpop.permute.xlu0 %2398
  %2400 = vrot.lane.b32.xlu0 %v2171, 112
  %v2401 = vpop.permute.xlu0 %2400
  %2402 = vrot.lane.b32.xlu0 %v2172, 112
  %v2403 = vpop.permute.xlu0 %2402
  %2404 = vrot.lane.b32.xlu0 %v2173, 112
  %v2405 = vpop.permute.xlu0 %2404
  %2406 = vrot.lane.b32.xlu0 %v2167, 112
  %v2407 = vpop.permute.xlu0 %2406
  %2408 = vrot.lane.b32.xlu0 %v2193, 112
  %v2409 = vpop.permute.xlu0 %2408
  %2410 = vrot.lane.b32.xlu0 %v2194, 112
  %v2411 = vpop.permute.xlu0 %2410
  %2412 = vrot.lane.b32.xlu0 %v2195, 112
  %v2413 = vpop.permute.xlu0 %2412
  %2414 = vrot.lane.b32.xlu0 %v2196, 112
  %v2415 = vpop.permute.xlu0 %2414
  %2416 = vrot.lane.b32.xlu0 %v2197, 112
  %v2417 = vpop.permute.xlu0 %2416
  %2418 = vrot.lane.b32.xlu0 %v2191, 112
  %v2419 = vpop.permute.xlu0 %2418
  %2420 = vrot.lane.b32.xlu0 %v2217, 112
  %v2421 = vpop.permute.xlu0 %2420
  %2422 = vrot.lane.b32.xlu0 %v2218, 112
  %v2423 = vpop.permute.xlu0 %2422
  %2424 = vrot.lane.b32.xlu0 %v2219, 112
  %v2425 = vpop.permute.xlu0 %2424
  %2426 = vrot.lane.b32.xlu0 %v2220, 112
  %v2427 = vpop.permute.xlu0 %2426
  %2428 = vrot.lane.b32.xlu0 %v2221, 112
  %v2429 = vpop.permute.xlu0 %2428
  %2430 = vrot.lane.b32.xlu0 %v2215, 112
  %v2431 = vpop.permute.xlu0 %2430
  %2432 = vrot.lane.b32.xlu0 %v2241, 112
  %v2433 = vpop.permute.xlu0 %2432
  %2434 = vrot.lane.b32.xlu0 %v2242, 112
  %v2435 = vpop.permute.xlu0 %2434
  %2436 = vrot.lane.b32.xlu0 %v2243, 112
  %v2437 = vpop.permute.xlu0 %2436
  %2438 = vrot.lane.b32.xlu0 %v2244, 112
  %v2439 = vpop.permute.xlu0 %2438
  %2440 = vrot.lane.b32.xlu0 %v2245, 112
  %v2441 = vpop.permute.xlu0 %2440
  %2442 = vrot.lane.b32.xlu0 %v2239, 112
  %v2443 = vpop.permute.xlu0 %2442
  %vm2444 = vcmask 916480
  %v2445 = vsel %vm2444, %v2253, %v2255
  %v2446 = vsel %vm2444, %v2255, %v2257
  %v2447 = vsel %vm2444, %v2257, %v2259
  %v2448 = vsel %vm2444, %v2259, %v2261
  %v2449 = vsel %vm2444, %v2261, %v2263
  %v2450 = vsel %vm2444, %v2265, %v2267
  %v2451 = vsel %vm2444, %v2267, %v2269
  %v2452 = vsel %vm2444, %v2269, %v2271
  %v2453 = vsel %vm2444, %v2271, %v2273
  %v2454 = vsel %vm2444, %v2273, %v2275
  %v2455 = vsel %vm2444, %v2277, %v2279
  %v2456 = vsel %vm2444, %v2279, %v2281
  %v2457 = vsel %vm2444, %v2281, %v2283
  %v2458 = vsel %vm2444, %v2283, %v2285
  %v2459 = vsel %vm2444, %v2285, %v2287
  %v2460 = vsel %vm2444, %v2289, %v2291
  %v2461 = vsel %vm2444, %v2291, %v2293
  %v2462 = vsel %vm2444, %v2293, %v2295
  %v2463 = vsel %vm2444, %v2295, %v2297
  %v2464 = vsel %vm2444, %v2297, %v2299
  %v2465 = vsel %vm2444, %v2301, %v2303
  %v2466 = vsel %vm2444, %v2303, %v2305
  %v2467 = vsel %vm2444, %v2305, %v2307
  %v2468 = vsel %vm2444, %v2307, %v2309
  %v2469 = vsel %vm2444, %v2309, %v2311
  %v2470 = vsel %vm2444, %v2313, %v2315
  %v2471 = vsel %vm2444, %v2315, %v2317
  %v2472 = vsel %vm2444, %v2317, %v2319
  %v2473 = vsel %vm2444, %v2319, %v2321
  %v2474 = vsel %vm2444, %v2321, %v2323
  %v2475 = vsel %vm2444, %v2325, %v2327
  %v2476 = vsel %vm2444, %v2327, %v2329
  %v2477 = vsel %vm2444, %v2329, %v2331
  %v2478 = vsel %vm2444, %v2331, %v2333
  %v2479 = vsel %vm2444, %v2333, %v2335
  %v2480 = vsel %vm2444, %v2337, %v2339
  %v2481 = vsel %vm2444, %v2339, %v2341
  %v2482 = vsel %vm2444, %v2341, %v2343
  %v2483 = vsel %vm2444, %v2343, %v2345
  %v2484 = vsel %vm2444, %v2345, %v2347
  %v2485 = vsel %vm2444, %v2349, %v2351
  %v2486 = vsel %vm2444, %v2351, %v2353
  %v2487 = vsel %vm2444, %v2353, %v2355
  %v2488 = vsel %vm2444, %v2355, %v2357
  %v2489 = vsel %vm2444, %v2357, %v2359
  %v2490 = vsel %vm2444, %v2361, %v2363
  %v2491 = vsel %vm2444, %v2363, %v2365
  %v2492 = vsel %vm2444, %v2365, %v2367
  %v2493 = vsel %vm2444, %v2367, %v2369
  %v2494 = vsel %vm2444, %v2369, %v2371
  %v2495 = vsel %vm2444, %v2373, %v2375
  %v2496 = vsel %vm2444, %v2375, %v2377
  %v2497 = vsel %vm2444, %v2377, %v2379
  %v2498 = vsel %vm2444, %v2379, %v2381
  %v2499 = vsel %vm2444, %v2381, %v2383
  %v2500 = vsel %vm2444, %v2385, %v2387
  %v2501 = vsel %vm2444, %v2387, %v2389
  %v2502 = vsel %vm2444, %v2389, %v2391
  %v2503 = vsel %vm2444, %v2391, %v2393
  %v2504 = vsel %vm2444, %v2393, %v2395
  %v2505 = vsel %vm2444, %v2397, %v2399
  %v2506 = vsel %vm2444, %v2399, %v2401
  %v2507 = vsel %vm2444, %v2401, %v2403
  %v2508 = vsel %vm2444, %v2403, %v2405
  %v2509 = vsel %vm2444, %v2405, %v2407
  %v2510 = vsel %vm2444, %v2409, %v2411
  %v2511 = vsel %vm2444, %v2411, %v2413
  %v2512 = vsel %vm2444, %v2413, %v2415
  %v2513 = vsel %vm2444, %v2415, %v2417
  %v2514 = vsel %vm2444, %v2417, %v2419
  %v2515 = vsel %vm2444, %v2421, %v2423
  %v2516 = vsel %vm2444, %v2423, %v2425
  %v2517 = vsel %vm2444, %v2425, %v2427
  %v2518 = vsel %vm2444, %v2427, %v2429
  %v2519 = vsel %vm2444, %v2429, %v2431
  %v2520 = vsel %vm2444, %v2433, %v2435
  %v2521 = vsel %vm2444, %v2435, %v2437
  %v2522 = vsel %vm2444, %v2437, %v2439
  %v2523 = vsel %vm2444, %v2439, %v2441
  %v2524 = vsel %vm2444, %v2441, %v2443
  %2622 = vset.pattern.permute.xlu0 0
  %2623 = vperm.xlu0 %2622, %v1792
  %v2624 = vpop.permute.xlu0 %2623
  %2627 = vset.pattern.permute.xlu0 0
  %2628 = vperm.xlu0 %2627, %v1793
  %v2629 = vpop.permute.xlu0 %2628
  %v2635 = vunpack.c.l.b16 %v1788
  %v2636 = vunpack.c.h.b16 %v1788
  %v2637 = vunpack.c.l.b16 %v1789
  %v2638 = vunpack.c.h.b16 %v1789
  %v2639 = vunpack.c.l.b16 %v1790
  %v2640 = vunpack.c.h.b16 %v1790
  %v2641 = vunpack.c.l.b16 %v1791
  %v2642 = vunpack.c.h.b16 %v1791
  %v2643 = vpack.c.b16 %v2639, %v2635
  %v2644 = vpack.c.b16 %v2640, %v2636
  %v2645 = vpack.c.b16 %v2641, %v2637
  %v2646 = vpack.c.b16 %v2642, %v2638
  %2651 = vmatprep.subr.bf16.mxu0 %v1693
  %2652 = vmatpush1.bf16.msra.mxu0 %v1692
  %2653 = vmatprep.subr.bf16.mxu0 %v1906
  %2654 = vmatpush1.bf16.msra.mxu0 %v1905
  %2655 = vmatprep.subr.bf16.mxu0 %v1930
  %2656 = vmatpush1.bf16.msra.mxu0 %v1929
  %2657 = vmatprep.subr.bf16.mxu0 %v1954
  %2658 = vmatpush1.bf16.msra.mxu0 %v1953
  %2659 = vmatprep.subr.bf16.mxu0 %v1978
  %2660 = vmatpush1.bf16.msra.mxu0 %v1977
  %2661 = vmatprep.subr.bf16.mxu0 %v2002
  %2662 = vmatpush1.bf16.msra.mxu0 %v2001
  %2663 = vmatprep.subr.bf16.mxu0 %v2026
  %2664 = vmatpush1.bf16.msra.mxu0 %v2025
  %2665 = vmatprep.subr.bf16.mxu0 %v2050
  %2666 = vmatpush1.bf16.msra.mxu0 %v2049
  %2667 = vmatprep.subr.bf16.mxu0 %v2074
  %2668 = vmatpush1.bf16.msra.mxu0 %v2073
  %2669 = vmatprep.subr.bf16.mxu0 %v2098
  %2670 = vmatpush1.bf16.msra.mxu0 %v2097
  %2671 = vmatprep.subr.bf16.mxu0 %v2122
  %2672 = vmatpush1.bf16.msra.mxu0 %v2121
  %2673 = vmatprep.subr.bf16.mxu0 %v2146
  %2674 = vmatpush1.bf16.msra.mxu0 %v2145
  %2675 = vmatprep.subr.bf16.mxu0 %v2170
  %2676 = vmatpush1.bf16.msra.mxu0 %v2169
  %2677 = vmatprep.subr.bf16.mxu0 %v2194
  %2678 = vmatpush1.bf16.msra.mxu0 %v2193
  %2679 = vmatprep.subr.bf16.mxu0 %v2218
  %2680 = vmatpush1.bf16.msra.mxu0 %v2217
  %2681 = vmatprep.subr.bf16.mxu0 %v2242
  %2682 = vmatpush1.bf16.msra.mxu0 %v2241
  %2683 = vmatprep.mubr.bf16.mxu0 %v2644
  %2684 = vmatmul.mubr.bf16.gmra.mrb[0].mxu0 %v2643
  %v2685 = vpop.f32.mrb[0].mxu0
  %v2686 = vadd.f32 %v2624, %v2685
  %v2687 = vpop.f32.mrb[0].mxu0
  %v2688 = vadd.f32 %v2624, %v2687
  %v2689 = vpop.f32.mrb[0].mxu0
  %v2690 = vadd.f32 %v2629, %v2689
  %v2691 = vpop.f32.mrb[0].mxu0
  %v2692 = vadd.f32 %v2629, %v2691
  %2693 = vdwg.mxu0
  %2694 = vmatprep.subr.bf16.mxu0 %v2446
  %2695 = vmatpush1.bf16.msra.mxu0 %v2445
  %2696 = vmatprep.subr.bf16.mxu0 %v2451
  %2697 = vmatpush1.bf16.msra.mxu0 %v2450
  %2698 = vmatprep.subr.bf16.mxu0 %v2456
  %2699 = vmatpush1.bf16.msra.mxu0 %v2455
  %2700 = vmatprep.subr.bf16.mxu0 %v2461
  %2701 = vmatpush1.bf16.msra.mxu0 %v2460
  %2702 = vmatprep.subr.bf16.mxu0 %v2466
  %2703 = vmatpush1.bf16.msra.mxu0 %v2465
  %2704 = vmatprep.subr.bf16.mxu0 %v2471
  %2705 = vmatpush1.bf16.msra.mxu0 %v2470
  %2706 = vmatprep.subr.bf16.mxu0 %v2476
  %2707 = vmatpush1.bf16.msra.mxu0 %v2475
  %2708 = vmatprep.subr.bf16.mxu0 %v2481
  %2709 = vmatpush1.bf16.msra.mxu0 %v2480
  %2710 = vmatprep.subr.bf16.mxu0 %v2486
  %2711 = vmatpush1.bf16.msra.mxu0 %v2485
  %2712 = vmatprep.subr.bf16.mxu0 %v2491
  %2713 = vmatpush1.bf16.msra.mxu0 %v2490
  %2714 = vmatprep.subr.bf16.mxu0 %v2496
  %2715 = vmatpush1.bf16.msra.mxu0 %v2495
  %2716 = vmatprep.subr.bf16.mxu0 %v2501
  %2717 = vmatpush1.bf16.msra.mxu0 %v2500
  %2718 = vmatprep.subr.bf16.mxu0 %v2506
  %2719 = vmatpush1.bf16.msra.mxu0 %v2505
  %2720 = vmatprep.subr.bf16.mxu0 %v2511
  %2721 = vmatpush1.bf16.msra.mxu0 %v2510
  %2722 = vmatprep.subr.bf16.mxu0 %v2516
  %2723 = vmatpush1.bf16.msra.mxu0 %v2515
  %2724 = vmatprep.subr.bf16.mxu0 %v2521
  %2725 = vmatpush1.bf16.msra.mxu0 %v2520
  %2726 = vmatprep.mubr.bf16.mxu0 %v2646
  %2727 = vmatmul.mubr.bf16.gmra.mrb[0].mxu0 %v2645
  %v2728 = vpop.f32.mrb[0].mxu0
  %v2729 = vadd.f32 %v2686, %v2728
  %v2730 = vpop.f32.mrb[0].mxu0
  %v2731 = vadd.f32 %v2688, %v2730
  %v2732 = vpop.f32.mrb[0].mxu0
  %v2733 = vadd.f32 %v2690, %v2732
  %v2734 = vpop.f32.mrb[0].mxu0
  %v2735 = vadd.f32 %v2692, %v2734
  %2736 = vdwg.mxu0
  %2737 = vmatprep.subr.bf16.mxu0 %v1695
  %2738 = vmatpush1.bf16.msra.mxu0 %v1694
  %2739 = vmatprep.subr.bf16.mxu0 %v1908
  %2740 = vmatpush1.bf16.msra.mxu0 %v1907
  %2741 = vmatprep.subr.bf16.mxu0 %v1932
  %2742 = vmatpush1.bf16.msra.mxu0 %v1931
  %2743 = vmatprep.subr.bf16.mxu0 %v1956
  %2744 = vmatpush1.bf16.msra.mxu0 %v1955
  %2745 = vmatprep.subr.bf16.mxu0 %v1980
  %2746 = vmatpush1.bf16.msra.mxu0 %v1979
  %2747 = vmatprep.subr.bf16.mxu0 %v2004
  %2748 = vmatpush1.bf16.msra.mxu0 %v2003
  %2749 = vmatprep.subr.bf16.mxu0 %v2028
  %2750 = vmatpush1.bf16.msra.mxu0 %v2027
  %2751 = vmatprep.subr.bf16.mxu0 %v2052
  %2752 = vmatpush1.bf16.msra.mxu0 %v2051
  %2753 = vmatprep.subr.bf16.mxu0 %v2076
  %2754 = vmatpush1.bf16.msra.mxu0 %v2075
  %2755 = vmatprep.subr.bf16.mxu0 %v2100
  %2756 = vmatpush1.bf16.msra.mxu0 %v2099
  %2757 = vmatprep.subr.bf16.mxu0 %v2124
  %2758 = vmatpush1.bf16.msra.mxu0 %v2123
  %2759 = vmatprep.subr.bf16.mxu0 %v2148
  %2760 = vmatpush1.bf16.msra.mxu0 %v2147
  %2761 = vmatprep.subr.bf16.mxu0 %v2172
  %2762 = vmatpush1.bf16.msra.mxu0 %v2171
  %2763 = vmatprep.subr.bf16.mxu0 %v2196
  %2764 = vmatpush1.bf16.msra.mxu0 %v2195
  %2765 = vmatprep.subr.bf16.mxu0 %v2220
  %2766 = vmatpush1.bf16.msra.mxu0 %v2219
  %2767 = vmatprep.subr.bf16.mxu0 %v2244
  %2768 = vmatpush1.bf16.msra.mxu0 %v2243
  %2769 = vmatprep.mubr.bf16.mxu0 %v2644
  %2770 = vmatmul.mubr.bf16.gmra.mrb[0].mxu0 %v2643
  %v2771 = vpop.f32.mrb[0].mxu0
  %v2772 = vadd.f32 %v2624, %v2771
  %v2773 = vpop.f32.mrb[0].mxu0
  %v2774 = vadd.f32 %v2624, %v2773
  %v2775 = vpop.f32.mrb[0].mxu0
  %v2776 = vadd.f32 %v2629, %v2775
  %v2777 = vpop.f32.mrb[0].mxu0
  %v2778 = vadd.f32 %v2629, %v2777
  %2779 = vdwg.mxu0
  %2780 = vmatprep.subr.bf16.mxu0 %v2448
  %2781 = vmatpush1.bf16.msra.mxu0 %v2447
  %2782 = vmatprep.subr.bf16.mxu0 %v2453
  %2783 = vmatpush1.bf16.msra.mxu0 %v2452
  %2784 = vmatprep.subr.bf16.mxu0 %v2458
  %2785 = vmatpush1.bf16.msra.mxu0 %v2457
  %2786 = vmatprep.subr.bf16.mxu0 %v2463
  %2787 = vmatpush1.bf16.msra.mxu0 %v2462
  %2788 = vmatprep.subr.bf16.mxu0 %v2468
  %2789 = vmatpush1.bf16.msra.mxu0 %v2467
  %2790 = vmatprep.subr.bf16.mxu0 %v2473
  %2791 = vmatpush1.bf16.msra.mxu0 %v2472
  %2792 = vmatprep.subr.bf16.mxu0 %v2478
  %2793 = vmatpush1.bf16.msra.mxu0 %v2477
  %2794 = vmatprep.subr.bf16.mxu0 %v2483
  %2795 = vmatpush1.bf16.msra.mxu0 %v2482
  %2796 = vmatprep.subr.bf16.mxu0 %v2488
  %2797 = vmatpush1.bf16.msra.mxu0 %v2487
  %2798 = vmatprep.subr.bf16.mxu0 %v2493
  %2799 = vmatpush1.bf16.msra.mxu0 %v2492
  %2800 = vmatprep.subr.bf16.mxu0 %v2498
  %2801 = vmatpush1.bf16.msra.mxu0 %v2497
  %2802 = vmatprep.subr.bf16.mxu0 %v2503
  %2803 = vmatpush1.bf16.msra.mxu0 %v2502
  %2804 = vmatprep.subr.bf16.mxu0 %v2508
  %2805 = vmatpush1.bf16.msra.mxu0 %v2507
  %2806 = vmatprep.subr.bf16.mxu0 %v2513
  %2807 = vmatpush1.bf16.msra.mxu0 %v2512
  %2808 = vmatprep.subr.bf16.mxu0 %v2518
  %2809 = vmatpush1.bf16.msra.mxu0 %v2517
  %2810 = vmatprep.subr.bf16.mxu0 %v2523
  %2811 = vmatpush1.bf16.msra.mxu0 %v2522
  %2812 = vmatprep.mubr.bf16.mxu0 %v2646
  %2813 = vmatmul.mubr.bf16.gmra.mrb[0].mxu0 %v2645
  %v2814 = vpop.f32.mrb[0].mxu0
  %v2815 = vadd.f32 %v2772, %v2814
  %v2816 = vpop.f32.mrb[0].mxu0
  %v2817 = vadd.f32 %v2774, %v2816
  %v2818 = vpop.f32.mrb[0].mxu0
  %v2819 = vadd.f32 %v2776, %v2818
  %v2820 = vpop.f32.mrb[0].mxu0
  %v2821 = vadd.f32 %v2778, %v2820
  %2822 = vdwg.mxu0
  %2823 = vmatprep.subr.bf16.mxu0 %v1697
  %2824 = vmatpush1.bf16.msra.mxu0 %v1696
  %2825 = vmatprep.subr.bf16.mxu0 %v1903
  %2826 = vmatpush1.bf16.msra.mxu0 %v1909
  %2827 = vmatprep.subr.bf16.mxu0 %v1927
  %2828 = vmatpush1.bf16.msra.mxu0 %v1933
  %2829 = vmatprep.subr.bf16.mxu0 %v1951
  %2830 = vmatpush1.bf16.msra.mxu0 %v1957
  %2831 = vmatprep.subr.bf16.mxu0 %v1975
  %2832 = vmatpush1.bf16.msra.mxu0 %v1981
  %2833 = vmatprep.subr.bf16.mxu0 %v1999
  %2834 = vmatpush1.bf16.msra.mxu0 %v2005
  %2835 = vmatprep.subr.bf16.mxu0 %v2023
  %2836 = vmatpush1.bf16.msra.mxu0 %v2029
  %2837 = vmatprep.subr.bf16.mxu0 %v2047
  %2838 = vmatpush1.bf16.msra.mxu0 %v2053
  %2839 = vmatprep.subr.bf16.mxu0 %v2071
  %2840 = vmatpush1.bf16.msra.mxu0 %v2077
  %2841 = vmatprep.subr.bf16.mxu0 %v2095
  %2842 = vmatpush1.bf16.msra.mxu0 %v2101
  %2843 = vmatprep.subr.bf16.mxu0 %v2119
  %2844 = vmatpush1.bf16.msra.mxu0 %v2125
  %2845 = vmatprep.subr.bf16.mxu0 %v2143
  %2846 = vmatpush1.bf16.msra.mxu0 %v2149
  %2847 = vmatprep.subr.bf16.mxu0 %v2167
  %2848 = vmatpush1.bf16.msra.mxu0 %v2173
  %2849 = vmatprep.subr.bf16.mxu0 %v2191
  %2850 = vmatpush1.bf16.msra.mxu0 %v2197
  %2851 = vmatprep.subr.bf16.mxu0 %v2215
  %2852 = vmatpush1.bf16.msra.mxu0 %v2221
  %2853 = vmatprep.subr.bf16.mxu0 %v2239
  %2854 = vmatpush1.bf16.msra.mxu0 %v2245
  %2855 = vmatprep.mubr.bf16.mxu0 %v2644
  %2856 = vmatmul.mubr.bf16.gmra.mrb[0].mxu0 %v2643
  %v2857 = vpop.f32.mrb[0].mxu0
  %v2858 = vadd.f32 %v2624, %v2857
  %v2859 = vpop.f32.mrb[0].mxu0
  %v2860 = vadd.f32 %v2624, %v2859
  %v2861 = vpop.f32.mrb[0].mxu0
  %v2862 = vadd.f32 %v2629, %v2861
  %v2863 = vpop.f32.mrb[0].mxu0
  %v2864 = vadd.f32 %v2629, %v2863
  %2865 = vdwg.mxu0
  %2866 = vmatprep.subr.bf16.mxu0 %v2263
  %2867 = vmatpush1.bf16.msra.mxu0 %v2449
  %2868 = vmatprep.subr.bf16.mxu0 %v2275
  %2869 = vmatpush1.bf16.msra.mxu0 %v2454
  %2870 = vmatprep.subr.bf16.mxu0 %v2287
  %2871 = vmatpush1.bf16.msra.mxu0 %v2459
  %2872 = vmatprep.subr.bf16.mxu0 %v2299
  %2873 = vmatpush1.bf16.msra.mxu0 %v2464
  %2874 = vmatprep.subr.bf16.mxu0 %v2311
  %2875 = vmatpush1.bf16.msra.mxu0 %v2469
  %2876 = vmatprep.subr.bf16.mxu0 %v2323
  %2877 = vmatpush1.bf16.msra.mxu0 %v2474
  %2878 = vmatprep.subr.bf16.mxu0 %v2335
  %2879 = vmatpush1.bf16.msra.mxu0 %v2479
  %2880 = vmatprep.subr.bf16.mxu0 %v2347
  %2881 = vmatpush1.bf16.msra.mxu0 %v2484
  %2882 = vmatprep.subr.bf16.mxu0 %v2359
  %2883 = vmatpush1.bf16.msra.mxu0 %v2489
  %2884 = vmatprep.subr.bf16.mxu0 %v2371
  %2885 = vmatpush1.bf16.msra.mxu0 %v2494
  %2886 = vmatprep.subr.bf16.mxu0 %v2383
  %2887 = vmatpush1.bf16.msra.mxu0 %v2499
  %2888 = vmatprep.subr.bf16.mxu0 %v2395
  %2889 = vmatpush1.bf16.msra.mxu0 %v2504
  %2890 = vmatprep.subr.bf16.mxu0 %v2407
  %2891 = vmatpush1.bf16.msra.mxu0 %v2509
  %2892 = vmatprep.subr.bf16.mxu0 %v2419
  %2893 = vmatpush1.bf16.msra.mxu0 %v2514
  %2894 = vmatprep.subr.bf16.mxu0 %v2431
  %2895 = vmatpush1.bf16.msra.mxu0 %v2519
  %2896 = vmatprep.subr.bf16.mxu0 %v2443
  %2897 = vmatpush1.bf16.msra.mxu0 %v2524
  %2898 = vmatprep.mubr.bf16.mxu0 %v2646
  %2899 = vmatmul.mubr.bf16.gmra.mrb[0].mxu0 %v2645
  %v2900 = vpop.f32.mrb[0].mxu0
  %v2901 = vadd.f32 %v2858, %v2900
  %v2902 = vpop.f32.mrb[0].mxu0
  %v2903 = vadd.f32 %v2860, %v2902
  %v2904 = vpop.f32.mrb[0].mxu0
  %v2905 = vadd.f32 %v2862, %v2904
  %v2906 = vpop.f32.mrb[0].mxu0
  %v2907 = vadd.f32 %v2864, %v2906
  %2908 = vdwg.mxu0
  %v2909 = vmax.f32 %v2729, 1e-06
  %v2910 = vmax.f32 %v2731, 1e-06
  %v2911 = vmax.f32 %v2815, 1e-06
  %v2912 = vmax.f32 %v2817, 1e-06
  %v2913 = vmax.f32 %v2901, 1e-06
  %v2914 = vmax.f32 %v2903, 1e-06
  %v2915 = vmax.f32 %v2733, 1e-06
  %v2916 = vmax.f32 %v2735, 1e-06
  %v2917 = vmax.f32 %v2819, 1e-06
  %v2918 = vmax.f32 %v2821, 1e-06
  %v2919 = vmax.f32 %v2905, 1e-06
  %v2920 = vmax.f32 %v2907, 1e-06
  %v2921 = vmul.f32 %v2909, %v2909
  %v2922 = vmul.f32 %v2910, %v2910
  %v2923 = vmul.f32 %v2911, %v2911
  %v2924 = vmul.f32 %v2912, %v2912
  %v2925 = vmul.f32 %v2913, %v2913
  %v2926 = vmul.f32 %v2914, %v2914
  %v2927 = vmul.f32 %v2915, %v2915
  %v2928 = vmul.f32 %v2916, %v2916
  %v2929 = vmul.f32 %v2917, %v2917
  %v2930 = vmul.f32 %v2918, %v2918
  %v2931 = vmul.f32 %v2919, %v2919
  %v2932 = vmul.f32 %v2920, %v2920
  %v2933 = vmul.f32 %v2921, %v2909
  %v2934 = vmul.f32 %v2922, %v2910
  %v2935 = vmul.f32 %v2923, %v2911
  %v2936 = vmul.f32 %v2924, %v2912
  %v2937 = vmul.f32 %v2925, %v2913
  %v2938 = vmul.f32 %v2926, %v2914
  %v2939 = vmul.f32 %v2927, %v2915
  %v2940 = vmul.f32 %v2928, %v2916
  %v2941 = vmul.f32 %v2929, %v2917
  %v2942 = vmul.f32 %v2930, %v2918
  %v2943 = vmul.f32 %v2931, %v2919
  %v2944 = vmul.f32 %v2932, %v2920
  %v2945 = vpack.c.bf16 %v2939, %v2933
  %v2946 = vpack.c.bf16 %v2940, %v2934
  %v2947 = vpack.c.bf16 %v2941, %v2935
  %v2948 = vpack.c.bf16 %v2942, %v2936
  %v2949 = vpack.c.bf16 %v2943, %v2937
  %v2950 = vpack.c.bf16 %v2944, %v2938
  %v3039 = vunpack.c.l.b16 %v1798
  %v3040 = vunpack.c.h.b16 %v1798
  %v3041 = vunpack.c.l.b16 %v1799
  %v3042 = vunpack.c.h.b16 %v1799
  %v3043 = vunpack.c.l.b16 %v1800
  %v3044 = vunpack.c.h.b16 %v1800
  %v3045 = vunpack.c.l.b16 %v1801
  %v3046 = vunpack.c.h.b16 %v1801
  %v3047 = vunpack.c.l.b16 %v1802
  %v3048 = vunpack.c.h.b16 %v1802
  %v3049 = vunpack.c.l.b16 %v1803
  %v3050 = vunpack.c.h.b16 %v1803
  %v3051 = vunpack.c.l.b16 %v1804
  %v3052 = vunpack.c.h.b16 %v1804
  %v3053 = vunpack.c.l.b16 %v1805
  %v3054 = vunpack.c.h.b16 %v1805
  %v3055 = vunpack.c.l.b16 %v1806
  %v3056 = vunpack.c.h.b16 %v1806
  %v3057 = vunpack.c.l.b16 %v1807
  %v3058 = vunpack.c.h.b16 %v1807
  %v3059 = vunpack.c.l.b16 %v1808
  %v3060 = vunpack.c.h.b16 %v1808
  %v3061 = vunpack.c.l.b16 %v1809
  %v3062 = vunpack.c.h.b16 %v1809
  %v3063 = vunpack.c.l.b16 %v1810
  %v3064 = vunpack.c.h.b16 %v1810
  %v3065 = vunpack.c.l.b16 %v1811
  %v3066 = vunpack.c.h.b16 %v1811
  %v3067 = vunpack.c.l.b16 %v1812
  %v3068 = vunpack.c.h.b16 %v1812
  %v3069 = vunpack.c.l.b16 %v1813
  %v3070 = vunpack.c.h.b16 %v1813
  %v3071 = vunpack.c.l.b16 %v1814
  %v3072 = vunpack.c.h.b16 %v1814
  %v3073 = vunpack.c.l.b16 %v1815
  %v3074 = vunpack.c.h.b16 %v1815
  %v3075 = vunpack.c.l.b16 %v1816
  %v3076 = vunpack.c.h.b16 %v1816
  %v3077 = vunpack.c.l.b16 %v1817
  %v3078 = vunpack.c.h.b16 %v1817
  %v3079 = vunpack.c.l.b16 %v1818
  %v3080 = vunpack.c.h.b16 %v1818
  %v3081 = vunpack.c.l.b16 %v1819
  %v3082 = vunpack.c.h.b16 %v1819
  %v3083 = vunpack.c.l.b16 %v1820
  %v3084 = vunpack.c.h.b16 %v1820
  %v3085 = vunpack.c.l.b16 %v1821
  %v3086 = vunpack.c.h.b16 %v1821
  %v3087 = vunpack.c.l.b16 %v1822
  %v3088 = vunpack.c.h.b16 %v1822
  %v3089 = vunpack.c.l.b16 %v1823
  %v3090 = vunpack.c.h.b16 %v1823
  %v3091 = vunpack.c.l.b16 %v1824
  %v3092 = vunpack.c.h.b16 %v1824
  %v3093 = vunpack.c.l.b16 %v1825
  %v3094 = vunpack.c.h.b16 %v1825
  %v3095 = vunpack.c.l.b16 %v1826
  %v3096 = vunpack.c.h.b16 %v1826
  %v3097 = vunpack.c.l.b16 %v1827
  %v3098 = vunpack.c.h.b16 %v1827
  %v3099 = vunpack.c.l.b16 %v1828
  %v3100 = vunpack.c.h.b16 %v1828
  %v3101 = vunpack.c.l.b16 %v1829
  %v3102 = vunpack.c.h.b16 %v1829
  %v3103 = vunpack.c.l.b16 %v1830
  %v3104 = vunpack.c.h.b16 %v1830
  %v3105 = vunpack.c.l.b16 %v1831
  %v3106 = vunpack.c.h.b16 %v1831
  %v3107 = vunpack.c.l.b16 %v1832
  %v3108 = vunpack.c.h.b16 %v1832
  %v3109 = vunpack.c.l.b16 %v1833
  %v3110 = vunpack.c.h.b16 %v1833
  %v3111 = vunpack.c.l.b16 %v1834
  %v3112 = vunpack.c.h.b16 %v1834
  %v3113 = vunpack.c.l.b16 %v1835
  %v3114 = vunpack.c.h.b16 %v1835
  %v3115 = vunpack.c.l.b16 %v1836
  %v3116 = vunpack.c.h.b16 %v1836
  %v3117 = vunpack.c.l.b16 %v1837
  %v3118 = vunpack.c.h.b16 %v1837
  %v3119 = vunpack.c.l.b16 %v1838
  %v3120 = vunpack.c.h.b16 %v1838
  %v3121 = vunpack.c.l.b16 %v1839
  %v3122 = vunpack.c.h.b16 %v1839
  %v3123 = vunpack.c.l.b16 %v1840
  %v3124 = vunpack.c.h.b16 %v1840
  %v3125 = vunpack.c.l.b16 %v1841
  %v3126 = vunpack.c.h.b16 %v1841
  %v3127 = vunpack.c.l.b16 %v1842
  %v3128 = vunpack.c.h.b16 %v1842
  %v3129 = vunpack.c.l.b16 %v1843
  %v3130 = vunpack.c.h.b16 %v1843
  %v3131 = vunpack.c.l.b16 %v1844
  %v3132 = vunpack.c.h.b16 %v1844
  %v3133 = vunpack.c.l.b16 %v1845
  %v3134 = vunpack.c.h.b16 %v1845
  %v3135 = vunpack.c.l.b16 %v1846
  %v3136 = vunpack.c.h.b16 %v1846
  %v3137 = vunpack.c.l.b16 %v1847
  %v3138 = vunpack.c.h.b16 %v1847
  %v3139 = vunpack.c.l.b16 %v1848
  %v3140 = vunpack.c.h.b16 %v1848
  %v3141 = vunpack.c.l.b16 %v1849
  %v3142 = vunpack.c.h.b16 %v1849
  %v3143 = vunpack.c.l.b16 %v1850
  %v3144 = vunpack.c.h.b16 %v1850
  %v3145 = vunpack.c.l.b16 %v1851
  %v3146 = vunpack.c.h.b16 %v1851
  %v3147 = vunpack.c.l.b16 %v1852
  %v3148 = vunpack.c.h.b16 %v1852
  %v3149 = vunpack.c.l.b16 %v1853
  %v3150 = vunpack.c.h.b16 %v1853
  %v3151 = vunpack.c.l.b16 %v1854
  %v3152 = vunpack.c.h.b16 %v1854
  %v3153 = vunpack.c.l.b16 %v1855
  %v3154 = vunpack.c.h.b16 %v1855
  %v3155 = vunpack.c.l.b16 %v1856
  %v3156 = vunpack.c.h.b16 %v1856
  %v3157 = vunpack.c.l.b16 %v1857
  %v3158 = vunpack.c.h.b16 %v1857
  %v3159 = vunpack.c.l.b16 %v1858
  %v3160 = vunpack.c.h.b16 %v1858
  %v3161 = vunpack.c.l.b16 %v1859
  %v3162 = vunpack.c.h.b16 %v1859
  %v3163 = vunpack.c.l.b16 %v1860
  %v3164 = vunpack.c.h.b16 %v1860
  %v3165 = vunpack.c.l.b16 %v1861
  %v3166 = vunpack.c.h.b16 %v1861
  %v3167 = vunpack.c.l.b16 %v1862
  %v3168 = vunpack.c.h.b16 %v1862
  %v3169 = vunpack.c.l.b16 %v1863
  %v3170 = vunpack.c.h.b16 %v1863
  %v3171 = vunpack.c.l.b16 %v1864
  %v3172 = vunpack.c.h.b16 %v1864
  %v3173 = vunpack.c.l.b16 %v1865
  %v3174 = vunpack.c.h.b16 %v1865
  %v3175 = vunpack.c.l.b16 %v1866
  %v3176 = vunpack.c.h.b16 %v1866
  %v3177 = vunpack.c.l.b16 %v1867
  %v3178 = vunpack.c.h.b16 %v1867
  %v3179 = vunpack.c.l.b16 %v1868
  %v3180 = vunpack.c.h.b16 %v1868
  %v3181 = vunpack.c.l.b16 %v1869
  %v3182 = vunpack.c.h.b16 %v1869
  %v3183 = vunpack.c.l.b16 %v1870
  %v3184 = vunpack.c.h.b16 %v1870
  %v3185 = vunpack.c.l.b16 %v1871
  %v3186 = vunpack.c.h.b16 %v1871
  %v3187 = vunpack.c.l.b16 %v1872
  %v3188 = vunpack.c.h.b16 %v1872
  %v3189 = vunpack.c.l.b16 %v1873
  %v3190 = vunpack.c.h.b16 %v1873
  %v3191 = vunpack.c.l.b16 %v1874
  %v3192 = vunpack.c.h.b16 %v1874
  %v3193 = vunpack.c.l.b16 %v1875
  %v3194 = vunpack.c.h.b16 %v1875
  %v3195 = vunpack.c.l.b16 %v1876
  %v3196 = vunpack.c.h.b16 %v1876
  %v3197 = vunpack.c.l.b16 %v1877
  %v3198 = vunpack.c.h.b16 %v1877
  %v3199 = vunpack.c.l.b16 %v1878
  %v3200 = vunpack.c.h.b16 %v1878
  %v3201 = vunpack.c.l.b16 %v1879
  %v3202 = vunpack.c.h.b16 %v1879
  %v3203 = vunpack.c.l.b16 %v1880
  %v3204 = vunpack.c.h.b16 %v1880
  %v3205 = vunpack.c.l.b16 %v1881
  %v3206 = vunpack.c.h.b16 %v1881
  %v3207 = vunpack.c.l.b16 %v1882
  %v3208 = vunpack.c.h.b16 %v1882
  %v3209 = vunpack.c.l.b16 %v1883
  %v3210 = vunpack.c.h.b16 %v1883
  %v3211 = vunpack.c.l.b16 %v1884
  %v3212 = vunpack.c.h.b16 %v1884
  %v3213 = vunpack.c.l.b16 %v1885
  %v3214 = vunpack.c.h.b16 %v1885
  %v3215 = vpack.c.b16 %v3041, %v3039
  %v3216 = vpack.c.b16 %v3042, %v3040
  %v3217 = vpack.c.b16 %v3045, %v3043
  %v3218 = vpack.c.b16 %v3046, %v3044
  %v3219 = vpack.c.b16 %v3049, %v3047
  %v3220 = vpack.c.b16 %v3050, %v3048
  %v3221 = vpack.c.b16 %v3053, %v3051
  %v3222 = vpack.c.b16 %v3054, %v3052
  %v3223 = vpack.c.b16 %v3057, %v3055
  %v3224 = vpack.c.b16 %v3058, %v3056
  %v3225 = vpack.c.b16 %v3061, %v3059
  %v3226 = vpack.c.b16 %v3062, %v3060
  %v3227 = vpack.c.b16 %v3065, %v3063
  %v3228 = vpack.c.b16 %v3066, %v3064
  %v3229 = vpack.c.b16 %v3069, %v3067
  %v3230 = vpack.c.b16 %v3070, %v3068
  %v3231 = vpack.c.b16 %v3073, %v3071
  %v3232 = vpack.c.b16 %v3074, %v3072
  %v3233 = vpack.c.b16 %v3077, %v3075
  %v3234 = vpack.c.b16 %v3078, %v3076
  %v3235 = vpack.c.b16 %v3081, %v3079
  %v3236 = vpack.c.b16 %v3082, %v3080
  %v3237 = vpack.c.b16 %v3085, %v3083
  %v3238 = vpack.c.b16 %v3086, %v3084
  %v3239 = vpack.c.b16 %v3089, %v3087
  %v3240 = vpack.c.b16 %v3090, %v3088
  %v3241 = vpack.c.b16 %v3093, %v3091
  %v3242 = vpack.c.b16 %v3094, %v3092
  %v3243 = vpack.c.b16 %v3097, %v3095
  %v3244 = vpack.c.b16 %v3098, %v3096
  %v3245 = vpack.c.b16 %v3101, %v3099
  %v3246 = vpack.c.b16 %v3102, %v3100
  %v3247 = vpack.c.b16 %v3105, %v3103
  %v3248 = vpack.c.b16 %v3106, %v3104
  %v3249 = vpack.c.b16 %v3109, %v3107
  %v3250 = vpack.c.b16 %v3110, %v3108
  %v3251 = vpack.c.b16 %v3113, %v3111
  %v3252 = vpack.c.b16 %v3114, %v3112
  %v3253 = vpack.c.b16 %v3117, %v3115
  %v3254 = vpack.c.b16 %v3118, %v3116
  %v3255 = vpack.c.b16 %v3121, %v3119
  %v3256 = vpack.c.b16 %v3122, %v3120
  %v3257 = vpack.c.b16 %v3125, %v3123
  %v3258 = vpack.c.b16 %v3126, %v3124
  %v3259 = vpack.c.b16 %v3129, %v3127
  %v3260 = vpack.c.b16 %v3130, %v3128
  %v3261 = vpack.c.b16 %v3133, %v3131
  %v3262 = vpack.c.b16 %v3134, %v3132
  %v3263 = vpack.c.b16 %v3137, %v3135
  %v3264 = vpack.c.b16 %v3138, %v3136
  %v3265 = vpack.c.b16 %v3141, %v3139
  %v3266 = vpack.c.b16 %v3142, %v3140
  %v3267 = vpack.c.b16 %v3145, %v3143
  %v3268 = vpack.c.b16 %v3146, %v3144
  %v3269 = vpack.c.b16 %v3149, %v3147
  %v3270 = vpack.c.b16 %v3150, %v3148
  %v3271 = vpack.c.b16 %v3153, %v3151
  %v3272 = vpack.c.b16 %v3154, %v3152
  %v3273 = vpack.c.b16 %v3157, %v3155
  %v3274 = vpack.c.b16 %v3158, %v3156
  %v3275 = vpack.c.b16 %v3161, %v3159
  %v3276 = vpack.c.b16 %v3162, %v3160
  %v3277 = vpack.c.b16 %v3165, %v3163
  %v3278 = vpack.c.b16 %v3166, %v3164
  %v3279 = vpack.c.b16 %v3169, %v3167
  %v3280 = vpack.c.b16 %v3170, %v3168
  %v3281 = vpack.c.b16 %v3173, %v3171
  %v3282 = vpack.c.b16 %v3174, %v3172
  %v3283 = vpack.c.b16 %v3177, %v3175
  %v3284 = vpack.c.b16 %v3178, %v3176
  %v3285 = vpack.c.b16 %v3181, %v3179
  %v3286 = vpack.c.b16 %v3182, %v3180
  %v3287 = vpack.c.b16 %v3185, %v3183
  %v3288 = vpack.c.b16 %v3186, %v3184
  %v3289 = vpack.c.b16 %v3189, %v3187
  %v3290 = vpack.c.b16 %v3190, %v3188
  %v3291 = vpack.c.b16 %v3193, %v3191
  %v3292 = vpack.c.b16 %v3194, %v3192
  %v3293 = vpack.c.b16 %v3197, %v3195
  %v3294 = vpack.c.b16 %v3198, %v3196
  %v3295 = vpack.c.b16 %v3201, %v3199
  %v3296 = vpack.c.b16 %v3202, %v3200
  %v3297 = vpack.c.b16 %v3205, %v3203
  %v3298 = vpack.c.b16 %v3206, %v3204
  %v3299 = vpack.c.b16 %v3209, %v3207
  %v3300 = vpack.c.b16 %v3210, %v3208
  %v3301 = vpack.c.b16 %v3213, %v3211
  %v3302 = vpack.c.b16 %v3214, %v3212
  %vm3391 = vcmask 523264
  %v3393 = vsel %vm3391, %v2950, 0
  %3395 = vmatprep.subr.bf16.mxu0 %v3216
  %3396 = vmatpush1.bf16.msra.mxu0 %v3215
  %3397 = vmatprep.subr.bf16.mxu0 %v3218
  %3398 = vmatpush1.bf16.msra.mxu0 %v3217
  %3399 = vmatprep.subr.bf16.mxu0 %v3220
  %3400 = vmatpush1.bf16.msra.mxu0 %v3219
  %3401 = vmatprep.subr.bf16.mxu0 %v3222
  %3402 = vmatpush1.bf16.msra.mxu0 %v3221
  %3403 = vmatprep.subr.bf16.mxu0 %v3224
  %3404 = vmatpush1.bf16.msra.mxu0 %v3223
  %3405 = vmatprep.subr.bf16.mxu0 %v3226
  %3406 = vmatpush1.bf16.msra.mxu0 %v3225
  %3407 = vmatprep.subr.bf16.mxu0 %v3228
  %3408 = vmatpush1.bf16.msra.mxu0 %v3227
  %3409 = vmatprep.subr.bf16.mxu0 %v3230
  %3410 = vmatpush1.bf16.msra.mxu0 %v3229
  %3411 = vmatprep.subr.bf16.mxu0 %v3232
  %3412 = vmatpush1.bf16.msra.mxu0 %v3231
  %3413 = vmatprep.subr.bf16.mxu0 %v3234
  %3414 = vmatpush1.bf16.msra.mxu0 %v3233
  %3415 = vmatprep.subr.bf16.mxu0 %v3236
  %3416 = vmatpush1.bf16.msra.mxu0 %v3235
  %3417 = vmatprep.subr.bf16.mxu0 %v3238
  %3418 = vmatpush1.bf16.msra.mxu0 %v3237
  %3419 = vmatprep.subr.bf16.mxu0 %v3240
  %3420 = vmatpush1.bf16.msra.mxu0 %v3239
  %3421 = vmatprep.subr.bf16.mxu0 %v3242
  %3422 = vmatpush1.bf16.msra.mxu0 %v3241
  %3423 = vmatprep.subr.bf16.mxu0 %v3244
  %3424 = vmatpush1.bf16.msra.mxu0 %v3243
  %3425 = vmatprep.subr.bf16.mxu0 %v3246
  %3426 = vmatpush1.bf16.msra.mxu0 %v3245
  %3427 = vmatprep.mubr.bf16.mxu0 %v2946
  %3428 = vmatmul.mubr.bf16.gmra.mrb[0].mxu0 %v2945
  %v3429 = vpop.f32.mrb[0].mxu0
  %v3430 = vadd.f32 0.0, %v3429
  %v3431 = vpop.f32.mrb[0].mxu0
  %v3432 = vadd.f32 0.0, %v3431
  %v3433 = vpop.f32.mrb[0].mxu0
  %v3434 = vadd.f32 0.0, %v3433
  %v3435 = vpop.f32.mrb[0].mxu0
  %v3436 = vadd.f32 0.0, %v3435
  %3437 = vdwg.mxu0
  %3438 = vmatprep.subr.bf16.mxu0 %v3248
  %3439 = vmatpush1.bf16.msra.mxu0 %v3247
  %3440 = vmatprep.subr.bf16.mxu0 %v3250
  %3441 = vmatpush1.bf16.msra.mxu0 %v3249
  %3442 = vmatprep.subr.bf16.mxu0 %v3252
  %3443 = vmatpush1.bf16.msra.mxu0 %v3251
  %3444 = vmatprep.subr.bf16.mxu0 %v3254
  %3445 = vmatpush1.bf16.msra.mxu0 %v3253
  %3446 = vmatprep.subr.bf16.mxu0 %v3256
  %3447 = vmatpush1.bf16.msra.mxu0 %v3255
  %3448 = vmatprep.subr.bf16.mxu0 %v3258
  %3449 = vmatpush1.bf16.msra.mxu0 %v3257
  %3450 = vmatprep.subr.bf16.mxu0 %v3260
  %3451 = vmatpush1.bf16.msra.mxu0 %v3259
  %3452 = vmatprep.subr.bf16.mxu0 %v3262
  %3453 = vmatpush1.bf16.msra.mxu0 %v3261
  %3454 = vmatprep.subr.bf16.mxu0 %v3264
  %3455 = vmatpush1.bf16.msra.mxu0 %v3263
  %3456 = vmatprep.subr.bf16.mxu0 %v3266
  %3457 = vmatpush1.bf16.msra.mxu0 %v3265
  %3458 = vmatprep.subr.bf16.mxu0 %v3268
  %3459 = vmatpush1.bf16.msra.mxu0 %v3267
  %3460 = vmatprep.subr.bf16.mxu0 %v3270
  %3461 = vmatpush1.bf16.msra.mxu0 %v3269
  %3462 = vmatprep.subr.bf16.mxu0 %v3272
  %3463 = vmatpush1.bf16.msra.mxu0 %v3271
  %3464 = vmatprep.subr.bf16.mxu0 %v3274
  %3465 = vmatpush1.bf16.msra.mxu0 %v3273
  %3466 = vmatprep.subr.bf16.mxu0 %v3276
  %3467 = vmatpush1.bf16.msra.mxu0 %v3275
  %3468 = vmatprep.subr.bf16.mxu0 %v3278
  %3469 = vmatpush1.bf16.msra.mxu0 %v3277
  %3470 = vmatprep.mubr.bf16.mxu0 %v2948
  %3471 = vmatmul.mubr.bf16.gmra.mrb[0].mxu0 %v2947
  %v3472 = vpop.f32.mrb[0].mxu0
  %v3473 = vadd.f32 %v3430, %v3472
  %v3474 = vpop.f32.mrb[0].mxu0
  %v3475 = vadd.f32 %v3432, %v3474
  %v3476 = vpop.f32.mrb[0].mxu0
  %v3477 = vadd.f32 %v3434, %v3476
  %v3478 = vpop.f32.mrb[0].mxu0
  %v3479 = vadd.f32 %v3436, %v3478
  %3480 = vdwg.mxu0
  %3481 = vmatprep.subr.bf16.mxu0 %v3280
  %3482 = vmatpush1.bf16.msra.mxu0 %v3279
  %3483 = vmatprep.subr.bf16.mxu0 %v3282
  %3484 = vmatpush1.bf16.msra.mxu0 %v3281
  %3485 = vmatprep.subr.bf16.mxu0 %v3284
  %3486 = vmatpush1.bf16.msra.mxu0 %v3283
  %3487 = vmatprep.subr.bf16.mxu0 %v3286
  %3488 = vmatpush1.bf16.msra.mxu0 %v3285
  %3489 = vmatprep.subr.bf16.mxu0 %v3288
  %3490 = vmatpush1.bf16.msra.mxu0 %v3287
  %3491 = vmatprep.subr.bf16.mxu0 %v3290
  %3492 = vmatpush1.bf16.msra.mxu0 %v3289
  %3493 = vmatprep.subr.bf16.mxu0 %v3292
  %3494 = vmatpush1.bf16.msra.mxu0 %v3291
  %3495 = vmatprep.subr.bf16.mxu0 %v3294
  %3496 = vmatpush1.bf16.msra.mxu0 %v3293
  %3497 = vmatprep.subr.bf16.mxu0 %v3296
  %3498 = vmatpush1.bf16.msra.mxu0 %v3295
  %3499 = vmatprep.subr.bf16.mxu0 %v3298
  %3500 = vmatpush1.bf16.msra.mxu0 %v3297
  %3501 = vmatprep.subr.bf16.mxu0 %v3300
  %3502 = vmatpush1.bf16.msra.mxu0 %v3299
  %3503 = vmatprep.subr.bf16.mxu0 %v3302
  %3504 = vmatpush1.bf16.msra.mxu0 %v3301
  %3505 = vmatprep.subr.bf16.mxu0 0
  %3506 = vmatpush1.bf16.msra.mxu0 0
  %3507 = vmatprep.subr.bf16.mxu0 0
  %3508 = vmatpush1.bf16.msra.mxu0 0
  %3509 = vmatprep.subr.bf16.mxu0 0
  %3510 = vmatpush1.bf16.msra.mxu0 0
  %3511 = vmatprep.subr.bf16.mxu0 0
  %3512 = vmatpush1.bf16.msra.mxu0 0
  %3513 = vmatprep.mubr.bf16.mxu0 %v3393
  %3514 = vmatmul.mubr.bf16.gmra.mrb[0].mxu0 %v2949
  %v3515 = vpop.f32.mrb[0].mxu0
  %v3516 = vadd.f32 %v3473, %v3515
  %v3517 = vpop.f32.mrb[0].mxu0
  %v3518 = vadd.f32 %v3475, %v3517
  %v3519 = vpop.f32.mrb[0].mxu0
  %v3520 = vadd.f32 %v3477, %v3519
  %v3521 = vpop.f32.mrb[0].mxu0
  %v3522 = vadd.f32 %v3479, %v3521
  %3523 = vdwg.mxu0
  %v3524 = vlog2.pop %v3516
  %v3525 = vmul.f32 %v3524, 0.6931472
  %v3526 = vlog2.pop %v3518
  %v3527 = vmul.f32 %v3526, 0.6931472
  %v3528 = vlog2.pop %v3520
  %v3529 = vmul.f32 %v3528, 0.6931472
  %v3530 = vlog2.pop %v3522
  %v3531 = vmul.f32 %v3530, 0.6931472
  %v3532 = vmul.f32 %v3525, 0.33333334
  %v3533 = vmul.f32 %v3527, 0.33333334
  %v3534 = vmul.f32 %v3529, 0.33333334
  %v3535 = vmul.f32 %v3531, 0.33333334
  %v3536 = vmul.f32 %v3532, 1.442695
  %v3537 = vpow.pop %v3536
  %v3538 = vmul.f32 %v3533, 1.442695
  %v3539 = vpow.pop %v3538
  %v3540 = vmul.f32 %v3534, 1.442695
  %v3541 = vpow.pop %v3540
  %v3542 = vmul.f32 %v3535, 1.442695
  %v3543 = vpow.pop %v3542
  %3550 = vrot.lane.b32.xlu0 %v1782, 127
  %v3551 = vpop.permute.xlu0 %3550
  %3552 = vrot.lane.b32.xlu0 %v1783, 127
  %v3553 = vpop.permute.xlu0 %3552
  %3554 = vrot.lane.b32.xlu0 %v1784, 127
  %v3555 = vpop.permute.xlu0 %3554
  %3556 = vrot.lane.b32.xlu0 %v1785, 127
  %v3557 = vpop.permute.xlu0 %3556
  %3558 = vrot.lane.b32.xlu0 %v1786, 127
  %v3559 = vpop.permute.xlu0 %3558
  %3560 = vrot.lane.b32.xlu0 %v1787, 127
  %v3561 = vpop.permute.xlu0 %3560
  %v3562 = vsel %vm1904, %v3551, %v3553
  %v3563 = vsel %vm1904, %v3553, %v3555
  %v3564 = vsel %vm1904, %v3555, %v3557
  %v3565 = vsel %vm1904, %v3557, %v3559
  %v3566 = vsel %vm1904, %v3559, %v3561
  %3573 = vrot.lane.b32.xlu0 %v1782, 126
  %v3574 = vpop.permute.xlu0 %3573
  %3575 = vrot.lane.b32.xlu0 %v1783, 126
  %v3576 = vpop.permute.xlu0 %3575
  %3577 = vrot.lane.b32.xlu0 %v1784, 126
  %v3578 = vpop.permute.xlu0 %3577
  %3579 = vrot.lane.b32.xlu0 %v1785, 126
  %v3580 = vpop.permute.xlu0 %3579
  %3581 = vrot.lane.b32.xlu0 %v1786, 126
  %v3582 = vpop.permute.xlu0 %3581
  %3583 = vrot.lane.b32.xlu0 %v1787, 126
  %v3584 = vpop.permute.xlu0 %3583
  %v3585 = vsel %vm1928, %v3574, %v3576
  %v3586 = vsel %vm1928, %v3576, %v3578
  %v3587 = vsel %vm1928, %v3578, %v3580
  %v3588 = vsel %vm1928, %v3580, %v3582
  %v3589 = vsel %vm1928, %v3582, %v3584
  %3596 = vrot.lane.b32.xlu0 %v1782, 125
  %v3597 = vpop.permute.xlu0 %3596
  %3598 = vrot.lane.b32.xlu0 %v1783, 125
  %v3599 = vpop.permute.xlu0 %3598
  %3600 = vrot.lane.b32.xlu0 %v1784, 125
  %v3601 = vpop.permute.xlu0 %3600
  %3602 = vrot.lane.b32.xlu0 %v1785, 125
  %v3603 = vpop.permute.xlu0 %3602
  %3604 = vrot.lane.b32.xlu0 %v1786, 125
  %v3605 = vpop.permute.xlu0 %3604
  %3606 = vrot.lane.b32.xlu0 %v1787, 125
  %v3607 = vpop.permute.xlu0 %3606
  %v3608 = vsel %vm1952, %v3597, %v3599
  %v3609 = vsel %vm1952, %v3599, %v3601
  %v3610 = vsel %vm1952, %v3601, %v3603
  %v3611 = vsel %vm1952, %v3603, %v3605
  %v3612 = vsel %vm1952, %v3605, %v3607
  %3619 = vrot.lane.b32.xlu0 %v1782, 124
  %v3620 = vpop.permute.xlu0 %3619
  %3621 = vrot.lane.b32.xlu0 %v1783, 124
  %v3622 = vpop.permute.xlu0 %3621
  %3623 = vrot.lane.b32.xlu0 %v1784, 124
  %v3624 = vpop.permute.xlu0 %3623
  %3625 = vrot.lane.b32.xlu0 %v1785, 124
  %v3626 = vpop.permute.xlu0 %3625
  %3627 = vrot.lane.b32.xlu0 %v1786, 124
  %v3628 = vpop.permute.xlu0 %3627
  %3629 = vrot.lane.b32.xlu0 %v1787, 124
  %v3630 = vpop.permute.xlu0 %3629
  %v3631 = vsel %vm1976, %v3620, %v3622
  %v3632 = vsel %vm1976, %v3622, %v3624
  %v3633 = vsel %vm1976, %v3624, %v3626
  %v3634 = vsel %vm1976, %v3626, %v3628
  %v3635 = vsel %vm1976, %v3628, %v3630
  %3642 = vrot.lane.b32.xlu0 %v1782, 123
  %v3643 = vpop.permute.xlu0 %3642
  %3644 = vrot.lane.b32.xlu0 %v1783, 123
  %v3645 = vpop.permute.xlu0 %3644
  %3646 = vrot.lane.b32.xlu0 %v1784, 123
  %v3647 = vpop.permute.xlu0 %3646
  %3648 = vrot.lane.b32.xlu0 %v1785, 123
  %v3649 = vpop.permute.xlu0 %3648
  %3650 = vrot.lane.b32.xlu0 %v1786, 123
  %v3651 = vpop.permute.xlu0 %3650
  %3652 = vrot.lane.b32.xlu0 %v1787, 123
  %v3653 = vpop.permute.xlu0 %3652
  %v3654 = vsel %vm2000, %v3643, %v3645
  %v3655 = vsel %vm2000, %v3645, %v3647
  %v3656 = vsel %vm2000, %v3647, %v3649
  %v3657 = vsel %vm2000, %v3649, %v3651
  %v3658 = vsel %vm2000, %v3651, %v3653
  %3665 = vrot.lane.b32.xlu0 %v1782, 122
  %v3666 = vpop.permute.xlu0 %3665
  %3667 = vrot.lane.b32.xlu0 %v1783, 122
  %v3668 = vpop.permute.xlu0 %3667
  %3669 = vrot.lane.b32.xlu0 %v1784, 122
  %v3670 = vpop.permute.xlu0 %3669
  %3671 = vrot.lane.b32.xlu0 %v1785, 122
  %v3672 = vpop.permute.xlu0 %3671
  %3673 = vrot.lane.b32.xlu0 %v1786, 122
  %v3674 = vpop.permute.xlu0 %3673
  %3675 = vrot.lane.b32.xlu0 %v1787, 122
  %v3676 = vpop.permute.xlu0 %3675
  %v3677 = vsel %vm2024, %v3666, %v3668
  %v3678 = vsel %vm2024, %v3668, %v3670
  %v3679 = vsel %vm2024, %v3670, %v3672
  %v3680 = vsel %vm2024, %v3672, %v3674
  %v3681 = vsel %vm2024, %v3674, %v3676
  %3688 = vrot.lane.b32.xlu0 %v1782, 121
  %v3689 = vpop.permute.xlu0 %3688
  %3690 = vrot.lane.b32.xlu0 %v1783, 121
  %v3691 = vpop.permute.xlu0 %3690
  %3692 = vrot.lane.b32.xlu0 %v1784, 121
  %v3693 = vpop.permute.xlu0 %3692
  %3694 = vrot.lane.b32.xlu0 %v1785, 121
  %v3695 = vpop.permute.xlu0 %3694
  %3696 = vrot.lane.b32.xlu0 %v1786, 121
  %v3697 = vpop.permute.xlu0 %3696
  %3698 = vrot.lane.b32.xlu0 %v1787, 121
  %v3699 = vpop.permute.xlu0 %3698
  %v3700 = vsel %vm2048, %v3689, %v3691
  %v3701 = vsel %vm2048, %v3691, %v3693
  %v3702 = vsel %vm2048, %v3693, %v3695
  %v3703 = vsel %vm2048, %v3695, %v3697
  %v3704 = vsel %vm2048, %v3697, %v3699
  %3711 = vrot.lane.b32.xlu0 %v1782, 120
  %v3712 = vpop.permute.xlu0 %3711
  %3713 = vrot.lane.b32.xlu0 %v1783, 120
  %v3714 = vpop.permute.xlu0 %3713
  %3715 = vrot.lane.b32.xlu0 %v1784, 120
  %v3716 = vpop.permute.xlu0 %3715
  %3717 = vrot.lane.b32.xlu0 %v1785, 120
  %v3718 = vpop.permute.xlu0 %3717
  %3719 = vrot.lane.b32.xlu0 %v1786, 120
  %v3720 = vpop.permute.xlu0 %3719
  %3721 = vrot.lane.b32.xlu0 %v1787, 120
  %v3722 = vpop.permute.xlu0 %3721
  %v3723 = vsel %vm2072, %v3712, %v3714
  %v3724 = vsel %vm2072, %v3714, %v3716
  %v3725 = vsel %vm2072, %v3716, %v3718
  %v3726 = vsel %vm2072, %v3718, %v3720
  %v3727 = vsel %vm2072, %v3720, %v3722
  %3734 = vrot.lane.b32.xlu0 %v1782, 119
  %v3735 = vpop.permute.xlu0 %3734
  %3736 = vrot.lane.b32.xlu0 %v1783, 119
  %v3737 = vpop.permute.xlu0 %3736
  %3738 = vrot.lane.b32.xlu0 %v1784, 119
  %v3739 = vpop.permute.xlu0 %3738
  %3740 = vrot.lane.b32.xlu0 %v1785, 119
  %v3741 = vpop.permute.xlu0 %3740
  %3742 = vrot.lane.b32.xlu0 %v1786, 119
  %v3743 = vpop.permute.xlu0 %3742
  %3744 = vrot.lane.b32.xlu0 %v1787, 119
  %v3745 = vpop.permute.xlu0 %3744
  %v3746 = vsel %vm2096, %v3735, %v3737
  %v3747 = vsel %vm2096, %v3737, %v3739
  %v3748 = vsel %vm2096, %v3739, %v3741
  %v3749 = vsel %vm2096, %v3741, %v3743
  %v3750 = vsel %vm2096, %v3743, %v3745
  %3757 = vrot.lane.b32.xlu0 %v1782, 118
  %v3758 = vpop.permute.xlu0 %3757
  %3759 = vrot.lane.b32.xlu0 %v1783, 118
  %v3760 = vpop.permute.xlu0 %3759
  %3761 = vrot.lane.b32.xlu0 %v1784, 118
  %v3762 = vpop.permute.xlu0 %3761
  %3763 = vrot.lane.b32.xlu0 %v1785, 118
  %v3764 = vpop.permute.xlu0 %3763
  %3765 = vrot.lane.b32.xlu0 %v1786, 118
  %v3766 = vpop.permute.xlu0 %3765
  %3767 = vrot.lane.b32.xlu0 %v1787, 118
  %v3768 = vpop.permute.xlu0 %3767
  %v3769 = vsel %vm2120, %v3758, %v3760
  %v3770 = vsel %vm2120, %v3760, %v3762
  %v3771 = vsel %vm2120, %v3762, %v3764
  %v3772 = vsel %vm2120, %v3764, %v3766
  %v3773 = vsel %vm2120, %v3766, %v3768
  %3780 = vrot.lane.b32.xlu0 %v1782, 117
  %v3781 = vpop.permute.xlu0 %3780
  %3782 = vrot.lane.b32.xlu0 %v1783, 117
  %v3783 = vpop.permute.xlu0 %3782
  %3784 = vrot.lane.b32.xlu0 %v1784, 117
  %v3785 = vpop.permute.xlu0 %3784
  %3786 = vrot.lane.b32.xlu0 %v1785, 117
  %v3787 = vpop.permute.xlu0 %3786
  %3788 = vrot.lane.b32.xlu0 %v1786, 117
  %v3789 = vpop.permute.xlu0 %3788
  %3790 = vrot.lane.b32.xlu0 %v1787, 117
  %v3791 = vpop.permute.xlu0 %3790
  %v3792 = vsel %vm2144, %v3781, %v3783
  %v3793 = vsel %vm2144, %v3783, %v3785
  %v3794 = vsel %vm2144, %v3785, %v3787
  %v3795 = vsel %vm2144, %v3787, %v3789
  %v3796 = vsel %vm2144, %v3789, %v3791
  %3803 = vrot.lane.b32.xlu0 %v1782, 116
  %v3804 = vpop.permute.xlu0 %3803
  %3805 = vrot.lane.b32.xlu0 %v1783, 116
  %v3806 = vpop.permute.xlu0 %3805
  %3807 = vrot.lane.b32.xlu0 %v1784, 116
  %v3808 = vpop.permute.xlu0 %3807
  %3809 = vrot.lane.b32.xlu0 %v1785, 116
  %v3810 = vpop.permute.xlu0 %3809
  %3811 = vrot.lane.b32.xlu0 %v1786, 116
  %v3812 = vpop.permute.xlu0 %3811
  %3813 = vrot.lane.b32.xlu0 %v1787, 116
  %v3814 = vpop.permute.xlu0 %3813
  %v3815 = vsel %vm2168, %v3804, %v3806
  %v3816 = vsel %vm2168, %v3806, %v3808
  %v3817 = vsel %vm2168, %v3808, %v3810
  %v3818 = vsel %vm2168, %v3810, %v3812
  %v3819 = vsel %vm2168, %v3812, %v3814
  %3826 = vrot.lane.b32.xlu0 %v1782, 115
  %v3827 = vpop.permute.xlu0 %3826
  %3828 = vrot.lane.b32.xlu0 %v1783, 115
  %v3829 = vpop.permute.xlu0 %3828
  %3830 = vrot.lane.b32.xlu0 %v1784, 115
  %v3831 = vpop.permute.xlu0 %3830
  %3832 = vrot.lane.b32.xlu0 %v1785, 115
  %v3833 = vpop.permute.xlu0 %3832
  %3834 = vrot.lane.b32.xlu0 %v1786, 115
  %v3835 = vpop.permute.xlu0 %3834
  %3836 = vrot.lane.b32.xlu0 %v1787, 115
  %v3837 = vpop.permute.xlu0 %3836
  %v3838 = vsel %vm2192, %v3827, %v3829
  %v3839 = vsel %vm2192, %v3829, %v3831
  %v3840 = vsel %vm2192, %v3831, %v3833
  %v3841 = vsel %vm2192, %v3833, %v3835
  %v3842 = vsel %vm2192, %v3835, %v3837
  %3849 = vrot.lane.b32.xlu0 %v1782, 114
  %v3850 = vpop.permute.xlu0 %3849
  %3851 = vrot.lane.b32.xlu0 %v1783, 114
  %v3852 = vpop.permute.xlu0 %3851
  %3853 = vrot.lane.b32.xlu0 %v1784, 114
  %v3854 = vpop.permute.xlu0 %3853
  %3855 = vrot.lane.b32.xlu0 %v1785, 114
  %v3856 = vpop.permute.xlu0 %3855
  %3857 = vrot.lane.b32.xlu0 %v1786, 114
  %v3858 = vpop.permute.xlu0 %3857
  %3859 = vrot.lane.b32.xlu0 %v1787, 114
  %v3860 = vpop.permute.xlu0 %3859
  %v3861 = vsel %vm2216, %v3850, %v3852
  %v3862 = vsel %vm2216, %v3852, %v3854
  %v3863 = vsel %vm2216, %v3854, %v3856
  %v3864 = vsel %vm2216, %v3856, %v3858
  %v3865 = vsel %vm2216, %v3858, %v3860
  %3872 = vrot.lane.b32.xlu0 %v1782, 113
  %v3873 = vpop.permute.xlu0 %3872
  %3874 = vrot.lane.b32.xlu0 %v1783, 113
  %v3875 = vpop.permute.xlu0 %3874
  %3876 = vrot.lane.b32.xlu0 %v1784, 113
  %v3877 = vpop.permute.xlu0 %3876
  %3878 = vrot.lane.b32.xlu0 %v1785, 113
  %v3879 = vpop.permute.xlu0 %3878
  %3880 = vrot.lane.b32.xlu0 %v1786, 113
  %v3881 = vpop.permute.xlu0 %3880
  %3882 = vrot.lane.b32.xlu0 %v1787, 113
  %v3883 = vpop.permute.xlu0 %3882
  %v3884 = vsel %vm2240, %v3873, %v3875
  %v3885 = vsel %vm2240, %v3875, %v3877
  %v3886 = vsel %vm2240, %v3877, %v3879
  %v3887 = vsel %vm2240, %v3879, %v3881
  %v3888 = vsel %vm2240, %v3881, %v3883
  %3895 = vrot.lane.b32.xlu0 %v1782, 112
  %v3896 = vpop.permute.xlu0 %3895
  %3897 = vrot.lane.b32.xlu0 %v1783, 112
  %v3898 = vpop.permute.xlu0 %3897
  %3899 = vrot.lane.b32.xlu0 %v1784, 112
  %v3900 = vpop.permute.xlu0 %3899
  %3901 = vrot.lane.b32.xlu0 %v1785, 112
  %v3902 = vpop.permute.xlu0 %3901
  %3903 = vrot.lane.b32.xlu0 %v1786, 112
  %v3904 = vpop.permute.xlu0 %3903
  %3905 = vrot.lane.b32.xlu0 %v1787, 112
  %v3906 = vpop.permute.xlu0 %3905
  %3907 = vrot.lane.b32.xlu0 %v3562, 112
  %v3908 = vpop.permute.xlu0 %3907
  %3909 = vrot.lane.b32.xlu0 %v3563, 112
  %v3910 = vpop.permute.xlu0 %3909
  %3911 = vrot.lane.b32.xlu0 %v3564, 112
  %v3912 = vpop.permute.xlu0 %3911
  %3913 = vrot.lane.b32.xlu0 %v3565, 112
  %v3914 = vpop.permute.xlu0 %3913
  %3915 = vrot.lane.b32.xlu0 %v3566, 112
  %v3916 = vpop.permute.xlu0 %3915
  %3917 = vrot.lane.b32.xlu0 %v3561, 112
  %v3918 = vpop.permute.xlu0 %3917
  %3919 = vrot.lane.b32.xlu0 %v3585, 112
  %v3920 = vpop.permute.xlu0 %3919
  %3921 = vrot.lane.b32.xlu0 %v3586, 112
  %v3922 = vpop.permute.xlu0 %3921
  %3923 = vrot.lane.b32.xlu0 %v3587, 112
  %v3924 = vpop.permute.xlu0 %3923
  %3925 = vrot.lane.b32.xlu0 %v3588, 112
  %v3926 = vpop.permute.xlu0 %3925
  %3927 = vrot.lane.b32.xlu0 %v3589, 112
  %v3928 = vpop.permute.xlu0 %3927
  %3929 = vrot.lane.b32.xlu0 %v3584, 112
  %v3930 = vpop.permute.xlu0 %3929
  %3931 = vrot.lane.b32.xlu0 %v3608, 112
  %v3932 = vpop.permute.xlu0 %3931
  %3933 = vrot.lane.b32.xlu0 %v3609, 112
  %v3934 = vpop.permute.xlu0 %3933
  %3935 = vrot.lane.b32.xlu0 %v3610, 112
  %v3936 = vpop.permute.xlu0 %3935
  %3937 = vrot.lane.b32.xlu0 %v3611, 112
  %v3938 = vpop.permute.xlu0 %3937
  %3939 = vrot.lane.b32.xlu0 %v3612, 112
  %v3940 = vpop.permute.xlu0 %3939
  %3941 = vrot.lane.b32.xlu0 %v3607, 112
  %v3942 = vpop.permute.xlu0 %3941
  %3943 = vrot.lane.b32.xlu0 %v3631, 112
  %v3944 = vpop.permute.xlu0 %3943
  %3945 = vrot.lane.b32.xlu0 %v3632, 112
  %v3946 = vpop.permute.xlu0 %3945
  %3947 = vrot.lane.b32.xlu0 %v3633, 112
  %v3948 = vpop.permute.xlu0 %3947
  %3949 = vrot.lane.b32.xlu0 %v3634, 112
  %v3950 = vpop.permute.xlu0 %3949
  %3951 = vrot.lane.b32.xlu0 %v3635, 112
  %v3952 = vpop.permute.xlu0 %3951
  %3953 = vrot.lane.b32.xlu0 %v3630, 112
  %v3954 = vpop.permute.xlu0 %3953
  %3955 = vrot.lane.b32.xlu0 %v3654, 112
  %v3956 = vpop.permute.xlu0 %3955
  %3957 = vrot.lane.b32.xlu0 %v3655, 112
  %v3958 = vpop.permute.xlu0 %3957
  %3959 = vrot.lane.b32.xlu0 %v3656, 112
  %v3960 = vpop.permute.xlu0 %3959
  %3961 = vrot.lane.b32.xlu0 %v3657, 112
  %v3962 = vpop.permute.xlu0 %3961
  %3963 = vrot.lane.b32.xlu0 %v3658, 112
  %v3964 = vpop.permute.xlu0 %3963
  %3965 = vrot.lane.b32.xlu0 %v3653, 112
  %v3966 = vpop.permute.xlu0 %3965
  %3967 = vrot.lane.b32.xlu0 %v3677, 112
  %v3968 = vpop.permute.xlu0 %3967
  %3969 = vrot.lane.b32.xlu0 %v3678, 112
  %v3970 = vpop.permute.xlu0 %3969
  %3971 = vrot.lane.b32.xlu0 %v3679, 112
  %v3972 = vpop.permute.xlu0 %3971
  %3973 = vrot.lane.b32.xlu0 %v3680, 112
  %v3974 = vpop.permute.xlu0 %3973
  %3975 = vrot.lane.b32.xlu0 %v3681, 112
  %v3976 = vpop.permute.xlu0 %3975
  %3977 = vrot.lane.b32.xlu0 %v3676, 112
  %v3978 = vpop.permute.xlu0 %3977
  %3979 = vrot.lane.b32.xlu0 %v3700, 112
  %v3980 = vpop.permute.xlu0 %3979
  %3981 = vrot.lane.b32.xlu0 %v3701, 112
  %v3982 = vpop.permute.xlu0 %3981
  %3983 = vrot.lane.b32.xlu0 %v3702, 112
  %v3984 = vpop.permute.xlu0 %3983
  %3985 = vrot.lane.b32.xlu0 %v3703, 112
  %v3986 = vpop.permute.xlu0 %3985
  %3987 = vrot.lane.b32.xlu0 %v3704, 112
  %v3988 = vpop.permute.xlu0 %3987
  %3989 = vrot.lane.b32.xlu0 %v3699, 112
  %v3990 = vpop.permute.xlu0 %3989
  %3991 = vrot.lane.b32.xlu0 %v3723, 112
  %v3992 = vpop.permute.xlu0 %3991
  %3993 = vrot.lane.b32.xlu0 %v3724, 112
  %v3994 = vpop.permute.xlu0 %3993
  %3995 = vrot.lane.b32.xlu0 %v3725, 112
  %v3996 = vpop.permute.xlu0 %3995
  %3997 = vrot.lane.b32.xlu0 %v3726, 112
  %v3998 = vpop.permute.xlu0 %3997
  %3999 = vrot.lane.b32.xlu0 %v3727, 112
  %v4000 = vpop.permute.xlu0 %3999
  %4001 = vrot.lane.b32.xlu0 %v3722, 112
  %v4002 = vpop.permute.xlu0 %4001
  %4003 = vrot.lane.b32.xlu0 %v3746, 112
  %v4004 = vpop.permute.xlu0 %4003
  %4005 = vrot.lane.b32.xlu0 %v3747, 112
  %v4006 = vpop.permute.xlu0 %4005
  %4007 = vrot.lane.b32.xlu0 %v3748, 112
  %v4008 = vpop.permute.xlu0 %4007
  %4009 = vrot.lane.b32.xlu0 %v3749, 112
  %v4010 = vpop.permute.xlu0 %4009
  %4011 = vrot.lane.b32.xlu0 %v3750, 112
  %v4012 = vpop.permute.xlu0 %4011
  %4013 = vrot.lane.b32.xlu0 %v3745, 112
  %v4014 = vpop.permute.xlu0 %4013
  %4015 = vrot.lane.b32.xlu0 %v3769, 112
  %v4016 = vpop.permute.xlu0 %4015
  %4017 = vrot.lane.b32.xlu0 %v3770, 112
  %v4018 = vpop.permute.xlu0 %4017
  %4019 = vrot.lane.b32.xlu0 %v3771, 112
  %v4020 = vpop.permute.xlu0 %4019
  %4021 = vrot.lane.b32.xlu0 %v3772, 112
  %v4022 = vpop.permute.xlu0 %4021
  %4023 = vrot.lane.b32.xlu0 %v3773, 112
  %v4024 = vpop.permute.xlu0 %4023
  %4025 = vrot.lane.b32.xlu0 %v3768, 112
  %v4026 = vpop.permute.xlu0 %4025
  %4027 = vrot.lane.b32.xlu0 %v3792, 112
  %v4028 = vpop.permute.xlu0 %4027
  %4029 = vrot.lane.b32.xlu0 %v3793, 112
  %v4030 = vpop.permute.xlu0 %4029
  %4031 = vrot.lane.b32.xlu0 %v3794, 112
  %v4032 = vpop.permute.xlu0 %4031
  %4033 = vrot.lane.b32.xlu0 %v3795, 112
  %v4034 = vpop.permute.xlu0 %4033
  %4035 = vrot.lane.b32.xlu0 %v3796, 112
  %v4036 = vpop.permute.xlu0 %4035
  %4037 = vrot.lane.b32.xlu0 %v3791, 112
  %v4038 = vpop.permute.xlu0 %4037
  %4039 = vrot.lane.b32.xlu0 %v3815, 112
  %v4040 = vpop.permute.xlu0 %4039
  %4041 = vrot.lane.b32.xlu0 %v3816, 112
  %v4042 = vpop.permute.xlu0 %4041
  %4043 = vrot.lane.b32.xlu0 %v3817, 112
  %v4044 = vpop.permute.xlu0 %4043
  %4045 = vrot.lane.b32.xlu0 %v3818, 112
  %v4046 = vpop.permute.xlu0 %4045
  %4047 = vrot.lane.b32.xlu0 %v3819, 112
  %v4048 = vpop.permute.xlu0 %4047
  %4049 = vrot.lane.b32.xlu0 %v3814, 112
  %v4050 = vpop.permute.xlu0 %4049
  %4051 = vrot.lane.b32.xlu0 %v3838, 112
  %v4052 = vpop.permute.xlu0 %4051
  %4053 = vrot.lane.b32.xlu0 %v3839, 112
  %v4054 = vpop.permute.xlu0 %4053
  %4055 = vrot.lane.b32.xlu0 %v3840, 112
  %v4056 = vpop.permute.xlu0 %4055
  %4057 = vrot.lane.b32.xlu0 %v3841, 112
  %v4058 = vpop.permute.xlu0 %4057
  %4059 = vrot.lane.b32.xlu0 %v3842, 112
  %v4060 = vpop.permute.xlu0 %4059
  %4061 = vrot.lane.b32.xlu0 %v3837, 112
  %v4062 = vpop.permute.xlu0 %4061
  %4063 = vrot.lane.b32.xlu0 %v3861, 112
  %v4064 = vpop.permute.xlu0 %4063
  %4065 = vrot.lane.b32.xlu0 %v3862, 112
  %v4066 = vpop.permute.xlu0 %4065
  %4067 = vrot.lane.b32.xlu0 %v3863, 112
  %v4068 = vpop.permute.xlu0 %4067
  %4069 = vrot.lane.b32.xlu0 %v3864, 112
  %v4070 = vpop.permute.xlu0 %4069
  %4071 = vrot.lane.b32.xlu0 %v3865, 112
  %v4072 = vpop.permute.xlu0 %4071
  %4073 = vrot.lane.b32.xlu0 %v3860, 112
  %v4074 = vpop.permute.xlu0 %4073
  %4075 = vrot.lane.b32.xlu0 %v3884, 112
  %v4076 = vpop.permute.xlu0 %4075
  %4077 = vrot.lane.b32.xlu0 %v3885, 112
  %v4078 = vpop.permute.xlu0 %4077
  %4079 = vrot.lane.b32.xlu0 %v3886, 112
  %v4080 = vpop.permute.xlu0 %4079
  %4081 = vrot.lane.b32.xlu0 %v3887, 112
  %v4082 = vpop.permute.xlu0 %4081
  %4083 = vrot.lane.b32.xlu0 %v3888, 112
  %v4084 = vpop.permute.xlu0 %4083
  %4085 = vrot.lane.b32.xlu0 %v3883, 112
  %v4086 = vpop.permute.xlu0 %4085
  %v4087 = vsel %vm2444, %v3896, %v3898
  %v4088 = vsel %vm2444, %v3898, %v3900
  %v4089 = vsel %vm2444, %v3900, %v3902
  %v4090 = vsel %vm2444, %v3902, %v3904
  %v4091 = vsel %vm2444, %v3904, %v3906
  %v4092 = vsel %vm2444, %v3908, %v3910
  %v4093 = vsel %vm2444, %v3910, %v3912
  %v4094 = vsel %vm2444, %v3912, %v3914
  %v4095 = vsel %vm2444, %v3914, %v3916
  %v4096 = vsel %vm2444, %v3916, %v3918
  %v4097 = vsel %vm2444, %v3920, %v3922
  %v4098 = vsel %vm2444, %v3922, %v3924
  %v4099 = vsel %vm2444, %v3924, %v3926
  %v4100 = vsel %vm2444, %v3926, %v3928
  %v4101 = vsel %vm2444, %v3928, %v3930
  %v4102 = vsel %vm2444, %v3932, %v3934
  %v4103 = vsel %vm2444, %v3934, %v3936
  %v4104 = vsel %vm2444, %v3936, %v3938
  %v4105 = vsel %vm2444, %v3938, %v3940
  %v4106 = vsel %vm2444, %v3940, %v3942
  %v4107 = vsel %vm2444, %v3944, %v3946
  %v4108 = vsel %vm2444, %v3946, %v3948
  %v4109 = vsel %vm2444, %v3948, %v3950
  %v4110 = vsel %vm2444, %v3950, %v3952
  %v4111 = vsel %vm2444, %v3952, %v3954
  %v4112 = vsel %vm2444, %v3956, %v3958
  %v4113 = vsel %vm2444, %v3958, %v3960
  %v4114 = vsel %vm2444, %v3960, %v3962
  %v4115 = vsel %vm2444, %v3962, %v3964
  %v4116 = vsel %vm2444, %v3964, %v3966
  %v4117 = vsel %vm2444, %v3968, %v3970
  %v4118 = vsel %vm2444, %v3970, %v3972
  %v4119 = vsel %vm2444, %v3972, %v3974
  %v4120 = vsel %vm2444, %v3974, %v3976
  %v4121 = vsel %vm2444, %v3976, %v3978
  %v4122 = vsel %vm2444, %v3980, %v3982
  %v4123 = vsel %vm2444, %v3982, %v3984
  %v4124 = vsel %vm2444, %v3984, %v3986
  %v4125 = vsel %vm2444, %v3986, %v3988
  %v4126 = vsel %vm2444, %v3988, %v3990
  %v4127 = vsel %vm2444, %v3992, %v3994
  %v4128 = vsel %vm2444, %v3994, %v3996
  %v4129 = vsel %vm2444, %v3996, %v3998
  %v4130 = vsel %vm2444, %v3998, %v4000
  %v4131 = vsel %vm2444, %v4000, %v4002
  %v4132 = vsel %vm2444, %v4004, %v4006
  %v4133 = vsel %vm2444, %v4006, %v4008
  %v4134 = vsel %vm2444, %v4008, %v4010
  %v4135 = vsel %vm2444, %v4010, %v4012
  %v4136 = vsel %vm2444, %v4012, %v4014
  %v4137 = vsel %vm2444, %v4016, %v4018
  %v4138 = vsel %vm2444, %v4018, %v4020
  %v4139 = vsel %vm2444, %v4020, %v4022
  %v4140 = vsel %vm2444, %v4022, %v4024
  %v4141 = vsel %vm2444, %v4024, %v4026
  %v4142 = vsel %vm2444, %v4028, %v4030
  %v4143 = vsel %vm2444, %v4030, %v4032
  %v4144 = vsel %vm2444, %v4032, %v4034
  %v4145 = vsel %vm2444, %v4034, %v4036
  %v4146 = vsel %vm2444, %v4036, %v4038
  %v4147 = vsel %vm2444, %v4040, %v4042
  %v4148 = vsel %vm2444, %v4042, %v4044
  %v4149 = vsel %vm2444, %v4044, %v4046
  %v4150 = vsel %vm2444, %v4046, %v4048
  %v4151 = vsel %vm2444, %v4048, %v4050
  %v4152 = vsel %vm2444, %v4052, %v4054
  %v4153 = vsel %vm2444, %v4054, %v4056
  %v4154 = vsel %vm2444, %v4056, %v4058
  %v4155 = vsel %vm2444, %v4058, %v4060
  %v4156 = vsel %vm2444, %v4060, %v4062
  %v4157 = vsel %vm2444, %v4064, %v4066
  %v4158 = vsel %vm2444, %v4066, %v4068
  %v4159 = vsel %vm2444, %v4068, %v4070
  %v4160 = vsel %vm2444, %v4070, %v4072
  %v4161 = vsel %vm2444, %v4072, %v4074
  %v4162 = vsel %vm2444, %v4076, %v4078
  %v4163 = vsel %vm2444, %v4078, %v4080
  %v4164 = vsel %vm2444, %v4080, %v4082
  %v4165 = vsel %vm2444, %v4082, %v4084
  %v4166 = vsel %vm2444, %v4084, %v4086
  %4263 = vmatprep.subr.bf16.mxu0 %v1783
  %4264 = vmatpush1.bf16.msra.mxu0 %v1782
  %4265 = vmatprep.subr.bf16.mxu0 %v3563
  %4266 = vmatpush1.bf16.msra.mxu0 %v3562
  %4267 = vmatprep.subr.bf16.mxu0 %v3586
  %4268 = vmatpush1.bf16.msra.mxu0 %v3585
  %4269 = vmatprep.subr.bf16.mxu0 %v3609
  %4270 = vmatpush1.bf16.msra.mxu0 %v3608
  %4271 = vmatprep.subr.bf16.mxu0 %v3632
  %4272 = vmatpush1.bf16.msra.mxu0 %v3631
  %4273 = vmatprep.subr.bf16.mxu0 %v3655
  %4274 = vmatpush1.bf16.msra.mxu0 %v3654
  %4275 = vmatprep.subr.bf16.mxu0 %v3678
  %4276 = vmatpush1.bf16.msra.mxu0 %v3677
  %4277 = vmatprep.subr.bf16.mxu0 %v3701
  %4278 = vmatpush1.bf16.msra.mxu0 %v3700
  %4279 = vmatprep.subr.bf16.mxu0 %v3724
  %4280 = vmatpush1.bf16.msra.mxu0 %v3723
  %4281 = vmatprep.subr.bf16.mxu0 %v3747
  %4282 = vmatpush1.bf16.msra.mxu0 %v3746
  %4283 = vmatprep.subr.bf16.mxu0 %v3770
  %4284 = vmatpush1.bf16.msra.mxu0 %v3769
  %4285 = vmatprep.subr.bf16.mxu0 %v3793
  %4286 = vmatpush1.bf16.msra.mxu0 %v3792
  %4287 = vmatprep.subr.bf16.mxu0 %v3816
  %4288 = vmatpush1.bf16.msra.mxu0 %v3815
  %4289 = vmatprep.subr.bf16.mxu0 %v3839
  %4290 = vmatpush1.bf16.msra.mxu0 %v3838
  %4291 = vmatprep.subr.bf16.mxu0 %v3862
  %4292 = vmatpush1.bf16.msra.mxu0 %v3861
  %4293 = vmatprep.subr.bf16.mxu0 %v3885
  %4294 = vmatpush1.bf16.msra.mxu0 %v3884
  %4295 = vmatprep.mubr.bf16.mxu0 %v2644
  %4296 = vmatmul.mubr.bf16.gmra.mrb[0].mxu0 %v2643
  %v4297 = vpop.f32.mrb[0].mxu0
  %v4298 = vadd.f32 %v2624, %v4297
  %v4299 = vpop.f32.mrb[0].mxu0
  %v4300 = vadd.f32 %v2624, %v4299
  %v4301 = vpop.f32.mrb[0].mxu0
  %v4302 = vadd.f32 %v2629, %v4301
  %v4303 = vpop.f32.mrb[0].mxu0
  %v4304 = vadd.f32 %v2629, %v4303
  %4305 = vdwg.mxu0
  %4306 = vmatprep.subr.bf16.mxu0 %v4088
  %4307 = vmatpush1.bf16.msra.mxu0 %v4087
  %4308 = vmatprep.subr.bf16.mxu0 %v4093
  %4309 = vmatpush1.bf16.msra.mxu0 %v4092
  %4310 = vmatprep.subr.bf16.mxu0 %v4098
  %4311 = vmatpush1.bf16.msra.mxu0 %v4097
  %4312 = vmatprep.subr.bf16.mxu0 %v4103
  %4313 = vmatpush1.bf16.msra.mxu0 %v4102
  %4314 = vmatprep.subr.bf16.mxu0 %v4108
  %4315 = vmatpush1.bf16.msra.mxu0 %v4107
  %4316 = vmatprep.subr.bf16.mxu0 %v4113
  %4317 = vmatpush1.bf16.msra.mxu0 %v4112
  %4318 = vmatprep.subr.bf16.mxu0 %v4118
  %4319 = vmatpush1.bf16.msra.mxu0 %v4117
  %4320 = vmatprep.subr.bf16.mxu0 %v4123
  %4321 = vmatpush1.bf16.msra.mxu0 %v4122
  %4322 = vmatprep.subr.bf16.mxu0 %v4128
  %4323 = vmatpush1.bf16.msra.mxu0 %v4127
  %4324 = vmatprep.subr.bf16.mxu0 %v4133
  %4325 = vmatpush1.bf16.msra.mxu0 %v4132
  %4326 = vmatprep.subr.bf16.mxu0 %v4138
  %4327 = vmatpush1.bf16.msra.mxu0 %v4137
  %4328 = vmatprep.subr.bf16.mxu0 %v4143
  %4329 = vmatpush1.bf16.msra.mxu0 %v4142
  %4330 = vmatprep.subr.bf16.mxu0 %v4148
  %4331 = vmatpush1.bf16.msra.mxu0 %v4147
  %4332 = vmatprep.subr.bf16.mxu0 %v4153
  %4333 = vmatpush1.bf16.msra.mxu0 %v4152
  %4334 = vmatprep.subr.bf16.mxu0 %v4158
  %4335 = vmatpush1.bf16.msra.mxu0 %v4157
  %4336 = vmatprep.subr.bf16.mxu0 %v4163
  %4337 = vmatpush1.bf16.msra.mxu0 %v4162
  %4338 = vmatprep.mubr.bf16.mxu0 %v2646
  %4339 = vmatmul.mubr.bf16.gmra.mrb[0].mxu0 %v2645
  %v4340 = vpop.f32.mrb[0].mxu0
  %v4341 = vadd.f32 %v4298, %v4340
  %v4342 = vpop.f32.mrb[0].mxu0
  %v4343 = vadd.f32 %v4300, %v4342
  %v4344 = vpop.f32.mrb[0].mxu0
  %v4345 = vadd.f32 %v4302, %v4344
  %v4346 = vpop.f32.mrb[0].mxu0
  %v4347 = vadd.f32 %v4304, %v4346
  %4348 = vdwg.mxu0
  %4349 = vmatprep.subr.bf16.mxu0 %v1785
  %4350 = vmatpush1.bf16.msra.mxu0 %v1784
  %4351 = vmatprep.subr.bf16.mxu0 %v3565
  %4352 = vmatpush1.bf16.msra.mxu0 %v3564
  %4353 = vmatprep.subr.bf16.mxu0 %v3588
  %4354 = vmatpush1.bf16.msra.mxu0 %v3587
  %4355 = vmatprep.subr.bf16.mxu0 %v3611
  %4356 = vmatpush1.bf16.msra.mxu0 %v3610
  %4357 = vmatprep.subr.bf16.mxu0 %v3634
  %4358 = vmatpush1.bf16.msra.mxu0 %v3633
  %4359 = vmatprep.subr.bf16.mxu0 %v3657
  %4360 = vmatpush1.bf16.msra.mxu0 %v3656
  %4361 = vmatprep.subr.bf16.mxu0 %v3680
  %4362 = vmatpush1.bf16.msra.mxu0 %v3679
  %4363 = vmatprep.subr.bf16.mxu0 %v3703
  %4364 = vmatpush1.bf16.msra.mxu0 %v3702
  %4365 = vmatprep.subr.bf16.mxu0 %v3726
  %4366 = vmatpush1.bf16.msra.mxu0 %v3725
  %4367 = vmatprep.subr.bf16.mxu0 %v3749
  %4368 = vmatpush1.bf16.msra.mxu0 %v3748
  %4369 = vmatprep.subr.bf16.mxu0 %v3772
  %4370 = vmatpush1.bf16.msra.mxu0 %v3771
  %4371 = vmatprep.subr.bf16.mxu0 %v3795
  %4372 = vmatpush1.bf16.msra.mxu0 %v3794
  %4373 = vmatprep.subr.bf16.mxu0 %v3818
  %4374 = vmatpush1.bf16.msra.mxu0 %v3817
  %4375 = vmatprep.subr.bf16.mxu0 %v3841
  %4376 = vmatpush1.bf16.msra.mxu0 %v3840
  %4377 = vmatprep.subr.bf16.mxu0 %v3864
  %4378 = vmatpush1.bf16.msra.mxu0 %v3863
  %4379 = vmatprep.subr.bf16.mxu0 %v3887
  %4380 = vmatpush1.bf16.msra.mxu0 %v3886
  %4381 = vmatprep.mubr.bf16.mxu0 %v2644
  %4382 = vmatmul.mubr.bf16.gmra.mrb[0].mxu0 %v2643
  %v4383 = vpop.f32.mrb[0].mxu0
  %v4384 = vadd.f32 %v2624, %v4383
  %v4385 = vpop.f32.mrb[0].mxu0
  %v4386 = vadd.f32 %v2624, %v4385
  %v4387 = vpop.f32.mrb[0].mxu0
  %v4388 = vadd.f32 %v2629, %v4387
  %v4389 = vpop.f32.mrb[0].mxu0
  %v4390 = vadd.f32 %v2629, %v4389
  %4391 = vdwg.mxu0
  %4392 = vmatprep.subr.bf16.mxu0 %v4090
  %4393 = vmatpush1.bf16.msra.mxu0 %v4089
  %4394 = vmatprep.subr.bf16.mxu0 %v4095
  %4395 = vmatpush1.bf16.msra.mxu0 %v4094
  %4396 = vmatprep.subr.bf16.mxu0 %v4100
  %4397 = vmatpush1.bf16.msra.mxu0 %v4099
  %4398 = vmatprep.subr.bf16.mxu0 %v4105
  %4399 = vmatpush1.bf16.msra.mxu0 %v4104
  %4400 = vmatprep.subr.bf16.mxu0 %v4110
  %4401 = vmatpush1.bf16.msra.mxu0 %v4109
  %4402 = vmatprep.subr.bf16.mxu0 %v4115
  %4403 = vmatpush1.bf16.msra.mxu0 %v4114
  %4404 = vmatprep.subr.bf16.mxu0 %v4120
  %4405 = vmatpush1.bf16.msra.mxu0 %v4119
  %4406 = vmatprep.subr.bf16.mxu0 %v4125
  %4407 = vmatpush1.bf16.msra.mxu0 %v4124
  %4408 = vmatprep.subr.bf16.mxu0 %v4130
  %4409 = vmatpush1.bf16.msra.mxu0 %v4129
  %4410 = vmatprep.subr.bf16.mxu0 %v4135
  %4411 = vmatpush1.bf16.msra.mxu0 %v4134
  %4412 = vmatprep.subr.bf16.mxu0 %v4140
  %4413 = vmatpush1.bf16.msra.mxu0 %v4139
  %4414 = vmatprep.subr.bf16.mxu0 %v4145
  %4415 = vmatpush1.bf16.msra.mxu0 %v4144
  %4416 = vmatprep.subr.bf16.mxu0 %v4150
  %4417 = vmatpush1.bf16.msra.mxu0 %v4149
  %4418 = vmatprep.subr.bf16.mxu0 %v4155
  %4419 = vmatpush1.bf16.msra.mxu0 %v4154
  %4420 = vmatprep.subr.bf16.mxu0 %v4160
  %4421 = vmatpush1.bf16.msra.mxu0 %v4159
  %4422 = vmatprep.subr.bf16.mxu0 %v4165
  %4423 = vmatpush1.bf16.msra.mxu0 %v4164
  %4424 = vmatprep.mubr.bf16.mxu0 %v2646
  %4425 = vmatmul.mubr.bf16.gmra.mrb[0].mxu0 %v2645
  %v4426 = vpop.f32.mrb[0].mxu0
  %v4427 = vadd.f32 %v4384, %v4426
  %v4428 = vpop.f32.mrb[0].mxu0
  %v4429 = vadd.f32 %v4386, %v4428
  %v4430 = vpop.f32.mrb[0].mxu0
  %v4431 = vadd.f32 %v4388, %v4430
  %v4432 = vpop.f32.mrb[0].mxu0
  %v4433 = vadd.f32 %v4390, %v4432
  %4434 = vdwg.mxu0
  %4435 = vmatprep.subr.bf16.mxu0 %v1787
  %4436 = vmatpush1.bf16.msra.mxu0 %v1786
  %4437 = vmatprep.subr.bf16.mxu0 %v3561
  %4438 = vmatpush1.bf16.msra.mxu0 %v3566
  %4439 = vmatprep.subr.bf16.mxu0 %v3584
  %4440 = vmatpush1.bf16.msra.mxu0 %v3589
  %4441 = vmatprep.subr.bf16.mxu0 %v3607
  %4442 = vmatpush1.bf16.msra.mxu0 %v3612
  %4443 = vmatprep.subr.bf16.mxu0 %v3630
  %4444 = vmatpush1.bf16.msra.mxu0 %v3635
  %4445 = vmatprep.subr.bf16.mxu0 %v3653
  %4446 = vmatpush1.bf16.msra.mxu0 %v3658
  %4447 = vmatprep.subr.bf16.mxu0 %v3676
  %4448 = vmatpush1.bf16.msra.mxu0 %v3681
  %4449 = vmatprep.subr.bf16.mxu0 %v3699
  %4450 = vmatpush1.bf16.msra.mxu0 %v3704
  %4451 = vmatprep.subr.bf16.mxu0 %v3722
  %4452 = vmatpush1.bf16.msra.mxu0 %v3727
  %4453 = vmatprep.subr.bf16.mxu0 %v3745
  %4454 = vmatpush1.bf16.msra.mxu0 %v3750
  %4455 = vmatprep.subr.bf16.mxu0 %v3768
  %4456 = vmatpush1.bf16.msra.mxu0 %v3773
  %4457 = vmatprep.subr.bf16.mxu0 %v3791
  %4458 = vmatpush1.bf16.msra.mxu0 %v3796
  %4459 = vmatprep.subr.bf16.mxu0 %v3814
  %4460 = vmatpush1.bf16.msra.mxu0 %v3819
  %4461 = vmatprep.subr.bf16.mxu0 %v3837
  %4462 = vmatpush1.bf16.msra.mxu0 %v3842
  %4463 = vmatprep.subr.bf16.mxu0 %v3860
  %4464 = vmatpush1.bf16.msra.mxu0 %v3865
  %4465 = vmatprep.subr.bf16.mxu0 %v3883
  %4466 = vmatpush1.bf16.msra.mxu0 %v3888
  %4467 = vmatprep.mubr.bf16.mxu0 %v2644
  %4468 = vmatmul.mubr.bf16.gmra.mrb[0].mxu0 %v2643
  %v4469 = vpop.f32.mrb[0].mxu0
  %v4470 = vadd.f32 %v2624, %v4469
  %v4471 = vpop.f32.mrb[0].mxu0
  %v4472 = vadd.f32 %v2624, %v4471
  %v4473 = vpop.f32.mrb[0].mxu0
  %v4474 = vadd.f32 %v2629, %v4473
  %v4475 = vpop.f32.mrb[0].mxu0
  %v4476 = vadd.f32 %v2629, %v4475
  %4477 = vdwg.mxu0
  %4478 = vmatprep.subr.bf16.mxu0 %v3906
  %4479 = vmatpush1.bf16.msra.mxu0 %v4091
  %4480 = vmatprep.subr.bf16.mxu0 %v3918
  %4481 = vmatpush1.bf16.msra.mxu0 %v4096
  %4482 = vmatprep.subr.bf16.mxu0 %v3930
  %4483 = vmatpush1.bf16.msra.mxu0 %v4101
  %4484 = vmatprep.subr.bf16.mxu0 %v3942
  %4485 = vmatpush1.bf16.msra.mxu0 %v4106
  %4486 = vmatprep.subr.bf16.mxu0 %v3954
  %4487 = vmatpush1.bf16.msra.mxu0 %v4111
  %4488 = vmatprep.subr.bf16.mxu0 %v3966
  %4489 = vmatpush1.bf16.msra.mxu0 %v4116
  %4490 = vmatprep.subr.bf16.mxu0 %v3978
  %4491 = vmatpush1.bf16.msra.mxu0 %v4121
  %4492 = vmatprep.subr.bf16.mxu0 %v3990
  %4493 = vmatpush1.bf16.msra.mxu0 %v4126
  %4494 = vmatprep.subr.bf16.mxu0 %v4002
  %4495 = vmatpush1.bf16.msra.mxu0 %v4131
  %4496 = vmatprep.subr.bf16.mxu0 %v4014
  %4497 = vmatpush1.bf16.msra.mxu0 %v4136
  %4498 = vmatprep.subr.bf16.mxu0 %v4026
  %4499 = vmatpush1.bf16.msra.mxu0 %v4141
  %4500 = vmatprep.subr.bf16.mxu0 %v4038
  %4501 = vmatpush1.bf16.msra.mxu0 %v4146
  %4502 = vmatprep.subr.bf16.mxu0 %v4050
  %4503 = vmatpush1.bf16.msra.mxu0 %v4151
  %4504 = vmatprep.subr.bf16.mxu0 %v4062
  %4505 = vmatpush1.bf16.msra.mxu0 %v4156
  %4506 = vmatprep.subr.bf16.mxu0 %v4074
  %4507 = vmatpush1.bf16.msra.mxu0 %v4161
  %4508 = vmatprep.subr.bf16.mxu0 %v4086
  %4509 = vmatpush1.bf16.msra.mxu0 %v4166
  %4510 = vmatprep.mubr.bf16.mxu0 %v2646
  %4511 = vmatmul.mubr.bf16.gmra.mrb[0].mxu0 %v2645
  %v4512 = vpop.f32.mrb[0].mxu0
  %v4513 = vadd.f32 %v4470, %v4512
  %v4514 = vpop.f32.mrb[0].mxu0
  %v4515 = vadd.f32 %v4472, %v4514
  %v4516 = vpop.f32.mrb[0].mxu0
  %v4517 = vadd.f32 %v4474, %v4516
  %v4518 = vpop.f32.mrb[0].mxu0
  %v4519 = vadd.f32 %v4476, %v4518
  %4520 = vdwg.mxu0
  %v4521 = vmax.f32 %v4341, 1e-06
  %v4522 = vmax.f32 %v4343, 1e-06
  %v4523 = vmax.f32 %v4427, 1e-06
  %v4524 = vmax.f32 %v4429, 1e-06
  %v4525 = vmax.f32 %v4513, 1e-06
  %v4526 = vmax.f32 %v4515, 1e-06
  %v4527 = vmax.f32 %v4345, 1e-06
  %v4528 = vmax.f32 %v4347, 1e-06
  %v4529 = vmax.f32 %v4431, 1e-06
  %v4530 = vmax.f32 %v4433, 1e-06
  %v4531 = vmax.f32 %v4517, 1e-06
  %v4532 = vmax.f32 %v4519, 1e-06
  %v4533 = vmul.f32 %v4521, %v4521
  %v4534 = vmul.f32 %v4522, %v4522
  %v4535 = vmul.f32 %v4523, %v4523
  %v4536 = vmul.f32 %v4524, %v4524
  %v4537 = vmul.f32 %v4525, %v4525
  %v4538 = vmul.f32 %v4526, %v4526
  %v4539 = vmul.f32 %v4527, %v4527
  %v4540 = vmul.f32 %v4528, %v4528
  %v4541 = vmul.f32 %v4529, %v4529
  %v4542 = vmul.f32 %v4530, %v4530
  %v4543 = vmul.f32 %v4531, %v4531
  %v4544 = vmul.f32 %v4532, %v4532
  %v4545 = vmul.f32 %v4533, %v4521
  %v4546 = vmul.f32 %v4534, %v4522
  %v4547 = vmul.f32 %v4535, %v4523
  %v4548 = vmul.f32 %v4536, %v4524
  %v4549 = vmul.f32 %v4537, %v4525
  %v4550 = vmul.f32 %v4538, %v4526
  %v4551 = vmul.f32 %v4539, %v4527
  %v4552 = vmul.f32 %v4540, %v4528
  %v4553 = vmul.f32 %v4541, %v4529
  %v4554 = vmul.f32 %v4542, %v4530
  %v4555 = vmul.f32 %v4543, %v4531
  %v4556 = vmul.f32 %v4544, %v4532
  %v4557 = vpack.c.bf16 %v4551, %v4545
  %v4558 = vpack.c.bf16 %v4552, %v4546
  %v4559 = vpack.c.bf16 %v4553, %v4547
  %v4560 = vpack.c.bf16 %v4554, %v4548
  %v4561 = vpack.c.bf16 %v4555, %v4549
  %v4562 = vpack.c.bf16 %v4556, %v4550
  %v4564 = vsel %vm3391, %v4562, 0
  %4566 = vmatprep.subr.bf16.mxu0 %v3216
  %4567 = vmatpush1.bf16.msra.mxu0 %v3215
  %4568 = vmatprep.subr.bf16.mxu0 %v3218
  %4569 = vmatpush1.bf16.msra.mxu0 %v3217
  %4570 = vmatprep.subr.bf16.mxu0 %v3220
  %4571 = vmatpush1.bf16.msra.mxu0 %v3219
  %4572 = vmatprep.subr.bf16.mxu0 %v3222
  %4573 = vmatpush1.bf16.msra.mxu0 %v3221
  %4574 = vmatprep.subr.bf16.mxu0 %v3224
  %4575 = vmatpush1.bf16.msra.mxu0 %v3223
  %4576 = vmatprep.subr.bf16.mxu0 %v3226
  %4577 = vmatpush1.bf16.msra.mxu0 %v3225
  %4578 = vmatprep.subr.bf16.mxu0 %v3228
  %4579 = vmatpush1.bf16.msra.mxu0 %v3227
  %4580 = vmatprep.subr.bf16.mxu0 %v3230
  %4581 = vmatpush1.bf16.msra.mxu0 %v3229
  %4582 = vmatprep.subr.bf16.mxu0 %v3232
  %4583 = vmatpush1.bf16.msra.mxu0 %v3231
  %4584 = vmatprep.subr.bf16.mxu0 %v3234
  %4585 = vmatpush1.bf16.msra.mxu0 %v3233
  %4586 = vmatprep.subr.bf16.mxu0 %v3236
  %4587 = vmatpush1.bf16.msra.mxu0 %v3235
  %4588 = vmatprep.subr.bf16.mxu0 %v3238
  %4589 = vmatpush1.bf16.msra.mxu0 %v3237
  %4590 = vmatprep.subr.bf16.mxu0 %v3240
  %4591 = vmatpush1.bf16.msra.mxu0 %v3239
  %4592 = vmatprep.subr.bf16.mxu0 %v3242
  %4593 = vmatpush1.bf16.msra.mxu0 %v3241
  %4594 = vmatprep.subr.bf16.mxu0 %v3244
  %4595 = vmatpush1.bf16.msra.mxu0 %v3243
  %4596 = vmatprep.subr.bf16.mxu0 %v3246
  %4597 = vmatpush1.bf16.msra.mxu0 %v3245
  %4598 = vmatprep.mubr.bf16.mxu0 %v4558
  %4599 = vmatmul.mubr.bf16.gmra.mrb[0].mxu0 %v4557
  %v4600 = vpop.f32.mrb[0].mxu0
  %v4601 = vadd.f32 0.0, %v4600
  %v4602 = vpop.f32.mrb[0].mxu0
  %v4603 = vadd.f32 0.0, %v4602
  %v4604 = vpop.f32.mrb[0].mxu0
  %v4605 = vadd.f32 0.0, %v4604
  %v4606 = vpop.f32.mrb[0].mxu0
  %v4607 = vadd.f32 0.0, %v4606
  %4608 = vdwg.mxu0
  %4609 = vmatprep.subr.bf16.mxu0 %v3248
  %4610 = vmatpush1.bf16.msra.mxu0 %v3247
  %4611 = vmatprep.subr.bf16.mxu0 %v3250
  %4612 = vmatpush1.bf16.msra.mxu0 %v3249
  %4613 = vmatprep.subr.bf16.mxu0 %v3252
  %4614 = vmatpush1.bf16.msra.mxu0 %v3251
  %4615 = vmatprep.subr.bf16.mxu0 %v3254
  %4616 = vmatpush1.bf16.msra.mxu0 %v3253
  %4617 = vmatprep.subr.bf16.mxu0 %v3256
  %4618 = vmatpush1.bf16.msra.mxu0 %v3255
  %4619 = vmatprep.subr.bf16.mxu0 %v3258
  %4620 = vmatpush1.bf16.msra.mxu0 %v3257
  %4621 = vmatprep.subr.bf16.mxu0 %v3260
  %4622 = vmatpush1.bf16.msra.mxu0 %v3259
  %4623 = vmatprep.subr.bf16.mxu0 %v3262
  %4624 = vmatpush1.bf16.msra.mxu0 %v3261
  %4625 = vmatprep.subr.bf16.mxu0 %v3264
  %4626 = vmatpush1.bf16.msra.mxu0 %v3263
  %4627 = vmatprep.subr.bf16.mxu0 %v3266
  %4628 = vmatpush1.bf16.msra.mxu0 %v3265
  %4629 = vmatprep.subr.bf16.mxu0 %v3268
  %4630 = vmatpush1.bf16.msra.mxu0 %v3267
  %4631 = vmatprep.subr.bf16.mxu0 %v3270
  %4632 = vmatpush1.bf16.msra.mxu0 %v3269
  %4633 = vmatprep.subr.bf16.mxu0 %v3272
  %4634 = vmatpush1.bf16.msra.mxu0 %v3271
  %4635 = vmatprep.subr.bf16.mxu0 %v3274
  %4636 = vmatpush1.bf16.msra.mxu0 %v3273
  %4637 = vmatprep.subr.bf16.mxu0 %v3276
  %4638 = vmatpush1.bf16.msra.mxu0 %v3275
  %4639 = vmatprep.subr.bf16.mxu0 %v3278
  %4640 = vmatpush1.bf16.msra.mxu0 %v3277
  %4641 = vmatprep.mubr.bf16.mxu0 %v4560
  %4642 = vmatmul.mubr.bf16.gmra.mrb[0].mxu0 %v4559
  %v4643 = vpop.f32.mrb[0].mxu0
  %v4644 = vadd.f32 %v4601, %v4643
  %v4645 = vpop.f32.mrb[0].mxu0
  %v4646 = vadd.f32 %v4603, %v4645
  %v4647 = vpop.f32.mrb[0].mxu0
  %v4648 = vadd.f32 %v4605, %v4647
  %v4649 = vpop.f32.mrb[0].mxu0
  %v4650 = vadd.f32 %v4607, %v4649
  %4651 = vdwg.mxu0
  %4652 = vmatprep.subr.bf16.mxu0 %v3280
  %4653 = vmatpush1.bf16.msra.mxu0 %v3279
  %4654 = vmatprep.subr.bf16.mxu0 %v3282
  %4655 = vmatpush1.bf16.msra.mxu0 %v3281
  %4656 = vmatprep.subr.bf16.mxu0 %v3284
  %4657 = vmatpush1.bf16.msra.mxu0 %v3283
  %4658 = vmatprep.subr.bf16.mxu0 %v3286
  %4659 = vmatpush1.bf16.msra.mxu0 %v3285
  %4660 = vmatprep.subr.bf16.mxu0 %v3288
  %4661 = vmatpush1.bf16.msra.mxu0 %v3287
  %4662 = vmatprep.subr.bf16.mxu0 %v3290
  %4663 = vmatpush1.bf16.msra.mxu0 %v3289
  %4664 = vmatprep.subr.bf16.mxu0 %v3292
  %4665 = vmatpush1.bf16.msra.mxu0 %v3291
  %4666 = vmatprep.subr.bf16.mxu0 %v3294
  %4667 = vmatpush1.bf16.msra.mxu0 %v3293
  %4668 = vmatprep.subr.bf16.mxu0 %v3296
  %4669 = vmatpush1.bf16.msra.mxu0 %v3295
  %4670 = vmatprep.subr.bf16.mxu0 %v3298
  %4671 = vmatpush1.bf16.msra.mxu0 %v3297
  %4672 = vmatprep.subr.bf16.mxu0 %v3300
  %4673 = vmatpush1.bf16.msra.mxu0 %v3299
  %4674 = vmatprep.subr.bf16.mxu0 %v3302
  %4675 = vmatpush1.bf16.msra.mxu0 %v3301
  %4676 = vmatprep.subr.bf16.mxu0 0
  %4677 = vmatpush1.bf16.msra.mxu0 0
  %4678 = vmatprep.subr.bf16.mxu0 0
  %4679 = vmatpush1.bf16.msra.mxu0 0
  %4680 = vmatprep.subr.bf16.mxu0 0
  %4681 = vmatpush1.bf16.msra.mxu0 0
  %4682 = vmatprep.subr.bf16.mxu0 0
  %4683 = vmatpush1.bf16.msra.mxu0 0
  %4684 = vmatprep.mubr.bf16.mxu0 %v4564
  %4685 = vmatmul.mubr.bf16.gmra.mrb[0].mxu0 %v4561
  %v4686 = vpop.f32.mrb[0].mxu0
  %v4687 = vadd.f32 %v4644, %v4686
  %v4688 = vpop.f32.mrb[0].mxu0
  %v4689 = vadd.f32 %v4646, %v4688
  %v4690 = vpop.f32.mrb[0].mxu0
  %v4691 = vadd.f32 %v4648, %v4690
  %v4692 = vpop.f32.mrb[0].mxu0
  %v4693 = vadd.f32 %v4650, %v4692
  %4694 = vdwg.mxu0
  %v4695 = vlog2.pop %v4687
  %v4696 = vmul.f32 %v4695, 0.6931472
  %v4697 = vlog2.pop %v4689
  %v4698 = vmul.f32 %v4697, 0.6931472
  %v4699 = vlog2.pop %v4691
  %v4700 = vmul.f32 %v4699, 0.6931472
  %v4701 = vlog2.pop %v4693
  %v4702 = vmul.f32 %v4701, 0.6931472
  %v4703 = vmul.f32 %v4696, 0.33333334
  %v4704 = vmul.f32 %v4698, 0.33333334
  %v4705 = vmul.f32 %v4700, 0.33333334
  %v4706 = vmul.f32 %v4702, 0.33333334
  %v4707 = vmul.f32 %v4703, 1.442695
  %v4708 = vpow.pop %v4707
  %v4709 = vmul.f32 %v4704, 1.442695
  %v4710 = vpow.pop %v4709
  %v4711 = vmul.f32 %v4705, 1.442695
  %v4712 = vpow.pop %v4711
  %v4713 = vmul.f32 %v4706, 1.442695
  %v4714 = vpow.pop %v4713
  %vm4715 = vcmask 392192
  %v4716 = vsel %vm4715, %v3539, 0.0
  %v4717 = vadd.f32 %v3537, %v4716
  %4718 = vadd.xlane.f32.xlu0 %v4717
  %v4719 = vpop.xlane.xlu0 %4718
  %v4720 = vsel %vm4715, %v3543, 0.0
  %v4721 = vadd.f32 %v3541, %v4720
  %4722 = vadd.xlane.f32.xlu0 %v4721
  %v4723 = vpop.xlane.xlu0 %4722
  %v4724 = vsel %vm4715, %v4710, 0.0
  %v4725 = vadd.f32 %v4708, %v4724
  %4726 = vadd.xlane.f32.xlu0 %v4725
  %v4727 = vpop.xlane.xlu0 %4726
  %v4728 = vsel %vm4715, %v4714, 0.0
  %v4729 = vadd.f32 %v4712, %v4728
  %4730 = vadd.xlane.f32.xlu0 %v4729
  %v4731 = vpop.xlane.xlu0 %4730
  %v4732 = vadd.f32 %v4719, %v4727
  %v4733 = vadd.f32 %v4723, %v4731
  %v4734 = vmul.f32 %v4732, 0.0028409092
  %v4735 = vmul.f32 %v4733, 0.0028409092
  %v4736 = vsub.f32 %v3537, %v4734
  %v4737 = vsub.f32 %v3539, %v4734
  %v4738 = vsub.f32 %v3541, %v4735
  %v4739 = vsub.f32 %v3543, %v4735
  %v4740 = vsub.f32 %v4708, %v4734
  %v4741 = vsub.f32 %v4710, %v4734
  %v4742 = vsub.f32 %v4712, %v4735
  %v4743 = vsub.f32 %v4714, %v4735
  %v4744 = vmul.f32 %v4736, %v4736
  %v4745 = vmul.f32 %v4737, %v4737
  %v4746 = vmul.f32 %v4738, %v4738
  %v4747 = vmul.f32 %v4739, %v4739
  %v4748 = vsel %vm4715, %v4745, 0.0
  %v4749 = vadd.f32 %v4744, %v4748
  %4750 = vadd.xlane.f32.xlu0 %v4749
  %v4751 = vpop.xlane.xlu0 %4750
  %v4752 = vsel %vm4715, %v4747, 0.0
  %v4753 = vadd.f32 %v4746, %v4752
  %4754 = vadd.xlane.f32.xlu0 %v4753
  %v4755 = vpop.xlane.xlu0 %4754
  %v4756 = vmul.f32 %v4740, %v4740
  %v4757 = vmul.f32 %v4741, %v4741
  %v4758 = vmul.f32 %v4742, %v4742
  %v4759 = vmul.f32 %v4743, %v4743
  %v4760 = vsel %vm4715, %v4757, 0.0
  %v4761 = vadd.f32 %v4756, %v4760
  %4762 = vadd.xlane.f32.xlu0 %v4761
  %v4763 = vpop.xlane.xlu0 %4762
  %v4764 = vsel %vm4715, %v4759, 0.0
  %v4765 = vadd.f32 %v4758, %v4764
  %4766 = vadd.xlane.f32.xlu0 %v4765
  %v4767 = vpop.xlane.xlu0 %4766
  %v4768 = vadd.f32 %v4751, %v4763
  %v4769 = vadd.f32 %v4755, %v4767
  %v4770 = vmul.f32 %v4768, 0.0028409092
  %v4771 = vmul.f32 %v4769, 0.0028409092
  %v4772 = vadd.f32 %v4770, 1e-05
  %v4773 = vadd.f32 %v4771, 1e-05
  %v4774 = vrsqrt.pop %v4772
  %v4775 = vrsqrt.pop %v4773
  %v4776 = vmul.f32 %v4774, %v1794
  %v4777 = vmul.f32 %v4775, %v1795
  %4779 = vset.pattern.permute.xlu0 0
  %4780 = vperm.xlu0 %4779, %v4776
  %v4781 = vpop.permute.xlu0 %4780
  %4784 = vset.pattern.permute.xlu0 0
  %4785 = vperm.xlu0 %4784, %v4777
  %v4786 = vpop.permute.xlu0 %4785
  %v4788 = vmul.f32 %v4736, %v4781
  %v4789 = vmul.f32 %v4737, %v4781
  %v4790 = vmul.f32 %v4738, %v4786
  %v4791 = vmul.f32 %v4739, %v4786
  %4793 = vset.pattern.permute.xlu0 0
  %4794 = vperm.xlu0 %4793, %v1796
  %v4795 = vpop.permute.xlu0 %4794
  %4798 = vset.pattern.permute.xlu0 0
  %4799 = vperm.xlu0 %4798, %v1797
  %v4800 = vpop.permute.xlu0 %4799
  %v4802 = vadd.f32 %v4788, %v4795
  %v4803 = vadd.f32 %v4789, %v4795
  %v4804 = vadd.f32 %v4790, %v4800
  %v4805 = vadd.f32 %v4791, %v4800
  %v4806 = vmul.f32 %v4802, 0.5
  %v4807 = vmul.f32 %v4803, 0.5
  %v4808 = vmul.f32 %v4804, 0.5
  %v4809 = vmul.f32 %v4805, 0.5
  %v4810 = vtanh.pop %v4806
  %v4811 = vtanh.pop %v4807
  %v4812 = vtanh.pop %v4808
  %v4813 = vtanh.pop %v4809
  %v4814 = vmul.f32 %v4810, 0.5
  %v4815 = vmul.f32 %v4811, 0.5
  %v4816 = vmul.f32 %v4812, 0.5
  %v4817 = vmul.f32 %v4813, 0.5
  %v4818 = vadd.f32 %v4814, 0.5
  %v4819 = vadd.f32 %v4815, 0.5
  %v4820 = vadd.f32 %v4816, 0.5
  %v4821 = vadd.f32 %v4817, 0.5
  %v4822 = vmul.f32 %v4802, %v4818
  %v4823 = vmul.f32 %v4803, %v4819
  %v4824 = vmul.f32 %v4804, %v4820
  %v4825 = vmul.f32 %v4805, %v4821
  %v4826 = vpack.c.bf16 %v4824, %v4822
  %v4827 = vpack.c.bf16 %v4825, %v4823
  %v4828 = vmul.f32 %v4740, %v4781
  %v4829 = vmul.f32 %v4741, %v4781
  %v4830 = vmul.f32 %v4742, %v4786
  %v4831 = vmul.f32 %v4743, %v4786
  %v4832 = vadd.f32 %v4828, %v4795
  %v4833 = vadd.f32 %v4829, %v4795
  %v4834 = vadd.f32 %v4830, %v4800
  %v4835 = vadd.f32 %v4831, %v4800
  %v4836 = vmul.f32 %v4832, 0.5
  %v4837 = vmul.f32 %v4833, 0.5
  %v4838 = vmul.f32 %v4834, 0.5
  %v4839 = vmul.f32 %v4835, 0.5
  %v4840 = vtanh.pop %v4836
  %v4841 = vtanh.pop %v4837
  %v4842 = vtanh.pop %v4838
  %v4843 = vtanh.pop %v4839
  %v4844 = vmul.f32 %v4840, 0.5
  %v4845 = vmul.f32 %v4841, 0.5
  %v4846 = vmul.f32 %v4842, 0.5
  %v4847 = vmul.f32 %v4843, 0.5
  %v4848 = vadd.f32 %v4844, 0.5
  %v4849 = vadd.f32 %v4845, 0.5
  %v4850 = vadd.f32 %v4846, 0.5
  %v4851 = vadd.f32 %v4847, 0.5
  %v4852 = vmul.f32 %v4832, %v4848
  %v4853 = vmul.f32 %v4833, %v4849
  %v4854 = vmul.f32 %v4834, %v4850
  %v4855 = vmul.f32 %v4835, %v4851
  %v4856 = vpack.c.bf16 %v4854, %v4852
  %v4857 = vpack.c.bf16 %v4855, %v4853
  %v4858 = vld [vmem:[%s10] sm:$0xff]
  %v4859 = vld [vmem:[%s10 + $0x8] sm:$0xff]
  %v4860 = vld [vmem:[%s10 + $0x10] sm:$0xff]
  %v4861 = vld [vmem:[%s10 + $0x18] sm:$0xff]
  %v4862 = vld [vmem:[%s10 + $0x20] sm:$0xff]
  %v4863 = vld [vmem:[%s10 + $0x28] sm:$0xff]
  %v4864 = vld [vmem:[%s10 + $0x30] sm:$0xff]
  %v4865 = vld [vmem:[%s10 + $0x38] sm:$0xff]
  %v4866 = vld [vmem:[%s11] sm:$0xff]
  %v4867 = vld [vmem:[%s11 + $0x8] sm:$0xff]
  %v4868 = vld [vmem:[%s11 + $0x10] sm:$0xff]
  %v4869 = vld [vmem:[%s11 + $0x18] sm:$0xff]
  %v4870 = vld [vmem:[%s12] sm:$0xff]
  %v4871 = vld [vmem:[%s12 + $0x8] sm:$0xff]
  %v4872 = vld [vmem:[%s12 + $0x10] sm:$0xff]
  %v4873 = vld [vmem:[%s12 + $0x18] sm:$0xff]
  %v4874 = vld [vmem:[%s13] sm:$0xff]
  %v4875 = vld [vmem:[%s13 + $0x8] sm:$0xff]
  %v4876 = vld [vmem:[%s13 + $0x10] sm:$0xff]
  %v4877 = vld [vmem:[%s13 + $0x18] sm:$0xff]
  %4880 = vrot.lane.b32.xlu0 %v4826, 1
  %v4881 = vpop.permute.xlu0 %4880
  %4882 = vrot.lane.b32.xlu0 %v4827, 1
  %v4883 = vpop.permute.xlu0 %4882
  %vm4884 = vcmask 7168
  %v4885 = vsel %vm4884, %v4881, %v4883
  %vm4887 = vcmask 7168
  %v4890 = vsel %vm4887, 0, %v4881
  %4892 = vrot.lane.b32.xlu0 %v4826, 98
  %v4893 = vpop.permute.xlu0 %4892
  %4894 = vrot.lane.b32.xlu0 %v4827, 98
  %v4895 = vpop.permute.xlu0 %4894
  %vm4896 = vcmask 801792
  %v4897 = vsel %vm4896, %v4893, %v4895
  %vm4898 = vcmask 146432
  %v4900 = vsel %vm4898, %v4895, 0
  %4901 = vrot.lane.b32.xlu0 %v4826, 127
  %v4902 = vpop.permute.xlu0 %4901
  %4903 = vrot.lane.b32.xlu0 %v4827, 127
  %v4904 = vpop.permute.xlu0 %4903
  %v4905 = vsel %vm1904, %v4902, %v4904
  %4908 = vrot.lane.b32.xlu0 %v4826, 126
  %v4909 = vpop.permute.xlu0 %4908
  %4910 = vrot.lane.b32.xlu0 %v4827, 126
  %v4911 = vpop.permute.xlu0 %4910
  %v4912 = vsel %vm1928, %v4909, %v4911
  %4915 = vrot.lane.b32.xlu0 %v4826, 125
  %v4916 = vpop.permute.xlu0 %4915
  %4917 = vrot.lane.b32.xlu0 %v4827, 125
  %v4918 = vpop.permute.xlu0 %4917
  %v4919 = vsel %vm1952, %v4916, %v4918
  %4922 = vrot.lane.b32.xlu0 %v4826, 124
  %v4923 = vpop.permute.xlu0 %4922
  %4924 = vrot.lane.b32.xlu0 %v4827, 124
  %v4925 = vpop.permute.xlu0 %4924
  %v4926 = vsel %vm1976, %v4923, %v4925
  %4929 = vrot.lane.b32.xlu0 %v4826, 123
  %v4930 = vpop.permute.xlu0 %4929
  %4931 = vrot.lane.b32.xlu0 %v4827, 123
  %v4932 = vpop.permute.xlu0 %4931
  %v4933 = vsel %vm2000, %v4930, %v4932
  %4936 = vrot.lane.b32.xlu0 %v4826, 122
  %v4937 = vpop.permute.xlu0 %4936
  %4938 = vrot.lane.b32.xlu0 %v4827, 122
  %v4939 = vpop.permute.xlu0 %4938
  %v4940 = vsel %vm2024, %v4937, %v4939
  %4943 = vrot.lane.b32.xlu0 %v4826, 121
  %v4944 = vpop.permute.xlu0 %4943
  %4945 = vrot.lane.b32.xlu0 %v4827, 121
  %v4946 = vpop.permute.xlu0 %4945
  %v4947 = vsel %vm2048, %v4944, %v4946
  %4950 = vrot.lane.b32.xlu0 %v4826, 120
  %v4951 = vpop.permute.xlu0 %4950
  %4952 = vrot.lane.b32.xlu0 %v4827, 120
  %v4953 = vpop.permute.xlu0 %4952
  %v4954 = vsel %vm2072, %v4951, %v4953
  %4957 = vrot.lane.b32.xlu0 %v4826, 119
  %v4958 = vpop.permute.xlu0 %4957
  %4959 = vrot.lane.b32.xlu0 %v4827, 119
  %v4960 = vpop.permute.xlu0 %4959
  %v4961 = vsel %vm2096, %v4958, %v4960
  %4964 = vrot.lane.b32.xlu0 %v4826, 118
  %v4965 = vpop.permute.xlu0 %4964
  %4966 = vrot.lane.b32.xlu0 %v4827, 118
  %v4967 = vpop.permute.xlu0 %4966
  %v4968 = vsel %vm2120, %v4965, %v4967
  %4971 = vrot.lane.b32.xlu0 %v4826, 117
  %v4972 = vpop.permute.xlu0 %4971
  %4973 = vrot.lane.b32.xlu0 %v4827, 117
  %v4974 = vpop.permute.xlu0 %4973
  %v4975 = vsel %vm2144, %v4972, %v4974
  %4978 = vrot.lane.b32.xlu0 %v4826, 116
  %v4979 = vpop.permute.xlu0 %4978
  %4980 = vrot.lane.b32.xlu0 %v4827, 116
  %v4981 = vpop.permute.xlu0 %4980
  %v4982 = vsel %vm2168, %v4979, %v4981
  %4985 = vrot.lane.b32.xlu0 %v4826, 115
  %v4986 = vpop.permute.xlu0 %4985
  %4987 = vrot.lane.b32.xlu0 %v4827, 115
  %v4988 = vpop.permute.xlu0 %4987
  %v4989 = vsel %vm2192, %v4986, %v4988
  %4992 = vrot.lane.b32.xlu0 %v4826, 114
  %v4993 = vpop.permute.xlu0 %4992
  %4994 = vrot.lane.b32.xlu0 %v4827, 114
  %v4995 = vpop.permute.xlu0 %4994
  %v4996 = vsel %vm2216, %v4993, %v4995
  %5000 = vrot.lane.b32.xlu0 %v4897, 15
  %v5001 = vpop.permute.xlu0 %5000
  %5002 = vrot.lane.b32.xlu0 %v4900, 15
  %v5003 = vpop.permute.xlu0 %5002
  %vm5004 = vcmask 121856
  %v5005 = vsel %vm5004, %v5001, %v5003
  %5006 = vrot.lane.b32.xlu0 %v4826, 113
  %v5007 = vpop.permute.xlu0 %5006
  %5008 = vrot.lane.b32.xlu0 %v4827, 113
  %v5009 = vpop.permute.xlu0 %5008
  %5010 = vrot.lane.b32.xlu0 %v4905, 113
  %v5011 = vpop.permute.xlu0 %5010
  %5012 = vrot.lane.b32.xlu0 %v4904, 113
  %v5013 = vpop.permute.xlu0 %5012
  %5014 = vrot.lane.b32.xlu0 %v4912, 113
  %v5015 = vpop.permute.xlu0 %5014
  %5016 = vrot.lane.b32.xlu0 %v4911, 113
  %v5017 = vpop.permute.xlu0 %5016
  %5018 = vrot.lane.b32.xlu0 %v4919, 113
  %v5019 = vpop.permute.xlu0 %5018
  %5020 = vrot.lane.b32.xlu0 %v4918, 113
  %v5021 = vpop.permute.xlu0 %5020
  %5022 = vrot.lane.b32.xlu0 %v4926, 113
  %v5023 = vpop.permute.xlu0 %5022
  %5024 = vrot.lane.b32.xlu0 %v4925, 113
  %v5025 = vpop.permute.xlu0 %5024
  %5026 = vrot.lane.b32.xlu0 %v4933, 113
  %v5027 = vpop.permute.xlu0 %5026
  %5028 = vrot.lane.b32.xlu0 %v4932, 113
  %v5029 = vpop.permute.xlu0 %5028
  %5030 = vrot.lane.b32.xlu0 %v4940, 113
  %v5031 = vpop.permute.xlu0 %5030
  %5032 = vrot.lane.b32.xlu0 %v4939, 113
  %v5033 = vpop.permute.xlu0 %5032
  %5034 = vrot.lane.b32.xlu0 %v4947, 113
  %v5035 = vpop.permute.xlu0 %5034
  %5036 = vrot.lane.b32.xlu0 %v4946, 113
  %v5037 = vpop.permute.xlu0 %5036
  %5038 = vrot.lane.b32.xlu0 %v4954, 113
  %v5039 = vpop.permute.xlu0 %5038
  %5040 = vrot.lane.b32.xlu0 %v4953, 113
  %v5041 = vpop.permute.xlu0 %5040
  %5042 = vrot.lane.b32.xlu0 %v4961, 113
  %v5043 = vpop.permute.xlu0 %5042
  %5044 = vrot.lane.b32.xlu0 %v4960, 113
  %v5045 = vpop.permute.xlu0 %5044
  %5046 = vrot.lane.b32.xlu0 %v4968, 113
  %v5047 = vpop.permute.xlu0 %5046
  %5048 = vrot.lane.b32.xlu0 %v4967, 113
  %v5049 = vpop.permute.xlu0 %5048
  %5050 = vrot.lane.b32.xlu0 %v4975, 113
  %v5051 = vpop.permute.xlu0 %5050
  %5052 = vrot.lane.b32.xlu0 %v4974, 113
  %v5053 = vpop.permute.xlu0 %5052
  %5054 = vrot.lane.b32.xlu0 %v4982, 113
  %v5055 = vpop.permute.xlu0 %5054
  %5056 = vrot.lane.b32.xlu0 %v4981, 113
  %v5057 = vpop.permute.xlu0 %5056
  %5058 = vrot.lane.b32.xlu0 %v4989, 113
  %v5059 = vpop.permute.xlu0 %5058
  %5060 = vrot.lane.b32.xlu0 %v4988, 113
  %v5061 = vpop.permute.xlu0 %5060
  %5062 = vrot.lane.b32.xlu0 %v4996, 113
  %v5063 = vpop.permute.xlu0 %5062
  %5064 = vrot.lane.b32.xlu0 %v4995, 113
  %v5065 = vpop.permute.xlu0 %5064
  %5066 = vrot.lane.b32.xlu0 %v5001, 113
  %v5067 = vpop.permute.xlu0 %5066
  %5068 = vrot.lane.b32.xlu0 %v5005, 113
  %v5069 = vpop.permute.xlu0 %5068
  %v5070 = vsel %vm2240, %v5007, %v5009
  %v5071 = vsel %vm2240, %v5011, %v5013
  %v5072 = vsel %vm2240, %v5015, %v5017
  %v5073 = vsel %vm2240, %v5019, %v5021
  %v5074 = vsel %vm2240, %v5023, %v5025
  %v5075 = vsel %vm2240, %v5027, %v5029
  %v5076 = vsel %vm2240, %v5031, %v5033
  %v5077 = vsel %vm2240, %v5035, %v5037
  %v5078 = vsel %vm2240, %v5039, %v5041
  %v5079 = vsel %vm2240, %v5043, %v5045
  %v5080 = vsel %vm2240, %v5047, %v5049
  %v5081 = vsel %vm2240, %v5051, %v5053
  %v5082 = vsel %vm2240, %v5055, %v5057
  %v5083 = vsel %vm2240, %v5059, %v5061
  %v5084 = vsel %vm2240, %v5063, %v5065
  %v5085 = vsel %vm2240, %v5067, %v5069
  %5119 = vset.pattern.permute.xlu0 0
  %5120 = vperm.xlu0 %5119, %v4866
  %v5121 = vpop.permute.xlu0 %5120
  %5124 = vset.pattern.permute.xlu0 0
  %5125 = vperm.xlu0 %5124, %v4867
  %v5126 = vpop.permute.xlu0 %5125
  %5129 = vset.pattern.permute.xlu0 0
  %5130 = vperm.xlu0 %5129, %v4868
  %v5131 = vpop.permute.xlu0 %5130
  %5134 = vset.pattern.permute.xlu0 0
  %5135 = vperm.xlu0 %5134, %v4869
  %v5136 = vpop.permute.xlu0 %5135
  %v5146 = vunpack.c.l.b16 %v4858
  %v5147 = vunpack.c.h.b16 %v4858
  %v5148 = vunpack.c.l.b16 %v4859
  %v5149 = vunpack.c.h.b16 %v4859
  %v5150 = vunpack.c.l.b16 %v4860
  %v5151 = vunpack.c.h.b16 %v4860
  %v5152 = vunpack.c.l.b16 %v4861
  %v5153 = vunpack.c.h.b16 %v4861
  %v5154 = vunpack.c.l.b16 %v4862
  %v5155 = vunpack.c.h.b16 %v4862
  %v5156 = vunpack.c.l.b16 %v4863
  %v5157 = vunpack.c.h.b16 %v4863
  %v5158 = vunpack.c.l.b16 %v4864
  %v5159 = vunpack.c.h.b16 %v4864
  %v5160 = vunpack.c.l.b16 %v4865
  %v5161 = vunpack.c.h.b16 %v4865
  %v5162 = vpack.c.b16 %v5150, %v5146
  %v5163 = vpack.c.b16 %v5151, %v5147
  %v5164 = vpack.c.b16 %v5152, %v5148
  %v5165 = vpack.c.b16 %v5153, %v5149
  %v5166 = vpack.c.b16 %v5158, %v5154
  %v5167 = vpack.c.b16 %v5159, %v5155
  %v5168 = vpack.c.b16 %v5160, %v5156
  %v5169 = vpack.c.b16 %v5161, %v5157
  %5178 = vmatprep.subr.bf16.mxu0 %v4885
  %5179 = vmatpush1.bf16.msra.mxu0 %v4890
  %5180 = vmatprep.subr.bf16.mxu0 %v4827
  %5181 = vmatpush1.bf16.msra.mxu0 %v4826
  %5182 = vmatprep.subr.bf16.mxu0 %v4904
  %5183 = vmatpush1.bf16.msra.mxu0 %v4905
  %5184 = vmatprep.subr.bf16.mxu0 %v4911
  %5185 = vmatpush1.bf16.msra.mxu0 %v4912
  %5186 = vmatprep.subr.bf16.mxu0 %v4918
  %5187 = vmatpush1.bf16.msra.mxu0 %v4919
  %5188 = vmatprep.subr.bf16.mxu0 %v4925
  %5189 = vmatpush1.bf16.msra.mxu0 %v4926
  %5190 = vmatprep.subr.bf16.mxu0 %v4932
  %5191 = vmatpush1.bf16.msra.mxu0 %v4933
  %5192 = vmatprep.subr.bf16.mxu0 %v4939
  %5193 = vmatpush1.bf16.msra.mxu0 %v4940
  %5194 = vmatprep.subr.bf16.mxu0 %v4946
  %5195 = vmatpush1.bf16.msra.mxu0 %v4947
  %5196 = vmatprep.subr.bf16.mxu0 %v4953
  %5197 = vmatpush1.bf16.msra.mxu0 %v4954
  %5198 = vmatprep.subr.bf16.mxu0 %v4960
  %5199 = vmatpush1.bf16.msra.mxu0 %v4961
  %5200 = vmatprep.subr.bf16.mxu0 %v4967
  %5201 = vmatpush1.bf16.msra.mxu0 %v4968
  %5202 = vmatprep.subr.bf16.mxu0 %v4974
  %5203 = vmatpush1.bf16.msra.mxu0 %v4975
  %5204 = vmatprep.subr.bf16.mxu0 %v4981
  %5205 = vmatpush1.bf16.msra.mxu0 %v4982
  %5206 = vmatprep.subr.bf16.mxu0 %v4988
  %5207 = vmatpush1.bf16.msra.mxu0 %v4989
  %5208 = vmatprep.subr.bf16.mxu0 %v4995
  %5209 = vmatpush1.bf16.msra.mxu0 %v4996
  %5210 = vmatprep.mubr.bf16.mxu0 %v5163
  %5211 = vmatmul.mubr.bf16.gmra.mrb[0].mxu0 %v5162
  %v5212 = vpop.f32.mrb[0].mxu0
  %v5213 = vadd.f32 %v5121, %v5212
  %v5214 = vpop.f32.mrb[0].mxu0
  %v5215 = vadd.f32 %v5121, %v5214
  %v5216 = vpop.f32.mrb[0].mxu0
  %v5217 = vadd.f32 %v5126, %v5216
  %v5218 = vpop.f32.mrb[0].mxu0
  %v5219 = vadd.f32 %v5126, %v5218
  %5220 = vmatprep.mubr.bf16.mxu0 %v5167
  %5221 = vmatmul.mubr.bf16.gmra.mrb[0].mxu0 %v5166
  %v5222 = vpop.f32.mrb[0].mxu0
  %v5223 = vadd.f32 %v5131, %v5222
  %v5224 = vpop.f32.mrb[0].mxu0
  %v5225 = vadd.f32 %v5131, %v5224
  %v5226 = vpop.f32.mrb[0].mxu0
  %v5227 = vadd.f32 %v5136, %v5226
  %v5228 = vpop.f32.mrb[0].mxu0
  %v5229 = vadd.f32 %v5136, %v5228
  %5230 = vdwg.mxu0
  %5231 = vmatprep.subr.bf16.mxu0 %v5009
  %5232 = vmatpush1.bf16.msra.mxu0 %v5070
  %5233 = vmatprep.subr.bf16.mxu0 %v5013
  %5234 = vmatpush1.bf16.msra.mxu0 %v5071
  %5235 = vmatprep.subr.bf16.mxu0 %v5017
  %5236 = vmatpush1.bf16.msra.mxu0 %v5072
  %5237 = vmatprep.subr.bf16.mxu0 %v5021
  %5238 = vmatpush1.bf16.msra.mxu0 %v5073
  %5239 = vmatprep.subr.bf16.mxu0 %v5025
  %5240 = vmatpush1.bf16.msra.mxu0 %v5074
  %5241 = vmatprep.subr.bf16.mxu0 %v5029
  %5242 = vmatpush1.bf16.msra.mxu0 %v5075
  %5243 = vmatprep.subr.bf16.mxu0 %v5033
  %5244 = vmatpush1.bf16.msra.mxu0 %v5076
  %5245 = vmatprep.subr.bf16.mxu0 %v5037
  %5246 = vmatpush1.bf16.msra.mxu0 %v5077
  %5247 = vmatprep.subr.bf16.mxu0 %v5041
  %5248 = vmatpush1.bf16.msra.mxu0 %v5078
  %5249 = vmatprep.subr.bf16.mxu0 %v5045
  %5250 = vmatpush1.bf16.msra.mxu0 %v5079
  %5251 = vmatprep.subr.bf16.mxu0 %v5049
  %5252 = vmatpush1.bf16.msra.mxu0 %v5080
  %5253 = vmatprep.subr.bf16.mxu0 %v5053
  %5254 = vmatpush1.bf16.msra.mxu0 %v5081
  %5255 = vmatprep.subr.bf16.mxu0 %v5057
  %5256 = vmatpush1.bf16.msra.mxu0 %v5082
  %5257 = vmatprep.subr.bf16.mxu0 %v5061
  %5258 = vmatpush1.bf16.msra.mxu0 %v5083
  %5259 = vmatprep.subr.bf16.mxu0 %v5065
  %5260 = vmatpush1.bf16.msra.mxu0 %v5084
  %5261 = vmatprep.subr.bf16.mxu0 %v5069
  %5262 = vmatpush1.bf16.msra.mxu0 %v5085
  %5263 = vmatprep.mubr.bf16.mxu0 %v5165
  %5264 = vmatmul.mubr.bf16.gmra.mrb[0].mxu0 %v5164
  %v5265 = vpop.f32.mrb[0].mxu0
  %v5266 = vadd.f32 %v5213, %v5265
  %v5267 = vpop.f32.mrb[0].mxu0
  %v5268 = vadd.f32 %v5215, %v5267
  %v5269 = vpop.f32.mrb[0].mxu0
  %v5270 = vadd.f32 %v5217, %v5269
  %v5271 = vpop.f32.mrb[0].mxu0
  %v5272 = vadd.f32 %v5219, %v5271
  %5273 = vmatprep.mubr.bf16.mxu0 %v5169
  %5274 = vmatmul.mubr.bf16.gmra.mrb[0].mxu0 %v5168
  %v5275 = vpop.f32.mrb[0].mxu0
  %v5276 = vadd.f32 %v5223, %v5275
  %v5277 = vpop.f32.mrb[0].mxu0
  %v5278 = vadd.f32 %v5225, %v5277
  %v5279 = vpop.f32.mrb[0].mxu0
  %v5280 = vadd.f32 %v5227, %v5279
  %v5281 = vpop.f32.mrb[0].mxu0
  %v5282 = vadd.f32 %v5229, %v5281
  %5283 = vdwg.mxu0
  %5286 = vrot.lane.b32.xlu0 %v4856, 1
  %v5287 = vpop.permute.xlu0 %5286
  %5288 = vrot.lane.b32.xlu0 %v4857, 1
  %v5289 = vpop.permute.xlu0 %5288
  %v5290 = vsel %vm4884, %v5287, %v5289
  %v5293 = vsel %vm4887, 0, %v5287
  %5295 = vrot.lane.b32.xlu0 %v4856, 98
  %v5296 = vpop.permute.xlu0 %5295
  %5297 = vrot.lane.b32.xlu0 %v4857, 98
  %v5298 = vpop.permute.xlu0 %5297
  %v5299 = vsel %vm4896, %v5296, %v5298
  %v5301 = vsel %vm4898, %v5298, 0
  %5302 = vrot.lane.b32.xlu0 %v4856, 127
  %v5303 = vpop.permute.xlu0 %5302
  %5304 = vrot.lane.b32.xlu0 %v4857, 127
  %v5305 = vpop.permute.xlu0 %5304
  %v5306 = vsel %vm1904, %v5303, %v5305
  %5309 = vrot.lane.b32.xlu0 %v4856, 126
  %v5310 = vpop.permute.xlu0 %5309
  %5311 = vrot.lane.b32.xlu0 %v4857, 126
  %v5312 = vpop.permute.xlu0 %5311
  %v5313 = vsel %vm1928, %v5310, %v5312
  %5316 = vrot.lane.b32.xlu0 %v4856, 125
  %v5317 = vpop.permute.xlu0 %5316
  %5318 = vrot.lane.b32.xlu0 %v4857, 125
  %v5319 = vpop.permute.xlu0 %5318
  %v5320 = vsel %vm1952, %v5317, %v5319
  %5323 = vrot.lane.b32.xlu0 %v4856, 124
  %v5324 = vpop.permute.xlu0 %5323
  %5325 = vrot.lane.b32.xlu0 %v4857, 124
  %v5326 = vpop.permute.xlu0 %5325
  %v5327 = vsel %vm1976, %v5324, %v5326
  %5330 = vrot.lane.b32.xlu0 %v4856, 123
  %v5331 = vpop.permute.xlu0 %5330
  %5332 = vrot.lane.b32.xlu0 %v4857, 123
  %v5333 = vpop.permute.xlu0 %5332
  %v5334 = vsel %vm2000, %v5331, %v5333
  %5337 = vrot.lane.b32.xlu0 %v4856, 122
  %v5338 = vpop.permute.xlu0 %5337
  %5339 = vrot.lane.b32.xlu0 %v4857, 122
  %v5340 = vpop.permute.xlu0 %5339
  %v5341 = vsel %vm2024, %v5338, %v5340
  %5344 = vrot.lane.b32.xlu0 %v4856, 121
  %v5345 = vpop.permute.xlu0 %5344
  %5346 = vrot.lane.b32.xlu0 %v4857, 121
  %v5347 = vpop.permute.xlu0 %5346
  %v5348 = vsel %vm2048, %v5345, %v5347
  %5351 = vrot.lane.b32.xlu0 %v4856, 120
  %v5352 = vpop.permute.xlu0 %5351
  %5353 = vrot.lane.b32.xlu0 %v4857, 120
  %v5354 = vpop.permute.xlu0 %5353
  %v5355 = vsel %vm2072, %v5352, %v5354
  %5358 = vrot.lane.b32.xlu0 %v4856, 119
  %v5359 = vpop.permute.xlu0 %5358
  %5360 = vrot.lane.b32.xlu0 %v4857, 119
  %v5361 = vpop.permute.xlu0 %5360
  %v5362 = vsel %vm2096, %v5359, %v5361
  %5365 = vrot.lane.b32.xlu0 %v4856, 118
  %v5366 = vpop.permute.xlu0 %5365
  %5367 = vrot.lane.b32.xlu0 %v4857, 118
  %v5368 = vpop.permute.xlu0 %5367
  %v5369 = vsel %vm2120, %v5366, %v5368
  %5372 = vrot.lane.b32.xlu0 %v4856, 117
  %v5373 = vpop.permute.xlu0 %5372
  %5374 = vrot.lane.b32.xlu0 %v4857, 117
  %v5375 = vpop.permute.xlu0 %5374
  %v5376 = vsel %vm2144, %v5373, %v5375
  %5379 = vrot.lane.b32.xlu0 %v4856, 116
  %v5380 = vpop.permute.xlu0 %5379
  %5381 = vrot.lane.b32.xlu0 %v4857, 116
  %v5382 = vpop.permute.xlu0 %5381
  %v5383 = vsel %vm2168, %v5380, %v5382
  %5386 = vrot.lane.b32.xlu0 %v4856, 115
  %v5387 = vpop.permute.xlu0 %5386
  %5388 = vrot.lane.b32.xlu0 %v4857, 115
  %v5389 = vpop.permute.xlu0 %5388
  %v5390 = vsel %vm2192, %v5387, %v5389
  %5393 = vrot.lane.b32.xlu0 %v4856, 114
  %v5394 = vpop.permute.xlu0 %5393
  %5395 = vrot.lane.b32.xlu0 %v4857, 114
  %v5396 = vpop.permute.xlu0 %5395
  %v5397 = vsel %vm2216, %v5394, %v5396
  %5401 = vrot.lane.b32.xlu0 %v5299, 15
  %v5402 = vpop.permute.xlu0 %5401
  %5403 = vrot.lane.b32.xlu0 %v5301, 15
  %v5404 = vpop.permute.xlu0 %5403
  %v5405 = vsel %vm5004, %v5402, %v5404
  %5406 = vrot.lane.b32.xlu0 %v4856, 113
  %v5407 = vpop.permute.xlu0 %5406
  %5408 = vrot.lane.b32.xlu0 %v4857, 113
  %v5409 = vpop.permute.xlu0 %5408
  %5410 = vrot.lane.b32.xlu0 %v5306, 113
  %v5411 = vpop.permute.xlu0 %5410
  %5412 = vrot.lane.b32.xlu0 %v5305, 113
  %v5413 = vpop.permute.xlu0 %5412
  %5414 = vrot.lane.b32.xlu0 %v5313, 113
  %v5415 = vpop.permute.xlu0 %5414
  %5416 = vrot.lane.b32.xlu0 %v5312, 113
  %v5417 = vpop.permute.xlu0 %5416
  %5418 = vrot.lane.b32.xlu0 %v5320, 113
  %v5419 = vpop.permute.xlu0 %5418
  %5420 = vrot.lane.b32.xlu0 %v5319, 113
  %v5421 = vpop.permute.xlu0 %5420
  %5422 = vrot.lane.b32.xlu0 %v5327, 113
  %v5423 = vpop.permute.xlu0 %5422
  %5424 = vrot.lane.b32.xlu0 %v5326, 113
  %v5425 = vpop.permute.xlu0 %5424
  %5426 = vrot.lane.b32.xlu0 %v5334, 113
  %v5427 = vpop.permute.xlu0 %5426
  %5428 = vrot.lane.b32.xlu0 %v5333, 113
  %v5429 = vpop.permute.xlu0 %5428
  %5430 = vrot.lane.b32.xlu0 %v5341, 113
  %v5431 = vpop.permute.xlu0 %5430
  %5432 = vrot.lane.b32.xlu0 %v5340, 113
  %v5433 = vpop.permute.xlu0 %5432
  %5434 = vrot.lane.b32.xlu0 %v5348, 113
  %v5435 = vpop.permute.xlu0 %5434
  %5436 = vrot.lane.b32.xlu0 %v5347, 113
  %v5437 = vpop.permute.xlu0 %5436
  %5438 = vrot.lane.b32.xlu0 %v5355, 113
  %v5439 = vpop.permute.xlu0 %5438
  %5440 = vrot.lane.b32.xlu0 %v5354, 113
  %v5441 = vpop.permute.xlu0 %5440
  %5442 = vrot.lane.b32.xlu0 %v5362, 113
  %v5443 = vpop.permute.xlu0 %5442
  %5444 = vrot.lane.b32.xlu0 %v5361, 113
  %v5445 = vpop.permute.xlu0 %5444
  %5446 = vrot.lane.b32.xlu0 %v5369, 113
  %v5447 = vpop.permute.xlu0 %5446
  %5448 = vrot.lane.b32.xlu0 %v5368, 113
  %v5449 = vpop.permute.xlu0 %5448
  %5450 = vrot.lane.b32.xlu0 %v5376, 113
  %v5451 = vpop.permute.xlu0 %5450
  %5452 = vrot.lane.b32.xlu0 %v5375, 113
  %v5453 = vpop.permute.xlu0 %5452
  %5454 = vrot.lane.b32.xlu0 %v5383, 113
  %v5455 = vpop.permute.xlu0 %5454
  %5456 = vrot.lane.b32.xlu0 %v5382, 113
  %v5457 = vpop.permute.xlu0 %5456
  %5458 = vrot.lane.b32.xlu0 %v5390, 113
  %v5459 = vpop.permute.xlu0 %5458
  %5460 = vrot.lane.b32.xlu0 %v5389, 113
  %v5461 = vpop.permute.xlu0 %5460
  %5462 = vrot.lane.b32.xlu0 %v5397, 113
  %v5463 = vpop.permute.xlu0 %5462
  %5464 = vrot.lane.b32.xlu0 %v5396, 113
  %v5465 = vpop.permute.xlu0 %5464
  %5466 = vrot.lane.b32.xlu0 %v5402, 113
  %v5467 = vpop.permute.xlu0 %5466
  %5468 = vrot.lane.b32.xlu0 %v5405, 113
  %v5469 = vpop.permute.xlu0 %5468
  %v5470 = vsel %vm2240, %v5407, %v5409
  %v5471 = vsel %vm2240, %v5411, %v5413
  %v5472 = vsel %vm2240, %v5415, %v5417
  %v5473 = vsel %vm2240, %v5419, %v5421
  %v5474 = vsel %vm2240, %v5423, %v5425
  %v5475 = vsel %vm2240, %v5427, %v5429
  %v5476 = vsel %vm2240, %v5431, %v5433
  %v5477 = vsel %vm2240, %v5435, %v5437
  %v5478 = vsel %vm2240, %v5439, %v5441
  %v5479 = vsel %vm2240, %v5443, %v5445
  %v5480 = vsel %vm2240, %v5447, %v5449
  %v5481 = vsel %vm2240, %v5451, %v5453
  %v5482 = vsel %vm2240, %v5455, %v5457
  %v5483 = vsel %vm2240, %v5459, %v5461
  %v5484 = vsel %vm2240, %v5463, %v5465
  %v5485 = vsel %vm2240, %v5467, %v5469
  %5518 = vmatprep.subr.bf16.mxu0 %v5290
  %5519 = vmatpush1.bf16.msra.mxu0 %v5293
  %5520 = vmatprep.subr.bf16.mxu0 %v4857
  %5521 = vmatpush1.bf16.msra.mxu0 %v4856
  %5522 = vmatprep.subr.bf16.mxu0 %v5305
  %5523 = vmatpush1.bf16.msra.mxu0 %v5306
  %5524 = vmatprep.subr.bf16.mxu0 %v5312
  %5525 = vmatpush1.bf16.msra.mxu0 %v5313
  %5526 = vmatprep.subr.bf16.mxu0 %v5319
  %5527 = vmatpush1.bf16.msra.mxu0 %v5320
  %5528 = vmatprep.subr.bf16.mxu0 %v5326
  %5529 = vmatpush1.bf16.msra.mxu0 %v5327
  %5530 = vmatprep.subr.bf16.mxu0 %v5333
  %5531 = vmatpush1.bf16.msra.mxu0 %v5334
  %5532 = vmatprep.subr.bf16.mxu0 %v5340
  %5533 = vmatpush1.bf16.msra.mxu0 %v5341
  %5534 = vmatprep.subr.bf16.mxu0 %v5347
  %5535 = vmatpush1.bf16.msra.mxu0 %v5348
  %5536 = vmatprep.subr.bf16.mxu0 %v5354
  %5537 = vmatpush1.bf16.msra.mxu0 %v5355
  %5538 = vmatprep.subr.bf16.mxu0 %v5361
  %5539 = vmatpush1.bf16.msra.mxu0 %v5362
  %5540 = vmatprep.subr.bf16.mxu0 %v5368
  %5541 = vmatpush1.bf16.msra.mxu0 %v5369
  %5542 = vmatprep.subr.bf16.mxu0 %v5375
  %5543 = vmatpush1.bf16.msra.mxu0 %v5376
  %5544 = vmatprep.subr.bf16.mxu0 %v5382
  %5545 = vmatpush1.bf16.msra.mxu0 %v5383
  %5546 = vmatprep.subr.bf16.mxu0 %v5389
  %5547 = vmatpush1.bf16.msra.mxu0 %v5390
  %5548 = vmatprep.subr.bf16.mxu0 %v5396
  %5549 = vmatpush1.bf16.msra.mxu0 %v5397
  %5550 = vmatprep.mubr.bf16.mxu0 %v5163
  %5551 = vmatmul.mubr.bf16.gmra.mrb[0].mxu0 %v5162
  %v5552 = vpop.f32.mrb[0].mxu0
  %v5553 = vadd.f32 %v5121, %v5552
  %v5554 = vpop.f32.mrb[0].mxu0
  %v5555 = vadd.f32 %v5121, %v5554
  %v5556 = vpop.f32.mrb[0].mxu0
  %v5557 = vadd.f32 %v5126, %v5556
  %v5558 = vpop.f32.mrb[0].mxu0
  %v5559 = vadd.f32 %v5126, %v5558
  %5560 = vmatprep.mubr.bf16.mxu0 %v5167
  %5561 = vmatmul.mubr.bf16.gmra.mrb[0].mxu0 %v5166
  %v5562 = vpop.f32.mrb[0].mxu0
  %v5563 = vadd.f32 %v5131, %v5562
  %v5564 = vpop.f32.mrb[0].mxu0
  %v5565 = vadd.f32 %v5131, %v5564
  %v5566 = vpop.f32.mrb[0].mxu0
  %v5567 = vadd.f32 %v5136, %v5566
  %v5568 = vpop.f32.mrb[0].mxu0
  %v5569 = vadd.f32 %v5136, %v5568
  %5570 = vdwg.mxu0
  %5571 = vmatprep.subr.bf16.mxu0 %v5409
  %5572 = vmatpush1.bf16.msra.mxu0 %v5470
  %5573 = vmatprep.subr.bf16.mxu0 %v5413
  %5574 = vmatpush1.bf16.msra.mxu0 %v5471
  %5575 = vmatprep.subr.bf16.mxu0 %v5417
  %5576 = vmatpush1.bf16.msra.mxu0 %v5472
  %5577 = vmatprep.subr.bf16.mxu0 %v5421
  %5578 = vmatpush1.bf16.msra.mxu0 %v5473
  %5579 = vmatprep.subr.bf16.mxu0 %v5425
  %5580 = vmatpush1.bf16.msra.mxu0 %v5474
  %5581 = vmatprep.subr.bf16.mxu0 %v5429
  %5582 = vmatpush1.bf16.msra.mxu0 %v5475
  %5583 = vmatprep.subr.bf16.mxu0 %v5433
  %5584 = vmatpush1.bf16.msra.mxu0 %v5476
  %5585 = vmatprep.subr.bf16.mxu0 %v5437
  %5586 = vmatpush1.bf16.msra.mxu0 %v5477
  %5587 = vmatprep.subr.bf16.mxu0 %v5441
  %5588 = vmatpush1.bf16.msra.mxu0 %v5478
  %5589 = vmatprep.subr.bf16.mxu0 %v5445
  %5590 = vmatpush1.bf16.msra.mxu0 %v5479
  %5591 = vmatprep.subr.bf16.mxu0 %v5449
  %5592 = vmatpush1.bf16.msra.mxu0 %v5480
  %5593 = vmatprep.subr.bf16.mxu0 %v5453
  %5594 = vmatpush1.bf16.msra.mxu0 %v5481
  %5595 = vmatprep.subr.bf16.mxu0 %v5457
  %5596 = vmatpush1.bf16.msra.mxu0 %v5482
  %5597 = vmatprep.subr.bf16.mxu0 %v5461
  %5598 = vmatpush1.bf16.msra.mxu0 %v5483
  %5599 = vmatprep.subr.bf16.mxu0 %v5465
  %5600 = vmatpush1.bf16.msra.mxu0 %v5484
  %5601 = vmatprep.subr.bf16.mxu0 %v5469
  %5602 = vmatpush1.bf16.msra.mxu0 %v5485
  %5603 = vmatprep.mubr.bf16.mxu0 %v5165
  %5604 = vmatmul.mubr.bf16.gmra.mrb[0].mxu0 %v5164
  %v5605 = vpop.f32.mrb[0].mxu0
  %v5606 = vadd.f32 %v5553, %v5605
  %v5607 = vpop.f32.mrb[0].mxu0
  %v5608 = vadd.f32 %v5555, %v5607
  %v5609 = vpop.f32.mrb[0].mxu0
  %v5610 = vadd.f32 %v5557, %v5609
  %v5611 = vpop.f32.mrb[0].mxu0
  %v5612 = vadd.f32 %v5559, %v5611
  %5613 = vmatprep.mubr.bf16.mxu0 %v5169
  %5614 = vmatmul.mubr.bf16.gmra.mrb[0].mxu0 %v5168
  %v5615 = vpop.f32.mrb[0].mxu0
  %v5616 = vadd.f32 %v5563, %v5615
  %v5617 = vpop.f32.mrb[0].mxu0
  %v5618 = vadd.f32 %v5565, %v5617
  %v5619 = vpop.f32.mrb[0].mxu0
  %v5620 = vadd.f32 %v5567, %v5619
  %v5621 = vpop.f32.mrb[0].mxu0
  %v5622 = vadd.f32 %v5569, %v5621
  %5623 = vdwg.mxu0
  %vm5624 = vcmask 154624
  %v5625 = vsel %vm5624, %v5268, 0.0
  %v5626 = vadd.f32 %v5266, %v5625
  %5627 = vadd.xlane.f32.xlu0 %v5626
  %v5628 = vpop.xlane.xlu0 %5627
  %v5629 = vsel %vm5624, %v5272, 0.0
  %v5630 = vadd.f32 %v5270, %v5629
  %5631 = vadd.xlane.f32.xlu0 %v5630
  %v5632 = vpop.xlane.xlu0 %5631
  %v5633 = vsel %vm5624, %v5278, 0.0
  %v5634 = vadd.f32 %v5276, %v5633
  %5635 = vadd.xlane.f32.xlu0 %v5634
  %v5636 = vpop.xlane.xlu0 %5635
  %v5637 = vsel %vm5624, %v5282, 0.0
  %v5638 = vadd.f32 %v5280, %v5637
  %5639 = vadd.xlane.f32.xlu0 %v5638
  %v5640 = vpop.xlane.xlu0 %5639
  %v5641 = vsel %vm5624, %v5608, 0.0
  %v5642 = vadd.f32 %v5606, %v5641
  %5643 = vadd.xlane.f32.xlu0 %v5642
  %v5644 = vpop.xlane.xlu0 %5643
  %v5645 = vsel %vm5624, %v5612, 0.0
  %v5646 = vadd.f32 %v5610, %v5645
  %5647 = vadd.xlane.f32.xlu0 %v5646
  %v5648 = vpop.xlane.xlu0 %5647
  %v5649 = vsel %vm5624, %v5618, 0.0
  %v5650 = vadd.f32 %v5616, %v5649
  %5651 = vadd.xlane.f32.xlu0 %v5650
  %v5652 = vpop.xlane.xlu0 %5651
  %v5653 = vsel %vm5624, %v5622, 0.0
  %v5654 = vadd.f32 %v5620, %v5653
  %5655 = vadd.xlane.f32.xlu0 %v5654
  %v5656 = vpop.xlane.xlu0 %5655
  %v5657 = vadd.f32 %v5628, %v5644
  %v5658 = vadd.f32 %v5632, %v5648
  %v5659 = vadd.f32 %v5636, %v5652
  %v5660 = vadd.f32 %v5640, %v5656
  %v5661 = vmul.f32 %v5657, 0.0034013605
  %v5662 = vmul.f32 %v5658, 0.0034013605
  %v5663 = vmul.f32 %v5659, 0.0034013605
  %v5664 = vmul.f32 %v5660, 0.0034013605
  %v5665 = vsub.f32 %v5266, %v5661
  %v5666 = vsub.f32 %v5268, %v5661
  %v5667 = vsub.f32 %v5270, %v5662
  %v5668 = vsub.f32 %v5272, %v5662
  %v5669 = vsub.f32 %v5276, %v5663
  %v5670 = vsub.f32 %v5278, %v5663
  %v5671 = vsub.f32 %v5280, %v5664
  %v5672 = vsub.f32 %v5282, %v5664
  %v5673 = vsub.f32 %v5606, %v5661
  %v5674 = vsub.f32 %v5608, %v5661
  %v5675 = vsub.f32 %v5610, %v5662
  %v5676 = vsub.f32 %v5612, %v5662
  %v5677 = vsub.f32 %v5616, %v5663
  %v5678 = vsub.f32 %v5618, %v5663
  %v5679 = vsub.f32 %v5620, %v5664
  %v5680 = vsub.f32 %v5622, %v5664
  %v5681 = vmul.f32 %v5665, %v5665
  %v5682 = vmul.f32 %v5666, %v5666
  %v5683 = vmul.f32 %v5667, %v5667
  %v5684 = vmul.f32 %v5668, %v5668
  %v5685 = vmul.f32 %v5669, %v5669
  %v5686 = vmul.f32 %v5670, %v5670
  %v5687 = vmul.f32 %v5671, %v5671
  %v5688 = vmul.f32 %v5672, %v5672
  %v5689 = vsel %vm5624, %v5682, 0.0
  %v5690 = vadd.f32 %v5681, %v5689
  %5691 = vadd.xlane.f32.xlu0 %v5690
  %v5692 = vpop.xlane.xlu0 %5691
  %v5693 = vsel %vm5624, %v5684, 0.0
  %v5694 = vadd.f32 %v5683, %v5693
  %5695 = vadd.xlane.f32.xlu0 %v5694
  %v5696 = vpop.xlane.xlu0 %5695
  %v5697 = vsel %vm5624, %v5686, 0.0
  %v5698 = vadd.f32 %v5685, %v5697
  %5699 = vadd.xlane.f32.xlu0 %v5698
  %v5700 = vpop.xlane.xlu0 %5699
  %v5701 = vsel %vm5624, %v5688, 0.0
  %v5702 = vadd.f32 %v5687, %v5701
  %5703 = vadd.xlane.f32.xlu0 %v5702
  %v5704 = vpop.xlane.xlu0 %5703
  %v5705 = vmul.f32 %v5673, %v5673
  %v5706 = vmul.f32 %v5674, %v5674
  %v5707 = vmul.f32 %v5675, %v5675
  %v5708 = vmul.f32 %v5676, %v5676
  %v5709 = vmul.f32 %v5677, %v5677
  %v5710 = vmul.f32 %v5678, %v5678
  %v5711 = vmul.f32 %v5679, %v5679
  %v5712 = vmul.f32 %v5680, %v5680
  %v5713 = vsel %vm5624, %v5706, 0.0
  %v5714 = vadd.f32 %v5705, %v5713
  %5715 = vadd.xlane.f32.xlu0 %v5714
  %v5716 = vpop.xlane.xlu0 %5715
  %v5717 = vsel %vm5624, %v5708, 0.0
  %v5718 = vadd.f32 %v5707, %v5717
  %5719 = vadd.xlane.f32.xlu0 %v5718
  %v5720 = vpop.xlane.xlu0 %5719
  %v5721 = vsel %vm5624, %v5710, 0.0
  %v5722 = vadd.f32 %v5709, %v5721
  %5723 = vadd.xlane.f32.xlu0 %v5722
  %v5724 = vpop.xlane.xlu0 %5723
  %v5725 = vsel %vm5624, %v5712, 0.0
  %v5726 = vadd.f32 %v5711, %v5725
  %5727 = vadd.xlane.f32.xlu0 %v5726
  %v5728 = vpop.xlane.xlu0 %5727
  %v5729 = vadd.f32 %v5692, %v5716
  %v5730 = vadd.f32 %v5696, %v5720
  %v5731 = vadd.f32 %v5700, %v5724
  %v5732 = vadd.f32 %v5704, %v5728
  %v5733 = vmul.f32 %v5729, 0.0034013605
  %v5734 = vmul.f32 %v5730, 0.0034013605
  %v5735 = vmul.f32 %v5731, 0.0034013605
  %v5736 = vmul.f32 %v5732, 0.0034013605
  %v5737 = vadd.f32 %v5733, 1e-05
  %v5738 = vadd.f32 %v5734, 1e-05
  %v5739 = vadd.f32 %v5735, 1e-05
  %v5740 = vadd.f32 %v5736, 1e-05
  %v5741 = vrsqrt.pop %v5737
  %v5742 = vrsqrt.pop %v5738
  %v5743 = vrsqrt.pop %v5739
  %v5744 = vrsqrt.pop %v5740
  %v5745 = vmul.f32 %v5741, %v4870
  %v5746 = vmul.f32 %v5742, %v4871
  %v5747 = vmul.f32 %v5743, %v4872
  %v5748 = vmul.f32 %v5744, %v4873
  %5750 = vset.pattern.permute.xlu0 0
  %5751 = vperm.xlu0 %5750, %v5745
  %v5752 = vpop.permute.xlu0 %5751
  %5755 = vset.pattern.permute.xlu0 0
  %5756 = vperm.xlu0 %5755, %v5746
  %v5757 = vpop.permute.xlu0 %5756
  %5760 = vset.pattern.permute.xlu0 0
  %5761 = vperm.xlu0 %5760, %v5747
  %v5762 = vpop.permute.xlu0 %5761
  %5765 = vset.pattern.permute.xlu0 0
  %5766 = vperm.xlu0 %5765, %v5748
  %v5767 = vpop.permute.xlu0 %5766
  %v5769 = vmul.f32 %v5665, %v5752
  %v5770 = vmul.f32 %v5666, %v5752
  %v5771 = vmul.f32 %v5667, %v5757
  %v5772 = vmul.f32 %v5668, %v5757
  %v5773 = vmul.f32 %v5669, %v5762
  %v5774 = vmul.f32 %v5670, %v5762
  %v5775 = vmul.f32 %v5671, %v5767
  %v5776 = vmul.f32 %v5672, %v5767
  %5778 = vset.pattern.permute.xlu0 0
  %5779 = vperm.xlu0 %5778, %v4874
  %v5780 = vpop.permute.xlu0 %5779
  %5783 = vset.pattern.permute.xlu0 0
  %5784 = vperm.xlu0 %5783, %v4875
  %v5785 = vpop.permute.xlu0 %5784
  %5788 = vset.pattern.permute.xlu0 0
  %5789 = vperm.xlu0 %5788, %v4876
  %v5790 = vpop.permute.xlu0 %5789
  %5793 = vset.pattern.permute.xlu0 0
  %5794 = vperm.xlu0 %5793, %v4877
  %v5795 = vpop.permute.xlu0 %5794
  %v5797 = vadd.f32 %v5769, %v5780
  %v5798 = vadd.f32 %v5770, %v5780
  %v5799 = vadd.f32 %v5771, %v5785
  %v5800 = vadd.f32 %v5772, %v5785
  %v5801 = vadd.f32 %v5773, %v5790
  %v5802 = vadd.f32 %v5774, %v5790
  %v5803 = vadd.f32 %v5775, %v5795
  %v5804 = vadd.f32 %v5776, %v5795
  %v5805 = vmul.f32 %v5797, 0.5
  %v5806 = vmul.f32 %v5798, 0.5
  %v5807 = vmul.f32 %v5799, 0.5
  %v5808 = vmul.f32 %v5800, 0.5
  %v5809 = vmul.f32 %v5801, 0.5
  %v5810 = vmul.f32 %v5802, 0.5
  %v5811 = vmul.f32 %v5803, 0.5
  %v5812 = vmul.f32 %v5804, 0.5
  %v5813 = vtanh.pop %v5805
  %v5814 = vtanh.pop %v5806
  %v5815 = vtanh.pop %v5807
  %v5816 = vtanh.pop %v5808
  %v5817 = vtanh.pop %v5809
  %v5818 = vtanh.pop %v5810
  %v5819 = vtanh.pop %v5811
  %v5820 = vtanh.pop %v5812
  %v5821 = vmul.f32 %v5813, 0.5
  %v5822 = vmul.f32 %v5814, 0.5
  %v5823 = vmul.f32 %v5815, 0.5
  %v5824 = vmul.f32 %v5816, 0.5
  %v5825 = vmul.f32 %v5817, 0.5
  %v5826 = vmul.f32 %v5818, 0.5
  %v5827 = vmul.f32 %v5819, 0.5
  %v5828 = vmul.f32 %v5820, 0.5
  %v5829 = vadd.f32 %v5821, 0.5
  %v5830 = vadd.f32 %v5822, 0.5
  %v5831 = vadd.f32 %v5823, 0.5
  %v5832 = vadd.f32 %v5824, 0.5
  %v5833 = vadd.f32 %v5825, 0.5
  %v5834 = vadd.f32 %v5826, 0.5
  %v5835 = vadd.f32 %v5827, 0.5
  %v5836 = vadd.f32 %v5828, 0.5
  %v5837 = vmul.f32 %v5797, %v5829
  %v5838 = vmul.f32 %v5798, %v5830
  %v5839 = vmul.f32 %v5799, %v5831
  %v5840 = vmul.f32 %v5800, %v5832
  %v5841 = vmul.f32 %v5801, %v5833
  %v5842 = vmul.f32 %v5802, %v5834
  %v5843 = vmul.f32 %v5803, %v5835
  %v5844 = vmul.f32 %v5804, %v5836
  %v5845 = vpack.c.bf16 %v5839, %v5837
  %v5846 = vpack.c.bf16 %v5840, %v5838
  %v5847 = vpack.c.bf16 %v5843, %v5841
  %v5848 = vpack.c.bf16 %v5844, %v5842
  %v5849 = vmul.f32 %v5673, %v5752
  %v5850 = vmul.f32 %v5674, %v5752
  %v5851 = vmul.f32 %v5675, %v5757
  %v5852 = vmul.f32 %v5676, %v5757
  %v5853 = vmul.f32 %v5677, %v5762
  %v5854 = vmul.f32 %v5678, %v5762
  %v5855 = vmul.f32 %v5679, %v5767
  %v5856 = vmul.f32 %v5680, %v5767
  %v5857 = vadd.f32 %v5849, %v5780
  %v5858 = vadd.f32 %v5850, %v5780
  %v5859 = vadd.f32 %v5851, %v5785
  %v5860 = vadd.f32 %v5852, %v5785
  %v5861 = vadd.f32 %v5853, %v5790
  %v5862 = vadd.f32 %v5854, %v5790
  %v5863 = vadd.f32 %v5855, %v5795
  %v5864 = vadd.f32 %v5856, %v5795
  %v5865 = vmul.f32 %v5857, 0.5
  %v5866 = vmul.f32 %v5858, 0.5
  %v5867 = vmul.f32 %v5859, 0.5
  %v5868 = vmul.f32 %v5860, 0.5
  %v5869 = vmul.f32 %v5861, 0.5
  %v5870 = vmul.f32 %v5862, 0.5
  %v5871 = vmul.f32 %v5863, 0.5
  %v5872 = vmul.f32 %v5864, 0.5
  %v5873 = vtanh.pop %v5865
  %v5874 = vtanh.pop %v5866
  %v5875 = vtanh.pop %v5867
  %v5876 = vtanh.pop %v5868
  %v5877 = vtanh.pop %v5869
  %v5878 = vtanh.pop %v5870
  %v5879 = vtanh.pop %v5871
  %v5880 = vtanh.pop %v5872
  %v5881 = vmul.f32 %v5873, 0.5
  %v5882 = vmul.f32 %v5874, 0.5
  %v5883 = vmul.f32 %v5875, 0.5
  %v5884 = vmul.f32 %v5876, 0.5
  %v5885 = vmul.f32 %v5877, 0.5
  %v5886 = vmul.f32 %v5878, 0.5
  %v5887 = vmul.f32 %v5879, 0.5
  %v5888 = vmul.f32 %v5880, 0.5
  %v5889 = vadd.f32 %v5881, 0.5
  %v5890 = vadd.f32 %v5882, 0.5
  %v5891 = vadd.f32 %v5883, 0.5
  %v5892 = vadd.f32 %v5884, 0.5
  %v5893 = vadd.f32 %v5885, 0.5
  %v5894 = vadd.f32 %v5886, 0.5
  %v5895 = vadd.f32 %v5887, 0.5
  %v5896 = vadd.f32 %v5888, 0.5
  %v5897 = vmul.f32 %v5857, %v5889
  %v5898 = vmul.f32 %v5858, %v5890
  %v5899 = vmul.f32 %v5859, %v5891
  %v5900 = vmul.f32 %v5860, %v5892
  %v5901 = vmul.f32 %v5861, %v5893
  %v5902 = vmul.f32 %v5862, %v5894
  %v5903 = vmul.f32 %v5863, %v5895
  %v5904 = vmul.f32 %v5864, %v5896
  %v5905 = vpack.c.bf16 %v5899, %v5897
  %v5906 = vpack.c.bf16 %v5900, %v5898
  %v5907 = vpack.c.bf16 %v5903, %v5901
  %v5908 = vpack.c.bf16 %v5904, %v5902
  %v5909 = vld [vmem:[%s14] sm:$0xff]
  %v5910 = vld [vmem:[%s14 + $0x8] sm:$0xff]
  %v5911 = vld [vmem:[%s14 + $0x10] sm:$0xff]
  %v5912 = vld [vmem:[%s14 + $0x18] sm:$0xff]
  %v5913 = vld [vmem:[%s14 + $0x20] sm:$0xff]
  %v5914 = vld [vmem:[%s14 + $0x28] sm:$0xff]
  %v5915 = vld [vmem:[%s14 + $0x30] sm:$0xff]
  %v5916 = vld [vmem:[%s14 + $0x38] sm:$0xff]
  %v5917 = vld [vmem:[%s15] sm:$0xff]
  %v5918 = vld [vmem:[%s15 + $0x8] sm:$0xff]
  %v5919 = vld [vmem:[%s15 + $0x10] sm:$0xff]
  %v5920 = vld [vmem:[%s15 + $0x18] sm:$0xff]
  %v5921 = vld [vmem:[%s16] sm:$0xff]
  %v5922 = vld [vmem:[%s16 + $0x8] sm:$0xff]
  %v5923 = vld [vmem:[%s16 + $0x10] sm:$0xff]
  %v5924 = vld [vmem:[%s16 + $0x18] sm:$0xff]
  %v5925 = vld [vmem:[%s17] sm:$0xff]
  %v5926 = vld [vmem:[%s17 + $0x8] sm:$0xff]
  %v5927 = vld [vmem:[%s17 + $0x10] sm:$0xff]
  %v5928 = vld [vmem:[%s17 + $0x18] sm:$0xff]
  %v5929 = vld [vmem:[%s18] sm:$0xf]
  %v5930 = vld [vmem:[%s18 + $0x4] sm:$0xf]
  %v5931 = vld [vmem:[%s18 + $0x8] sm:$0xf]
  %v5932 = vld [vmem:[%s18 + $0xc] sm:$0xf]
  %v5933 = vld [vmem:[%s18 + $0x10] sm:$0xf]
  %v5934 = vld [vmem:[%s18 + $0x14] sm:$0xf]
  %v5935 = vld [vmem:[%s18 + $0x18] sm:$0xf]
  %v5936 = vld [vmem:[%s18 + $0x1c] sm:$0xf]
  %v5937 = vld [vmem:[%s18 + $0x20] sm:$0xf]
  %v5938 = vld [vmem:[%s18 + $0x24] sm:$0xf]
  %v5939 = vld [vmem:[%s18 + $0x28] sm:$0xf]
  %v5940 = vld [vmem:[%s18 + $0x2c] sm:$0xf]
  %v5941 = vld [vmem:[%s18 + $0x30] sm:$0xf]
  %v5942 = vld [vmem:[%s18 + $0x34] sm:$0xf]
  %v5943 = vld [vmem:[%s18 + $0x38] sm:$0xf]
  %v5944 = vld [vmem:[%s18 + $0x3c] sm:$0xf]
  %v5945 = vld [vmem:[%s18 + $0x40] sm:$0x3]
  %5950 = vrot.lane.b32.xlu0 %v5845, 1
  %v5951 = vpop.permute.xlu0 %5950
  %5952 = vrot.lane.b32.xlu0 %v5846, 1
  %v5953 = vpop.permute.xlu0 %5952
  %5954 = vrot.lane.b32.xlu0 %v5847, 1
  %v5955 = vpop.permute.xlu0 %5954
  %5956 = vrot.lane.b32.xlu0 %v5848, 1
  %v5957 = vpop.permute.xlu0 %5956
  %v5958 = vsel %vm4884, %v5951, %v5953
  %v5959 = vsel %vm4884, %v5955, %v5957
  %v5963 = vsel %vm4887, 0, %v5951
  %v5966 = vsel %vm4887, 0, %v5955
  %5968 = vrot.lane.b32.xlu0 %v5845, 114
  %v5969 = vpop.permute.xlu0 %5968
  %5970 = vrot.lane.b32.xlu0 %v5846, 114
  %v5971 = vpop.permute.xlu0 %5970
  %5972 = vrot.lane.b32.xlu0 %v5847, 114
  %v5973 = vpop.permute.xlu0 %5972
  %5974 = vrot.lane.b32.xlu0 %v5848, 114
  %v5975 = vpop.permute.xlu0 %5974
  %v5976 = vsel %vm2216, %v5969, %v5971
  %v5977 = vsel %vm2216, %v5973, %v5975
  %vm5980 = vcmask 39936
  %v5982 = vsel %vm5980, %v5971, 0
  %v5985 = vsel %vm5980, %v5975, 0
  %5987 = vrot.lane.b32.xlu0 %v5845, 127
  %v5988 = vpop.permute.xlu0 %5987
  %5989 = vrot.lane.b32.xlu0 %v5846, 127
  %v5990 = vpop.permute.xlu0 %5989
  %5991 = vrot.lane.b32.xlu0 %v5847, 127
  %v5992 = vpop.permute.xlu0 %5991
  %5993 = vrot.lane.b32.xlu0 %v5848, 127
  %v5994 = vpop.permute.xlu0 %5993
  %v5995 = vsel %vm1904, %v5988, %v5990
  %v5996 = vsel %vm1904, %v5992, %v5994
  %6001 = vrot.lane.b32.xlu0 %v5845, 126
  %v6002 = vpop.permute.xlu0 %6001
  %6003 = vrot.lane.b32.xlu0 %v5846, 126
  %v6004 = vpop.permute.xlu0 %6003
  %6005 = vrot.lane.b32.xlu0 %v5847, 126
  %v6006 = vpop.permute.xlu0 %6005
  %6007 = vrot.lane.b32.xlu0 %v5848, 126
  %v6008 = vpop.permute.xlu0 %6007
  %v6009 = vsel %vm1928, %v6002, %v6004
  %v6010 = vsel %vm1928, %v6006, %v6008
  %6015 = vrot.lane.b32.xlu0 %v5845, 125
  %v6016 = vpop.permute.xlu0 %6015
  %6017 = vrot.lane.b32.xlu0 %v5846, 125
  %v6018 = vpop.permute.xlu0 %6017
  %6019 = vrot.lane.b32.xlu0 %v5847, 125
  %v6020 = vpop.permute.xlu0 %6019
  %6021 = vrot.lane.b32.xlu0 %v5848, 125
  %v6022 = vpop.permute.xlu0 %6021
  %v6023 = vsel %vm1952, %v6016, %v6018
  %v6024 = vsel %vm1952, %v6020, %v6022
  %6029 = vrot.lane.b32.xlu0 %v5845, 124
  %v6030 = vpop.permute.xlu0 %6029
  %6031 = vrot.lane.b32.xlu0 %v5846, 124
  %v6032 = vpop.permute.xlu0 %6031
  %6033 = vrot.lane.b32.xlu0 %v5847, 124
  %v6034 = vpop.permute.xlu0 %6033
  %6035 = vrot.lane.b32.xlu0 %v5848, 124
  %v6036 = vpop.permute.xlu0 %6035
  %v6037 = vsel %vm1976, %v6030, %v6032
  %v6038 = vsel %vm1976, %v6034, %v6036
  %6043 = vrot.lane.b32.xlu0 %v5845, 123
  %v6044 = vpop.permute.xlu0 %6043
  %6045 = vrot.lane.b32.xlu0 %v5846, 123
  %v6046 = vpop.permute.xlu0 %6045
  %6047 = vrot.lane.b32.xlu0 %v5847, 123
  %v6048 = vpop.permute.xlu0 %6047
  %6049 = vrot.lane.b32.xlu0 %v5848, 123
  %v6050 = vpop.permute.xlu0 %6049
  %v6051 = vsel %vm2000, %v6044, %v6046
  %v6052 = vsel %vm2000, %v6048, %v6050
  %6057 = vrot.lane.b32.xlu0 %v5845, 122
  %v6058 = vpop.permute.xlu0 %6057
  %6059 = vrot.lane.b32.xlu0 %v5846, 122
  %v6060 = vpop.permute.xlu0 %6059
  %6061 = vrot.lane.b32.xlu0 %v5847, 122
  %v6062 = vpop.permute.xlu0 %6061
  %6063 = vrot.lane.b32.xlu0 %v5848, 122
  %v6064 = vpop.permute.xlu0 %6063
  %v6065 = vsel %vm2024, %v6058, %v6060
  %v6066 = vsel %vm2024, %v6062, %v6064
  %6071 = vrot.lane.b32.xlu0 %v5845, 121
  %v6072 = vpop.permute.xlu0 %6071
  %6073 = vrot.lane.b32.xlu0 %v5846, 121
  %v6074 = vpop.permute.xlu0 %6073
  %6075 = vrot.lane.b32.xlu0 %v5847, 121
  %v6076 = vpop.permute.xlu0 %6075
  %6077 = vrot.lane.b32.xlu0 %v5848, 121
  %v6078 = vpop.permute.xlu0 %6077
  %v6079 = vsel %vm2048, %v6072, %v6074
  %v6080 = vsel %vm2048, %v6076, %v6078
  %6085 = vrot.lane.b32.xlu0 %v5845, 120
  %v6086 = vpop.permute.xlu0 %6085
  %6087 = vrot.lane.b32.xlu0 %v5846, 120
  %v6088 = vpop.permute.xlu0 %6087
  %6089 = vrot.lane.b32.xlu0 %v5847, 120
  %v6090 = vpop.permute.xlu0 %6089
  %6091 = vrot.lane.b32.xlu0 %v5848, 120
  %v6092 = vpop.permute.xlu0 %6091
  %v6093 = vsel %vm2072, %v6086, %v6088
  %v6094 = vsel %vm2072, %v6090, %v6092
  %6099 = vrot.lane.b32.xlu0 %v5845, 119
  %v6100 = vpop.permute.xlu0 %6099
  %6101 = vrot.lane.b32.xlu0 %v5846, 119
  %v6102 = vpop.permute.xlu0 %6101
  %6103 = vrot.lane.b32.xlu0 %v5847, 119
  %v6104 = vpop.permute.xlu0 %6103
  %6105 = vrot.lane.b32.xlu0 %v5848, 119
  %v6106 = vpop.permute.xlu0 %6105
  %v6107 = vsel %vm2096, %v6100, %v6102
  %v6108 = vsel %vm2096, %v6104, %v6106
  %6113 = vrot.lane.b32.xlu0 %v5845, 118
  %v6114 = vpop.permute.xlu0 %6113
  %6115 = vrot.lane.b32.xlu0 %v5846, 118
  %v6116 = vpop.permute.xlu0 %6115
  %6117 = vrot.lane.b32.xlu0 %v5847, 118
  %v6118 = vpop.permute.xlu0 %6117
  %6119 = vrot.lane.b32.xlu0 %v5848, 118
  %v6120 = vpop.permute.xlu0 %6119
  %v6121 = vsel %vm2120, %v6114, %v6116
  %v6122 = vsel %vm2120, %v6118, %v6120
  %6127 = vrot.lane.b32.xlu0 %v5845, 117
  %v6128 = vpop.permute.xlu0 %6127
  %6129 = vrot.lane.b32.xlu0 %v5846, 117
  %v6130 = vpop.permute.xlu0 %6129
  %6131 = vrot.lane.b32.xlu0 %v5847, 117
  %v6132 = vpop.permute.xlu0 %6131
  %6133 = vrot.lane.b32.xlu0 %v5848, 117
  %v6134 = vpop.permute.xlu0 %6133
  %v6135 = vsel %vm2144, %v6128, %v6130
  %v6136 = vsel %vm2144, %v6132, %v6134
  %6141 = vrot.lane.b32.xlu0 %v5845, 116
  %v6142 = vpop.permute.xlu0 %6141
  %6143 = vrot.lane.b32.xlu0 %v5846, 116
  %v6144 = vpop.permute.xlu0 %6143
  %6145 = vrot.lane.b32.xlu0 %v5847, 116
  %v6146 = vpop.permute.xlu0 %6145
  %6147 = vrot.lane.b32.xlu0 %v5848, 116
  %v6148 = vpop.permute.xlu0 %6147
  %v6149 = vsel %vm2168, %v6142, %v6144
  %v6150 = vsel %vm2168, %v6146, %v6148
  %6155 = vrot.lane.b32.xlu0 %v5845, 115
  %v6156 = vpop.permute.xlu0 %6155
  %6157 = vrot.lane.b32.xlu0 %v5846, 115
  %v6158 = vpop.permute.xlu0 %6157
  %6159 = vrot.lane.b32.xlu0 %v5847, 115
  %v6160 = vpop.permute.xlu0 %6159
  %6161 = vrot.lane.b32.xlu0 %v5848, 115
  %v6162 = vpop.permute.xlu0 %6161
  %v6163 = vsel %vm2192, %v6156, %v6158
  %v6164 = vsel %vm2192, %v6160, %v6162
  %6170 = vset.pattern.permute.xlu0 0
  %6171 = vperm.xlu0 %6170, %v5917
  %v6172 = vpop.permute.xlu0 %6171
  %6175 = vset.pattern.permute.xlu0 0
  %6176 = vperm.xlu0 %6175, %v5918
  %v6177 = vpop.permute.xlu0 %6176
  %6180 = vset.pattern.permute.xlu0 0
  %6181 = vperm.xlu0 %6180, %v5919
  %v6182 = vpop.permute.xlu0 %6181
  %6185 = vset.pattern.permute.xlu0 0
  %6186 = vperm.xlu0 %6185, %v5920
  %v6187 = vpop.permute.xlu0 %6186
  %v6197 = vunpack.c.l.b16 %v5909
  %v6198 = vunpack.c.h.b16 %v5909
  %v6199 = vunpack.c.l.b16 %v5910
  %v6200 = vunpack.c.h.b16 %v5910
  %v6201 = vunpack.c.l.b16 %v5911
  %v6202 = vunpack.c.h.b16 %v5911
  %v6203 = vunpack.c.l.b16 %v5912
  %v6204 = vunpack.c.h.b16 %v5912
  %v6205 = vunpack.c.l.b16 %v5913
  %v6206 = vunpack.c.h.b16 %v5913
  %v6207 = vunpack.c.l.b16 %v5914
  %v6208 = vunpack.c.h.b16 %v5914
  %v6209 = vunpack.c.l.b16 %v5915
  %v6210 = vunpack.c.h.b16 %v5915
  %v6211 = vunpack.c.l.b16 %v5916
  %v6212 = vunpack.c.h.b16 %v5916
  %v6213 = vpack.c.b16 %v6201, %v6197
  %v6214 = vpack.c.b16 %v6202, %v6198
  %v6215 = vpack.c.b16 %v6203, %v6199
  %v6216 = vpack.c.b16 %v6204, %v6200
  %v6217 = vpack.c.b16 %v6209, %v6205
  %v6218 = vpack.c.b16 %v6210, %v6206
  %v6219 = vpack.c.b16 %v6211, %v6207
  %v6220 = vpack.c.b16 %v6212, %v6208
  %6229 = vmatprep.subr.bf16.mxu0 %v5958
  %6230 = vmatpush1.bf16.msra.mxu0 %v5963
  %6231 = vmatprep.subr.bf16.mxu0 %v5959
  %6232 = vmatpush1.bf16.msra.mxu0 %v5966
  %6233 = vmatprep.subr.bf16.mxu0 %v5846
  %6234 = vmatpush1.bf16.msra.mxu0 %v5845
  %6235 = vmatprep.subr.bf16.mxu0 %v5848
  %6236 = vmatpush1.bf16.msra.mxu0 %v5847
  %6237 = vmatprep.subr.bf16.mxu0 %v5990
  %6238 = vmatpush1.bf16.msra.mxu0 %v5995
  %6239 = vmatprep.subr.bf16.mxu0 %v5994
  %6240 = vmatpush1.bf16.msra.mxu0 %v5996
  %6241 = vmatprep.subr.bf16.mxu0 %v6004
  %6242 = vmatpush1.bf16.msra.mxu0 %v6009
  %6243 = vmatprep.subr.bf16.mxu0 %v6008
  %6244 = vmatpush1.bf16.msra.mxu0 %v6010
  %6245 = vmatprep.subr.bf16.mxu0 %v6018
  %6246 = vmatpush1.bf16.msra.mxu0 %v6023
  %6247 = vmatprep.subr.bf16.mxu0 %v6022
  %6248 = vmatpush1.bf16.msra.mxu0 %v6024
  %6249 = vmatprep.subr.bf16.mxu0 %v6032
  %6250 = vmatpush1.bf16.msra.mxu0 %v6037
  %6251 = vmatprep.subr.bf16.mxu0 %v6036
  %6252 = vmatpush1.bf16.msra.mxu0 %v6038
  %6253 = vmatprep.subr.bf16.mxu0 %v6046
  %6254 = vmatpush1.bf16.msra.mxu0 %v6051
  %6255 = vmatprep.subr.bf16.mxu0 %v6050
  %6256 = vmatpush1.bf16.msra.mxu0 %v6052
  %6257 = vmatprep.subr.bf16.mxu0 %v6060
  %6258 = vmatpush1.bf16.msra.mxu0 %v6065
  %6259 = vmatprep.subr.bf16.mxu0 %v6064
  %6260 = vmatpush1.bf16.msra.mxu0 %v6066
  %6261 = vmatprep.mubr.bf16.mxu0 %v6214
  %6262 = vmatmul.mubr.bf16.gmra.mrb[0].mxu0 %v6213
  %v6263 = vpop.f32.mrb[0].mxu0
  %v6264 = vadd.f32 %v6172, %v6263
  %v6265 = vpop.f32.mrb[0].mxu0
  %v6266 = vadd.f32 %v6172, %v6265
  %v6267 = vpop.f32.mrb[0].mxu0
  %v6268 = vadd.f32 %v6177, %v6267
  %v6269 = vpop.f32.mrb[0].mxu0
  %v6270 = vadd.f32 %v6177, %v6269
  %6271 = vmatprep.mubr.bf16.mxu0 %v6218
  %6272 = vmatmul.mubr.bf16.gmra.mrb[0].mxu0 %v6217
  %v6273 = vpop.f32.mrb[0].mxu0
  %v6274 = vadd.f32 %v6182, %v6273
  %v6275 = vpop.f32.mrb[0].mxu0
  %v6276 = vadd.f32 %v6182, %v6275
  %v6277 = vpop.f32.mrb[0].mxu0
  %v6278 = vadd.f32 %v6187, %v6277
  %v6279 = vpop.f32.mrb[0].mxu0
  %v6280 = vadd.f32 %v6187, %v6279
  %6281 = vdwg.mxu0
  %6282 = vmatprep.subr.bf16.mxu0 %v6074
  %6283 = vmatpush1.bf16.msra.mxu0 %v6079
  %6284 = vmatprep.subr.bf16.mxu0 %v6078
  %6285 = vmatpush1.bf16.msra.mxu0 %v6080
  %6286 = vmatprep.subr.bf16.mxu0 %v6088
  %6287 = vmatpush1.bf16.msra.mxu0 %v6093
  %6288 = vmatprep.subr.bf16.mxu0 %v6092
  %6289 = vmatpush1.bf16.msra.mxu0 %v6094
  %6290 = vmatprep.subr.bf16.mxu0 %v6102
  %6291 = vmatpush1.bf16.msra.mxu0 %v6107
  %6292 = vmatprep.subr.bf16.mxu0 %v6106
  %6293 = vmatpush1.bf16.msra.mxu0 %v6108
  %6294 = vmatprep.subr.bf16.mxu0 %v6116
  %6295 = vmatpush1.bf16.msra.mxu0 %v6121
  %6296 = vmatprep.subr.bf16.mxu0 %v6120
  %6297 = vmatpush1.bf16.msra.mxu0 %v6122
  %6298 = vmatprep.subr.bf16.mxu0 %v6130
  %6299 = vmatpush1.bf16.msra.mxu0 %v6135
  %6300 = vmatprep.subr.bf16.mxu0 %v6134
  %6301 = vmatpush1.bf16.msra.mxu0 %v6136
  %6302 = vmatprep.subr.bf16.mxu0 %v6144
  %6303 = vmatpush1.bf16.msra.mxu0 %v6149
  %6304 = vmatprep.subr.bf16.mxu0 %v6148
  %6305 = vmatpush1.bf16.msra.mxu0 %v6150
  %6306 = vmatprep.subr.bf16.mxu0 %v6158
  %6307 = vmatpush1.bf16.msra.mxu0 %v6163
  %6308 = vmatprep.subr.bf16.mxu0 %v6162
  %6309 = vmatpush1.bf16.msra.mxu0 %v6164
  %6310 = vmatprep.subr.bf16.mxu0 %v5982
  %6311 = vmatpush1.bf16.msra.mxu0 %v5976
  %6312 = vmatprep.subr.bf16.mxu0 %v5985
  %6313 = vmatpush1.bf16.msra.mxu0 %v5977
  %6314 = vmatprep.mubr.bf16.mxu0 %v6216
  %6315 = vmatmul.mubr.bf16.gmra.mrb[0].mxu0 %v6215
  %v6316 = vpop.f32.mrb[0].mxu0
  %v6317 = vadd.f32 %v6264, %v6316
  %v6318 = vpop.f32.mrb[0].mxu0
  %v6319 = vadd.f32 %v6266, %v6318
  %v6320 = vpop.f32.mrb[0].mxu0
  %v6321 = vadd.f32 %v6268, %v6320
  %v6322 = vpop.f32.mrb[0].mxu0
  %v6323 = vadd.f32 %v6270, %v6322
  %6324 = vmatprep.mubr.bf16.mxu0 %v6220
  %6325 = vmatmul.mubr.bf16.gmra.mrb[0].mxu0 %v6219
  %v6326 = vpop.f32.mrb[0].mxu0
  %v6327 = vadd.f32 %v6274, %v6326
  %v6328 = vpop.f32.mrb[0].mxu0
  %v6329 = vadd.f32 %v6276, %v6328
  %v6330 = vpop.f32.mrb[0].mxu0
  %v6331 = vadd.f32 %v6278, %v6330
  %v6332 = vpop.f32.mrb[0].mxu0
  %v6333 = vadd.f32 %v6280, %v6332
  %6334 = vdwg.mxu0
  %v6335 = vmax.f32 %v6317, 1e-06
  %v6336 = vmax.f32 %v6319, 1e-06
  %v6337 = vmax.f32 %v6321, 1e-06
  %v6338 = vmax.f32 %v6323, 1e-06
  %v6339 = vmax.f32 %v6327, 1e-06
  %v6340 = vmax.f32 %v6329, 1e-06
  %v6341 = vmax.f32 %v6331, 1e-06
  %v6342 = vmax.f32 %v6333, 1e-06
  %v6343 = vmul.f32 %v6335, %v6335
  %v6344 = vmul.f32 %v6336, %v6336
  %v6345 = vmul.f32 %v6337, %v6337
  %v6346 = vmul.f32 %v6338, %v6338
  %v6347 = vmul.f32 %v6339, %v6339
  %v6348 = vmul.f32 %v6340, %v6340
  %v6349 = vmul.f32 %v6341, %v6341
  %v6350 = vmul.f32 %v6342, %v6342
  %v6351 = vmul.f32 %v6343, %v6335
  %v6352 = vmul.f32 %v6344, %v6336
  %v6353 = vmul.f32 %v6345, %v6337
  %v6354 = vmul.f32 %v6346, %v6338
  %v6355 = vmul.f32 %v6347, %v6339
  %v6356 = vmul.f32 %v6348, %v6340
  %v6357 = vmul.f32 %v6349, %v6341
  %v6358 = vmul.f32 %v6350, %v6342
  %v6359 = vpack.c.bf16 %v6353, %v6351
  %v6360 = vpack.c.bf16 %v6354, %v6352
  %v6361 = vpack.c.bf16 %v6357, %v6355
  %v6362 = vpack.c.bf16 %v6358, %v6356
  %v6380 = vunpack.c.l.b16 %v5929
  %v6381 = vunpack.c.l.b16 %v5930
  %v6382 = vunpack.c.l.b16 %v5931
  %v6383 = vunpack.c.l.b16 %v5932
  %v6384 = vunpack.c.l.b16 %v5933
  %v6385 = vunpack.c.l.b16 %v5934
  %v6386 = vunpack.c.l.b16 %v5935
  %v6387 = vunpack.c.l.b16 %v5936
  %v6388 = vunpack.c.l.b16 %v5937
  %v6389 = vunpack.c.l.b16 %v5938
  %v6390 = vunpack.c.l.b16 %v5939
  %v6391 = vunpack.c.l.b16 %v5940
  %v6392 = vunpack.c.l.b16 %v5941
  %v6393 = vunpack.c.l.b16 %v5942
  %v6394 = vunpack.c.l.b16 %v5943
  %v6395 = vunpack.c.l.b16 %v5944
  %v6396 = vunpack.c.l.b16 %v5945
  %v6397 = vpack.c.b16 %v6381, %v6380
  %v6398 = vpack.c.b16 %v6383, %v6382
  %v6399 = vpack.c.b16 %v6385, %v6384
  %v6400 = vpack.c.b16 %v6387, %v6386
  %v6401 = vpack.c.b16 %v6389, %v6388
  %v6402 = vpack.c.b16 %v6391, %v6390
  %v6403 = vpack.c.b16 %v6393, %v6392
  %v6404 = vpack.c.b16 %v6395, %v6394
  %v6405 = vpack.c.b16 %v6396, %v6396
  %vm6414 = vcmask 31744
  %v6416 = vsel %vm6414, %v6360, 0
  %v6419 = vsel %vm6414, %v6362, 0
  %v6422 = vsel %vm499, %v6405, 0
  %6424 = vmatprep.subr.bf16.mxu0 0
  %6425 = vmatpush1.bf16.msra.mxu0 %v6397
  %6426 = vmatprep.subr.bf16.mxu0 0
  %6427 = vmatpush1.bf16.msra.mxu0 %v6398
  %6428 = vmatprep.subr.bf16.mxu0 0
  %6429 = vmatpush1.bf16.msra.mxu0 %v6399
  %6430 = vmatprep.subr.bf16.mxu0 0
  %6431 = vmatpush1.bf16.msra.mxu0 %v6400
  %6432 = vmatprep.subr.bf16.mxu0 0
  %6433 = vmatpush1.bf16.msra.mxu0 %v6401
  %6434 = vmatprep.subr.bf16.mxu0 0
  %6435 = vmatpush1.bf16.msra.mxu0 %v6402
  %6436 = vmatprep.subr.bf16.mxu0 0
  %6437 = vmatpush1.bf16.msra.mxu0 %v6403
  %6438 = vmatprep.subr.bf16.mxu0 0
  %6439 = vmatpush1.bf16.msra.mxu0 %v6404
  %6440 = vmatprep.subr.bf16.mxu0 0
  %6441 = vmatpush1.bf16.msra.mxu0 %v6422
  %6442 = vmatprep.subr.bf16.mxu0 0
  %6443 = vmatpush1.bf16.msra.mxu0 0
  %6444 = vmatprep.subr.bf16.mxu0 0
  %6445 = vmatpush1.bf16.msra.mxu0 0
  %6446 = vmatprep.subr.bf16.mxu0 0
  %6447 = vmatpush1.bf16.msra.mxu0 0
  %6448 = vmatprep.subr.bf16.mxu0 0
  %6449 = vmatpush1.bf16.msra.mxu0 0
  %6450 = vmatprep.subr.bf16.mxu0 0
  %6451 = vmatpush1.bf16.msra.mxu0 0
  %6452 = vmatprep.subr.bf16.mxu0 0
  %6453 = vmatpush1.bf16.msra.mxu0 0
  %6454 = vmatprep.subr.bf16.mxu0 0
  %6455 = vmatpush1.bf16.msra.mxu0 0
  %6456 = vmatprep.mubr.bf16.mxu0 %v6416
  %6457 = vmatmul.mubr.bf16.gmra.mrb[0].mxu0 %v6359
  %v6458 = vpop.f32.mrb[0].mxu0
  %v6459 = vadd.f32 0.0, %v6458
  %v6460 = vpop.f32.mrb[0].mxu0
  %v6461 = vpop.f32.mrb[0].mxu0
  %v6462 = vadd.f32 0.0, %v6461
  %v6463 = vpop.f32.mrb[0].mxu0
  %6464 = vmatprep.mubr.bf16.mxu0 %v6419
  %6465 = vmatmul.mubr.bf16.gmra.mrb[0].mxu0 %v6361
  %v6466 = vpop.f32.mrb[0].mxu0
  %v6467 = vadd.f32 0.0, %v6466
  %v6468 = vpop.f32.mrb[0].mxu0
  %v6469 = vpop.f32.mrb[0].mxu0
  %v6470 = vadd.f32 0.0, %v6469
  %v6471 = vpop.f32.mrb[0].mxu0
  %6472 = vdwg.mxu0
  %v6473 = vlog2.pop %v6459
  %v6474 = vmul.f32 %v6473, 0.6931472
  %v6475 = vlog2.pop %v6462
  %v6476 = vmul.f32 %v6475, 0.6931472
  %v6477 = vlog2.pop %v6467
  %v6478 = vmul.f32 %v6477, 0.6931472
  %v6479 = vlog2.pop %v6470
  %v6480 = vmul.f32 %v6479, 0.6931472
  %v6481 = vmul.f32 %v6474, 0.33333334
  %v6482 = vmul.f32 %v6476, 0.33333334
  %v6483 = vmul.f32 %v6478, 0.33333334
  %v6484 = vmul.f32 %v6480, 0.33333334
  %v6485 = vmul.f32 %v6481, 1.442695
  %v6486 = vpow.pop %v6485
  %v6487 = vmul.f32 %v6482, 1.442695
  %v6488 = vpow.pop %v6487
  %v6489 = vmul.f32 %v6483, 1.442695
  %v6490 = vpow.pop %v6489
  %v6491 = vmul.f32 %v6484, 1.442695
  %v6492 = vpow.pop %v6491
  %6497 = vrot.lane.b32.xlu0 %v5905, 1
  %v6498 = vpop.permute.xlu0 %6497
  %6499 = vrot.lane.b32.xlu0 %v5906, 1
  %v6500 = vpop.permute.xlu0 %6499
  %6501 = vrot.lane.b32.xlu0 %v5907, 1
  %v6502 = vpop.permute.xlu0 %6501
  %6503 = vrot.lane.b32.xlu0 %v5908, 1
  %v6504 = vpop.permute.xlu0 %6503
  %v6505 = vsel %vm4884, %v6498, %v6500
  %v6506 = vsel %vm4884, %v6502, %v6504
  %v6510 = vsel %vm4887, 0, %v6498
  %v6513 = vsel %vm4887, 0, %v6502
  %6515 = vrot.lane.b32.xlu0 %v5905, 114
  %v6516 = vpop.permute.xlu0 %6515
  %6517 = vrot.lane.b32.xlu0 %v5906, 114
  %v6518 = vpop.permute.xlu0 %6517
  %6519 = vrot.lane.b32.xlu0 %v5907, 114
  %v6520 = vpop.permute.xlu0 %6519
  %6521 = vrot.lane.b32.xlu0 %v5908, 114
  %v6522 = vpop.permute.xlu0 %6521
  %v6523 = vsel %vm2216, %v6516, %v6518
  %v6524 = vsel %vm2216, %v6520, %v6522
  %v6528 = vsel %vm5980, %v6518, 0
  %v6531 = vsel %vm5980, %v6522, 0
  %6533 = vrot.lane.b32.xlu0 %v5905, 127
  %v6534 = vpop.permute.xlu0 %6533
  %6535 = vrot.lane.b32.xlu0 %v5906, 127
  %v6536 = vpop.permute.xlu0 %6535
  %6537 = vrot.lane.b32.xlu0 %v5907, 127
  %v6538 = vpop.permute.xlu0 %6537
  %6539 = vrot.lane.b32.xlu0 %v5908, 127
  %v6540 = vpop.permute.xlu0 %6539
  %v6541 = vsel %vm1904, %v6534, %v6536
  %v6542 = vsel %vm1904, %v6538, %v6540
  %6547 = vrot.lane.b32.xlu0 %v5905, 126
  %v6548 = vpop.permute.xlu0 %6547
  %6549 = vrot.lane.b32.xlu0 %v5906, 126
  %v6550 = vpop.permute.xlu0 %6549
  %6551 = vrot.lane.b32.xlu0 %v5907, 126
  %v6552 = vpop.permute.xlu0 %6551
  %6553 = vrot.lane.b32.xlu0 %v5908, 126
  %v6554 = vpop.permute.xlu0 %6553
  %v6555 = vsel %vm1928, %v6548, %v6550
  %v6556 = vsel %vm1928, %v6552, %v6554
  %6561 = vrot.lane.b32.xlu0 %v5905, 125
  %v6562 = vpop.permute.xlu0 %6561
  %6563 = vrot.lane.b32.xlu0 %v5906, 125
  %v6564 = vpop.permute.xlu0 %6563
  %6565 = vrot.lane.b32.xlu0 %v5907, 125
  %v6566 = vpop.permute.xlu0 %6565
  %6567 = vrot.lane.b32.xlu0 %v5908, 125
  %v6568 = vpop.permute.xlu0 %6567
  %v6569 = vsel %vm1952, %v6562, %v6564
  %v6570 = vsel %vm1952, %v6566, %v6568
  %6575 = vrot.lane.b32.xlu0 %v5905, 124
  %v6576 = vpop.permute.xlu0 %6575
  %6577 = vrot.lane.b32.xlu0 %v5906, 124
  %v6578 = vpop.permute.xlu0 %6577
  %6579 = vrot.lane.b32.xlu0 %v5907, 124
  %v6580 = vpop.permute.xlu0 %6579
  %6581 = vrot.lane.b32.xlu0 %v5908, 124
  %v6582 = vpop.permute.xlu0 %6581
  %v6583 = vsel %vm1976, %v6576, %v6578
  %v6584 = vsel %vm1976, %v6580, %v6582
  %6589 = vrot.lane.b32.xlu0 %v5905, 123
  %v6590 = vpop.permute.xlu0 %6589
  %6591 = vrot.lane.b32.xlu0 %v5906, 123
  %v6592 = vpop.permute.xlu0 %6591
  %6593 = vrot.lane.b32.xlu0 %v5907, 123
  %v6594 = vpop.permute.xlu0 %6593
  %6595 = vrot.lane.b32.xlu0 %v5908, 123
  %v6596 = vpop.permute.xlu0 %6595
  %v6597 = vsel %vm2000, %v6590, %v6592
  %v6598 = vsel %vm2000, %v6594, %v6596
  %6603 = vrot.lane.b32.xlu0 %v5905, 122
  %v6604 = vpop.permute.xlu0 %6603
  %6605 = vrot.lane.b32.xlu0 %v5906, 122
  %v6606 = vpop.permute.xlu0 %6605
  %6607 = vrot.lane.b32.xlu0 %v5907, 122
  %v6608 = vpop.permute.xlu0 %6607
  %6609 = vrot.lane.b32.xlu0 %v5908, 122
  %v6610 = vpop.permute.xlu0 %6609
  %v6611 = vsel %vm2024, %v6604, %v6606
  %v6612 = vsel %vm2024, %v6608, %v6610
  %6617 = vrot.lane.b32.xlu0 %v5905, 121
  %v6618 = vpop.permute.xlu0 %6617
  %6619 = vrot.lane.b32.xlu0 %v5906, 121
  %v6620 = vpop.permute.xlu0 %6619
  %6621 = vrot.lane.b32.xlu0 %v5907, 121
  %v6622 = vpop.permute.xlu0 %6621
  %6623 = vrot.lane.b32.xlu0 %v5908, 121
  %v6624 = vpop.permute.xlu0 %6623
  %v6625 = vsel %vm2048, %v6618, %v6620
  %v6626 = vsel %vm2048, %v6622, %v6624
  %6631 = vrot.lane.b32.xlu0 %v5905, 120
  %v6632 = vpop.permute.xlu0 %6631
  %6633 = vrot.lane.b32.xlu0 %v5906, 120
  %v6634 = vpop.permute.xlu0 %6633
  %6635 = vrot.lane.b32.xlu0 %v5907, 120
  %v6636 = vpop.permute.xlu0 %6635
  %6637 = vrot.lane.b32.xlu0 %v5908, 120
  %v6638 = vpop.permute.xlu0 %6637
  %v6639 = vsel %vm2072, %v6632, %v6634
  %v6640 = vsel %vm2072, %v6636, %v6638
  %6645 = vrot.lane.b32.xlu0 %v5905, 119
  %v6646 = vpop.permute.xlu0 %6645
  %6647 = vrot.lane.b32.xlu0 %v5906, 119
  %v6648 = vpop.permute.xlu0 %6647
  %6649 = vrot.lane.b32.xlu0 %v5907, 119
  %v6650 = vpop.permute.xlu0 %6649
  %6651 = vrot.lane.b32.xlu0 %v5908, 119
  %v6652 = vpop.permute.xlu0 %6651
  %v6653 = vsel %vm2096, %v6646, %v6648
  %v6654 = vsel %vm2096, %v6650, %v6652
  %6659 = vrot.lane.b32.xlu0 %v5905, 118
  %v6660 = vpop.permute.xlu0 %6659
  %6661 = vrot.lane.b32.xlu0 %v5906, 118
  %v6662 = vpop.permute.xlu0 %6661
  %6663 = vrot.lane.b32.xlu0 %v5907, 118
  %v6664 = vpop.permute.xlu0 %6663
  %6665 = vrot.lane.b32.xlu0 %v5908, 118
  %v6666 = vpop.permute.xlu0 %6665
  %v6667 = vsel %vm2120, %v6660, %v6662
  %v6668 = vsel %vm2120, %v6664, %v6666
  %6673 = vrot.lane.b32.xlu0 %v5905, 117
  %v6674 = vpop.permute.xlu0 %6673
  %6675 = vrot.lane.b32.xlu0 %v5906, 117
  %v6676 = vpop.permute.xlu0 %6675
  %6677 = vrot.lane.b32.xlu0 %v5907, 117
  %v6678 = vpop.permute.xlu0 %6677
  %6679 = vrot.lane.b32.xlu0 %v5908, 117
  %v6680 = vpop.permute.xlu0 %6679
  %v6681 = vsel %vm2144, %v6674, %v6676
  %v6682 = vsel %vm2144, %v6678, %v6680
  %6687 = vrot.lane.b32.xlu0 %v5905, 116
  %v6688 = vpop.permute.xlu0 %6687
  %6689 = vrot.lane.b32.xlu0 %v5906, 116
  %v6690 = vpop.permute.xlu0 %6689
  %6691 = vrot.lane.b32.xlu0 %v5907, 116
  %v6692 = vpop.permute.xlu0 %6691
  %6693 = vrot.lane.b32.xlu0 %v5908, 116
  %v6694 = vpop.permute.xlu0 %6693
  %v6695 = vsel %vm2168, %v6688, %v6690
  %v6696 = vsel %vm2168, %v6692, %v6694
  %6701 = vrot.lane.b32.xlu0 %v5905, 115
  %v6702 = vpop.permute.xlu0 %6701
  %6703 = vrot.lane.b32.xlu0 %v5906, 115
  %v6704 = vpop.permute.xlu0 %6703
  %6705 = vrot.lane.b32.xlu0 %v5907, 115
  %v6706 = vpop.permute.xlu0 %6705
  %6707 = vrot.lane.b32.xlu0 %v5908, 115
  %v6708 = vpop.permute.xlu0 %6707
  %v6709 = vsel %vm2192, %v6702, %v6704
  %v6710 = vsel %vm2192, %v6706, %v6708
  %6715 = vmatprep.subr.bf16.mxu0 %v6505
  %6716 = vmatpush1.bf16.msra.mxu0 %v6510
  %6717 = vmatprep.subr.bf16.mxu0 %v6506
  %6718 = vmatpush1.bf16.msra.mxu0 %v6513
  %6719 = vmatprep.subr.bf16.mxu0 %v5906
  %6720 = vmatpush1.bf16.msra.mxu0 %v5905
  %6721 = vmatprep.subr.bf16.mxu0 %v5908
  %6722 = vmatpush1.bf16.msra.mxu0 %v5907
  %6723 = vmatprep.subr.bf16.mxu0 %v6536
  %6724 = vmatpush1.bf16.msra.mxu0 %v6541
  %6725 = vmatprep.subr.bf16.mxu0 %v6540
  %6726 = vmatpush1.bf16.msra.mxu0 %v6542
  %6727 = vmatprep.subr.bf16.mxu0 %v6550
  %6728 = vmatpush1.bf16.msra.mxu0 %v6555
  %6729 = vmatprep.subr.bf16.mxu0 %v6554
  %6730 = vmatpush1.bf16.msra.mxu0 %v6556
  %6731 = vmatprep.subr.bf16.mxu0 %v6564
  %6732 = vmatpush1.bf16.msra.mxu0 %v6569
  %6733 = vmatprep.subr.bf16.mxu0 %v6568
  %6734 = vmatpush1.bf16.msra.mxu0 %v6570
  %6735 = vmatprep.subr.bf16.mxu0 %v6578
  %6736 = vmatpush1.bf16.msra.mxu0 %v6583
  %6737 = vmatprep.subr.bf16.mxu0 %v6582
  %6738 = vmatpush1.bf16.msra.mxu0 %v6584
  %6739 = vmatprep.subr.bf16.mxu0 %v6592
  %6740 = vmatpush1.bf16.msra.mxu0 %v6597
  %6741 = vmatprep.subr.bf16.mxu0 %v6596
  %6742 = vmatpush1.bf16.msra.mxu0 %v6598
  %6743 = vmatprep.subr.bf16.mxu0 %v6606
  %6744 = vmatpush1.bf16.msra.mxu0 %v6611
  %6745 = vmatprep.subr.bf16.mxu0 %v6610
  %6746 = vmatpush1.bf16.msra.mxu0 %v6612
  %6747 = vmatprep.mubr.bf16.mxu0 %v6214
  %6748 = vmatmul.mubr.bf16.gmra.mrb[0].mxu0 %v6213
  %v6749 = vpop.f32.mrb[0].mxu0
  %v6750 = vadd.f32 %v6172, %v6749
  %v6751 = vpop.f32.mrb[0].mxu0
  %v6752 = vadd.f32 %v6172, %v6751
  %v6753 = vpop.f32.mrb[0].mxu0
  %v6754 = vadd.f32 %v6177, %v6753
  %v6755 = vpop.f32.mrb[0].mxu0
  %v6756 = vadd.f32 %v6177, %v6755
  %6757 = vmatprep.mubr.bf16.mxu0 %v6218
  %6758 = vmatmul.mubr.bf16.gmra.mrb[0].mxu0 %v6217
  %v6759 = vpop.f32.mrb[0].mxu0
  %v6760 = vadd.f32 %v6182, %v6759
  %v6761 = vpop.f32.mrb[0].mxu0
  %v6762 = vadd.f32 %v6182, %v6761
  %v6763 = vpop.f32.mrb[0].mxu0
  %v6764 = vadd.f32 %v6187, %v6763
  %v6765 = vpop.f32.mrb[0].mxu0
  %v6766 = vadd.f32 %v6187, %v6765
  %6767 = vdwg.mxu0
  %6768 = vmatprep.subr.bf16.mxu0 %v6620
  %6769 = vmatpush1.bf16.msra.mxu0 %v6625
  %6770 = vmatprep.subr.bf16.mxu0 %v6624
  %6771 = vmatpush1.bf16.msra.mxu0 %v6626
  %6772 = vmatprep.subr.bf16.mxu0 %v6634
  %6773 = vmatpush1.bf16.msra.mxu0 %v6639
  %6774 = vmatprep.subr.bf16.mxu0 %v6638
  %6775 = vmatpush1.bf16.msra.mxu0 %v6640
  %6776 = vmatprep.subr.bf16.mxu0 %v6648
  %6777 = vmatpush1.bf16.msra.mxu0 %v6653
  %6778 = vmatprep.subr.bf16.mxu0 %v6652
  %6779 = vmatpush1.bf16.msra.mxu0 %v6654
  %6780 = vmatprep.subr.bf16.mxu0 %v6662
  %6781 = vmatpush1.bf16.msra.mxu0 %v6667
  %6782 = vmatprep.subr.bf16.mxu0 %v6666
  %6783 = vmatpush1.bf16.msra.mxu0 %v6668
  %6784 = vmatprep.subr.bf16.mxu0 %v6676
  %6785 = vmatpush1.bf16.msra.mxu0 %v6681
  %6786 = vmatprep.subr.bf16.mxu0 %v6680
  %6787 = vmatpush1.bf16.msra.mxu0 %v6682
  %6788 = vmatprep.subr.bf16.mxu0 %v6690
  %6789 = vmatpush1.bf16.msra.mxu0 %v6695
  %6790 = vmatprep.subr.bf16.mxu0 %v6694
  %6791 = vmatpush1.bf16.msra.mxu0 %v6696
  %6792 = vmatprep.subr.bf16.mxu0 %v6704
  %6793 = vmatpush1.bf16.msra.mxu0 %v6709
  %6794 = vmatprep.subr.bf16.mxu0 %v6708
  %6795 = vmatpush1.bf16.msra.mxu0 %v6710
  %6796 = vmatprep.subr.bf16.mxu0 %v6528
  %6797 = vmatpush1.bf16.msra.mxu0 %v6523
  %6798 = vmatprep.subr.bf16.mxu0 %v6531
  %6799 = vmatpush1.bf16.msra.mxu0 %v6524
  %6800 = vmatprep.mubr.bf16.mxu0 %v6216
  %6801 = vmatmul.mubr.bf16.gmra.mrb[0].mxu0 %v6215
  %v6802 = vpop.f32.mrb[0].mxu0
  %v6803 = vadd.f32 %v6750, %v6802
  %v6804 = vpop.f32.mrb[0].mxu0
  %v6805 = vadd.f32 %v6752, %v6804
  %v6806 = vpop.f32.mrb[0].mxu0
  %v6807 = vadd.f32 %v6754, %v6806
  %v6808 = vpop.f32.mrb[0].mxu0
  %v6809 = vadd.f32 %v6756, %v6808
  %6810 = vmatprep.mubr.bf16.mxu0 %v6220
  %6811 = vmatmul.mubr.bf16.gmra.mrb[0].mxu0 %v6219
  %v6812 = vpop.f32.mrb[0].mxu0
  %v6813 = vadd.f32 %v6760, %v6812
  %v6814 = vpop.f32.mrb[0].mxu0
  %v6815 = vadd.f32 %v6762, %v6814
  %v6816 = vpop.f32.mrb[0].mxu0
  %v6817 = vadd.f32 %v6764, %v6816
  %v6818 = vpop.f32.mrb[0].mxu0
  %v6819 = vadd.f32 %v6766, %v6818
  %6820 = vdwg.mxu0
  %v6821 = vmax.f32 %v6803, 1e-06
  %v6822 = vmax.f32 %v6805, 1e-06
  %v6823 = vmax.f32 %v6807, 1e-06
  %v6824 = vmax.f32 %v6809, 1e-06
  %v6825 = vmax.f32 %v6813, 1e-06
  %v6826 = vmax.f32 %v6815, 1e-06
  %v6827 = vmax.f32 %v6817, 1e-06
  %v6828 = vmax.f32 %v6819, 1e-06
  %v6829 = vmul.f32 %v6821, %v6821
  %v6830 = vmul.f32 %v6822, %v6822
  %v6831 = vmul.f32 %v6823, %v6823
  %v6832 = vmul.f32 %v6824, %v6824
  %v6833 = vmul.f32 %v6825, %v6825
  %v6834 = vmul.f32 %v6826, %v6826
  %v6835 = vmul.f32 %v6827, %v6827
  %v6836 = vmul.f32 %v6828, %v6828
  %v6837 = vmul.f32 %v6829, %v6821
  %v6838 = vmul.f32 %v6830, %v6822
  %v6839 = vmul.f32 %v6831, %v6823
  %v6840 = vmul.f32 %v6832, %v6824
  %v6841 = vmul.f32 %v6833, %v6825
  %v6842 = vmul.f32 %v6834, %v6826
  %v6843 = vmul.f32 %v6835, %v6827
  %v6844 = vmul.f32 %v6836, %v6828
  %v6845 = vpack.c.bf16 %v6839, %v6837
  %v6846 = vpack.c.bf16 %v6840, %v6838
  %v6847 = vpack.c.bf16 %v6843, %v6841
  %v6848 = vpack.c.bf16 %v6844, %v6842
  %v6850 = vsel %vm6414, %v6846, 0
  %v6853 = vsel %vm6414, %v6848, 0
  %6855 = vmatprep.subr.bf16.mxu0 0
  %6856 = vmatpush1.bf16.msra.mxu0 %v6397
  %6857 = vmatprep.subr.bf16.mxu0 0
  %6858 = vmatpush1.bf16.msra.mxu0 %v6398
  %6859 = vmatprep.subr.bf16.mxu0 0
  %6860 = vmatpush1.bf16.msra.mxu0 %v6399
  %6861 = vmatprep.subr.bf16.mxu0 0
  %6862 = vmatpush1.bf16.msra.mxu0 %v6400
  %6863 = vmatprep.subr.bf16.mxu0 0
  %6864 = vmatpush1.bf16.msra.mxu0 %v6401
  %6865 = vmatprep.subr.bf16.mxu0 0
  %6866 = vmatpush1.bf16.msra.mxu0 %v6402
  %6867 = vmatprep.subr.bf16.mxu0 0
  %6868 = vmatpush1.bf16.msra.mxu0 %v6403
  %6869 = vmatprep.subr.bf16.mxu0 0
  %6870 = vmatpush1.bf16.msra.mxu0 %v6404
  %6871 = vmatprep.subr.bf16.mxu0 0
  %6872 = vmatpush1.bf16.msra.mxu0 %v6422
  %6873 = vmatprep.subr.bf16.mxu0 0
  %6874 = vmatpush1.bf16.msra.mxu0 0
  %6875 = vmatprep.subr.bf16.mxu0 0
  %6876 = vmatpush1.bf16.msra.mxu0 0
  %6877 = vmatprep.subr.bf16.mxu0 0
  %6878 = vmatpush1.bf16.msra.mxu0 0
  %6879 = vmatprep.subr.bf16.mxu0 0
  %6880 = vmatpush1.bf16.msra.mxu0 0
  %6881 = vmatprep.subr.bf16.mxu0 0
  %6882 = vmatpush1.bf16.msra.mxu0 0
  %6883 = vmatprep.subr.bf16.mxu0 0
  %6884 = vmatpush1.bf16.msra.mxu0 0
  %6885 = vmatprep.subr.bf16.mxu0 0
  %6886 = vmatpush1.bf16.msra.mxu0 0
  %6887 = vmatprep.mubr.bf16.mxu0 %v6850
  %6888 = vmatmul.mubr.bf16.gmra.mrb[0].mxu0 %v6845
  %v6889 = vpop.f32.mrb[0].mxu0
  %v6890 = vadd.f32 0.0, %v6889
  %v6891 = vpop.f32.mrb[0].mxu0
  %v6892 = vpop.f32.mrb[0].mxu0
  %v6893 = vadd.f32 0.0, %v6892
  %v6894 = vpop.f32.mrb[0].mxu0
  %6895 = vmatprep.mubr.bf16.mxu0 %v6853
  %6896 = vmatmul.mubr.bf16.gmra.mrb[0].mxu0 %v6847
  %v6897 = vpop.f32.mrb[0].mxu0
  %v6898 = vadd.f32 0.0, %v6897
  %v6899 = vpop.f32.mrb[0].mxu0
  %v6900 = vpop.f32.mrb[0].mxu0
  %v6901 = vadd.f32 0.0, %v6900
  %v6902 = vpop.f32.mrb[0].mxu0
  %6903 = vdwg.mxu0
  %v6904 = vlog2.pop %v6890
  %v6905 = vmul.f32 %v6904, 0.6931472
  %v6906 = vlog2.pop %v6893
  %v6907 = vmul.f32 %v6906, 0.6931472
  %v6908 = vlog2.pop %v6898
  %v6909 = vmul.f32 %v6908, 0.6931472
  %v6910 = vlog2.pop %v6901
  %v6911 = vmul.f32 %v6910, 0.6931472
  %v6912 = vmul.f32 %v6905, 0.33333334
  %v6913 = vmul.f32 %v6907, 0.33333334
  %v6914 = vmul.f32 %v6909, 0.33333334
  %v6915 = vmul.f32 %v6911, 0.33333334
  %v6916 = vmul.f32 %v6912, 1.442695
  %v6917 = vpow.pop %v6916
  %v6918 = vmul.f32 %v6913, 1.442695
  %v6919 = vpow.pop %v6918
  %v6920 = vmul.f32 %v6914, 1.442695
  %v6921 = vpow.pop %v6920
  %v6922 = vmul.f32 %v6915, 1.442695
  %v6923 = vpow.pop %v6922
  %vm6924 = vcmask 269312
  %v6925 = vsel %vm6924, %v6486, 0.0
  %6926 = vadd.xlane.f32.xlu0 %v6925
  %v6927 = vpop.xlane.xlu0 %6926
  %v6928 = vsel %vm6924, %v6488, 0.0
  %6929 = vadd.xlane.f32.xlu0 %v6928
  %v6930 = vpop.xlane.xlu0 %6929
  %v6931 = vsel %vm6924, %v6490, 0.0
  %6932 = vadd.xlane.f32.xlu0 %v6931
  %v6933 = vpop.xlane.xlu0 %6932
  %v6934 = vsel %vm6924, %v6492, 0.0
  %6935 = vadd.xlane.f32.xlu0 %v6934
  %v6936 = vpop.xlane.xlu0 %6935
  %v6937 = vsel %vm6924, %v6917, 0.0
  %6938 = vadd.xlane.f32.xlu0 %v6937
  %v6939 = vpop.xlane.xlu0 %6938
  %v6940 = vsel %vm6924, %v6919, 0.0
  %6941 = vadd.xlane.f32.xlu0 %v6940
  %v6942 = vpop.xlane.xlu0 %6941
  %v6943 = vsel %vm6924, %v6921, 0.0
  %6944 = vadd.xlane.f32.xlu0 %v6943
  %v6945 = vpop.xlane.xlu0 %6944
  %v6946 = vsel %vm6924, %v6923, 0.0
  %6947 = vadd.xlane.f32.xlu0 %v6946
  %v6948 = vpop.xlane.xlu0 %6947
  %v6949 = vadd.f32 %v6927, %v6939
  %v6950 = vadd.f32 %v6930, %v6942
  %v6951 = vadd.f32 %v6933, %v6945
  %v6952 = vadd.f32 %v6936, %v6948
  %v6953 = vmul.f32 %v6949, 0.015151516
  %v6954 = vmul.f32 %v6950, 0.015151516
  %v6955 = vmul.f32 %v6951, 0.015151516
  %v6956 = vmul.f32 %v6952, 0.015151516
  %v6957 = vsub.f32 %v6486, %v6953
  %v6958 = vsub.f32 %v6488, %v6954
  %v6959 = vsub.f32 %v6490, %v6955
  %v6960 = vsub.f32 %v6492, %v6956
  %v6961 = vsub.f32 %v6917, %v6953
  %v6962 = vsub.f32 %v6919, %v6954
  %v6963 = vsub.f32 %v6921, %v6955
  %v6964 = vsub.f32 %v6923, %v6956
  %v6965 = vmul.f32 %v6957, %v6957
  %v6966 = vmul.f32 %v6958, %v6958
  %v6967 = vmul.f32 %v6959, %v6959
  %v6968 = vmul.f32 %v6960, %v6960
  %v6969 = vsel %vm6924, %v6965, 0.0
  %6970 = vadd.xlane.f32.xlu0 %v6969
  %v6971 = vpop.xlane.xlu0 %6970
  %v6972 = vsel %vm6924, %v6966, 0.0
  %6973 = vadd.xlane.f32.xlu0 %v6972
  %v6974 = vpop.xlane.xlu0 %6973
  %v6975 = vsel %vm6924, %v6967, 0.0
  %6976 = vadd.xlane.f32.xlu0 %v6975
  %v6977 = vpop.xlane.xlu0 %6976
  %v6978 = vsel %vm6924, %v6968, 0.0
  %6979 = vadd.xlane.f32.xlu0 %v6978
  %v6980 = vpop.xlane.xlu0 %6979
  %v6981 = vmul.f32 %v6961, %v6961
  %v6982 = vmul.f32 %v6962, %v6962
  %v6983 = vmul.f32 %v6963, %v6963
  %v6984 = vmul.f32 %v6964, %v6964
  %v6985 = vsel %vm6924, %v6981, 0.0
  %6986 = vadd.xlane.f32.xlu0 %v6985
  %v6987 = vpop.xlane.xlu0 %6986
  %v6988 = vsel %vm6924, %v6982, 0.0
  %6989 = vadd.xlane.f32.xlu0 %v6988
  %v6990 = vpop.xlane.xlu0 %6989
  %v6991 = vsel %vm6924, %v6983, 0.0
  %6992 = vadd.xlane.f32.xlu0 %v6991
  %v6993 = vpop.xlane.xlu0 %6992
  %v6994 = vsel %vm6924, %v6984, 0.0
  %6995 = vadd.xlane.f32.xlu0 %v6994
  %v6996 = vpop.xlane.xlu0 %6995
  %v6997 = vadd.f32 %v6971, %v6987
  %v6998 = vadd.f32 %v6974, %v6990
  %v6999 = vadd.f32 %v6977, %v6993
  %v7000 = vadd.f32 %v6980, %v6996
  %v7001 = vmul.f32 %v6997, 0.015151516
  %v7002 = vmul.f32 %v6998, 0.015151516
  %v7003 = vmul.f32 %v6999, 0.015151516
  %v7004 = vmul.f32 %v7000, 0.015151516
  %v7005 = vadd.f32 %v7001, 1e-05
  %v7006 = vadd.f32 %v7002, 1e-05
  %v7007 = vadd.f32 %v7003, 1e-05
  %v7008 = vadd.f32 %v7004, 1e-05
  %v7009 = vrsqrt.pop %v7005
  %v7010 = vrsqrt.pop %v7006
  %v7011 = vrsqrt.pop %v7007
  %v7012 = vrsqrt.pop %v7008
  %v7013 = vmul.f32 %v7009, %v5921
  %v7014 = vmul.f32 %v7010, %v5922
  %v7015 = vmul.f32 %v7011, %v5923
  %v7016 = vmul.f32 %v7012, %v5924
  %7018 = vset.pattern.permute.xlu0 0
  %7019 = vperm.xlu0 %7018, %v7013
  %v7020 = vpop.permute.xlu0 %7019
  %7023 = vset.pattern.permute.xlu0 0
  %7024 = vperm.xlu0 %7023, %v7014
  %v7025 = vpop.permute.xlu0 %7024
  %7028 = vset.pattern.permute.xlu0 0
  %7029 = vperm.xlu0 %7028, %v7015
  %v7030 = vpop.permute.xlu0 %7029
  %7033 = vset.pattern.permute.xlu0 0
  %7034 = vperm.xlu0 %7033, %v7016
  %v7035 = vpop.permute.xlu0 %7034
  %v7037 = vmul.f32 %v6957, %v7020
  %v7038 = vmul.f32 %v6958, %v7025
  %v7039 = vmul.f32 %v6959, %v7030
  %v7040 = vmul.f32 %v6960, %v7035
  %7042 = vset.pattern.permute.xlu0 0
  %7043 = vperm.xlu0 %7042, %v5925
  %v7044 = vpop.permute.xlu0 %7043
  %7047 = vset.pattern.permute.xlu0 0
  %7048 = vperm.xlu0 %7047, %v5926
  %v7049 = vpop.permute.xlu0 %7048
  %7052 = vset.pattern.permute.xlu0 0
  %7053 = vperm.xlu0 %7052, %v5927
  %v7054 = vpop.permute.xlu0 %7053
  %7057 = vset.pattern.permute.xlu0 0
  %7058 = vperm.xlu0 %7057, %v5928
  %v7059 = vpop.permute.xlu0 %7058
  %v7061 = vadd.f32 %v7037, %v7044
  %v7062 = vadd.f32 %v7038, %v7049
  %v7063 = vadd.f32 %v7039, %v7054
  %v7064 = vadd.f32 %v7040, %v7059
  %v7065 = vmul.f32 %v7061, 0.5
  %v7066 = vmul.f32 %v7062, 0.5
  %v7067 = vmul.f32 %v7063, 0.5
  %v7068 = vmul.f32 %v7064, 0.5
  %v7069 = vtanh.pop %v7065
  %v7070 = vtanh.pop %v7066
  %v7071 = vtanh.pop %v7067
  %v7072 = vtanh.pop %v7068
  %v7073 = vmul.f32 %v7069, 0.5
  %v7074 = vmul.f32 %v7070, 0.5
  %v7075 = vmul.f32 %v7071, 0.5
  %v7076 = vmul.f32 %v7072, 0.5
  %v7077 = vadd.f32 %v7073, 0.5
  %v7078 = vadd.f32 %v7074, 0.5
  %v7079 = vadd.f32 %v7075, 0.5
  %v7080 = vadd.f32 %v7076, 0.5
  %v7081 = vmul.f32 %v7061, %v7077
  %v7082 = vmul.f32 %v7062, %v7078
  %v7083 = vmul.f32 %v7063, %v7079
  %v7084 = vmul.f32 %v7064, %v7080
  %v7085 = vpack.c.bf16 %v7082, %v7081
  %v7086 = vpack.c.bf16 %v7084, %v7083
  %v7087 = vmul.f32 %v6961, %v7020
  %v7088 = vmul.f32 %v6962, %v7025
  %v7089 = vmul.f32 %v6963, %v7030
  %v7090 = vmul.f32 %v6964, %v7035
  %v7091 = vadd.f32 %v7087, %v7044
  %v7092 = vadd.f32 %v7088, %v7049
  %v7093 = vadd.f32 %v7089, %v7054
  %v7094 = vadd.f32 %v7090, %v7059
  %v7095 = vmul.f32 %v7091, 0.5
  %v7096 = vmul.f32 %v7092, 0.5
  %v7097 = vmul.f32 %v7093, 0.5
  %v7098 = vmul.f32 %v7094, 0.5
  %v7099 = vtanh.pop %v7095
  %v7100 = vtanh.pop %v7096
  %v7101 = vtanh.pop %v7097
  %v7102 = vtanh.pop %v7098
  %v7103 = vmul.f32 %v7099, 0.5
  %v7104 = vmul.f32 %v7100, 0.5
  %v7105 = vmul.f32 %v7101, 0.5
  %v7106 = vmul.f32 %v7102, 0.5
  %v7107 = vadd.f32 %v7103, 0.5
  %v7108 = vadd.f32 %v7104, 0.5
  %v7109 = vadd.f32 %v7105, 0.5
  %v7110 = vadd.f32 %v7106, 0.5
  %v7111 = vmul.f32 %v7091, %v7107
  %v7112 = vmul.f32 %v7092, %v7108
  %v7113 = vmul.f32 %v7093, %v7109
  %v7114 = vmul.f32 %v7094, %v7110
  %v7115 = vpack.c.bf16 %v7112, %v7111
  %v7116 = vpack.c.bf16 %v7114, %v7113
  %v7117 = vld [vmem:[%s19] sm:$0xff]
  %v7118 = vld [vmem:[%s19 + $0x8] sm:$0xff]
  %v7119 = vld [vmem:[%s19 + $0x10] sm:$0xff]
  %v7120 = vld [vmem:[%s19 + $0x18] sm:$0xff]
  %v7121 = vld [vmem:[%s19 + $0x20] sm:$0xff]
  %v7122 = vld [vmem:[%s19 + $0x28] sm:$0xff]
  %v7123 = vld [vmem:[%s19 + $0x30] sm:$0xff]
  %v7124 = vld [vmem:[%s19 + $0x38] sm:$0xff]
  %v7125 = vld [vmem:[%s19 + $0x40] sm:$0xff]
  %v7126 = vld [vmem:[%s19 + $0x48] sm:$0xff]
  %v7127 = vld [vmem:[%s19 + $0x50] sm:$0xff]
  %v7128 = vld [vmem:[%s19 + $0x58] sm:$0xff]
  %v7129 = vld [vmem:[%s19 + $0x60] sm:$0xff]
  %v7130 = vld [vmem:[%s19 + $0x68] sm:$0xff]
  %v7131 = vld [vmem:[%s19 + $0x70] sm:$0xff]
  %v7132 = vld [vmem:[%s19 + $0x78] sm:$0xff]
  %v7133 = vld [vmem:[%s20] sm:$0xff]
  %v7134 = vld [vmem:[%s20 + $0x8] sm:$0xff]
  %v7135 = vld [vmem:[%s20 + $0x10] sm:$0xff]
  %v7136 = vld [vmem:[%s20 + $0x18] sm:$0xff]
  %v7137 = vld [vmem:[%s20 + $0x20] sm:$0xff]
  %v7138 = vld [vmem:[%s20 + $0x28] sm:$0xff]
  %v7139 = vld [vmem:[%s20 + $0x30] sm:$0xff]
  %v7140 = vld [vmem:[%s20 + $0x38] sm:$0xff]
  %v7141 = vld [vmem:[%s21] sm:$0xff]
  %v7142 = vld [vmem:[%s21 + $0x8] sm:$0xff]
  %v7143 = vld [vmem:[%s21 + $0x10] sm:$0xff]
  %v7144 = vld [vmem:[%s21 + $0x18] sm:$0xff]
  %v7145 = vld [vmem:[%s21 + $0x20] sm:$0xff]
  %v7146 = vld [vmem:[%s21 + $0x28] sm:$0xff]
  %v7147 = vld [vmem:[%s21 + $0x30] sm:$0xff]
  %v7148 = vld [vmem:[%s21 + $0x38] sm:$0xff]
  %v7149 = vld [vmem:[%s22] sm:$0xff]
  %v7150 = vld [vmem:[%s22 + $0x8] sm:$0xff]
  %v7151 = vld [vmem:[%s22 + $0x10] sm:$0xff]
  %v7152 = vld [vmem:[%s22 + $0x18] sm:$0xff]
  %v7153 = vld [vmem:[%s22 + $0x20] sm:$0xff]
  %v7154 = vld [vmem:[%s22 + $0x28] sm:$0xff]
  %v7155 = vld [vmem:[%s22 + $0x30] sm:$0xff]
  %v7156 = vld [vmem:[%s22 + $0x38] sm:$0xff]
  %7159 = vrot.lane.b32.xlu0 %v7085, 1
  %v7160 = vpop.permute.xlu0 %7159
  %7161 = vrot.lane.b32.xlu0 %v7086, 1
  %v7162 = vpop.permute.xlu0 %7161
  %v7164 = vsel %vm4887, 0, %v7160
  %v7167 = vsel %vm4887, 0, %v7162
  %7169 = vrot.lane.b32.xlu0 %v7085, 114
  %v7170 = vpop.permute.xlu0 %7169
  %7171 = vrot.lane.b32.xlu0 %v7086, 114
  %v7172 = vpop.permute.xlu0 %7171
  %v7174 = vsel %vm5624, %v7170, 0
  %v7177 = vsel %vm5624, %v7172, 0
  %7179 = vrot.lane.b32.xlu0 %v7085, 127
  %v7180 = vpop.permute.xlu0 %7179
  %7181 = vrot.lane.b32.xlu0 %v7086, 127
  %v7182 = vpop.permute.xlu0 %7181
  %7185 = vrot.lane.b32.xlu0 %v7085, 126
  %v7186 = vpop.permute.xlu0 %7185
  %7187 = vrot.lane.b32.xlu0 %v7086, 126
  %v7188 = vpop.permute.xlu0 %7187
  %7191 = vrot.lane.b32.xlu0 %v7085, 125
  %v7192 = vpop.permute.xlu0 %7191
  %7193 = vrot.lane.b32.xlu0 %v7086, 125
  %v7194 = vpop.permute.xlu0 %7193
  %7197 = vrot.lane.b32.xlu0 %v7085, 124
  %v7198 = vpop.permute.xlu0 %7197
  %7199 = vrot.lane.b32.xlu0 %v7086, 124
  %v7200 = vpop.permute.xlu0 %7199
  %7203 = vrot.lane.b32.xlu0 %v7085, 123
  %v7204 = vpop.permute.xlu0 %7203
  %7205 = vrot.lane.b32.xlu0 %v7086, 123
  %v7206 = vpop.permute.xlu0 %7205
  %7209 = vrot.lane.b32.xlu0 %v7085, 122
  %v7210 = vpop.permute.xlu0 %7209
  %7211 = vrot.lane.b32.xlu0 %v7086, 122
  %v7212 = vpop.permute.xlu0 %7211
  %7215 = vrot.lane.b32.xlu0 %v7085, 121
  %v7216 = vpop.permute.xlu0 %7215
  %7217 = vrot.lane.b32.xlu0 %v7086, 121
  %v7218 = vpop.permute.xlu0 %7217
  %7221 = vrot.lane.b32.xlu0 %v7085, 120
  %v7222 = vpop.permute.xlu0 %7221
  %7223 = vrot.lane.b32.xlu0 %v7086, 120
  %v7224 = vpop.permute.xlu0 %7223
  %7227 = vrot.lane.b32.xlu0 %v7085, 119
  %v7228 = vpop.permute.xlu0 %7227
  %7229 = vrot.lane.b32.xlu0 %v7086, 119
  %v7230 = vpop.permute.xlu0 %7229
  %7233 = vrot.lane.b32.xlu0 %v7085, 118
  %v7234 = vpop.permute.xlu0 %7233
  %7235 = vrot.lane.b32.xlu0 %v7086, 118
  %v7236 = vpop.permute.xlu0 %7235
  %7239 = vrot.lane.b32.xlu0 %v7085, 117
  %v7240 = vpop.permute.xlu0 %7239
  %7241 = vrot.lane.b32.xlu0 %v7086, 117
  %v7242 = vpop.permute.xlu0 %7241
  %7245 = vrot.lane.b32.xlu0 %v7085, 116
  %v7246 = vpop.permute.xlu0 %7245
  %7247 = vrot.lane.b32.xlu0 %v7086, 116
  %v7248 = vpop.permute.xlu0 %7247
  %7251 = vrot.lane.b32.xlu0 %v7085, 115
  %v7252 = vpop.permute.xlu0 %7251
  %7253 = vrot.lane.b32.xlu0 %v7086, 115
  %v7254 = vpop.permute.xlu0 %7253
  %7258 = vset.pattern.permute.xlu0 0
  %7259 = vperm.xlu0 %7258, %v7133
  %v7260 = vpop.permute.xlu0 %7259
  %7263 = vset.pattern.permute.xlu0 0
  %7264 = vperm.xlu0 %7263, %v7134
  %v7265 = vpop.permute.xlu0 %7264
  %7268 = vset.pattern.permute.xlu0 0
  %7269 = vperm.xlu0 %7268, %v7135
  %v7270 = vpop.permute.xlu0 %7269
  %7273 = vset.pattern.permute.xlu0 0
  %7274 = vperm.xlu0 %7273, %v7136
  %v7275 = vpop.permute.xlu0 %7274
  %7278 = vset.pattern.permute.xlu0 0
  %7279 = vperm.xlu0 %7278, %v7137
  %v7280 = vpop.permute.xlu0 %7279
  %7283 = vset.pattern.permute.xlu0 0
  %7284 = vperm.xlu0 %7283, %v7138
  %v7285 = vpop.permute.xlu0 %7284
  %7288 = vset.pattern.permute.xlu0 0
  %7289 = vperm.xlu0 %7288, %v7139
  %v7290 = vpop.permute.xlu0 %7289
  %7293 = vset.pattern.permute.xlu0 0
  %7294 = vperm.xlu0 %7293, %v7140
  %v7295 = vpop.permute.xlu0 %7294
  %v7313 = vunpack.c.l.b16 %v7117
  %v7314 = vunpack.c.h.b16 %v7117
  %v7315 = vunpack.c.l.b16 %v7118
  %v7316 = vunpack.c.h.b16 %v7118
  %v7317 = vunpack.c.l.b16 %v7119
  %v7318 = vunpack.c.h.b16 %v7119
  %v7319 = vunpack.c.l.b16 %v7120
  %v7320 = vunpack.c.h.b16 %v7120
  %v7321 = vunpack.c.l.b16 %v7121
  %v7322 = vunpack.c.h.b16 %v7121
  %v7323 = vunpack.c.l.b16 %v7122
  %v7324 = vunpack.c.h.b16 %v7122
  %v7325 = vunpack.c.l.b16 %v7123
  %v7326 = vunpack.c.h.b16 %v7123
  %v7327 = vunpack.c.l.b16 %v7124
  %v7328 = vunpack.c.h.b16 %v7124
  %v7329 = vunpack.c.l.b16 %v7125
  %v7330 = vunpack.c.h.b16 %v7125
  %v7331 = vunpack.c.l.b16 %v7126
  %v7332 = vunpack.c.h.b16 %v7126
  %v7333 = vunpack.c.l.b16 %v7127
  %v7334 = vunpack.c.h.b16 %v7127
  %v7335 = vunpack.c.l.b16 %v7128
  %v7336 = vunpack.c.h.b16 %v7128
  %v7337 = vunpack.c.l.b16 %v7129
  %v7338 = vunpack.c.h.b16 %v7129
  %v7339 = vunpack.c.l.b16 %v7130
  %v7340 = vunpack.c.h.b16 %v7130
  %v7341 = vunpack.c.l.b16 %v7131
  %v7342 = vunpack.c.h.b16 %v7131
  %v7343 = vunpack.c.l.b16 %v7132
  %v7344 = vunpack.c.h.b16 %v7132
  %v7345 = vpack.c.b16 %v7317, %v7313
  %v7346 = vpack.c.b16 %v7318, %v7314
  %v7347 = vpack.c.b16 %v7319, %v7315
  %v7348 = vpack.c.b16 %v7320, %v7316
  %v7349 = vpack.c.b16 %v7325, %v7321
  %v7350 = vpack.c.b16 %v7326, %v7322
  %v7351 = vpack.c.b16 %v7327, %v7323
  %v7352 = vpack.c.b16 %v7328, %v7324
  %v7353 = vpack.c.b16 %v7333, %v7329
  %v7354 = vpack.c.b16 %v7334, %v7330
  %v7355 = vpack.c.b16 %v7335, %v7331
  %v7356 = vpack.c.b16 %v7336, %v7332
  %v7357 = vpack.c.b16 %v7341, %v7337
  %v7358 = vpack.c.b16 %v7342, %v7338
  %v7359 = vpack.c.b16 %v7343, %v7339
  %v7360 = vpack.c.b16 %v7344, %v7340
  %7377 = vmatprep.subr.bf16.mxu0 0
  %7378 = vmatpush1.bf16.msra.mxu0 %v7164
  %7379 = vmatprep.subr.bf16.mxu0 0
  %7380 = vmatpush1.bf16.msra.mxu0 %v7167
  %7381 = vmatprep.subr.bf16.mxu0 0
  %7382 = vmatpush1.bf16.msra.mxu0 %v7085
  %7383 = vmatprep.subr.bf16.mxu0 0
  %7384 = vmatpush1.bf16.msra.mxu0 %v7086
  %7385 = vmatprep.subr.bf16.mxu0 0
  %7386 = vmatpush1.bf16.msra.mxu0 %v7180
  %7387 = vmatprep.subr.bf16.mxu0 0
  %7388 = vmatpush1.bf16.msra.mxu0 %v7182
  %7389 = vmatprep.subr.bf16.mxu0 0
  %7390 = vmatpush1.bf16.msra.mxu0 %v7186
  %7391 = vmatprep.subr.bf16.mxu0 0
  %7392 = vmatpush1.bf16.msra.mxu0 %v7188
  %7393 = vmatprep.subr.bf16.mxu0 0
  %7394 = vmatpush1.bf16.msra.mxu0 %v7192
  %7395 = vmatprep.subr.bf16.mxu0 0
  %7396 = vmatpush1.bf16.msra.mxu0 %v7194
  %7397 = vmatprep.subr.bf16.mxu0 0
  %7398 = vmatpush1.bf16.msra.mxu0 %v7198
  %7399 = vmatprep.subr.bf16.mxu0 0
  %7400 = vmatpush1.bf16.msra.mxu0 %v7200
  %7401 = vmatprep.subr.bf16.mxu0 0
  %7402 = vmatpush1.bf16.msra.mxu0 %v7204
  %7403 = vmatprep.subr.bf16.mxu0 0
  %7404 = vmatpush1.bf16.msra.mxu0 %v7206
  %7405 = vmatprep.subr.bf16.mxu0 0
  %7406 = vmatpush1.bf16.msra.mxu0 %v7210
  %7407 = vmatprep.subr.bf16.mxu0 0
  %7408 = vmatpush1.bf16.msra.mxu0 %v7212
  %7409 = vmatprep.mubr.bf16.mxu0 %v7346
  %7410 = vmatmul.mubr.bf16.gmra.mrb[0].mxu0 %v7345
  %v7411 = vpop.f32.mrb[0].mxu0
  %v7412 = vadd.f32 %v7260, %v7411
  %v7413 = vpop.f32.mrb[0].mxu0
  %v7414 = vpop.f32.mrb[0].mxu0
  %v7415 = vadd.f32 %v7265, %v7414
  %v7416 = vpop.f32.mrb[0].mxu0
  %7417 = vmatprep.mubr.bf16.mxu0 %v7350
  %7418 = vmatmul.mubr.bf16.gmra.mrb[0].mxu0 %v7349
  %v7419 = vpop.f32.mrb[0].mxu0
  %v7420 = vadd.f32 %v7270, %v7419
  %v7421 = vpop.f32.mrb[0].mxu0
  %v7422 = vpop.f32.mrb[0].mxu0
  %v7423 = vadd.f32 %v7275, %v7422
  %v7424 = vpop.f32.mrb[0].mxu0
  %7425 = vmatprep.mubr.bf16.mxu0 %v7354
  %7426 = vmatmul.mubr.bf16.gmra.mrb[0].mxu0 %v7353
  %v7427 = vpop.f32.mrb[0].mxu0
  %v7428 = vadd.f32 %v7280, %v7427
  %v7429 = vpop.f32.mrb[0].mxu0
  %v7430 = vpop.f32.mrb[0].mxu0
  %v7431 = vadd.f32 %v7285, %v7430
  %v7432 = vpop.f32.mrb[0].mxu0
  %7433 = vmatprep.mubr.bf16.mxu0 %v7358
  %7434 = vmatmul.mubr.bf16.gmra.mrb[0].mxu0 %v7357
  %v7435 = vpop.f32.mrb[0].mxu0
  %v7436 = vadd.f32 %v7290, %v7435
  %v7437 = vpop.f32.mrb[0].mxu0
  %v7438 = vpop.f32.mrb[0].mxu0
  %v7439 = vadd.f32 %v7295, %v7438
  %v7440 = vpop.f32.mrb[0].mxu0
  %7441 = vdwg.mxu0
  %7442 = vmatprep.subr.bf16.mxu0 0
  %7443 = vmatpush1.bf16.msra.mxu0 %v7216
  %7444 = vmatprep.subr.bf16.mxu0 0
  %7445 = vmatpush1.bf16.msra.mxu0 %v7218
  %7446 = vmatprep.subr.bf16.mxu0 0
  %7447 = vmatpush1.bf16.msra.mxu0 %v7222
  %7448 = vmatprep.subr.bf16.mxu0 0
  %7449 = vmatpush1.bf16.msra.mxu0 %v7224
  %7450 = vmatprep.subr.bf16.mxu0 0
  %7451 = vmatpush1.bf16.msra.mxu0 %v7228
  %7452 = vmatprep.subr.bf16.mxu0 0
  %7453 = vmatpush1.bf16.msra.mxu0 %v7230
  %7454 = vmatprep.subr.bf16.mxu0 0
  %7455 = vmatpush1.bf16.msra.mxu0 %v7234
  %7456 = vmatprep.subr.bf16.mxu0 0
  %7457 = vmatpush1.bf16.msra.mxu0 %v7236
  %7458 = vmatprep.subr.bf16.mxu0 0
  %7459 = vmatpush1.bf16.msra.mxu0 %v7240
  %7460 = vmatprep.subr.bf16.mxu0 0
  %7461 = vmatpush1.bf16.msra.mxu0 %v7242
  %7462 = vmatprep.subr.bf16.mxu0 0
  %7463 = vmatpush1.bf16.msra.mxu0 %v7246
  %7464 = vmatprep.subr.bf16.mxu0 0
  %7465 = vmatpush1.bf16.msra.mxu0 %v7248
  %7466 = vmatprep.subr.bf16.mxu0 0
  %7467 = vmatpush1.bf16.msra.mxu0 %v7252
  %7468 = vmatprep.subr.bf16.mxu0 0
  %7469 = vmatpush1.bf16.msra.mxu0 %v7254
  %7470 = vmatprep.subr.bf16.mxu0 0
  %7471 = vmatpush1.bf16.msra.mxu0 %v7174
  %7472 = vmatprep.subr.bf16.mxu0 0
  %7473 = vmatpush1.bf16.msra.mxu0 %v7177
  %7474 = vmatprep.mubr.bf16.mxu0 %v7348
  %7475 = vmatmul.mubr.bf16.gmra.mrb[0].mxu0 %v7347
  %v7476 = vpop.f32.mrb[0].mxu0
  %v7477 = vadd.f32 %v7412, %v7476
  %v7478 = vpop.f32.mrb[0].mxu0
  %v7479 = vpop.f32.mrb[0].mxu0
  %v7480 = vadd.f32 %v7415, %v7479
  %v7481 = vpop.f32.mrb[0].mxu0
  %7482 = vmatprep.mubr.bf16.mxu0 %v7352
  %7483 = vmatmul.mubr.bf16.gmra.mrb[0].mxu0 %v7351
  %v7484 = vpop.f32.mrb[0].mxu0
  %v7485 = vadd.f32 %v7420, %v7484
  %v7486 = vpop.f32.mrb[0].mxu0
  %v7487 = vpop.f32.mrb[0].mxu0
  %v7488 = vadd.f32 %v7423, %v7487
  %v7489 = vpop.f32.mrb[0].mxu0
  %7490 = vmatprep.mubr.bf16.mxu0 %v7356
  %7491 = vmatmul.mubr.bf16.gmra.mrb[0].mxu0 %v7355
  %v7492 = vpop.f32.mrb[0].mxu0
  %v7493 = vadd.f32 %v7428, %v7492
  %v7494 = vpop.f32.mrb[0].mxu0
  %v7495 = vpop.f32.mrb[0].mxu0
  %v7496 = vadd.f32 %v7431, %v7495
  %v7497 = vpop.f32.mrb[0].mxu0
  %7498 = vmatprep.mubr.bf16.mxu0 %v7360
  %7499 = vmatmul.mubr.bf16.gmra.mrb[0].mxu0 %v7359
  %v7500 = vpop.f32.mrb[0].mxu0
  %v7501 = vadd.f32 %v7436, %v7500
  %v7502 = vpop.f32.mrb[0].mxu0
  %v7503 = vpop.f32.mrb[0].mxu0
  %v7504 = vadd.f32 %v7439, %v7503
  %v7505 = vpop.f32.mrb[0].mxu0
  %7506 = vdwg.mxu0
  %7509 = vrot.lane.b32.xlu0 %v7115, 1
  %v7510 = vpop.permute.xlu0 %7509
  %7511 = vrot.lane.b32.xlu0 %v7116, 1
  %v7512 = vpop.permute.xlu0 %7511
  %v7514 = vsel %vm4887, 0, %v7510
  %v7517 = vsel %vm4887, 0, %v7512
  %7519 = vrot.lane.b32.xlu0 %v7115, 114
  %v7520 = vpop.permute.xlu0 %7519
  %7521 = vrot.lane.b32.xlu0 %v7116, 114
  %v7522 = vpop.permute.xlu0 %7521
  %v7524 = vsel %vm5624, %v7520, 0
  %v7527 = vsel %vm5624, %v7522, 0
  %7529 = vrot.lane.b32.xlu0 %v7115, 127
  %v7530 = vpop.permute.xlu0 %7529
  %7531 = vrot.lane.b32.xlu0 %v7116, 127
  %v7532 = vpop.permute.xlu0 %7531
  %7535 = vrot.lane.b32.xlu0 %v7115, 126
  %v7536 = vpop.permute.xlu0 %7535
  %7537 = vrot.lane.b32.xlu0 %v7116, 126
  %v7538 = vpop.permute.xlu0 %7537
  %7541 = vrot.lane.b32.xlu0 %v7115, 125
  %v7542 = vpop.permute.xlu0 %7541
  %7543 = vrot.lane.b32.xlu0 %v7116, 125
  %v7544 = vpop.permute.xlu0 %7543
  %7547 = vrot.lane.b32.xlu0 %v7115, 124
  %v7548 = vpop.permute.xlu0 %7547
  %7549 = vrot.lane.b32.xlu0 %v7116, 124
  %v7550 = vpop.permute.xlu0 %7549
  %7553 = vrot.lane.b32.xlu0 %v7115, 123
  %v7554 = vpop.permute.xlu0 %7553
  %7555 = vrot.lane.b32.xlu0 %v7116, 123
  %v7556 = vpop.permute.xlu0 %7555
  %7559 = vrot.lane.b32.xlu0 %v7115, 122
  %v7560 = vpop.permute.xlu0 %7559
  %7561 = vrot.lane.b32.xlu0 %v7116, 122
  %v7562 = vpop.permute.xlu0 %7561
  %7565 = vrot.lane.b32.xlu0 %v7115, 121
  %v7566 = vpop.permute.xlu0 %7565
  %7567 = vrot.lane.b32.xlu0 %v7116, 121
  %v7568 = vpop.permute.xlu0 %7567
  %7571 = vrot.lane.b32.xlu0 %v7115, 120
  %v7572 = vpop.permute.xlu0 %7571
  %7573 = vrot.lane.b32.xlu0 %v7116, 120
  %v7574 = vpop.permute.xlu0 %7573
  %7577 = vrot.lane.b32.xlu0 %v7115, 119
  %v7578 = vpop.permute.xlu0 %7577
  %7579 = vrot.lane.b32.xlu0 %v7116, 119
  %v7580 = vpop.permute.xlu0 %7579
  %7583 = vrot.lane.b32.xlu0 %v7115, 118
  %v7584 = vpop.permute.xlu0 %7583
  %7585 = vrot.lane.b32.xlu0 %v7116, 118
  %v7586 = vpop.permute.xlu0 %7585
  %7589 = vrot.lane.b32.xlu0 %v7115, 117
  %v7590 = vpop.permute.xlu0 %7589
  %7591 = vrot.lane.b32.xlu0 %v7116, 117
  %v7592 = vpop.permute.xlu0 %7591
  %7595 = vrot.lane.b32.xlu0 %v7115, 116
  %v7596 = vpop.permute.xlu0 %7595
  %7597 = vrot.lane.b32.xlu0 %v7116, 116
  %v7598 = vpop.permute.xlu0 %7597
  %7601 = vrot.lane.b32.xlu0 %v7115, 115
  %v7602 = vpop.permute.xlu0 %7601
  %7603 = vrot.lane.b32.xlu0 %v7116, 115
  %v7604 = vpop.permute.xlu0 %7603
  %7607 = vmatprep.subr.bf16.mxu0 0
  %7608 = vmatpush1.bf16.msra.mxu0 %v7514
  %7609 = vmatprep.subr.bf16.mxu0 0
  %7610 = vmatpush1.bf16.msra.mxu0 %v7517
  %7611 = vmatprep.subr.bf16.mxu0 0
  %7612 = vmatpush1.bf16.msra.mxu0 %v7115
  %7613 = vmatprep.subr.bf16.mxu0 0
  %7614 = vmatpush1.bf16.msra.mxu0 %v7116
  %7615 = vmatprep.subr.bf16.mxu0 0
  %7616 = vmatpush1.bf16.msra.mxu0 %v7530
  %7617 = vmatprep.subr.bf16.mxu0 0
  %7618 = vmatpush1.bf16.msra.mxu0 %v7532
  %7619 = vmatprep.subr.bf16.mxu0 0
  %7620 = vmatpush1.bf16.msra.mxu0 %v7536
  %7621 = vmatprep.subr.bf16.mxu0 0
  %7622 = vmatpush1.bf16.msra.mxu0 %v7538
  %7623 = vmatprep.subr.bf16.mxu0 0
  %7624 = vmatpush1.bf16.msra.mxu0 %v7542
  %7625 = vmatprep.subr.bf16.mxu0 0
  %7626 = vmatpush1.bf16.msra.mxu0 %v7544
  %7627 = vmatprep.subr.bf16.mxu0 0
  %7628 = vmatpush1.bf16.msra.mxu0 %v7548
  %7629 = vmatprep.subr.bf16.mxu0 0
  %7630 = vmatpush1.bf16.msra.mxu0 %v7550
  %7631 = vmatprep.subr.bf16.mxu0 0
  %7632 = vmatpush1.bf16.msra.mxu0 %v7554
  %7633 = vmatprep.subr.bf16.mxu0 0
  %7634 = vmatpush1.bf16.msra.mxu0 %v7556
  %7635 = vmatprep.subr.bf16.mxu0 0
  %7636 = vmatpush1.bf16.msra.mxu0 %v7560
  %7637 = vmatprep.subr.bf16.mxu0 0
  %7638 = vmatpush1.bf16.msra.mxu0 %v7562
  %7639 = vmatprep.mubr.bf16.mxu0 %v7346
  %7640 = vmatmul.mubr.bf16.gmra.mrb[0].mxu0 %v7345
  %v7641 = vpop.f32.mrb[0].mxu0
  %v7642 = vadd.f32 %v7260, %v7641
  %v7643 = vpop.f32.mrb[0].mxu0
  %v7644 = vpop.f32.mrb[0].mxu0
  %v7645 = vadd.f32 %v7265, %v7644
  %v7646 = vpop.f32.mrb[0].mxu0
  %7647 = vmatprep.mubr.bf16.mxu0 %v7350
  %7648 = vmatmul.mubr.bf16.gmra.mrb[0].mxu0 %v7349
  %v7649 = vpop.f32.mrb[0].mxu0
  %v7650 = vadd.f32 %v7270, %v7649
  %v7651 = vpop.f32.mrb[0].mxu0
  %v7652 = vpop.f32.mrb[0].mxu0
  %v7653 = vadd.f32 %v7275, %v7652
  %v7654 = vpop.f32.mrb[0].mxu0
  %7655 = vmatprep.mubr.bf16.mxu0 %v7354
  %7656 = vmatmul.mubr.bf16.gmra.mrb[0].mxu0 %v7353
  %v7657 = vpop.f32.mrb[0].mxu0
  %v7658 = vadd.f32 %v7280, %v7657
  %v7659 = vpop.f32.mrb[0].mxu0
  %v7660 = vpop.f32.mrb[0].mxu0
  %v7661 = vadd.f32 %v7285, %v7660
  %v7662 = vpop.f32.mrb[0].mxu0
  %7663 = vmatprep.mubr.bf16.mxu0 %v7358
  %7664 = vmatmul.mubr.bf16.gmra.mrb[0].mxu0 %v7357
  %v7665 = vpop.f32.mrb[0].mxu0
  %v7666 = vadd.f32 %v7290, %v7665
  %v7667 = vpop.f32.mrb[0].mxu0
  %v7668 = vpop.f32.mrb[0].mxu0
  %v7669 = vadd.f32 %v7295, %v7668
  %v7670 = vpop.f32.mrb[0].mxu0
  %7671 = vdwg.mxu0
  %7672 = vmatprep.subr.bf16.mxu0 0
  %7673 = vmatpush1.bf16.msra.mxu0 %v7566
  %7674 = vmatprep.subr.bf16.mxu0 0
  %7675 = vmatpush1.bf16.msra.mxu0 %v7568
  %7676 = vmatprep.subr.bf16.mxu0 0
  %7677 = vmatpush1.bf16.msra.mxu0 %v7572
  %7678 = vmatprep.subr.bf16.mxu0 0
  %7679 = vmatpush1.bf16.msra.mxu0 %v7574
  %7680 = vmatprep.subr.bf16.mxu0 0
  %7681 = vmatpush1.bf16.msra.mxu0 %v7578
  %7682 = vmatprep.subr.bf16.mxu0 0
  %7683 = vmatpush1.bf16.msra.mxu0 %v7580
  %7684 = vmatprep.subr.bf16.mxu0 0
  %7685 = vmatpush1.bf16.msra.mxu0 %v7584
  %7686 = vmatprep.subr.bf16.mxu0 0
  %7687 = vmatpush1.bf16.msra.mxu0 %v7586
  %7688 = vmatprep.subr.bf16.mxu0 0
  %7689 = vmatpush1.bf16.msra.mxu0 %v7590
  %7690 = vmatprep.subr.bf16.mxu0 0
  %7691 = vmatpush1.bf16.msra.mxu0 %v7592
  %7692 = vmatprep.subr.bf16.mxu0 0
  %7693 = vmatpush1.bf16.msra.mxu0 %v7596
  %7694 = vmatprep.subr.bf16.mxu0 0
  %7695 = vmatpush1.bf16.msra.mxu0 %v7598
  %7696 = vmatprep.subr.bf16.mxu0 0
  %7697 = vmatpush1.bf16.msra.mxu0 %v7602
  %7698 = vmatprep.subr.bf16.mxu0 0
  %7699 = vmatpush1.bf16.msra.mxu0 %v7604
  %7700 = vmatprep.subr.bf16.mxu0 0
  %7701 = vmatpush1.bf16.msra.mxu0 %v7524
  %7702 = vmatprep.subr.bf16.mxu0 0
  %7703 = vmatpush1.bf16.msra.mxu0 %v7527
  %7704 = vmatprep.mubr.bf16.mxu0 %v7348
  %7705 = vmatmul.mubr.bf16.gmra.mrb[0].mxu0 %v7347
  %v7706 = vpop.f32.mrb[0].mxu0
  %v7707 = vadd.f32 %v7642, %v7706
  %v7708 = vpop.f32.mrb[0].mxu0
  %v7709 = vpop.f32.mrb[0].mxu0
  %v7710 = vadd.f32 %v7645, %v7709
  %v7711 = vpop.f32.mrb[0].mxu0
  %7712 = vmatprep.mubr.bf16.mxu0 %v7352
  %7713 = vmatmul.mubr.bf16.gmra.mrb[0].mxu0 %v7351
  %v7714 = vpop.f32.mrb[0].mxu0
  %v7715 = vadd.f32 %v7650, %v7714
  %v7716 = vpop.f32.mrb[0].mxu0
  %v7717 = vpop.f32.mrb[0].mxu0
  %v7718 = vadd.f32 %v7653, %v7717
  %v7719 = vpop.f32.mrb[0].mxu0
  %7720 = vmatprep.mubr.bf16.mxu0 %v7356
  %7721 = vmatmul.mubr.bf16.gmra.mrb[0].mxu0 %v7355
  %v7722 = vpop.f32.mrb[0].mxu0
  %v7723 = vadd.f32 %v7658, %v7722
  %v7724 = vpop.f32.mrb[0].mxu0
  %v7725 = vpop.f32.mrb[0].mxu0
  %v7726 = vadd.f32 %v7661, %v7725
  %v7727 = vpop.f32.mrb[0].mxu0
  %7728 = vmatprep.mubr.bf16.mxu0 %v7360
  %7729 = vmatmul.mubr.bf16.gmra.mrb[0].mxu0 %v7359
  %v7730 = vpop.f32.mrb[0].mxu0
  %v7731 = vadd.f32 %v7666, %v7730
  %v7732 = vpop.f32.mrb[0].mxu0
  %v7733 = vpop.f32.mrb[0].mxu0
  %v7734 = vadd.f32 %v7669, %v7733
  %v7735 = vpop.f32.mrb[0].mxu0
  %7736 = vdwg.mxu0
  %vm7737 = vcmask 162816
  %v7738 = vsel %vm7737, %v7477, 0.0
  %7739 = vadd.xlane.f32.xlu0 %v7738
  %v7740 = vpop.xlane.xlu0 %7739
  %v7741 = vsel %vm7737, %v7480, 0.0
  %7742 = vadd.xlane.f32.xlu0 %v7741
  %v7743 = vpop.xlane.xlu0 %7742
  %v7744 = vsel %vm7737, %v7485, 0.0
  %7745 = vadd.xlane.f32.xlu0 %v7744
  %v7746 = vpop.xlane.xlu0 %7745
  %v7747 = vsel %vm7737, %v7488, 0.0
  %7748 = vadd.xlane.f32.xlu0 %v7747
  %v7749 = vpop.xlane.xlu0 %7748
  %v7750 = vsel %vm7737, %v7493, 0.0
  %7751 = vadd.xlane.f32.xlu0 %v7750
  %v7752 = vpop.xlane.xlu0 %7751
  %v7753 = vsel %vm7737, %v7496, 0.0
  %7754 = vadd.xlane.f32.xlu0 %v7753
  %v7755 = vpop.xlane.xlu0 %7754
  %v7756 = vsel %vm7737, %v7501, 0.0
  %7757 = vadd.xlane.f32.xlu0 %v7756
  %v7758 = vpop.xlane.xlu0 %7757
  %v7759 = vsel %vm7737, %v7504, 0.0
  %7760 = vadd.xlane.f32.xlu0 %v7759
  %v7761 = vpop.xlane.xlu0 %7760
  %v7762 = vsel %vm7737, %v7707, 0.0
  %7763 = vadd.xlane.f32.xlu0 %v7762
  %v7764 = vpop.xlane.xlu0 %7763
  %v7765 = vsel %vm7737, %v7710, 0.0
  %7766 = vadd.xlane.f32.xlu0 %v7765
  %v7767 = vpop.xlane.xlu0 %7766
  %v7768 = vsel %vm7737, %v7715, 0.0
  %7769 = vadd.xlane.f32.xlu0 %v7768
  %v7770 = vpop.xlane.xlu0 %7769
  %v7771 = vsel %vm7737, %v7718, 0.0
  %7772 = vadd.xlane.f32.xlu0 %v7771
  %v7773 = vpop.xlane.xlu0 %7772
  %v7774 = vsel %vm7737, %v7723, 0.0
  %7775 = vadd.xlane.f32.xlu0 %v7774
  %v7776 = vpop.xlane.xlu0 %7775
  %v7777 = vsel %vm7737, %v7726, 0.0
  %7778 = vadd.xlane.f32.xlu0 %v7777
  %v7779 = vpop.xlane.xlu0 %7778
  %v7780 = vsel %vm7737, %v7731, 0.0
  %7781 = vadd.xlane.f32.xlu0 %v7780
  %v7782 = vpop.xlane.xlu0 %7781
  %v7783 = vsel %vm7737, %v7734, 0.0
  %7784 = vadd.xlane.f32.xlu0 %v7783
  %v7785 = vpop.xlane.xlu0 %7784
  %v7786 = vadd.f32 %v7740, %v7764
  %v7787 = vadd.f32 %v7743, %v7767
  %v7788 = vadd.f32 %v7746, %v7770
  %v7789 = vadd.f32 %v7749, %v7773
  %v7790 = vadd.f32 %v7752, %v7776
  %v7791 = vadd.f32 %v7755, %v7779
  %v7792 = vadd.f32 %v7758, %v7782
  %v7793 = vadd.f32 %v7761, %v7785
  %v7794 = vmul.f32 %v7786, 0.025
  %v7795 = vmul.f32 %v7787, 0.025
  %v7796 = vmul.f32 %v7788, 0.025
  %v7797 = vmul.f32 %v7789, 0.025
  %v7798 = vmul.f32 %v7790, 0.025
  %v7799 = vmul.f32 %v7791, 0.025
  %v7800 = vmul.f32 %v7792, 0.025
  %v7801 = vmul.f32 %v7793, 0.025
  %v7802 = vsub.f32 %v7477, %v7794
  %v7803 = vsub.f32 %v7480, %v7795
  %v7804 = vsub.f32 %v7485, %v7796
  %v7805 = vsub.f32 %v7488, %v7797
  %v7806 = vsub.f32 %v7493, %v7798
  %v7807 = vsub.f32 %v7496, %v7799
  %v7808 = vsub.f32 %v7501, %v7800
  %v7809 = vsub.f32 %v7504, %v7801
  %v7810 = vsub.f32 %v7707, %v7794
  %v7811 = vsub.f32 %v7710, %v7795
  %v7812 = vsub.f32 %v7715, %v7796
  %v7813 = vsub.f32 %v7718, %v7797
  %v7814 = vsub.f32 %v7723, %v7798
  %v7815 = vsub.f32 %v7726, %v7799
  %v7816 = vsub.f32 %v7731, %v7800
  %v7817 = vsub.f32 %v7734, %v7801
  %v7818 = vmul.f32 %v7802, %v7802
  %v7819 = vmul.f32 %v7803, %v7803
  %v7820 = vmul.f32 %v7804, %v7804
  %v7821 = vmul.f32 %v7805, %v7805
  %v7822 = vmul.f32 %v7806, %v7806
  %v7823 = vmul.f32 %v7807, %v7807
  %v7824 = vmul.f32 %v7808, %v7808
  %v7825 = vmul.f32 %v7809, %v7809
  %v7826 = vsel %vm7737, %v7818, 0.0
  %7827 = vadd.xlane.f32.xlu0 %v7826
  %v7828 = vpop.xlane.xlu0 %7827
  %v7829 = vsel %vm7737, %v7819, 0.0
  %7830 = vadd.xlane.f32.xlu0 %v7829
  %v7831 = vpop.xlane.xlu0 %7830
  %v7832 = vsel %vm7737, %v7820, 0.0
  %7833 = vadd.xlane.f32.xlu0 %v7832
  %v7834 = vpop.xlane.xlu0 %7833
  %v7835 = vsel %vm7737, %v7821, 0.0
  %7836 = vadd.xlane.f32.xlu0 %v7835
  %v7837 = vpop.xlane.xlu0 %7836
  %v7838 = vsel %vm7737, %v7822, 0.0
  %7839 = vadd.xlane.f32.xlu0 %v7838
  %v7840 = vpop.xlane.xlu0 %7839
  %v7841 = vsel %vm7737, %v7823, 0.0
  %7842 = vadd.xlane.f32.xlu0 %v7841
  %v7843 = vpop.xlane.xlu0 %7842
  %v7844 = vsel %vm7737, %v7824, 0.0
  %7845 = vadd.xlane.f32.xlu0 %v7844
  %v7846 = vpop.xlane.xlu0 %7845
  %v7847 = vsel %vm7737, %v7825, 0.0
  %7848 = vadd.xlane.f32.xlu0 %v7847
  %v7849 = vpop.xlane.xlu0 %7848
  %v7850 = vmul.f32 %v7810, %v7810
  %v7851 = vmul.f32 %v7811, %v7811
  %v7852 = vmul.f32 %v7812, %v7812
  %v7853 = vmul.f32 %v7813, %v7813
  %v7854 = vmul.f32 %v7814, %v7814
  %v7855 = vmul.f32 %v7815, %v7815
  %v7856 = vmul.f32 %v7816, %v7816
  %v7857 = vmul.f32 %v7817, %v7817
  %v7858 = vsel %vm7737, %v7850, 0.0
  %7859 = vadd.xlane.f32.xlu0 %v7858
  %v7860 = vpop.xlane.xlu0 %7859
  %v7861 = vsel %vm7737, %v7851, 0.0
  %7862 = vadd.xlane.f32.xlu0 %v7861
  %v7863 = vpop.xlane.xlu0 %7862
  %v7864 = vsel %vm7737, %v7852, 0.0
  %7865 = vadd.xlane.f32.xlu0 %v7864
  %v7866 = vpop.xlane.xlu0 %7865
  %v7867 = vsel %vm7737, %v7853, 0.0
  %7868 = vadd.xlane.f32.xlu0 %v7867
  %v7869 = vpop.xlane.xlu0 %7868
  %v7870 = vsel %vm7737, %v7854, 0.0
  %7871 = vadd.xlane.f32.xlu0 %v7870
  %v7872 = vpop.xlane.xlu0 %7871
  %v7873 = vsel %vm7737, %v7855, 0.0
  %7874 = vadd.xlane.f32.xlu0 %v7873
  %v7875 = vpop.xlane.xlu0 %7874
  %v7876 = vsel %vm7737, %v7856, 0.0
  %7877 = vadd.xlane.f32.xlu0 %v7876
  %v7878 = vpop.xlane.xlu0 %7877
  %v7879 = vsel %vm7737, %v7857, 0.0
  %7880 = vadd.xlane.f32.xlu0 %v7879
  %v7881 = vpop.xlane.xlu0 %7880
  %v7882 = vadd.f32 %v7828, %v7860
  %v7883 = vadd.f32 %v7831, %v7863
  %v7884 = vadd.f32 %v7834, %v7866
  %v7885 = vadd.f32 %v7837, %v7869
  %v7886 = vadd.f32 %v7840, %v7872
  %v7887 = vadd.f32 %v7843, %v7875
  %v7888 = vadd.f32 %v7846, %v7878
  %v7889 = vadd.f32 %v7849, %v7881
  %v7890 = vmul.f32 %v7882, 0.025
  %v7891 = vmul.f32 %v7883, 0.025
  %v7892 = vmul.f32 %v7884, 0.025
  %v7893 = vmul.f32 %v7885, 0.025
  %v7894 = vmul.f32 %v7886, 0.025
  %v7895 = vmul.f32 %v7887, 0.025
  %v7896 = vmul.f32 %v7888, 0.025
  %v7897 = vmul.f32 %v7889, 0.025
  %v7898 = vadd.f32 %v7890, 1e-05
  %v7899 = vadd.f32 %v7891, 1e-05
  %v7900 = vadd.f32 %v7892, 1e-05
  %v7901 = vadd.f32 %v7893, 1e-05
  %v7902 = vadd.f32 %v7894, 1e-05
  %v7903 = vadd.f32 %v7895, 1e-05
  %v7904 = vadd.f32 %v7896, 1e-05
  %v7905 = vadd.f32 %v7897, 1e-05
  %v7906 = vrsqrt.pop %v7898
  %v7907 = vrsqrt.pop %v7899
  %v7908 = vrsqrt.pop %v7900
  %v7909 = vrsqrt.pop %v7901
  %v7910 = vrsqrt.pop %v7902
  %v7911 = vrsqrt.pop %v7903
  %v7912 = vrsqrt.pop %v7904
  %v7913 = vrsqrt.pop %v7905
  %v7914 = vmul.f32 %v7906, %v7141
  %v7915 = vmul.f32 %v7907, %v7142
  %v7916 = vmul.f32 %v7908, %v7143
  %v7917 = vmul.f32 %v7909, %v7144
  %v7918 = vmul.f32 %v7910, %v7145
  %v7919 = vmul.f32 %v7911, %v7146
  %v7920 = vmul.f32 %v7912, %v7147
  %v7921 = vmul.f32 %v7913, %v7148
  %7923 = vset.pattern.permute.xlu0 0
  %7924 = vperm.xlu0 %7923, %v7914
  %v7925 = vpop.permute.xlu0 %7924
  %7928 = vset.pattern.permute.xlu0 0
  %7929 = vperm.xlu0 %7928, %v7915
  %v7930 = vpop.permute.xlu0 %7929
  %7933 = vset.pattern.permute.xlu0 0
  %7934 = vperm.xlu0 %7933, %v7916
  %v7935 = vpop.permute.xlu0 %7934
  %7938 = vset.pattern.permute.xlu0 0
  %7939 = vperm.xlu0 %7938, %v7917
  %v7940 = vpop.permute.xlu0 %7939
  %7943 = vset.pattern.permute.xlu0 0
  %7944 = vperm.xlu0 %7943, %v7918
  %v7945 = vpop.permute.xlu0 %7944
  %7948 = vset.pattern.permute.xlu0 0
  %7949 = vperm.xlu0 %7948, %v7919
  %v7950 = vpop.permute.xlu0 %7949
  %7953 = vset.pattern.permute.xlu0 0
  %7954 = vperm.xlu0 %7953, %v7920
  %v7955 = vpop.permute.xlu0 %7954
  %7958 = vset.pattern.permute.xlu0 0
  %7959 = vperm.xlu0 %7958, %v7921
  %v7960 = vpop.permute.xlu0 %7959
  %v7962 = vmul.f32 %v7802, %v7925
  %v7963 = vmul.f32 %v7803, %v7930
  %v7964 = vmul.f32 %v7804, %v7935
  %v7965 = vmul.f32 %v7805, %v7940
  %v7966 = vmul.f32 %v7806, %v7945
  %v7967 = vmul.f32 %v7807, %v7950
  %v7968 = vmul.f32 %v7808, %v7955
  %v7969 = vmul.f32 %v7809, %v7960
  %7971 = vset.pattern.permute.xlu0 0
  %7972 = vperm.xlu0 %7971, %v7149
  %v7973 = vpop.permute.xlu0 %7972
  %7976 = vset.pattern.permute.xlu0 0
  %7977 = vperm.xlu0 %7976, %v7150
  %v7978 = vpop.permute.xlu0 %7977
  %7981 = vset.pattern.permute.xlu0 0
  %7982 = vperm.xlu0 %7981, %v7151
  %v7983 = vpop.permute.xlu0 %7982
  %7986 = vset.pattern.permute.xlu0 0
  %7987 = vperm.xlu0 %7986, %v7152
  %v7988 = vpop.permute.xlu0 %7987
  %7991 = vset.pattern.permute.xlu0 0
  %7992 = vperm.xlu0 %7991, %v7153
  %v7993 = vpop.permute.xlu0 %7992
  %7996 = vset.pattern.permute.xlu0 0
  %7997 = vperm.xlu0 %7996, %v7154
  %v7998 = vpop.permute.xlu0 %7997
  %8001 = vset.pattern.permute.xlu0 0
  %8002 = vperm.xlu0 %8001, %v7155
  %v8003 = vpop.permute.xlu0 %8002
  %8006 = vset.pattern.permute.xlu0 0
  %8007 = vperm.xlu0 %8006, %v7156
  %v8008 = vpop.permute.xlu0 %8007
  %v8010 = vadd.f32 %v7962, %v7973
  %v8011 = vadd.f32 %v7963, %v7978
  %v8012 = vadd.f32 %v7964, %v7983
  %v8013 = vadd.f32 %v7965, %v7988
  %v8014 = vadd.f32 %v7966, %v7993
  %v8015 = vadd.f32 %v7967, %v7998
  %v8016 = vadd.f32 %v7968, %v8003
  %v8017 = vadd.f32 %v7969, %v8008
  %v8018 = vmul.f32 %v8010, 0.5
  %v8019 = vmul.f32 %v8011, 0.5
  %v8020 = vmul.f32 %v8012, 0.5
  %v8021 = vmul.f32 %v8013, 0.5
  %v8022 = vmul.f32 %v8014, 0.5
  %v8023 = vmul.f32 %v8015, 0.5
  %v8024 = vmul.f32 %v8016, 0.5
  %v8025 = vmul.f32 %v8017, 0.5
  %v8026 = vtanh.pop %v8018
  %v8027 = vtanh.pop %v8019
  %v8028 = vtanh.pop %v8020
  %v8029 = vtanh.pop %v8021
  %v8030 = vtanh.pop %v8022
  %v8031 = vtanh.pop %v8023
  %v8032 = vtanh.pop %v8024
  %v8033 = vtanh.pop %v8025
  %v8034 = vmul.f32 %v8026, 0.5
  %v8035 = vmul.f32 %v8027, 0.5
  %v8036 = vmul.f32 %v8028, 0.5
  %v8037 = vmul.f32 %v8029, 0.5
  %v8038 = vmul.f32 %v8030, 0.5
  %v8039 = vmul.f32 %v8031, 0.5
  %v8040 = vmul.f32 %v8032, 0.5
  %v8041 = vmul.f32 %v8033, 0.5
  %v8042 = vadd.f32 %v8034, 0.5
  %v8043 = vadd.f32 %v8035, 0.5
  %v8044 = vadd.f32 %v8036, 0.5
  %v8045 = vadd.f32 %v8037, 0.5
  %v8046 = vadd.f32 %v8038, 0.5
  %v8047 = vadd.f32 %v8039, 0.5
  %v8048 = vadd.f32 %v8040, 0.5
  %v8049 = vadd.f32 %v8041, 0.5
  %v8050 = vmul.f32 %v8010, %v8042
  %v8051 = vmul.f32 %v8011, %v8043
  %v8052 = vmul.f32 %v8012, %v8044
  %v8053 = vmul.f32 %v8013, %v8045
  %v8054 = vmul.f32 %v8014, %v8046
  %v8055 = vmul.f32 %v8015, %v8047
  %v8056 = vmul.f32 %v8016, %v8048
  %v8057 = vmul.f32 %v8017, %v8049
  %v8058 = vpack.c.bf16 %v8051, %v8050
  %v8059 = vpack.c.bf16 %v8053, %v8052
  %v8060 = vpack.c.bf16 %v8055, %v8054
  %v8061 = vpack.c.bf16 %v8057, %v8056
  %v8062 = vmul.f32 %v7810, %v7925
  %v8063 = vmul.f32 %v7811, %v7930
  %v8064 = vmul.f32 %v7812, %v7935
  %v8065 = vmul.f32 %v7813, %v7940
  %v8066 = vmul.f32 %v7814, %v7945
  %v8067 = vmul.f32 %v7815, %v7950
  %v8068 = vmul.f32 %v7816, %v7955
  %v8069 = vmul.f32 %v7817, %v7960
  %v8070 = vadd.f32 %v8062, %v7973
  %v8071 = vadd.f32 %v8063, %v7978
  %v8072 = vadd.f32 %v8064, %v7983
  %v8073 = vadd.f32 %v8065, %v7988
  %v8074 = vadd.f32 %v8066, %v7993
  %v8075 = vadd.f32 %v8067, %v7998
  %v8076 = vadd.f32 %v8068, %v8003
  %v8077 = vadd.f32 %v8069, %v8008
  %v8078 = vmul.f32 %v8070, 0.5
  %v8079 = vmul.f32 %v8071, 0.5
  %v8080 = vmul.f32 %v8072, 0.5
  %v8081 = vmul.f32 %v8073, 0.5
  %v8082 = vmul.f32 %v8074, 0.5
  %v8083 = vmul.f32 %v8075, 0.5
  %v8084 = vmul.f32 %v8076, 0.5
  %v8085 = vmul.f32 %v8077, 0.5
  %v8086 = vtanh.pop %v8078
  %v8087 = vtanh.pop %v8079
  %v8088 = vtanh.pop %v8080
  %v8089 = vtanh.pop %v8081
  %v8090 = vtanh.pop %v8082
  %v8091 = vtanh.pop %v8083
  %v8092 = vtanh.pop %v8084
  %v8093 = vtanh.pop %v8085
  %v8094 = vmul.f32 %v8086, 0.5
  %v8095 = vmul.f32 %v8087, 0.5
  %v8096 = vmul.f32 %v8088, 0.5
  %v8097 = vmul.f32 %v8089, 0.5
  %v8098 = vmul.f32 %v8090, 0.5
  %v8099 = vmul.f32 %v8091, 0.5
  %v8100 = vmul.f32 %v8092, 0.5
  %v8101 = vmul.f32 %v8093, 0.5
  %v8102 = vadd.f32 %v8094, 0.5
  %v8103 = vadd.f32 %v8095, 0.5
  %v8104 = vadd.f32 %v8096, 0.5
  %v8105 = vadd.f32 %v8097, 0.5
  %v8106 = vadd.f32 %v8098, 0.5
  %v8107 = vadd.f32 %v8099, 0.5
  %v8108 = vadd.f32 %v8100, 0.5
  %v8109 = vadd.f32 %v8101, 0.5
  %v8110 = vmul.f32 %v8070, %v8102
  %v8111 = vmul.f32 %v8071, %v8103
  %v8112 = vmul.f32 %v8072, %v8104
  %v8113 = vmul.f32 %v8073, %v8105
  %v8114 = vmul.f32 %v8074, %v8106
  %v8115 = vmul.f32 %v8075, %v8107
  %v8116 = vmul.f32 %v8076, %v8108
  %v8117 = vmul.f32 %v8077, %v8109
  %v8118 = vpack.c.bf16 %v8111, %v8110
  %v8119 = vpack.c.bf16 %v8113, %v8112
  %v8120 = vpack.c.bf16 %v8115, %v8114
  %v8121 = vpack.c.bf16 %v8117, %v8116
  %v8122 = vld [vmem:[%s23] sm:$0xff]
  %v8123 = vld [vmem:[%s23 + $0x8] sm:$0xff]
  %v8124 = vld [vmem:[%s23 + $0x10] sm:$0xff]
  %v8125 = vld [vmem:[%s23 + $0x18] sm:$0xff]
  %v8126 = vld [vmem:[%s23 + $0x20] sm:$0xff]
  %v8127 = vld [vmem:[%s23 + $0x28] sm:$0xff]
  %v8128 = vld [vmem:[%s23 + $0x30] sm:$0xff]
  %v8129 = vld [vmem:[%s23 + $0x38] sm:$0xff]
  %v8130 = vld [vmem:[%s23 + $0x40] sm:$0xff]
  %v8131 = vld [vmem:[%s23 + $0x48] sm:$0xff]
  %v8132 = vld [vmem:[%s23 + $0x50] sm:$0xff]
  %v8133 = vld [vmem:[%s23 + $0x58] sm:$0xff]
  %v8134 = vld [vmem:[%s23 + $0x60] sm:$0xff]
  %v8135 = vld [vmem:[%s23 + $0x68] sm:$0xff]
  %v8136 = vld [vmem:[%s23 + $0x70] sm:$0xff]
  %v8137 = vld [vmem:[%s23 + $0x78] sm:$0xff]
  %v8138 = vld [vmem:[%s23 + $0x80] sm:$0xff]
  %v8139 = vld [vmem:[%s23 + $0x88] sm:$0xff]
  %v8140 = vld [vmem:[%s23 + $0x90] sm:$0xff]
  %v8141 = vld [vmem:[%s23 + $0x98] sm:$0xff]
  %v8142 = vld [vmem:[%s23 + $0xa0] sm:$0xff]
  %v8143 = vld [vmem:[%s23 + $0xa8] sm:$0xff]
  %v8144 = vld [vmem:[%s23 + $0xb0] sm:$0xff]
  %v8145 = vld [vmem:[%s23 + $0xb8] sm:$0xff]
  %v8146 = vld [vmem:[%s23 + $0xc0] sm:$0xff]
  %v8147 = vld [vmem:[%s23 + $0xc8] sm:$0xff]
  %v8148 = vld [vmem:[%s23 + $0xd0] sm:$0xff]
  %v8149 = vld [vmem:[%s23 + $0xd8] sm:$0xff]
  %v8150 = vld [vmem:[%s23 + $0xe0] sm:$0xff]
  %v8151 = vld [vmem:[%s23 + $0xe8] sm:$0xff]
  %v8152 = vld [vmem:[%s23 + $0xf0] sm:$0xff]
  %v8153 = vld [vmem:[%s23 + $0xf8] sm:$0xff]
  %v8154 = vld [vmem:[%s24] sm:$0xff]
  %v8155 = vld [vmem:[%s24 + $0x8] sm:$0xff]
  %v8156 = vld [vmem:[%s24 + $0x10] sm:$0xff]
  %v8157 = vld [vmem:[%s24 + $0x18] sm:$0xff]
  %v8158 = vld [vmem:[%s24 + $0x20] sm:$0xff]
  %v8159 = vld [vmem:[%s24 + $0x28] sm:$0xff]
  %v8160 = vld [vmem:[%s24 + $0x30] sm:$0xff]
  %v8161 = vld [vmem:[%s24 + $0x38] sm:$0xff]
  %v8162 = vld [vmem:[%s25] sm:$0xff]
  %v8163 = vld [vmem:[%s25 + $0x8] sm:$0xff]
  %v8164 = vld [vmem:[%s25 + $0x10] sm:$0xff]
  %v8165 = vld [vmem:[%s25 + $0x18] sm:$0xff]
  %v8166 = vld [vmem:[%s25 + $0x20] sm:$0xff]
  %v8167 = vld [vmem:[%s25 + $0x28] sm:$0xff]
  %v8168 = vld [vmem:[%s25 + $0x30] sm:$0xff]
  %v8169 = vld [vmem:[%s25 + $0x38] sm:$0xff]
  %v8170 = vld [vmem:[%s26] sm:$0xff]
  %v8171 = vld [vmem:[%s26 + $0x8] sm:$0xff]
  %v8172 = vld [vmem:[%s26 + $0x10] sm:$0xff]
  %v8173 = vld [vmem:[%s26 + $0x18] sm:$0xff]
  %v8174 = vld [vmem:[%s26 + $0x20] sm:$0xff]
  %v8175 = vld [vmem:[%s26 + $0x28] sm:$0xff]
  %v8176 = vld [vmem:[%s26 + $0x30] sm:$0xff]
  %v8177 = vld [vmem:[%s26 + $0x38] sm:$0xff]
  %v8178 = vld [vmem:[%s27] sm:$0x7]
  %8183 = vrot.lane.b32.xlu0 %v8058, 1
  %v8184 = vpop.permute.xlu0 %8183
  %8185 = vrot.lane.b32.xlu0 %v8059, 1
  %v8186 = vpop.permute.xlu0 %8185
  %8187 = vrot.lane.b32.xlu0 %v8060, 1
  %v8188 = vpop.permute.xlu0 %8187
  %8189 = vrot.lane.b32.xlu0 %v8061, 1
  %v8190 = vpop.permute.xlu0 %8189
  %v8192 = vsel %vm4887, 0, %v8184
  %v8195 = vsel %vm4887, 0, %v8186
  %v8198 = vsel %vm4887, 0, %v8188
  %v8201 = vsel %vm4887, 0, %v8190
  %8203 = vrot.lane.b32.xlu0 %v8058, 114
  %v8204 = vpop.permute.xlu0 %8203
  %8205 = vrot.lane.b32.xlu0 %v8059, 114
  %v8206 = vpop.permute.xlu0 %8205
  %8207 = vrot.lane.b32.xlu0 %v8060, 114
  %v8208 = vpop.permute.xlu0 %8207
  %8209 = vrot.lane.b32.xlu0 %v8061, 114
  %v8210 = vpop.permute.xlu0 %8209
  %vm8211 = vcmask 48128
  %v8213 = vsel %vm8211, %v8204, 0
  %v8216 = vsel %vm8211, %v8206, 0
  %v8219 = vsel %vm8211, %v8208, 0
  %v8222 = vsel %vm8211, %v8210, 0
  %8224 = vrot.lane.b32.xlu0 %v8058, 127
  %v8225 = vpop.permute.xlu0 %8224
  %8226 = vrot.lane.b32.xlu0 %v8059, 127
  %v8227 = vpop.permute.xlu0 %8226
  %8228 = vrot.lane.b32.xlu0 %v8060, 127
  %v8229 = vpop.permute.xlu0 %8228
  %8230 = vrot.lane.b32.xlu0 %v8061, 127
  %v8231 = vpop.permute.xlu0 %8230
  %8236 = vrot.lane.b32.xlu0 %v8058, 126
  %v8237 = vpop.permute.xlu0 %8236
  %8238 = vrot.lane.b32.xlu0 %v8059, 126
  %v8239 = vpop.permute.xlu0 %8238
  %8240 = vrot.lane.b32.xlu0 %v8060, 126
  %v8241 = vpop.permute.xlu0 %8240
  %8242 = vrot.lane.b32.xlu0 %v8061, 126
  %v8243 = vpop.permute.xlu0 %8242
  %8248 = vrot.lane.b32.xlu0 %v8058, 125
  %v8249 = vpop.permute.xlu0 %8248
  %8250 = vrot.lane.b32.xlu0 %v8059, 125
  %v8251 = vpop.permute.xlu0 %8250
  %8252 = vrot.lane.b32.xlu0 %v8060, 125
  %v8253 = vpop.permute.xlu0 %8252
  %8254 = vrot.lane.b32.xlu0 %v8061, 125
  %v8255 = vpop.permute.xlu0 %8254
  %8260 = vrot.lane.b32.xlu0 %v8058, 124
  %v8261 = vpop.permute.xlu0 %8260
  %8262 = vrot.lane.b32.xlu0 %v8059, 124
  %v8263 = vpop.permute.xlu0 %8262
  %8264 = vrot.lane.b32.xlu0 %v8060, 124
  %v8265 = vpop.permute.xlu0 %8264
  %8266 = vrot.lane.b32.xlu0 %v8061, 124
  %v8267 = vpop.permute.xlu0 %8266
  %8272 = vrot.lane.b32.xlu0 %v8058, 123
  %v8273 = vpop.permute.xlu0 %8272
  %8274 = vrot.lane.b32.xlu0 %v8059, 123
  %v8275 = vpop.permute.xlu0 %8274
  %8276 = vrot.lane.b32.xlu0 %v8060, 123
  %v8277 = vpop.permute.xlu0 %8276
  %8278 = vrot.lane.b32.xlu0 %v8061, 123
  %v8279 = vpop.permute.xlu0 %8278
  %8284 = vrot.lane.b32.xlu0 %v8058, 122
  %v8285 = vpop.permute.xlu0 %8284
  %8286 = vrot.lane.b32.xlu0 %v8059, 122
  %v8287 = vpop.permute.xlu0 %8286
  %8288 = vrot.lane.b32.xlu0 %v8060, 122
  %v8289 = vpop.permute.xlu0 %8288
  %8290 = vrot.lane.b32.xlu0 %v8061, 122
  %v8291 = vpop.permute.xlu0 %8290
  %8296 = vrot.lane.b32.xlu0 %v8058, 121
  %v8297 = vpop.permute.xlu0 %8296
  %8298 = vrot.lane.b32.xlu0 %v8059, 121
  %v8299 = vpop.permute.xlu0 %8298
  %8300 = vrot.lane.b32.xlu0 %v8060, 121
  %v8301 = vpop.permute.xlu0 %8300
  %8302 = vrot.lane.b32.xlu0 %v8061, 121
  %v8303 = vpop.permute.xlu0 %8302
  %8308 = vrot.lane.b32.xlu0 %v8058, 120
  %v8309 = vpop.permute.xlu0 %8308
  %8310 = vrot.lane.b32.xlu0 %v8059, 120
  %v8311 = vpop.permute.xlu0 %8310
  %8312 = vrot.lane.b32.xlu0 %v8060, 120
  %v8313 = vpop.permute.xlu0 %8312
  %8314 = vrot.lane.b32.xlu0 %v8061, 120
  %v8315 = vpop.permute.xlu0 %8314
  %8320 = vrot.lane.b32.xlu0 %v8058, 119
  %v8321 = vpop.permute.xlu0 %8320
  %8322 = vrot.lane.b32.xlu0 %v8059, 119
  %v8323 = vpop.permute.xlu0 %8322
  %8324 = vrot.lane.b32.xlu0 %v8060, 119
  %v8325 = vpop.permute.xlu0 %8324
  %8326 = vrot.lane.b32.xlu0 %v8061, 119
  %v8327 = vpop.permute.xlu0 %8326
  %8332 = vrot.lane.b32.xlu0 %v8058, 118
  %v8333 = vpop.permute.xlu0 %8332
  %8334 = vrot.lane.b32.xlu0 %v8059, 118
  %v8335 = vpop.permute.xlu0 %8334
  %8336 = vrot.lane.b32.xlu0 %v8060, 118
  %v8337 = vpop.permute.xlu0 %8336
  %8338 = vrot.lane.b32.xlu0 %v8061, 118
  %v8339 = vpop.permute.xlu0 %8338
  %8344 = vrot.lane.b32.xlu0 %v8058, 117
  %v8345 = vpop.permute.xlu0 %8344
  %8346 = vrot.lane.b32.xlu0 %v8059, 117
  %v8347 = vpop.permute.xlu0 %8346
  %8348 = vrot.lane.b32.xlu0 %v8060, 117
  %v8349 = vpop.permute.xlu0 %8348
  %8350 = vrot.lane.b32.xlu0 %v8061, 117
  %v8351 = vpop.permute.xlu0 %8350
  %8356 = vrot.lane.b32.xlu0 %v8058, 116
  %v8357 = vpop.permute.xlu0 %8356
  %8358 = vrot.lane.b32.xlu0 %v8059, 116
  %v8359 = vpop.permute.xlu0 %8358
  %8360 = vrot.lane.b32.xlu0 %v8060, 116
  %v8361 = vpop.permute.xlu0 %8360
  %8362 = vrot.lane.b32.xlu0 %v8061, 116
  %v8363 = vpop.permute.xlu0 %8362
  %8368 = vrot.lane.b32.xlu0 %v8058, 115
  %v8369 = vpop.permute.xlu0 %8368
  %8370 = vrot.lane.b32.xlu0 %v8059, 115
  %v8371 = vpop.permute.xlu0 %8370
  %8372 = vrot.lane.b32.xlu0 %v8060, 115
  %v8373 = vpop.permute.xlu0 %8372
  %8374 = vrot.lane.b32.xlu0 %v8061, 115
  %v8375 = vpop.permute.xlu0 %8374
  %8381 = vset.pattern.permute.xlu0 0
  %8382 = vperm.xlu0 %8381, %v8154
  %v8383 = vpop.permute.xlu0 %8382
  %8386 = vset.pattern.permute.xlu0 0
  %8387 = vperm.xlu0 %8386, %v8155
  %v8388 = vpop.permute.xlu0 %8387
  %8391 = vset.pattern.permute.xlu0 0
  %8392 = vperm.xlu0 %8391, %v8156
  %v8393 = vpop.permute.xlu0 %8392
  %8396 = vset.pattern.permute.xlu0 0
  %8397 = vperm.xlu0 %8396, %v8157
  %v8398 = vpop.permute.xlu0 %8397
  %8401 = vset.pattern.permute.xlu0 0
  %8402 = vperm.xlu0 %8401, %v8158
  %v8403 = vpop.permute.xlu0 %8402
  %8406 = vset.pattern.permute.xlu0 0
  %8407 = vperm.xlu0 %8406, %v8159
  %v8408 = vpop.permute.xlu0 %8407
  %8411 = vset.pattern.permute.xlu0 0
  %8412 = vperm.xlu0 %8411, %v8160
  %v8413 = vpop.permute.xlu0 %8412
  %8416 = vset.pattern.permute.xlu0 0
  %8417 = vperm.xlu0 %8416, %v8161
  %v8418 = vpop.permute.xlu0 %8417
  %v8452 = vunpack.c.l.b16 %v8122
  %v8453 = vunpack.c.h.b16 %v8122
  %v8454 = vunpack.c.l.b16 %v8123
  %v8455 = vunpack.c.h.b16 %v8123
  %v8456 = vunpack.c.l.b16 %v8124
  %v8457 = vunpack.c.h.b16 %v8124
  %v8458 = vunpack.c.l.b16 %v8125
  %v8459 = vunpack.c.h.b16 %v8125
  %v8460 = vunpack.c.l.b16 %v8126
  %v8461 = vunpack.c.h.b16 %v8126
  %v8462 = vunpack.c.l.b16 %v8127
  %v8463 = vunpack.c.h.b16 %v8127
  %v8464 = vunpack.c.l.b16 %v8128
  %v8465 = vunpack.c.h.b16 %v8128
  %v8466 = vunpack.c.l.b16 %v8129
  %v8467 = vunpack.c.h.b16 %v8129
  %v8468 = vunpack.c.l.b16 %v8130
  %v8469 = vunpack.c.h.b16 %v8130
  %v8470 = vunpack.c.l.b16 %v8131
  %v8471 = vunpack.c.h.b16 %v8131
  %v8472 = vunpack.c.l.b16 %v8132
  %v8473 = vunpack.c.h.b16 %v8132
  %v8474 = vunpack.c.l.b16 %v8133
  %v8475 = vunpack.c.h.b16 %v8133
  %v8476 = vunpack.c.l.b16 %v8134
  %v8477 = vunpack.c.h.b16 %v8134
  %v8478 = vunpack.c.l.b16 %v8135
  %v8479 = vunpack.c.h.b16 %v8135
  %v8480 = vunpack.c.l.b16 %v8136
  %v8481 = vunpack.c.h.b16 %v8136
  %v8482 = vunpack.c.l.b16 %v8137
  %v8483 = vunpack.c.h.b16 %v8137
  %v8484 = vunpack.c.l.b16 %v8138
  %v8485 = vunpack.c.h.b16 %v8138
  %v8486 = vunpack.c.l.b16 %v8139
  %v8487 = vunpack.c.h.b16 %v8139
  %v8488 = vunpack.c.l.b16 %v8140
  %v8489 = vunpack.c.h.b16 %v8140
  %v8490 = vunpack.c.l.b16 %v8141
  %v8491 = vunpack.c.h.b16 %v8141
  %v8492 = vunpack.c.l.b16 %v8142
  %v8493 = vunpack.c.h.b16 %v8142
  %v8494 = vunpack.c.l.b16 %v8143
  %v8495 = vunpack.c.h.b16 %v8143
  %v8496 = vunpack.c.l.b16 %v8144
  %v8497 = vunpack.c.h.b16 %v8144
  %v8498 = vunpack.c.l.b16 %v8145
  %v8499 = vunpack.c.h.b16 %v8145
  %v8500 = vunpack.c.l.b16 %v8146
  %v8501 = vunpack.c.h.b16 %v8146
  %v8502 = vunpack.c.l.b16 %v8147
  %v8503 = vunpack.c.h.b16 %v8147
  %v8504 = vunpack.c.l.b16 %v8148
  %v8505 = vunpack.c.h.b16 %v8148
  %v8506 = vunpack.c.l.b16 %v8149
  %v8507 = vunpack.c.h.b16 %v8149
  %v8508 = vunpack.c.l.b16 %v8150
  %v8509 = vunpack.c.h.b16 %v8150
  %v8510 = vunpack.c.l.b16 %v8151
  %v8511 = vunpack.c.h.b16 %v8151
  %v8512 = vunpack.c.l.b16 %v8152
  %v8513 = vunpack.c.h.b16 %v8152
  %v8514 = vunpack.c.l.b16 %v8153
  %v8515 = vunpack.c.h.b16 %v8153
  %v8516 = vpack.c.b16 %v8460, %v8452
  %v8517 = vpack.c.b16 %v8461, %v8453
  %v8518 = vpack.c.b16 %v8462, %v8454
  %v8519 = vpack.c.b16 %v8463, %v8455
  %v8520 = vpack.c.b16 %v8464, %v8456
  %v8521 = vpack.c.b16 %v8465, %v8457
  %v8522 = vpack.c.b16 %v8466, %v8458
  %v8523 = vpack.c.b16 %v8467, %v8459
  %v8524 = vpack.c.b16 %v8476, %v8468
  %v8525 = vpack.c.b16 %v8477, %v8469
  %v8526 = vpack.c.b16 %v8478, %v8470
  %v8527 = vpack.c.b16 %v8479, %v8471
  %v8528 = vpack.c.b16 %v8480, %v8472
  %v8529 = vpack.c.b16 %v8481, %v8473
  %v8530 = vpack.c.b16 %v8482, %v8474
  %v8531 = vpack.c.b16 %v8483, %v8475
  %v8532 = vpack.c.b16 %v8492, %v8484
  %v8533 = vpack.c.b16 %v8493, %v8485
  %v8534 = vpack.c.b16 %v8494, %v8486
  %v8535 = vpack.c.b16 %v8495, %v8487
  %v8536 = vpack.c.b16 %v8496, %v8488
  %v8537 = vpack.c.b16 %v8497, %v8489
  %v8538 = vpack.c.b16 %v8498, %v8490
  %v8539 = vpack.c.b16 %v8499, %v8491
  %v8540 = vpack.c.b16 %v8508, %v8500
  %v8541 = vpack.c.b16 %v8509, %v8501
  %v8542 = vpack.c.b16 %v8510, %v8502
  %v8543 = vpack.c.b16 %v8511, %v8503
  %v8544 = vpack.c.b16 %v8512, %v8504
  %v8545 = vpack.c.b16 %v8513, %v8505
  %v8546 = vpack.c.b16 %v8514, %v8506
  %v8547 = vpack.c.b16 %v8515, %v8507
  %8580 = vmatprep.subr.bf16.mxu0 0
  %8581 = vmatpush1.bf16.msra.mxu0 %v8192
  %8582 = vmatprep.subr.bf16.mxu0 0
  %8583 = vmatpush1.bf16.msra.mxu0 %v8195
  %8584 = vmatprep.subr.bf16.mxu0 0
  %8585 = vmatpush1.bf16.msra.mxu0 %v8198
  %8586 = vmatprep.subr.bf16.mxu0 0
  %8587 = vmatpush1.bf16.msra.mxu0 %v8201
  %8588 = vmatprep.subr.bf16.mxu0 0
  %8589 = vmatpush1.bf16.msra.mxu0 %v8058
  %8590 = vmatprep.subr.bf16.mxu0 0
  %8591 = vmatpush1.bf16.msra.mxu0 %v8059
  %8592 = vmatprep.subr.bf16.mxu0 0
  %8593 = vmatpush1.bf16.msra.mxu0 %v8060
  %8594 = vmatprep.subr.bf16.mxu0 0
  %8595 = vmatpush1.bf16.msra.mxu0 %v8061
  %8596 = vmatprep.subr.bf16.mxu0 0
  %8597 = vmatpush1.bf16.msra.mxu0 %v8225
  %8598 = vmatprep.subr.bf16.mxu0 0
  %8599 = vmatpush1.bf16.msra.mxu0 %v8227
  %8600 = vmatprep.subr.bf16.mxu0 0
  %8601 = vmatpush1.bf16.msra.mxu0 %v8229
  %8602 = vmatprep.subr.bf16.mxu0 0
  %8603 = vmatpush1.bf16.msra.mxu0 %v8231
  %8604 = vmatprep.subr.bf16.mxu0 0
  %8605 = vmatpush1.bf16.msra.mxu0 %v8237
  %8606 = vmatprep.subr.bf16.mxu0 0
  %8607 = vmatpush1.bf16.msra.mxu0 %v8239
  %8608 = vmatprep.subr.bf16.mxu0 0
  %8609 = vmatpush1.bf16.msra.mxu0 %v8241
  %8610 = vmatprep.subr.bf16.mxu0 0
  %8611 = vmatpush1.bf16.msra.mxu0 %v8243
  %8612 = vmatprep.mubr.bf16.mxu0 %v8517
  %8613 = vmatmul.mubr.bf16.gmra.mrb[0].mxu0 %v8516
  %v8614 = vpop.f32.mrb[0].mxu0
  %v8615 = vadd.f32 %v8383, %v8614
  %v8616 = vpop.f32.mrb[0].mxu0
  %v8617 = vpop.f32.mrb[0].mxu0
  %v8618 = vadd.f32 %v8388, %v8617
  %v8619 = vpop.f32.mrb[0].mxu0
  %8620 = vmatprep.mubr.bf16.mxu0 %v8525
  %8621 = vmatmul.mubr.bf16.gmra.mrb[0].mxu0 %v8524
  %v8622 = vpop.f32.mrb[0].mxu0
  %v8623 = vadd.f32 %v8393, %v8622
  %v8624 = vpop.f32.mrb[0].mxu0
  %v8625 = vpop.f32.mrb[0].mxu0
  %v8626 = vadd.f32 %v8398, %v8625
  %v8627 = vpop.f32.mrb[0].mxu0
  %8628 = vmatprep.mubr.bf16.mxu0 %v8533
  %8629 = vmatmul.mubr.bf16.gmra.mrb[0].mxu0 %v8532
  %v8630 = vpop.f32.mrb[0].mxu0
  %v8631 = vadd.f32 %v8403, %v8630
  %v8632 = vpop.f32.mrb[0].mxu0
  %v8633 = vpop.f32.mrb[0].mxu0
  %v8634 = vadd.f32 %v8408, %v8633
  %v8635 = vpop.f32.mrb[0].mxu0
  %8636 = vmatprep.mubr.bf16.mxu0 %v8541
  %8637 = vmatmul.mubr.bf16.gmra.mrb[0].mxu0 %v8540
  %v8638 = vpop.f32.mrb[0].mxu0
  %v8639 = vadd.f32 %v8413, %v8638
  %v8640 = vpop.f32.mrb[0].mxu0
  %v8641 = vpop.f32.mrb[0].mxu0
  %v8642 = vadd.f32 %v8418, %v8641
  %v8643 = vpop.f32.mrb[0].mxu0
  %8644 = vdwg.mxu0
  %8645 = vmatprep.subr.bf16.mxu0 0
  %8646 = vmatpush1.bf16.msra.mxu0 %v8249
  %8647 = vmatprep.subr.bf16.mxu0 0
  %8648 = vmatpush1.bf16.msra.mxu0 %v8251
  %8649 = vmatprep.subr.bf16.mxu0 0
  %8650 = vmatpush1.bf16.msra.mxu0 %v8253
  %8651 = vmatprep.subr.bf16.mxu0 0
  %8652 = vmatpush1.bf16.msra.mxu0 %v8255
  %8653 = vmatprep.subr.bf16.mxu0 0
  %8654 = vmatpush1.bf16.msra.mxu0 %v8261
  %8655 = vmatprep.subr.bf16.mxu0 0
  %8656 = vmatpush1.bf16.msra.mxu0 %v8263
  %8657 = vmatprep.subr.bf16.mxu0 0
  %8658 = vmatpush1.bf16.msra.mxu0 %v8265
  %8659 = vmatprep.subr.bf16.mxu0 0
  %8660 = vmatpush1.bf16.msra.mxu0 %v8267
  %8661 = vmatprep.subr.bf16.mxu0 0
  %8662 = vmatpush1.bf16.msra.mxu0 %v8273
  %8663 = vmatprep.subr.bf16.mxu0 0
  %8664 = vmatpush1.bf16.msra.mxu0 %v8275
  %8665 = vmatprep.subr.bf16.mxu0 0
  %8666 = vmatpush1.bf16.msra.mxu0 %v8277
  %8667 = vmatprep.subr.bf16.mxu0 0
  %8668 = vmatpush1.bf16.msra.mxu0 %v8279
  %8669 = vmatprep.subr.bf16.mxu0 0
  %8670 = vmatpush1.bf16.msra.mxu0 %v8285
  %8671 = vmatprep.subr.bf16.mxu0 0
  %8672 = vmatpush1.bf16.msra.mxu0 %v8287
  %8673 = vmatprep.subr.bf16.mxu0 0
  %8674 = vmatpush1.bf16.msra.mxu0 %v8289
  %8675 = vmatprep.subr.bf16.mxu0 0
  %8676 = vmatpush1.bf16.msra.mxu0 %v8291
  %8677 = vmatprep.mubr.bf16.mxu0 %v8519
  %8678 = vmatmul.mubr.bf16.gmra.mrb[0].mxu0 %v8518
  %v8679 = vpop.f32.mrb[0].mxu0
  %v8680 = vadd.f32 %v8615, %v8679
  %v8681 = vpop.f32.mrb[0].mxu0
  %v8682 = vpop.f32.mrb[0].mxu0
  %v8683 = vadd.f32 %v8618, %v8682
  %v8684 = vpop.f32.mrb[0].mxu0
  %8685 = vmatprep.mubr.bf16.mxu0 %v8527
  %8686 = vmatmul.mubr.bf16.gmra.mrb[0].mxu0 %v8526
  %v8687 = vpop.f32.mrb[0].mxu0
  %v8688 = vadd.f32 %v8623, %v8687
  %v8689 = vpop.f32.mrb[0].mxu0
  %v8690 = vpop.f32.mrb[0].mxu0
  %v8691 = vadd.f32 %v8626, %v8690
  %v8692 = vpop.f32.mrb[0].mxu0
  %8693 = vmatprep.mubr.bf16.mxu0 %v8535
  %8694 = vmatmul.mubr.bf16.gmra.mrb[0].mxu0 %v8534
  %v8695 = vpop.f32.mrb[0].mxu0
  %v8696 = vadd.f32 %v8631, %v8695
  %v8697 = vpop.f32.mrb[0].mxu0
  %v8698 = vpop.f32.mrb[0].mxu0
  %v8699 = vadd.f32 %v8634, %v8698
  %v8700 = vpop.f32.mrb[0].mxu0
  %8701 = vmatprep.mubr.bf16.mxu0 %v8543
  %8702 = vmatmul.mubr.bf16.gmra.mrb[0].mxu0 %v8542
  %v8703 = vpop.f32.mrb[0].mxu0
  %v8704 = vadd.f32 %v8639, %v8703
  %v8705 = vpop.f32.mrb[0].mxu0
  %v8706 = vpop.f32.mrb[0].mxu0
  %v8707 = vadd.f32 %v8642, %v8706
  %v8708 = vpop.f32.mrb[0].mxu0
  %8709 = vdwg.mxu0
  %8710 = vmatprep.subr.bf16.mxu0 0
  %8711 = vmatpush1.bf16.msra.mxu0 %v8297
  %8712 = vmatprep.subr.bf16.mxu0 0
  %8713 = vmatpush1.bf16.msra.mxu0 %v8299
  %8714 = vmatprep.subr.bf16.mxu0 0
  %8715 = vmatpush1.bf16.msra.mxu0 %v8301
  %8716 = vmatprep.subr.bf16.mxu0 0
  %8717 = vmatpush1.bf16.msra.mxu0 %v8303
  %8718 = vmatprep.subr.bf16.mxu0 0
  %8719 = vmatpush1.bf16.msra.mxu0 %v8309
  %8720 = vmatprep.subr.bf16.mxu0 0
  %8721 = vmatpush1.bf16.msra.mxu0 %v8311
  %8722 = vmatprep.subr.bf16.mxu0 0
  %8723 = vmatpush1.bf16.msra.mxu0 %v8313
  %8724 = vmatprep.subr.bf16.mxu0 0
  %8725 = vmatpush1.bf16.msra.mxu0 %v8315
  %8726 = vmatprep.subr.bf16.mxu0 0
  %8727 = vmatpush1.bf16.msra.mxu0 %v8321
  %8728 = vmatprep.subr.bf16.mxu0 0
  %8729 = vmatpush1.bf16.msra.mxu0 %v8323
  %8730 = vmatprep.subr.bf16.mxu0 0
  %8731 = vmatpush1.bf16.msra.mxu0 %v8325
  %8732 = vmatprep.subr.bf16.mxu0 0
  %8733 = vmatpush1.bf16.msra.mxu0 %v8327
  %8734 = vmatprep.subr.bf16.mxu0 0
  %8735 = vmatpush1.bf16.msra.mxu0 %v8333
  %8736 = vmatprep.subr.bf16.mxu0 0
  %8737 = vmatpush1.bf16.msra.mxu0 %v8335
  %8738 = vmatprep.subr.bf16.mxu0 0
  %8739 = vmatpush1.bf16.msra.mxu0 %v8337
  %8740 = vmatprep.subr.bf16.mxu0 0
  %8741 = vmatpush1.bf16.msra.mxu0 %v8339
  %8742 = vmatprep.mubr.bf16.mxu0 %v8521
  %8743 = vmatmul.mubr.bf16.gmra.mrb[0].mxu0 %v8520
  %v8744 = vpop.f32.mrb[0].mxu0
  %v8745 = vadd.f32 %v8680, %v8744
  %v8746 = vpop.f32.mrb[0].mxu0
  %v8747 = vpop.f32.mrb[0].mxu0
  %v8748 = vadd.f32 %v8683, %v8747
  %v8749 = vpop.f32.mrb[0].mxu0
  %8750 = vmatprep.mubr.bf16.mxu0 %v8529
  %8751 = vmatmul.mubr.bf16.gmra.mrb[0].mxu0 %v8528
  %v8752 = vpop.f32.mrb[0].mxu0
  %v8753 = vadd.f32 %v8688, %v8752
  %v8754 = vpop.f32.mrb[0].mxu0
  %v8755 = vpop.f32.mrb[0].mxu0
  %v8756 = vadd.f32 %v8691, %v8755
  %v8757 = vpop.f32.mrb[0].mxu0
  %8758 = vmatprep.mubr.bf16.mxu0 %v8537
  %8759 = vmatmul.mubr.bf16.gmra.mrb[0].mxu0 %v8536
  %v8760 = vpop.f32.mrb[0].mxu0
  %v8761 = vadd.f32 %v8696, %v8760
  %v8762 = vpop.f32.mrb[0].mxu0
  %v8763 = vpop.f32.mrb[0].mxu0
  %v8764 = vadd.f32 %v8699, %v8763
  %v8765 = vpop.f32.mrb[0].mxu0
  %8766 = vmatprep.mubr.bf16.mxu0 %v8545
  %8767 = vmatmul.mubr.bf16.gmra.mrb[0].mxu0 %v8544
  %v8768 = vpop.f32.mrb[0].mxu0
  %v8769 = vadd.f32 %v8704, %v8768
  %v8770 = vpop.f32.mrb[0].mxu0
  %v8771 = vpop.f32.mrb[0].mxu0
  %v8772 = vadd.f32 %v8707, %v8771
  %v8773 = vpop.f32.mrb[0].mxu0
  %8774 = vdwg.mxu0
  %8775 = vmatprep.subr.bf16.mxu0 0
  %8776 = vmatpush1.bf16.msra.mxu0 %v8345
  %8777 = vmatprep.subr.bf16.mxu0 0
  %8778 = vmatpush1.bf16.msra.mxu0 %v8347
  %8779 = vmatprep.subr.bf16.mxu0 0
  %8780 = vmatpush1.bf16.msra.mxu0 %v8349
  %8781 = vmatprep.subr.bf16.mxu0 0
  %8782 = vmatpush1.bf16.msra.mxu0 %v8351
  %8783 = vmatprep.subr.bf16.mxu0 0
  %8784 = vmatpush1.bf16.msra.mxu0 %v8357
  %8785 = vmatprep.subr.bf16.mxu0 0
  %8786 = vmatpush1.bf16.msra.mxu0 %v8359
  %8787 = vmatprep.subr.bf16.mxu0 0
  %8788 = vmatpush1.bf16.msra.mxu0 %v8361
  %8789 = vmatprep.subr.bf16.mxu0 0
  %8790 = vmatpush1.bf16.msra.mxu0 %v8363
  %8791 = vmatprep.subr.bf16.mxu0 0
  %8792 = vmatpush1.bf16.msra.mxu0 %v8369
  %8793 = vmatprep.subr.bf16.mxu0 0
  %8794 = vmatpush1.bf16.msra.mxu0 %v8371
  %8795 = vmatprep.subr.bf16.mxu0 0
  %8796 = vmatpush1.bf16.msra.mxu0 %v8373
  %8797 = vmatprep.subr.bf16.mxu0 0
  %8798 = vmatpush1.bf16.msra.mxu0 %v8375
  %8799 = vmatprep.subr.bf16.mxu0 0
  %8800 = vmatpush1.bf16.msra.mxu0 %v8213
  %8801 = vmatprep.subr.bf16.mxu0 0
  %8802 = vmatpush1.bf16.msra.mxu0 %v8216
  %8803 = vmatprep.subr.bf16.mxu0 0
  %8804 = vmatpush1.bf16.msra.mxu0 %v8219
  %8805 = vmatprep.subr.bf16.mxu0 0
  %8806 = vmatpush1.bf16.msra.mxu0 %v8222
  %8807 = vmatprep.mubr.bf16.mxu0 %v8523
  %8808 = vmatmul.mubr.bf16.gmra.mrb[0].mxu0 %v8522
  %v8809 = vpop.f32.mrb[0].mxu0
  %v8810 = vadd.f32 %v8745, %v8809
  %v8811 = vpop.f32.mrb[0].mxu0
  %v8812 = vpop.f32.mrb[0].mxu0
  %v8813 = vadd.f32 %v8748, %v8812
  %v8814 = vpop.f32.mrb[0].mxu0
  %8815 = vmatprep.mubr.bf16.mxu0 %v8531
  %8816 = vmatmul.mubr.bf16.gmra.mrb[0].mxu0 %v8530
  %v8817 = vpop.f32.mrb[0].mxu0
  %v8818 = vadd.f32 %v8753, %v8817
  %v8819 = vpop.f32.mrb[0].mxu0
  %v8820 = vpop.f32.mrb[0].mxu0
  %v8821 = vadd.f32 %v8756, %v8820
  %v8822 = vpop.f32.mrb[0].mxu0
  %8823 = vmatprep.mubr.bf16.mxu0 %v8539
  %8824 = vmatmul.mubr.bf16.gmra.mrb[0].mxu0 %v8538
  %v8825 = vpop.f32.mrb[0].mxu0
  %v8826 = vadd.f32 %v8761, %v8825
  %v8827 = vpop.f32.mrb[0].mxu0
  %v8828 = vpop.f32.mrb[0].mxu0
  %v8829 = vadd.f32 %v8764, %v8828
  %v8830 = vpop.f32.mrb[0].mxu0
  %8831 = vmatprep.mubr.bf16.mxu0 %v8547
  %8832 = vmatmul.mubr.bf16.gmra.mrb[0].mxu0 %v8546
  %v8833 = vpop.f32.mrb[0].mxu0
  %v8834 = vadd.f32 %v8769, %v8833
  %v8835 = vpop.f32.mrb[0].mxu0
  %v8836 = vpop.f32.mrb[0].mxu0
  %v8837 = vadd.f32 %v8772, %v8836
  %v8838 = vpop.f32.mrb[0].mxu0
  %8839 = vdwg.mxu0
  %v8840 = vmax.f32 %v8810, 1e-06
  %v8841 = vmax.f32 %v8813, 1e-06
  %v8842 = vmax.f32 %v8818, 1e-06
  %v8843 = vmax.f32 %v8821, 1e-06
  %v8844 = vmax.f32 %v8826, 1e-06
  %v8845 = vmax.f32 %v8829, 1e-06
  %v8846 = vmax.f32 %v8834, 1e-06
  %v8847 = vmax.f32 %v8837, 1e-06
  %v8848 = vmul.f32 %v8840, %v8840
  %v8849 = vmul.f32 %v8841, %v8841
  %v8850 = vmul.f32 %v8842, %v8842
  %v8851 = vmul.f32 %v8843, %v8843
  %v8852 = vmul.f32 %v8844, %v8844
  %v8853 = vmul.f32 %v8845, %v8845
  %v8854 = vmul.f32 %v8846, %v8846
  %v8855 = vmul.f32 %v8847, %v8847
  %v8856 = vmul.f32 %v8848, %v8840
  %v8857 = vmul.f32 %v8849, %v8841
  %v8858 = vmul.f32 %v8850, %v8842
  %v8859 = vmul.f32 %v8851, %v8843
  %v8860 = vmul.f32 %v8852, %v8844
  %v8861 = vmul.f32 %v8853, %v8845
  %v8862 = vmul.f32 %v8854, %v8846
  %v8863 = vmul.f32 %v8855, %v8847
  %v8864 = vpack.c.bf16 %v8857, %v8856
  %v8865 = vpack.c.bf16 %v8859, %v8858
  %v8866 = vpack.c.bf16 %v8861, %v8860
  %v8867 = vpack.c.bf16 %v8863, %v8862
  %v8869 = vsel %vm8211, %v8864, 0
  %v8872 = vsel %vm8211, %v8865, 0
  %v8875 = vsel %vm8211, %v8866, 0
  %v8878 = vsel %vm8211, %v8867, 0
  %v8881 = vsel %vm506, %v8178, 0
  %8883 = vmatprep.subr.bf16.mxu0 0
  %8884 = vmatpush1.bf16.msra.mxu0 %v8881
  %8885 = vmatprep.subr.bf16.mxu0 0
  %8886 = vmatpush1.bf16.msra.mxu0 0
  %8887 = vmatprep.subr.bf16.mxu0 0
  %8888 = vmatpush1.bf16.msra.mxu0 0
  %8889 = vmatprep.subr.bf16.mxu0 0
  %8890 = vmatpush1.bf16.msra.mxu0 0
  %8891 = vmatprep.subr.bf16.mxu0 0
  %8892 = vmatpush1.bf16.msra.mxu0 0
  %8893 = vmatprep.subr.bf16.mxu0 0
  %8894 = vmatpush1.bf16.msra.mxu0 0
  %8895 = vmatprep.subr.bf16.mxu0 0
  %8896 = vmatpush1.bf16.msra.mxu0 0
  %8897 = vmatprep.subr.bf16.mxu0 0
  %8898 = vmatpush1.bf16.msra.mxu0 0
  %8899 = vmatprep.subr.bf16.mxu0 0
  %8900 = vmatpush1.bf16.msra.mxu0 0
  %8901 = vmatprep.subr.bf16.mxu0 0
  %8902 = vmatpush1.bf16.msra.mxu0 0
  %8903 = vmatprep.subr.bf16.mxu0 0
  %8904 = vmatpush1.bf16.msra.mxu0 0
  %8905 = vmatprep.subr.bf16.mxu0 0
  %8906 = vmatpush1.bf16.msra.mxu0 0
  %8907 = vmatprep.subr.bf16.mxu0 0
  %8908 = vmatpush1.bf16.msra.mxu0 0
  %8909 = vmatprep.subr.bf16.mxu0 0
  %8910 = vmatpush1.bf16.msra.mxu0 0
  %8911 = vmatprep.subr.bf16.mxu0 0
  %8912 = vmatpush1.bf16.msra.mxu0 0
  %8913 = vmatprep.subr.bf16.mxu0 0
  %8914 = vmatpush1.bf16.msra.mxu0 0
  %8915 = vmatprep.mubr.bf16.mxu0 0
  %8916 = vmatmul.mubr.bf16.gmra.mrb[0].mxu0 %v8869
  %v8917 = vpop.f32.mrb[0].mxu0
  %v8918 = vadd.f32 0.0, %v8917
  %v8919 = vpop.f32.mrb[0].mxu0
  %v8920 = vpop.f32.mrb[0].mxu0
  %v8921 = vadd.f32 0.0, %v8920
  %v8922 = vpop.f32.mrb[0].mxu0
  %8923 = vmatprep.mubr.bf16.mxu0 0
  %8924 = vmatmul.mubr.bf16.gmra.mrb[0].mxu0 %v8872
  %v8925 = vpop.f32.mrb[0].mxu0
  %v8926 = vadd.f32 0.0, %v8925
  %v8927 = vpop.f32.mrb[0].mxu0
  %v8928 = vpop.f32.mrb[0].mxu0
  %v8929 = vadd.f32 0.0, %v8928
  %v8930 = vpop.f32.mrb[0].mxu0
  %8931 = vmatprep.mubr.bf16.mxu0 0
  %8932 = vmatmul.mubr.bf16.gmra.mrb[0].mxu0 %v8875
  %v8933 = vpop.f32.mrb[0].mxu0
  %v8934 = vadd.f32 0.0, %v8933
  %v8935 = vpop.f32.mrb[0].mxu0
  %v8936 = vpop.f32.mrb[0].mxu0
  %v8937 = vadd.f32 0.0, %v8936
  %v8938 = vpop.f32.mrb[0].mxu0
  %8939 = vmatprep.mubr.bf16.mxu0 0
  %8940 = vmatmul.mubr.bf16.gmra.mrb[0].mxu0 %v8878
  %v8941 = vpop.f32.mrb[0].mxu0
  %v8942 = vadd.f32 0.0, %v8941
  %v8943 = vpop.f32.mrb[0].mxu0
  %v8944 = vpop.f32.mrb[0].mxu0
  %v8945 = vadd.f32 0.0, %v8944
  %v8946 = vpop.f32.mrb[0].mxu0
  %8947 = vdwg.mxu0
  %v8948 = vlog2.pop %v8918
  %v8949 = vmul.f32 %v8948, 0.6931472
  %v8950 = vlog2.pop %v8921
  %v8951 = vmul.f32 %v8950, 0.6931472
  %v8952 = vlog2.pop %v8926
  %v8953 = vmul.f32 %v8952, 0.6931472
  %v8954 = vlog2.pop %v8929
  %v8955 = vmul.f32 %v8954, 0.6931472
  %v8956 = vlog2.pop %v8934
  %v8957 = vmul.f32 %v8956, 0.6931472
  %v8958 = vlog2.pop %v8937
  %v8959 = vmul.f32 %v8958, 0.6931472
  %v8960 = vlog2.pop %v8942
  %v8961 = vmul.f32 %v8960, 0.6931472
  %v8962 = vlog2.pop %v8945
  %v8963 = vmul.f32 %v8962, 0.6931472
  %v8964 = vmul.f32 %v8949, 0.33333334
  %v8965 = vmul.f32 %v8951, 0.33333334
  %v8966 = vmul.f32 %v8953, 0.33333334
  %v8967 = vmul.f32 %v8955, 0.33333334
  %v8968 = vmul.f32 %v8957, 0.33333334
  %v8969 = vmul.f32 %v8959, 0.33333334
  %v8970 = vmul.f32 %v8961, 0.33333334
  %v8971 = vmul.f32 %v8963, 0.33333334
  %v8972 = vmul.f32 %v8964, 1.442695
  %v8973 = vpow.pop %v8972
  %v8974 = vmul.f32 %v8965, 1.442695
  %v8975 = vpow.pop %v8974
  %v8976 = vmul.f32 %v8966, 1.442695
  %v8977 = vpow.pop %v8976
  %v8978 = vmul.f32 %v8967, 1.442695
  %v8979 = vpow.pop %v8978
  %v8980 = vmul.f32 %v8968, 1.442695
  %v8981 = vpow.pop %v8980
  %v8982 = vmul.f32 %v8969, 1.442695
  %v8983 = vpow.pop %v8982
  %v8984 = vmul.f32 %v8970, 1.442695
  %v8985 = vpow.pop %v8984
  %v8986 = vmul.f32 %v8971, 1.442695
  %v8987 = vpow.pop %v8986
  %8992 = vrot.lane.b32.xlu0 %v8118, 1
  %v8993 = vpop.permute.xlu0 %8992
  %8994 = vrot.lane.b32.xlu0 %v8119, 1
  %v8995 = vpop.permute.xlu0 %8994
  %8996 = vrot.lane.b32.xlu0 %v8120, 1
  %v8997 = vpop.permute.xlu0 %8996
  %8998 = vrot.lane.b32.xlu0 %v8121, 1
  %v8999 = vpop.permute.xlu0 %8998
  %v9001 = vsel %vm4887, 0, %v8993
  %v9004 = vsel %vm4887, 0, %v8995
  %v9007 = vsel %vm4887, 0, %v8997
  %v9010 = vsel %vm4887, 0, %v8999
  %9012 = vrot.lane.b32.xlu0 %v8118, 114
  %v9013 = vpop.permute.xlu0 %9012
  %9014 = vrot.lane.b32.xlu0 %v8119, 114
  %v9015 = vpop.permute.xlu0 %9014
  %9016 = vrot.lane.b32.xlu0 %v8120, 114
  %v9017 = vpop.permute.xlu0 %9016
  %9018 = vrot.lane.b32.xlu0 %v8121, 114
  %v9019 = vpop.permute.xlu0 %9018
  %v9021 = vsel %vm8211, %v9013, 0
  %v9024 = vsel %vm8211, %v9015, 0
  %v9027 = vsel %vm8211, %v9017, 0
  %v9030 = vsel %vm8211, %v9019, 0
  %9032 = vrot.lane.b32.xlu0 %v8118, 127
  %v9033 = vpop.permute.xlu0 %9032
  %9034 = vrot.lane.b32.xlu0 %v8119, 127
  %v9035 = vpop.permute.xlu0 %9034
  %9036 = vrot.lane.b32.xlu0 %v8120, 127
  %v9037 = vpop.permute.xlu0 %9036
  %9038 = vrot.lane.b32.xlu0 %v8121, 127
  %v9039 = vpop.permute.xlu0 %9038
  %9044 = vrot.lane.b32.xlu0 %v8118, 126
  %v9045 = vpop.permute.xlu0 %9044
  %9046 = vrot.lane.b32.xlu0 %v8119, 126
  %v9047 = vpop.permute.xlu0 %9046
  %9048 = vrot.lane.b32.xlu0 %v8120, 126
  %v9049 = vpop.permute.xlu0 %9048
  %9050 = vrot.lane.b32.xlu0 %v8121, 126
  %v9051 = vpop.permute.xlu0 %9050
  %9056 = vrot.lane.b32.xlu0 %v8118, 125
  %v9057 = vpop.permute.xlu0 %9056
  %9058 = vrot.lane.b32.xlu0 %v8119, 125
  %v9059 = vpop.permute.xlu0 %9058
  %9060 = vrot.lane.b32.xlu0 %v8120, 125
  %v9061 = vpop.permute.xlu0 %9060
  %9062 = vrot.lane.b32.xlu0 %v8121, 125
  %v9063 = vpop.permute.xlu0 %9062
  %9068 = vrot.lane.b32.xlu0 %v8118, 124
  %v9069 = vpop.permute.xlu0 %9068
  %9070 = vrot.lane.b32.xlu0 %v8119, 124
  %v9071 = vpop.permute.xlu0 %9070
  %9072 = vrot.lane.b32.xlu0 %v8120, 124
  %v9073 = vpop.permute.xlu0 %9072
  %9074 = vrot.lane.b32.xlu0 %v8121, 124
  %v9075 = vpop.permute.xlu0 %9074
  %9080 = vrot.lane.b32.xlu0 %v8118, 123
  %v9081 = vpop.permute.xlu0 %9080
  %9082 = vrot.lane.b32.xlu0 %v8119, 123
  %v9083 = vpop.permute.xlu0 %9082
  %9084 = vrot.lane.b32.xlu0 %v8120, 123
  %v9085 = vpop.permute.xlu0 %9084
  %9086 = vrot.lane.b32.xlu0 %v8121, 123
  %v9087 = vpop.permute.xlu0 %9086
  %9092 = vrot.lane.b32.xlu0 %v8118, 122
  %v9093 = vpop.permute.xlu0 %9092
  %9094 = vrot.lane.b32.xlu0 %v8119, 122
  %v9095 = vpop.permute.xlu0 %9094
  %9096 = vrot.lane.b32.xlu0 %v8120, 122
  %v9097 = vpop.permute.xlu0 %9096
  %9098 = vrot.lane.b32.xlu0 %v8121, 122
  %v9099 = vpop.permute.xlu0 %9098
  %9104 = vrot.lane.b32.xlu0 %v8118, 121
  %v9105 = vpop.permute.xlu0 %9104
  %9106 = vrot.lane.b32.xlu0 %v8119, 121
  %v9107 = vpop.permute.xlu0 %9106
  %9108 = vrot.lane.b32.xlu0 %v8120, 121
  %v9109 = vpop.permute.xlu0 %9108
  %9110 = vrot.lane.b32.xlu0 %v8121, 121
  %v9111 = vpop.permute.xlu0 %9110
  %9116 = vrot.lane.b32.xlu0 %v8118, 120
  %v9117 = vpop.permute.xlu0 %9116
  %9118 = vrot.lane.b32.xlu0 %v8119, 120
  %v9119 = vpop.permute.xlu0 %9118
  %9120 = vrot.lane.b32.xlu0 %v8120, 120
  %v9121 = vpop.permute.xlu0 %9120
  %9122 = vrot.lane.b32.xlu0 %v8121, 120
  %v9123 = vpop.permute.xlu0 %9122
  %9128 = vrot.lane.b32.xlu0 %v8118, 119
  %v9129 = vpop.permute.xlu0 %9128
  %9130 = vrot.lane.b32.xlu0 %v8119, 119
  %v9131 = vpop.permute.xlu0 %9130
  %9132 = vrot.lane.b32.xlu0 %v8120, 119
  %v9133 = vpop.permute.xlu0 %9132
  %9134 = vrot.lane.b32.xlu0 %v8121, 119
  %v9135 = vpop.permute.xlu0 %9134
  %9140 = vrot.lane.b32.xlu0 %v8118, 118
  %v9141 = vpop.permute.xlu0 %9140
  %9142 = vrot.lane.b32.xlu0 %v8119, 118
  %v9143 = vpop.permute.xlu0 %9142
  %9144 = vrot.lane.b32.xlu0 %v8120, 118
  %v9145 = vpop.permute.xlu0 %9144
  %9146 = vrot.lane.b32.xlu0 %v8121, 118
  %v9147 = vpop.permute.xlu0 %9146
  %9152 = vrot.lane.b32.xlu0 %v8118, 117
  %v9153 = vpop.permute.xlu0 %9152
  %9154 = vrot.lane.b32.xlu0 %v8119, 117
  %v9155 = vpop.permute.xlu0 %9154
  %9156 = vrot.lane.b32.xlu0 %v8120, 117
  %v9157 = vpop.permute.xlu0 %9156
  %9158 = vrot.lane.b32.xlu0 %v8121, 117
  %v9159 = vpop.permute.xlu0 %9158
  %9164 = vrot.lane.b32.xlu0 %v8118, 116
  %v9165 = vpop.permute.xlu0 %9164
  %9166 = vrot.lane.b32.xlu0 %v8119, 116
  %v9167 = vpop.permute.xlu0 %9166
  %9168 = vrot.lane.b32.xlu0 %v8120, 116
  %v9169 = vpop.permute.xlu0 %9168
  %9170 = vrot.lane.b32.xlu0 %v8121, 116
  %v9171 = vpop.permute.xlu0 %9170
  %9176 = vrot.lane.b32.xlu0 %v8118, 115
  %v9177 = vpop.permute.xlu0 %9176
  %9178 = vrot.lane.b32.xlu0 %v8119, 115
  %v9179 = vpop.permute.xlu0 %9178
  %9180 = vrot.lane.b32.xlu0 %v8120, 115
  %v9181 = vpop.permute.xlu0 %9180
  %9182 = vrot.lane.b32.xlu0 %v8121, 115
  %v9183 = vpop.permute.xlu0 %9182
  %9188 = vmatprep.subr.bf16.mxu0 0
  %9189 = vmatpush1.bf16.msra.mxu0 %v9001
  %9190 = vmatprep.subr.bf16.mxu0 0
  %9191 = vmatpush1.bf16.msra.mxu0 %v9004
  %9192 = vmatprep.subr.bf16.mxu0 0
  %9193 = vmatpush1.bf16.msra.mxu0 %v9007
  %9194 = vmatprep.subr.bf16.mxu0 0
  %9195 = vmatpush1.bf16.msra.mxu0 %v9010
  %9196 = vmatprep.subr.bf16.mxu0 0
  %9197 = vmatpush1.bf16.msra.mxu0 %v8118
  %9198 = vmatprep.subr.bf16.mxu0 0
  %9199 = vmatpush1.bf16.msra.mxu0 %v8119
  %9200 = vmatprep.subr.bf16.mxu0 0
  %9201 = vmatpush1.bf16.msra.mxu0 %v8120
  %9202 = vmatprep.subr.bf16.mxu0 0
  %9203 = vmatpush1.bf16.msra.mxu0 %v8121
  %9204 = vmatprep.subr.bf16.mxu0 0
  %9205 = vmatpush1.bf16.msra.mxu0 %v9033
  %9206 = vmatprep.subr.bf16.mxu0 0
  %9207 = vmatpush1.bf16.msra.mxu0 %v9035
  %9208 = vmatprep.subr.bf16.mxu0 0
  %9209 = vmatpush1.bf16.msra.mxu0 %v9037
  %9210 = vmatprep.subr.bf16.mxu0 0
  %9211 = vmatpush1.bf16.msra.mxu0 %v9039
  %9212 = vmatprep.subr.bf16.mxu0 0
  %9213 = vmatpush1.bf16.msra.mxu0 %v9045
  %9214 = vmatprep.subr.bf16.mxu0 0
  %9215 = vmatpush1.bf16.msra.mxu0 %v9047
  %9216 = vmatprep.subr.bf16.mxu0 0
  %9217 = vmatpush1.bf16.msra.mxu0 %v9049
  %9218 = vmatprep.subr.bf16.mxu0 0
  %9219 = vmatpush1.bf16.msra.mxu0 %v9051
  %9220 = vmatprep.mubr.bf16.mxu0 %v8517
  %9221 = vmatmul.mubr.bf16.gmra.mrb[0].mxu0 %v8516
  %v9222 = vpop.f32.mrb[0].mxu0
  %v9223 = vadd.f32 %v8383, %v9222
  %v9224 = vpop.f32.mrb[0].mxu0
  %v9225 = vpop.f32.mrb[0].mxu0
  %v9226 = vadd.f32 %v8388, %v9225
  %v9227 = vpop.f32.mrb[0].mxu0
  %9228 = vmatprep.mubr.bf16.mxu0 %v8525
  %9229 = vmatmul.mubr.bf16.gmra.mrb[0].mxu0 %v8524
  %v9230 = vpop.f32.mrb[0].mxu0
  %v9231 = vadd.f32 %v8393, %v9230
  %v9232 = vpop.f32.mrb[0].mxu0
  %v9233 = vpop.f32.mrb[0].mxu0
  %v9234 = vadd.f32 %v8398, %v9233
  %v9235 = vpop.f32.mrb[0].mxu0
  %9236 = vmatprep.mubr.bf16.mxu0 %v8533
  %9237 = vmatmul.mubr.bf16.gmra.mrb[0].mxu0 %v8532
  %v9238 = vpop.f32.mrb[0].mxu0
  %v9239 = vadd.f32 %v8403, %v9238
  %v9240 = vpop.f32.mrb[0].mxu0
  %v9241 = vpop.f32.mrb[0].mxu0
  %v9242 = vadd.f32 %v8408, %v9241
  %v9243 = vpop.f32.mrb[0].mxu0
  %9244 = vmatprep.mubr.bf16.mxu0 %v8541
  %9245 = vmatmul.mubr.bf16.gmra.mrb[0].mxu0 %v8540
  %v9246 = vpop.f32.mrb[0].mxu0
  %v9247 = vadd.f32 %v8413, %v9246
  %v9248 = vpop.f32.mrb[0].mxu0
  %v9249 = vpop.f32.mrb[0].mxu0
  %v9250 = vadd.f32 %v8418, %v9249
  %v9251 = vpop.f32.mrb[0].mxu0
  %9252 = vdwg.mxu0
  %9253 = vmatprep.subr.bf16.mxu0 0
  %9254 = vmatpush1.bf16.msra.mxu0 %v9057
  %9255 = vmatprep.subr.bf16.mxu0 0
  %9256 = vmatpush1.bf16.msra.mxu0 %v9059
  %9257 = vmatprep.subr.bf16.mxu0 0
  %9258 = vmatpush1.bf16.msra.mxu0 %v9061
  %9259 = vmatprep.subr.bf16.mxu0 0
  %9260 = vmatpush1.bf16.msra.mxu0 %v9063
  %9261 = vmatprep.subr.bf16.mxu0 0
  %9262 = vmatpush1.bf16.msra.mxu0 %v9069
  %9263 = vmatprep.subr.bf16.mxu0 0
  %9264 = vmatpush1.bf16.msra.mxu0 %v9071
  %9265 = vmatprep.subr.bf16.mxu0 0
  %9266 = vmatpush1.bf16.msra.mxu0 %v9073
  %9267 = vmatprep.subr.bf16.mxu0 0
  %9268 = vmatpush1.bf16.msra.mxu0 %v9075
  %9269 = vmatprep.subr.bf16.mxu0 0
  %9270 = vmatpush1.bf16.msra.mxu0 %v9081
  %9271 = vmatprep.subr.bf16.mxu0 0
  %9272 = vmatpush1.bf16.msra.mxu0 %v9083
  %9273 = vmatprep.subr.bf16.mxu0 0
  %9274 = vmatpush1.bf16.msra.mxu0 %v9085
  %9275 = vmatprep.subr.bf16.mxu0 0
  %9276 = vmatpush1.bf16.msra.mxu0 %v9087
  %9277 = vmatprep.subr.bf16.mxu0 0
  %9278 = vmatpush1.bf16.msra.mxu0 %v9093
  %9279 = vmatprep.subr.bf16.mxu0 0
  %9280 = vmatpush1.bf16.msra.mxu0 %v9095
  %9281 = vmatprep.subr.bf16.mxu0 0
  %9282 = vmatpush1.bf16.msra.mxu0 %v9097
  %9283 = vmatprep.subr.bf16.mxu0 0
  %9284 = vmatpush1.bf16.msra.mxu0 %v9099
  %9285 = vmatprep.mubr.bf16.mxu0 %v8519
  %9286 = vmatmul.mubr.bf16.gmra.mrb[0].mxu0 %v8518
  %v9287 = vpop.f32.mrb[0].mxu0
  %v9288 = vadd.f32 %v9223, %v9287
  %v9289 = vpop.f32.mrb[0].mxu0
  %v9290 = vpop.f32.mrb[0].mxu0
  %v9291 = vadd.f32 %v9226, %v9290
  %v9292 = vpop.f32.mrb[0].mxu0
  %9293 = vmatprep.mubr.bf16.mxu0 %v8527
  %9294 = vmatmul.mubr.bf16.gmra.mrb[0].mxu0 %v8526
  %v9295 = vpop.f32.mrb[0].mxu0
  %v9296 = vadd.f32 %v9231, %v9295
  %v9297 = vpop.f32.mrb[0].mxu0
  %v9298 = vpop.f32.mrb[0].mxu0
  %v9299 = vadd.f32 %v9234, %v9298
  %v9300 = vpop.f32.mrb[0].mxu0
  %9301 = vmatprep.mubr.bf16.mxu0 %v8535
  %9302 = vmatmul.mubr.bf16.gmra.mrb[0].mxu0 %v8534
  %v9303 = vpop.f32.mrb[0].mxu0
  %v9304 = vadd.f32 %v9239, %v9303
  %v9305 = vpop.f32.mrb[0].mxu0
  %v9306 = vpop.f32.mrb[0].mxu0
  %v9307 = vadd.f32 %v9242, %v9306
  %v9308 = vpop.f32.mrb[0].mxu0
  %9309 = vmatprep.mubr.bf16.mxu0 %v8543
  %9310 = vmatmul.mubr.bf16.gmra.mrb[0].mxu0 %v8542
  %v9311 = vpop.f32.mrb[0].mxu0
  %v9312 = vadd.f32 %v9247, %v9311
  %v9313 = vpop.f32.mrb[0].mxu0
  %v9314 = vpop.f32.mrb[0].mxu0
  %v9315 = vadd.f32 %v9250, %v9314
  %v9316 = vpop.f32.mrb[0].mxu0
  %9317 = vdwg.mxu0
  %9318 = vmatprep.subr.bf16.mxu0 0
  %9319 = vmatpush1.bf16.msra.mxu0 %v9105
  %9320 = vmatprep.subr.bf16.mxu0 0
  %9321 = vmatpush1.bf16.msra.mxu0 %v9107
  %9322 = vmatprep.subr.bf16.mxu0 0
  %9323 = vmatpush1.bf16.msra.mxu0 %v9109
  %9324 = vmatprep.subr.bf16.mxu0 0
  %9325 = vmatpush1.bf16.msra.mxu0 %v9111
  %9326 = vmatprep.subr.bf16.mxu0 0
  %9327 = vmatpush1.bf16.msra.mxu0 %v9117
  %9328 = vmatprep.subr.bf16.mxu0 0
  %9329 = vmatpush1.bf16.msra.mxu0 %v9119
  %9330 = vmatprep.subr.bf16.mxu0 0
  %9331 = vmatpush1.bf16.msra.mxu0 %v9121
  %9332 = vmatprep.subr.bf16.mxu0 0
  %9333 = vmatpush1.bf16.msra.mxu0 %v9123
  %9334 = vmatprep.subr.bf16.mxu0 0
  %9335 = vmatpush1.bf16.msra.mxu0 %v9129
  %9336 = vmatprep.subr.bf16.mxu0 0
  %9337 = vmatpush1.bf16.msra.mxu0 %v9131
  %9338 = vmatprep.subr.bf16.mxu0 0
  %9339 = vmatpush1.bf16.msra.mxu0 %v9133
  %9340 = vmatprep.subr.bf16.mxu0 0
  %9341 = vmatpush1.bf16.msra.mxu0 %v9135
  %9342 = vmatprep.subr.bf16.mxu0 0
  %9343 = vmatpush1.bf16.msra.mxu0 %v9141
  %9344 = vmatprep.subr.bf16.mxu0 0
  %9345 = vmatpush1.bf16.msra.mxu0 %v9143
  %9346 = vmatprep.subr.bf16.mxu0 0
  %9347 = vmatpush1.bf16.msra.mxu0 %v9145
  %9348 = vmatprep.subr.bf16.mxu0 0
  %9349 = vmatpush1.bf16.msra.mxu0 %v9147
  %9350 = vmatprep.mubr.bf16.mxu0 %v8521
  %9351 = vmatmul.mubr.bf16.gmra.mrb[0].mxu0 %v8520
  %v9352 = vpop.f32.mrb[0].mxu0
  %v9353 = vadd.f32 %v9288, %v9352
  %v9354 = vpop.f32.mrb[0].mxu0
  %v9355 = vpop.f32.mrb[0].mxu0
  %v9356 = vadd.f32 %v9291, %v9355
  %v9357 = vpop.f32.mrb[0].mxu0
  %9358 = vmatprep.mubr.bf16.mxu0 %v8529
  %9359 = vmatmul.mubr.bf16.gmra.mrb[0].mxu0 %v8528
  %v9360 = vpop.f32.mrb[0].mxu0
  %v9361 = vadd.f32 %v9296, %v9360
  %v9362 = vpop.f32.mrb[0].mxu0
  %v9363 = vpop.f32.mrb[0].mxu0
  %v9364 = vadd.f32 %v9299, %v9363
  %v9365 = vpop.f32.mrb[0].mxu0
  %9366 = vmatprep.mubr.bf16.mxu0 %v8537
  %9367 = vmatmul.mubr.bf16.gmra.mrb[0].mxu0 %v8536
  %v9368 = vpop.f32.mrb[0].mxu0
  %v9369 = vadd.f32 %v9304, %v9368
  %v9370 = vpop.f32.mrb[0].mxu0
  %v9371 = vpop.f32.mrb[0].mxu0
  %v9372 = vadd.f32 %v9307, %v9371
  %v9373 = vpop.f32.mrb[0].mxu0
  %9374 = vmatprep.mubr.bf16.mxu0 %v8545
  %9375 = vmatmul.mubr.bf16.gmra.mrb[0].mxu0 %v8544
  %v9376 = vpop.f32.mrb[0].mxu0
  %v9377 = vadd.f32 %v9312, %v9376
  %v9378 = vpop.f32.mrb[0].mxu0
  %v9379 = vpop.f32.mrb[0].mxu0
  %v9380 = vadd.f32 %v9315, %v9379
  %v9381 = vpop.f32.mrb[0].mxu0
  %9382 = vdwg.mxu0
  %9383 = vmatprep.subr.bf16.mxu0 0
  %9384 = vmatpush1.bf16.msra.mxu0 %v9153
  %9385 = vmatprep.subr.bf16.mxu0 0
  %9386 = vmatpush1.bf16.msra.mxu0 %v9155
  %9387 = vmatprep.subr.bf16.mxu0 0
  %9388 = vmatpush1.bf16.msra.mxu0 %v9157
  %9389 = vmatprep.subr.bf16.mxu0 0
  %9390 = vmatpush1.bf16.msra.mxu0 %v9159
  %9391 = vmatprep.subr.bf16.mxu0 0
  %9392 = vmatpush1.bf16.msra.mxu0 %v9165
  %9393 = vmatprep.subr.bf16.mxu0 0
  %9394 = vmatpush1.bf16.msra.mxu0 %v9167
  %9395 = vmatprep.subr.bf16.mxu0 0
  %9396 = vmatpush1.bf16.msra.mxu0 %v9169
  %9397 = vmatprep.subr.bf16.mxu0 0
  %9398 = vmatpush1.bf16.msra.mxu0 %v9171
  %9399 = vmatprep.subr.bf16.mxu0 0
  %9400 = vmatpush1.bf16.msra.mxu0 %v9177
  %9401 = vmatprep.subr.bf16.mxu0 0
  %9402 = vmatpush1.bf16.msra.mxu0 %v9179
  %9403 = vmatprep.subr.bf16.mxu0 0
  %9404 = vmatpush1.bf16.msra.mxu0 %v9181
  %9405 = vmatprep.subr.bf16.mxu0 0
  %9406 = vmatpush1.bf16.msra.mxu0 %v9183
  %9407 = vmatprep.subr.bf16.mxu0 0
  %9408 = vmatpush1.bf16.msra.mxu0 %v9021
  %9409 = vmatprep.subr.bf16.mxu0 0
  %9410 = vmatpush1.bf16.msra.mxu0 %v9024
  %9411 = vmatprep.subr.bf16.mxu0 0
  %9412 = vmatpush1.bf16.msra.mxu0 %v9027
  %9413 = vmatprep.subr.bf16.mxu0 0
  %9414 = vmatpush1.bf16.msra.mxu0 %v9030
  %9415 = vmatprep.mubr.bf16.mxu0 %v8523
  %9416 = vmatmul.mubr.bf16.gmra.mrb[0].mxu0 %v8522
  %v9417 = vpop.f32.mrb[0].mxu0
  %v9418 = vadd.f32 %v9353, %v9417
  %v9419 = vpop.f32.mrb[0].mxu0
  %v9420 = vpop.f32.mrb[0].mxu0
  %v9421 = vadd.f32 %v9356, %v9420
  %v9422 = vpop.f32.mrb[0].mxu0
  %9423 = vmatprep.mubr.bf16.mxu0 %v8531
  %9424 = vmatmul.mubr.bf16.gmra.mrb[0].mxu0 %v8530
  %v9425 = vpop.f32.mrb[0].mxu0
  %v9426 = vadd.f32 %v9361, %v9425
  %v9427 = vpop.f32.mrb[0].mxu0
  %v9428 = vpop.f32.mrb[0].mxu0
  %v9429 = vadd.f32 %v9364, %v9428
  %v9430 = vpop.f32.mrb[0].mxu0
  %9431 = vmatprep.mubr.bf16.mxu0 %v8539
  %9432 = vmatmul.mubr.bf16.gmra.mrb[0].mxu0 %v8538
  %v9433 = vpop.f32.mrb[0].mxu0
  %v9434 = vadd.f32 %v9369, %v9433
  %v9435 = vpop.f32.mrb[0].mxu0
  %v9436 = vpop.f32.mrb[0].mxu0
  %v9437 = vadd.f32 %v9372, %v9436
  %v9438 = vpop.f32.mrb[0].mxu0
  %9439 = vmatprep.mubr.bf16.mxu0 %v8547
  %9440 = vmatmul.mubr.bf16.gmra.mrb[0].mxu0 %v8546
  %v9441 = vpop.f32.mrb[0].mxu0
  %v9442 = vadd.f32 %v9377, %v9441
  %v9443 = vpop.f32.mrb[0].mxu0
  %v9444 = vpop.f32.mrb[0].mxu0
  %v9445 = vadd.f32 %v9380, %v9444
  %v9446 = vpop.f32.mrb[0].mxu0
  %9447 = vdwg.mxu0
  %v9448 = vmax.f32 %v9418, 1e-06
  %v9449 = vmax.f32 %v9421, 1e-06
  %v9450 = vmax.f32 %v9426, 1e-06
  %v9451 = vmax.f32 %v9429, 1e-06
  %v9452 = vmax.f32 %v9434, 1e-06
  %v9453 = vmax.f32 %v9437, 1e-06
  %v9454 = vmax.f32 %v9442, 1e-06
  %v9455 = vmax.f32 %v9445, 1e-06
  %v9456 = vmul.f32 %v9448, %v9448
  %v9457 = vmul.f32 %v9449, %v9449
  %v9458 = vmul.f32 %v9450, %v9450
  %v9459 = vmul.f32 %v9451, %v9451
  %v9460 = vmul.f32 %v9452, %v9452
  %v9461 = vmul.f32 %v9453, %v9453
  %v9462 = vmul.f32 %v9454, %v9454
  %v9463 = vmul.f32 %v9455, %v9455
  %v9464 = vmul.f32 %v9456, %v9448
  %v9465 = vmul.f32 %v9457, %v9449
  %v9466 = vmul.f32 %v9458, %v9450
  %v9467 = vmul.f32 %v9459, %v9451
  %v9468 = vmul.f32 %v9460, %v9452
  %v9469 = vmul.f32 %v9461, %v9453
  %v9470 = vmul.f32 %v9462, %v9454
  %v9471 = vmul.f32 %v9463, %v9455
  %v9472 = vpack.c.bf16 %v9465, %v9464
  %v9473 = vpack.c.bf16 %v9467, %v9466
  %v9474 = vpack.c.bf16 %v9469, %v9468
  %v9475 = vpack.c.bf16 %v9471, %v9470
  %v9477 = vsel %vm8211, %v9472, 0
  %v9480 = vsel %vm8211, %v9473, 0
  %v9483 = vsel %vm8211, %v9474, 0
  %v9486 = vsel %vm8211, %v9475, 0
  %9488 = vmatprep.subr.bf16.mxu0 0
  %9489 = vmatpush1.bf16.msra.mxu0 %v8881
  %9490 = vmatprep.subr.bf16.mxu0 0
  %9491 = vmatpush1.bf16.msra.mxu0 0
  %9492 = vmatprep.subr.bf16.mxu0 0
  %9493 = vmatpush1.bf16.msra.mxu0 0
  %9494 = vmatprep.subr.bf16.mxu0 0
  %9495 = vmatpush1.bf16.msra.mxu0 0
  %9496 = vmatprep.subr.bf16.mxu0 0
  %9497 = vmatpush1.bf16.msra.mxu0 0
  %9498 = vmatprep.subr.bf16.mxu0 0
  %9499 = vmatpush1.bf16.msra.mxu0 0
  %9500 = vmatprep.subr.bf16.mxu0 0
  %9501 = vmatpush1.bf16.msra.mxu0 0
  %9502 = vmatprep.subr.bf16.mxu0 0
  %9503 = vmatpush1.bf16.msra.mxu0 0
  %9504 = vmatprep.subr.bf16.mxu0 0
  %9505 = vmatpush1.bf16.msra.mxu0 0
  %9506 = vmatprep.subr.bf16.mxu0 0
  %9507 = vmatpush1.bf16.msra.mxu0 0
  %9508 = vmatprep.subr.bf16.mxu0 0
  %9509 = vmatpush1.bf16.msra.mxu0 0
  %9510 = vmatprep.subr.bf16.mxu0 0
  %9511 = vmatpush1.bf16.msra.mxu0 0
  %9512 = vmatprep.subr.bf16.mxu0 0
  %9513 = vmatpush1.bf16.msra.mxu0 0
  %9514 = vmatprep.subr.bf16.mxu0 0
  %9515 = vmatpush1.bf16.msra.mxu0 0
  %9516 = vmatprep.subr.bf16.mxu0 0
  %9517 = vmatpush1.bf16.msra.mxu0 0
  %9518 = vmatprep.subr.bf16.mxu0 0
  %9519 = vmatpush1.bf16.msra.mxu0 0
  %9520 = vmatprep.mubr.bf16.mxu0 0
  %9521 = vmatmul.mubr.bf16.gmra.mrb[0].mxu0 %v9477
  %v9522 = vpop.f32.mrb[0].mxu0
  %v9523 = vadd.f32 0.0, %v9522
  %v9524 = vpop.f32.mrb[0].mxu0
  %v9525 = vpop.f32.mrb[0].mxu0
  %v9526 = vadd.f32 0.0, %v9525
  %v9527 = vpop.f32.mrb[0].mxu0
  %9528 = vmatprep.mubr.bf16.mxu0 0
  %9529 = vmatmul.mubr.bf16.gmra.mrb[0].mxu0 %v9480
  %v9530 = vpop.f32.mrb[0].mxu0
  %v9531 = vadd.f32 0.0, %v9530
  %v9532 = vpop.f32.mrb[0].mxu0
  %v9533 = vpop.f32.mrb[0].mxu0
  %v9534 = vadd.f32 0.0, %v9533
  %v9535 = vpop.f32.mrb[0].mxu0
  %9536 = vmatprep.mubr.bf16.mxu0 0
  %9537 = vmatmul.mubr.bf16.gmra.mrb[0].mxu0 %v9483
  %v9538 = vpop.f32.mrb[0].mxu0
  %v9539 = vadd.f32 0.0, %v9538
  %v9540 = vpop.f32.mrb[0].mxu0
  %v9541 = vpop.f32.mrb[0].mxu0
  %v9542 = vadd.f32 0.0, %v9541
  %v9543 = vpop.f32.mrb[0].mxu0
  %9544 = vmatprep.mubr.bf16.mxu0 0
  %9545 = vmatmul.mubr.bf16.gmra.mrb[0].mxu0 %v9486
  %v9546 = vpop.f32.mrb[0].mxu0
  %v9547 = vadd.f32 0.0, %v9546
  %v9548 = vpop.f32.mrb[0].mxu0
  %v9549 = vpop.f32.mrb[0].mxu0
  %v9550 = vadd.f32 0.0, %v9549
  %v9551 = vpop.f32.mrb[0].mxu0
  %9552 = vdwg.mxu0
  %v9553 = vlog2.pop %v9523
  %v9554 = vmul.f32 %v9553, 0.6931472
  %v9555 = vlog2.pop %v9526
  %v9556 = vmul.f32 %v9555, 0.6931472
  %v9557 = vlog2.pop %v9531
  %v9558 = vmul.f32 %v9557, 0.6931472
  %v9559 = vlog2.pop %v9534
  %v9560 = vmul.f32 %v9559, 0.6931472
  %v9561 = vlog2.pop %v9539
  %v9562 = vmul.f32 %v9561, 0.6931472
  %v9563 = vlog2.pop %v9542
  %v9564 = vmul.f32 %v9563, 0.6931472
  %v9565 = vlog2.pop %v9547
  %v9566 = vmul.f32 %v9565, 0.6931472
  %v9567 = vlog2.pop %v9550
  %v9568 = vmul.f32 %v9567, 0.6931472
  %v9569 = vmul.f32 %v9554, 0.33333334
  %v9570 = vmul.f32 %v9556, 0.33333334
  %v9571 = vmul.f32 %v9558, 0.33333334
  %v9572 = vmul.f32 %v9560, 0.33333334
  %v9573 = vmul.f32 %v9562, 0.33333334
  %v9574 = vmul.f32 %v9564, 0.33333334
  %v9575 = vmul.f32 %v9566, 0.33333334
  %v9576 = vmul.f32 %v9568, 0.33333334
  %v9577 = vmul.f32 %v9569, 1.442695
  %v9578 = vpow.pop %v9577
  %v9579 = vmul.f32 %v9570, 1.442695
  %v9580 = vpow.pop %v9579
  %v9581 = vmul.f32 %v9571, 1.442695
  %v9582 = vpow.pop %v9581
  %v9583 = vmul.f32 %v9572, 1.442695
  %v9584 = vpow.pop %v9583
  %v9585 = vmul.f32 %v9573, 1.442695
  %v9586 = vpow.pop %v9585
  %v9587 = vmul.f32 %v9574, 1.442695
  %v9588 = vpow.pop %v9587
  %v9589 = vmul.f32 %v9575, 1.442695
  %v9590 = vpow.pop %v9589
  %v9591 = vmul.f32 %v9576, 1.442695
  %v9592 = vpow.pop %v9591
  %vm9593 = vcmask 23552
  %v9594 = vsel %vm9593, %v8973, 0.0
  %9595 = vadd.xlane.f32.xlu0 %v9594
  %v9596 = vpop.xlane.xlu0 %9595
  %v9597 = vsel %vm9593, %v8975, 0.0
  %9598 = vadd.xlane.f32.xlu0 %v9597
  %v9599 = vpop.xlane.xlu0 %9598
  %v9600 = vsel %vm9593, %v8977, 0.0
  %9601 = vadd.xlane.f32.xlu0 %v9600
  %v9602 = vpop.xlane.xlu0 %9601
  %v9603 = vsel %vm9593, %v8979, 0.0
  %9604 = vadd.xlane.f32.xlu0 %v9603
  %v9605 = vpop.xlane.xlu0 %9604
  %v9606 = vsel %vm9593, %v8981, 0.0
  %9607 = vadd.xlane.f32.xlu0 %v9606
  %v9608 = vpop.xlane.xlu0 %9607
  %v9609 = vsel %vm9593, %v8983, 0.0
  %9610 = vadd.xlane.f32.xlu0 %v9609
  %v9611 = vpop.xlane.xlu0 %9610
  %v9612 = vsel %vm9593, %v8985, 0.0
  %9613 = vadd.xlane.f32.xlu0 %v9612
  %v9614 = vpop.xlane.xlu0 %9613
  %v9615 = vsel %vm9593, %v8987, 0.0
  %9616 = vadd.xlane.f32.xlu0 %v9615
  %v9617 = vpop.xlane.xlu0 %9616
  %v9618 = vsel %vm9593, %v9578, 0.0
  %9619 = vadd.xlane.f32.xlu0 %v9618
  %v9620 = vpop.xlane.xlu0 %9619
  %v9621 = vsel %vm9593, %v9580, 0.0
  %9622 = vadd.xlane.f32.xlu0 %v9621
  %v9623 = vpop.xlane.xlu0 %9622
  %v9624 = vsel %vm9593, %v9582, 0.0
  %9625 = vadd.xlane.f32.xlu0 %v9624
  %v9626 = vpop.xlane.xlu0 %9625
  %v9627 = vsel %vm9593, %v9584, 0.0
  %9628 = vadd.xlane.f32.xlu0 %v9627
  %v9629 = vpop.xlane.xlu0 %9628
  %v9630 = vsel %vm9593, %v9586, 0.0
  %9631 = vadd.xlane.f32.xlu0 %v9630
  %v9632 = vpop.xlane.xlu0 %9631
  %v9633 = vsel %vm9593, %v9588, 0.0
  %9634 = vadd.xlane.f32.xlu0 %v9633
  %v9635 = vpop.xlane.xlu0 %9634
  %v9636 = vsel %vm9593, %v9590, 0.0
  %9637 = vadd.xlane.f32.xlu0 %v9636
  %v9638 = vpop.xlane.xlu0 %9637
  %v9639 = vsel %vm9593, %v9592, 0.0
  %9640 = vadd.xlane.f32.xlu0 %v9639
  %v9641 = vpop.xlane.xlu0 %9640
  %v9642 = vadd.f32 %v9596, %v9620
  %v9643 = vadd.f32 %v9599, %v9623
  %v9644 = vadd.f32 %v9602, %v9626
  %v9645 = vadd.f32 %v9605, %v9629
  %v9646 = vadd.f32 %v9608, %v9632
  %v9647 = vadd.f32 %v9611, %v9635
  %v9648 = vadd.f32 %v9614, %v9638
  %v9649 = vadd.f32 %v9617, %v9641
  %v9650 = vmul.f32 %v9642, 0.16666667
  %v9651 = vmul.f32 %v9643, 0.16666667
  %v9652 = vmul.f32 %v9644, 0.16666667
  %v9653 = vmul.f32 %v9645, 0.16666667
  %v9654 = vmul.f32 %v9646, 0.16666667
  %v9655 = vmul.f32 %v9647, 0.16666667
  %v9656 = vmul.f32 %v9648, 0.16666667
  %v9657 = vmul.f32 %v9649, 0.16666667
  %v9658 = vsub.f32 %v8973, %v9650
  %v9659 = vsub.f32 %v8975, %v9651
  %v9660 = vsub.f32 %v8977, %v9652
  %v9661 = vsub.f32 %v8979, %v9653
  %v9662 = vsub.f32 %v8981, %v9654
  %v9663 = vsub.f32 %v8983, %v9655
  %v9664 = vsub.f32 %v8985, %v9656
  %v9665 = vsub.f32 %v8987, %v9657
  %v9666 = vsub.f32 %v9578, %v9650
  %v9667 = vsub.f32 %v9580, %v9651
  %v9668 = vsub.f32 %v9582, %v9652
  %v9669 = vsub.f32 %v9584, %v9653
  %v9670 = vsub.f32 %v9586, %v9654
  %v9671 = vsub.f32 %v9588, %v9655
  %v9672 = vsub.f32 %v9590, %v9656
  %v9673 = vsub.f32 %v9592, %v9657
  %v9674 = vmul.f32 %v9658, %v9658
  %v9675 = vmul.f32 %v9659, %v9659
  %v9676 = vmul.f32 %v9660, %v9660
  %v9677 = vmul.f32 %v9661, %v9661
  %v9678 = vmul.f32 %v9662, %v9662
  %v9679 = vmul.f32 %v9663, %v9663
  %v9680 = vmul.f32 %v9664, %v9664
  %v9681 = vmul.f32 %v9665, %v9665
  %v9682 = vsel %vm9593, %v9674, 0.0
  %9683 = vadd.xlane.f32.xlu0 %v9682
  %v9684 = vpop.xlane.xlu0 %9683
  %v9685 = vsel %vm9593, %v9675, 0.0
  %9686 = vadd.xlane.f32.xlu0 %v9685
  %v9687 = vpop.xlane.xlu0 %9686
  %v9688 = vsel %vm9593, %v9676, 0.0
  %9689 = vadd.xlane.f32.xlu0 %v9688
  %v9690 = vpop.xlane.xlu0 %9689
  %v9691 = vsel %vm9593, %v9677, 0.0
  %9692 = vadd.xlane.f32.xlu0 %v9691
  %v9693 = vpop.xlane.xlu0 %9692
  %v9694 = vsel %vm9593, %v9678, 0.0
  %9695 = vadd.xlane.f32.xlu0 %v9694
  %v9696 = vpop.xlane.xlu0 %9695
  %v9697 = vsel %vm9593, %v9679, 0.0
  %9698 = vadd.xlane.f32.xlu0 %v9697
  %v9699 = vpop.xlane.xlu0 %9698
  %v9700 = vsel %vm9593, %v9680, 0.0
  %9701 = vadd.xlane.f32.xlu0 %v9700
  %v9702 = vpop.xlane.xlu0 %9701
  %v9703 = vsel %vm9593, %v9681, 0.0
  %9704 = vadd.xlane.f32.xlu0 %v9703
  %v9705 = vpop.xlane.xlu0 %9704
  %v9706 = vmul.f32 %v9666, %v9666
  %v9707 = vmul.f32 %v9667, %v9667
  %v9708 = vmul.f32 %v9668, %v9668
  %v9709 = vmul.f32 %v9669, %v9669
  %v9710 = vmul.f32 %v9670, %v9670
  %v9711 = vmul.f32 %v9671, %v9671
  %v9712 = vmul.f32 %v9672, %v9672
  %v9713 = vmul.f32 %v9673, %v9673
  %v9714 = vsel %vm9593, %v9706, 0.0
  %9715 = vadd.xlane.f32.xlu0 %v9714
  %v9716 = vpop.xlane.xlu0 %9715
  %v9717 = vsel %vm9593, %v9707, 0.0
  %9718 = vadd.xlane.f32.xlu0 %v9717
  %v9719 = vpop.xlane.xlu0 %9718
  %v9720 = vsel %vm9593, %v9708, 0.0
  %9721 = vadd.xlane.f32.xlu0 %v9720
  %v9722 = vpop.xlane.xlu0 %9721
  %v9723 = vsel %vm9593, %v9709, 0.0
  %9724 = vadd.xlane.f32.xlu0 %v9723
  %v9725 = vpop.xlane.xlu0 %9724
  %v9726 = vsel %vm9593, %v9710, 0.0
  %9727 = vadd.xlane.f32.xlu0 %v9726
  %v9728 = vpop.xlane.xlu0 %9727
  %v9729 = vsel %vm9593, %v9711, 0.0
  %9730 = vadd.xlane.f32.xlu0 %v9729
  %v9731 = vpop.xlane.xlu0 %9730
  %v9732 = vsel %vm9593, %v9712, 0.0
  %9733 = vadd.xlane.f32.xlu0 %v9732
  %v9734 = vpop.xlane.xlu0 %9733
  %v9735 = vsel %vm9593, %v9713, 0.0
  %9736 = vadd.xlane.f32.xlu0 %v9735
  %v9737 = vpop.xlane.xlu0 %9736
  %v9738 = vadd.f32 %v9684, %v9716
  %v9739 = vadd.f32 %v9687, %v9719
  %v9740 = vadd.f32 %v9690, %v9722
  %v9741 = vadd.f32 %v9693, %v9725
  %v9742 = vadd.f32 %v9696, %v9728
  %v9743 = vadd.f32 %v9699, %v9731
  %v9744 = vadd.f32 %v9702, %v9734
  %v9745 = vadd.f32 %v9705, %v9737
  %v9746 = vmul.f32 %v9738, 0.16666667
  %v9747 = vmul.f32 %v9739, 0.16666667
  %v9748 = vmul.f32 %v9740, 0.16666667
  %v9749 = vmul.f32 %v9741, 0.16666667
  %v9750 = vmul.f32 %v9742, 0.16666667
  %v9751 = vmul.f32 %v9743, 0.16666667
  %v9752 = vmul.f32 %v9744, 0.16666667
  %v9753 = vmul.f32 %v9745, 0.16666667
  %v9754 = vadd.f32 %v9746, 1e-05
  %v9755 = vadd.f32 %v9747, 1e-05
  %v9756 = vadd.f32 %v9748, 1e-05
  %v9757 = vadd.f32 %v9749, 1e-05
  %v9758 = vadd.f32 %v9750, 1e-05
  %v9759 = vadd.f32 %v9751, 1e-05
  %v9760 = vadd.f32 %v9752, 1e-05
  %v9761 = vadd.f32 %v9753, 1e-05
  %v9762 = vrsqrt.pop %v9754
  %v9763 = vrsqrt.pop %v9755
  %v9764 = vrsqrt.pop %v9756
  %v9765 = vrsqrt.pop %v9757
  %v9766 = vrsqrt.pop %v9758
  %v9767 = vrsqrt.pop %v9759
  %v9768 = vrsqrt.pop %v9760
  %v9769 = vrsqrt.pop %v9761
  %v9770 = vmul.f32 %v9762, %v8162
  %v9771 = vmul.f32 %v9763, %v8163
  %v9772 = vmul.f32 %v9764, %v8164
  %v9773 = vmul.f32 %v9765, %v8165
  %v9774 = vmul.f32 %v9766, %v8166
  %v9775 = vmul.f32 %v9767, %v8167
  %v9776 = vmul.f32 %v9768, %v8168
  %v9777 = vmul.f32 %v9769, %v8169
  %9779 = vset.pattern.permute.xlu0 0
  %9780 = vperm.xlu0 %9779, %v9770
  %v9781 = vpop.permute.xlu0 %9780
  %9784 = vset.pattern.permute.xlu0 0
  %9785 = vperm.xlu0 %9784, %v9771
  %v9786 = vpop.permute.xlu0 %9785
  %9789 = vset.pattern.permute.xlu0 0
  %9790 = vperm.xlu0 %9789, %v9772
  %v9791 = vpop.permute.xlu0 %9790
  %9794 = vset.pattern.permute.xlu0 0
  %9795 = vperm.xlu0 %9794, %v9773
  %v9796 = vpop.permute.xlu0 %9795
  %9799 = vset.pattern.permute.xlu0 0
  %9800 = vperm.xlu0 %9799, %v9774
  %v9801 = vpop.permute.xlu0 %9800
  %9804 = vset.pattern.permute.xlu0 0
  %9805 = vperm.xlu0 %9804, %v9775
  %v9806 = vpop.permute.xlu0 %9805
  %9809 = vset.pattern.permute.xlu0 0
  %9810 = vperm.xlu0 %9809, %v9776
  %v9811 = vpop.permute.xlu0 %9810
  %9814 = vset.pattern.permute.xlu0 0
  %9815 = vperm.xlu0 %9814, %v9777
  %v9816 = vpop.permute.xlu0 %9815
  %v9818 = vmul.f32 %v9658, %v9781
  %v9819 = vmul.f32 %v9659, %v9786
  %v9820 = vmul.f32 %v9660, %v9791
  %v9821 = vmul.f32 %v9661, %v9796
  %v9822 = vmul.f32 %v9662, %v9801
  %v9823 = vmul.f32 %v9663, %v9806
  %v9824 = vmul.f32 %v9664, %v9811
  %v9825 = vmul.f32 %v9665, %v9816
  %9827 = vset.pattern.permute.xlu0 0
  %9828 = vperm.xlu0 %9827, %v8170
  %v9829 = vpop.permute.xlu0 %9828
  %9832 = vset.pattern.permute.xlu0 0
  %9833 = vperm.xlu0 %9832, %v8171
  %v9834 = vpop.permute.xlu0 %9833
  %9837 = vset.pattern.permute.xlu0 0
  %9838 = vperm.xlu0 %9837, %v8172
  %v9839 = vpop.permute.xlu0 %9838
  %9842 = vset.pattern.permute.xlu0 0
  %9843 = vperm.xlu0 %9842, %v8173
  %v9844 = vpop.permute.xlu0 %9843
  %9847 = vset.pattern.permute.xlu0 0
  %9848 = vperm.xlu0 %9847, %v8174
  %v9849 = vpop.permute.xlu0 %9848
  %9852 = vset.pattern.permute.xlu0 0
  %9853 = vperm.xlu0 %9852, %v8175
  %v9854 = vpop.permute.xlu0 %9853
  %9857 = vset.pattern.permute.xlu0 0
  %9858 = vperm.xlu0 %9857, %v8176
  %v9859 = vpop.permute.xlu0 %9858
  %9862 = vset.pattern.permute.xlu0 0
  %9863 = vperm.xlu0 %9862, %v8177
  %v9864 = vpop.permute.xlu0 %9863
  %v9866 = vadd.f32 %v9818, %v9829
  %v9867 = vadd.f32 %v9819, %v9834
  %v9868 = vadd.f32 %v9820, %v9839
  %v9869 = vadd.f32 %v9821, %v9844
  %v9870 = vadd.f32 %v9822, %v9849
  %v9871 = vadd.f32 %v9823, %v9854
  %v9872 = vadd.f32 %v9824, %v9859
  %v9873 = vadd.f32 %v9825, %v9864
  %v9874 = vmul.f32 %v9866, 0.5
  %v9875 = vmul.f32 %v9867, 0.5
  %v9876 = vmul.f32 %v9868, 0.5
  %v9877 = vmul.f32 %v9869, 0.5
  %v9878 = vmul.f32 %v9870, 0.5
  %v9879 = vmul.f32 %v9871, 0.5
  %v9880 = vmul.f32 %v9872, 0.5
  %v9881 = vmul.f32 %v9873, 0.5
  %v9882 = vtanh.pop %v9874
  %v9883 = vtanh.pop %v9875
  %v9884 = vtanh.pop %v9876
  %v9885 = vtanh.pop %v9877
  %v9886 = vtanh.pop %v9878
  %v9887 = vtanh.pop %v9879
  %v9888 = vtanh.pop %v9880
  %v9889 = vtanh.pop %v9881
  %v9890 = vmul.f32 %v9882, 0.5
  %v9891 = vmul.f32 %v9883, 0.5
  %v9892 = vmul.f32 %v9884, 0.5
  %v9893 = vmul.f32 %v9885, 0.5
  %v9894 = vmul.f32 %v9886, 0.5
  %v9895 = vmul.f32 %v9887, 0.5
  %v9896 = vmul.f32 %v9888, 0.5
  %v9897 = vmul.f32 %v9889, 0.5
  %v9898 = vadd.f32 %v9890, 0.5
  %v9899 = vadd.f32 %v9891, 0.5
  %v9900 = vadd.f32 %v9892, 0.5
  %v9901 = vadd.f32 %v9893, 0.5
  %v9902 = vadd.f32 %v9894, 0.5
  %v9903 = vadd.f32 %v9895, 0.5
  %v9904 = vadd.f32 %v9896, 0.5
  %v9905 = vadd.f32 %v9897, 0.5
  %v9906 = vmul.f32 %v9866, %v9898
  %v9907 = vmul.f32 %v9867, %v9899
  %v9908 = vmul.f32 %v9868, %v9900
  %v9909 = vmul.f32 %v9869, %v9901
  %v9910 = vmul.f32 %v9870, %v9902
  %v9911 = vmul.f32 %v9871, %v9903
  %v9912 = vmul.f32 %v9872, %v9904
  %v9913 = vmul.f32 %v9873, %v9905
  %9914 = vst.msk [vmem:[%s28] sm:$0xff] %vm9593, %v9906
  %9915 = vst.msk [vmem:[%s28 + $0x8] sm:$0xff] %vm9593, %v9907
  %9916 = vst.msk [vmem:[%s28 + $0x10] sm:$0xff] %vm9593, %v9908
  %9917 = vst.msk [vmem:[%s28 + $0x18] sm:$0xff] %vm9593, %v9909
  %9918 = vst.msk [vmem:[%s28 + $0x20] sm:$0xff] %vm9593, %v9910
  %9919 = vst.msk [vmem:[%s28 + $0x28] sm:$0xff] %vm9593, %v9911
  %9920 = vst.msk [vmem:[%s28 + $0x30] sm:$0xff] %vm9593, %v9912
  %9921 = vst.msk [vmem:[%s28 + $0x38] sm:$0xff] %vm9593, %v9913
  %v9922 = vmul.f32 %v9666, %v9781
  %v9923 = vmul.f32 %v9667, %v9786
  %v9924 = vmul.f32 %v9668, %v9791
  %v9925 = vmul.f32 %v9669, %v9796
  %v9926 = vmul.f32 %v9670, %v9801
  %v9927 = vmul.f32 %v9671, %v9806
  %v9928 = vmul.f32 %v9672, %v9811
  %v9929 = vmul.f32 %v9673, %v9816
  %v9930 = vadd.f32 %v9922, %v9829
  %v9931 = vadd.f32 %v9923, %v9834
  %v9932 = vadd.f32 %v9924, %v9839
  %v9933 = vadd.f32 %v9925, %v9844
  %v9934 = vadd.f32 %v9926, %v9849
  %v9935 = vadd.f32 %v9927, %v9854
  %v9936 = vadd.f32 %v9928, %v9859
  %v9937 = vadd.f32 %v9929, %v9864
  %v9938 = vmul.f32 %v9930, 0.5
  %v9939 = vmul.f32 %v9931, 0.5
  %v9940 = vmul.f32 %v9932, 0.5
  %v9941 = vmul.f32 %v9933, 0.5
  %v9942 = vmul.f32 %v9934, 0.5
  %v9943 = vmul.f32 %v9935, 0.5
  %v9944 = vmul.f32 %v9936, 0.5
  %v9945 = vmul.f32 %v9937, 0.5
  %v9946 = vtanh.pop %v9938
  %v9947 = vtanh.pop %v9939
  %v9948 = vtanh.pop %v9940
  %v9949 = vtanh.pop %v9941
  %v9950 = vtanh.pop %v9942
  %v9951 = vtanh.pop %v9943
  %v9952 = vtanh.pop %v9944
  %v9953 = vtanh.pop %v9945
  %v9954 = vmul.f32 %v9946, 0.5
  %v9955 = vmul.f32 %v9947, 0.5
  %v9956 = vmul.f32 %v9948, 0.5
  %v9957 = vmul.f32 %v9949, 0.5
  %v9958 = vmul.f32 %v9950, 0.5
  %v9959 = vmul.f32 %v9951, 0.5
  %v9960 = vmul.f32 %v9952, 0.5
  %v9961 = vmul.f32 %v9953, 0.5
  %v9962 = vadd.f32 %v9954, 0.5
  %v9963 = vadd.f32 %v9955, 0.5
  %v9964 = vadd.f32 %v9956, 0.5
  %v9965 = vadd.f32 %v9957, 0.5
  %v9966 = vadd.f32 %v9958, 0.5
  %v9967 = vadd.f32 %v9959, 0.5
  %v9968 = vadd.f32 %v9960, 0.5
  %v9969 = vadd.f32 %v9961, 0.5
  %v9970 = vmul.f32 %v9930, %v9962
  %v9971 = vmul.f32 %v9931, %v9963
  %v9972 = vmul.f32 %v9932, %v9964
  %v9973 = vmul.f32 %v9933, %v9965
  %v9974 = vmul.f32 %v9934, %v9966
  %v9975 = vmul.f32 %v9935, %v9967
  %v9976 = vmul.f32 %v9936, %v9968
  %v9977 = vmul.f32 %v9937, %v9969
  %s9978 = scalar_lea.vmem %s28, 64
  %9979 = vst.msk [vmem:[%s9978] sm:$0xff] %vm9593, %v9970
  %9980 = vst.msk [vmem:[%s9978 + $0x8] sm:$0xff] %vm9593, %v9971
  %9981 = vst.msk [vmem:[%s9978 + $0x10] sm:$0xff] %vm9593, %v9972
  %9982 = vst.msk [vmem:[%s9978 + $0x18] sm:$0xff] %vm9593, %v9973
  %9983 = vst.msk [vmem:[%s9978 + $0x20] sm:$0xff] %vm9593, %v9974
  %9984 = vst.msk [vmem:[%s9978 + $0x28] sm:$0xff] %vm9593, %v9975
  %9985 = vst.msk [vmem:[%s9978 + $0x30] sm:$0xff] %vm9593, %v9976
  %9986 = vst.msk [vmem:[%s9978 + $0x38] sm:$0xff] %vm9593, %v9977
  // Predicated region
  $region114: #{cnn1d_hight_forward.1} parent=0 // pred_check
    _
  $region115: #{cnn1d_hight_forward.1} parent=0 // pred_check_branch
    %9988 = sbr.rel (0) target = $region117
  $region116: #{cnn1d_hight_forward.1} parent=0 // pred_region
    _
  $region117: #{cnn1d_hight_forward.1} parent=0 // pred_fallthru
    _
  // Predicated region
  $region118: #{cnn1d_hight_forward.1} parent=0 // pred_check
    _
  $region119: #{cnn1d_hight_forward.1} parent=0 // pred_check_branch
    %9990 = sbr.rel (0) target = $region121
  $region120: #{cnn1d_hight_forward.1} parent=0 // pred_region
    _
  $region121: #{cnn1d_hight_forward.1} parent=0 // pred_fallthru
    _

</llo_original>
